<compile_context>
chip_gen: v7x
topology: tpu7x:2x2x1
jax: 0.10.0
libtpu: 0.0.40
codegen_flags: <defaults>
</compile_context>

<pallas_src>
import functools

import jax
import jax.numpy as jnp
from jax.experimental import pallas as pl
from jax.experimental.pallas import tpu as pltpu

EPS = 1e-5


# ----------------------------- Pallas kernel -------------------------------
def _encoder_kernel(x_ref, w_ref, s_ref, b_ref, m_ref, o_ref, slab,
                    *, N, C, H, W):
    """Fused Encoder: Block(C,C,1,1) -> Block(C,C,1,1), lane-dense layout.

    x_ref : (N, C, H*Wp)  f32   input, row stride Wp = W+2 (pad columns are 0)
    w_ref : (4, 9, C, C)  bf16  per-tap conv weights [cout, cin], taps kh*3+kw
                               order: [b0.conv1, b0.conv2, b1.conv1, b1.conv2]
    s_ref : (4, C, 1)     f32   folded BatchNorm scale
    b_ref : (4, C, 1)     f32   folded BatchNorm shift
    m_ref : (1, 1, H*Wp)  f32   1.0 on valid columns, 0.0 on the 2 pad columns
    o_ref : (N, C, H*Wp)  f32   output (same padded-column layout)
    slab  : (N, C, SLAB)  f32   flat zero-padded activation slab scratch
    """
    Wp = W + 2
    HWp = H * Wp
    SLAB = slab.shape[-1]
    EMB = Wp + 1          # slab offset of output position q = h*Wp + w

    mask = m_ref[...]     # (1, 1, HWp)

    # Zero only the head/tail strips the embeds never write; the 1-pixel
    # border columns inside the embedded range are re-zeroed by the mask on
    # every embed, so the "padded border stays zero" invariant holds for all
    # 4 convs without ever re-zeroing the whole slab.
    slab[:, :, 0:EMB] = jnp.zeros((N, C, EMB), jnp.float32)
    slab[:, :, EMB + HWp:] = jnp.zeros((N, C, SLAB - EMB - HWp), jnp.float32)

    def embed(act_pc):
        # act_pc: (N, C, HWp) f32 activation in padded-column (stride-Wp)
        # layout.  ONE shifted, masked, full-lane store per embed.
        slab[:, :, EMB:EMB + HWp] = act_pc * mask

    def conv_bn(idx):
        # 3x3 conv (stride 1, pad 1) + folded BN in transposed/lane-dense
        # form: accumulate 9 per-tap (C,C) x (C,HWp) MXU matmuls over lane-
        # shifted views of the slab.  (At C=4 the MXU is idle either way; the
        # old binding slots — masked vst + XLU window shuffles — are gone.)
        outs = []
        for n in range(N):
            acc = jnp.zeros((C, HWp), jnp.float32)
            for t in range(9):
                kh, kw = t // 3, t % 3
                off = kh * Wp + kw
                x_t = slab[n, :, off:off + HWp].astype(jnp.bfloat16)
                acc = acc + jnp.dot(w_ref[idx, t], x_t,
                                    preferred_element_type=jnp.float32)
            outs.append(acc)
        out = jnp.stack(outs, axis=0)                    # (N, C, HWp) f32
        return out * s_ref[idx] + b_ref[idx]             # BN in f32 (v5e-safe)

    x_pc = x_ref[...]                                    # (N, C, HWp)

    # ---- Block 1 -----------------------------------------------------------
    embed(x_pc)
    h = jnp.maximum(conv_bn(0), 0.0)                     # conv1 + BN1 + ReLU
    embed(h)
    b1 = jnp.maximum(conv_bn(1) + x_pc, 0.0)             # conv2 + BN2 + res + ReLU

    # ---- Block 2 -----------------------------------------------------------
    embed(b1)
    g = jnp.maximum(conv_bn(2), 0.0)
    embed(g)
    o_ref[...] = jnp.maximum(conv_bn(3) + b1, 0.0)


# ------------------------------- wrapper ------------------------------------
def encoder_forward(x_nchw, block_params):
    """Encoder = Block(C, C, stride=1, pad=1) -> Block(C, C, stride=1, pad=1)."""
    N, C, H, W = x_nchw.shape
    Wp = W + 2
    HWp = H * Wp
    SLAB = HWp + 2 * Wp + 2        # covers the largest tap offset (2*Wp + 2)

    # NCHW consumed directly; only a cheap 2-column right pad so rows have
    # stride Wp (no NCHW<->NHWC transpose / relayout pass).
    x_pc = jnp.pad(x_nchw.astype(jnp.float32),
                   ((0, 0), (0, 0), (0, 0), (0, Wp - W))).reshape(N, C, HWp)

    # Per-tap weights: OIHW -> (9, Cout, Cin), bf16 operands for the MXU.
    w = jnp.stack([
        jnp.transpose(block_params[b]["w%d" % i], (2, 3, 0, 1)).reshape(9, C, C)
        for b in range(2) for i in (1, 2)
    ]).astype(jnp.bfloat16)                                       # (4, 9, C, C)
    s = jnp.stack([block_params[b]["s%d" % i]
                   for b in range(2) for i in (1, 2)]).reshape(4, C, 1)
    sh = jnp.stack([block_params[b]["b%d" % i]
                    for b in range(2) for i in (1, 2)]).reshape(4, C, 1)
    # 1.0 on valid output columns (w < W within each stride-Wp row), else 0.
    mask = (jnp.arange(HWp) % Wp < W).astype(jnp.float32).reshape(1, 1, HWp)

    flops = 4 * 2 * (N * H * W) * (9 * C) * C                     # 4 convs
    bytes_accessed = (2 * N * C * HWp * 4                         # x + out
                      + 4 * 9 * C * C * 2                         # bf16 weights
                      + 2 * 4 * C * 4                             # BN scale/shift
                      + HWp * 4)                                  # mask

    kernel = functools.partial(_encoder_kernel, N=N, C=C, H=H, W=W)
    out_pc = pl.pallas_call(
        kernel,
        out_shape=jax.ShapeDtypeStruct((N, C, HWp), jnp.float32),
        grid=(1,),
        in_specs=[
            pl.BlockSpec((N, C, HWp), lambda i: (0, 0, 0)),
            pl.BlockSpec((4, 9, C, C), lambda i: (0, 0, 0, 0)),
            pl.BlockSpec((4, C, 1), lambda i: (0, 0, 0)),
            pl.BlockSpec((4, C, 1), lambda i: (0, 0, 0)),
            pl.BlockSpec((1, 1, HWp), lambda i: (0, 0, 0)),
        ],
        out_specs=pl.BlockSpec((N, C, HWp), lambda i: (0, 0, 0)),
        scratch_shapes=[pltpu.VMEM((N, C, SLAB), jnp.float32)],
        compiler_params=pltpu.CompilerParams(
            dimension_semantics=("arbitrary",)),
        cost_estimate=pl.CostEstimate(flops=flops, transcendentals=0,
                                      bytes_accessed=bytes_accessed),
    )(x_pc, w, s, sh, mask)

    # Drop the 2 pad columns: (N, C, H*Wp) -> (N, C, H, W).
    return out_pc.reshape(N, C, H, Wp)[:, :, :, :W]


# --------------------------- parameter handling -----------------------------
def _init_block_params(key, c):
    ks = jax.random.split(key, 10)
    p = {}
    p["w1"] = 0.1 * jax.random.normal(ks[0], (c, c, 3, 3), jnp.float32)  # OIHW
    p["w2"] = 0.1 * jax.random.normal(ks[1], (c, c, 3, 3), jnp.float32)  # OIHW
    for i, tag in enumerate(("1", "2")):
        g = 1.0 + 0.1 * jax.random.normal(ks[2 + 4 * i], (c,), jnp.float32)
        b = 0.1 * jax.random.normal(ks[3 + 4 * i], (c,), jnp.float32)
        m = 0.1 * jax.random.normal(ks[4 + 4 * i], (c,), jnp.float32)
        v = 1.0 + 0.5 * jax.random.uniform(ks[5 + 4 * i], (c,), jnp.float32)
        scale = g / jnp.sqrt(v + EPS)                 # folded inference BN
        p["s" + tag] = scale
        p["b" + tag] = b - m * scale
    return p


# ------------------------------ pure-JAX reference ---------------------------
def _conv3x3_bn_ref(x, w_oihw, scale, shift):
    # bf16-round the matmul operands exactly like the kernel; accumulate f32.
    xb = x.astype(jnp.bfloat16).astype(jnp.float32)
    wb = w_oihw.astype(jnp.bfloat16).astype(jnp.float32)
    y = jax.lax.conv_general_dilated(
        xb, wb, window_strides=(1, 1), padding=((1, 1), (1, 1)),
        dimension_numbers=("NCHW", "OIHW", "NCHW"),
        precision=jax.lax.Precision.HIGHEST)
    return y * scale.reshape(1, -1, 1, 1) + shift.reshape(1, -1, 1, 1)


def _encoder_ref(x_nchw, block_params):
    x = x_nchw.astype(jnp.float32)
    for p in block_params:
        h = jnp.maximum(_conv3x3_bn_ref(x, p["w1"], p["s1"], p["b1"]), 0.0)
        o = _conv3x3_bn_ref(h, p["w2"], p["s2"], p["b2"])
        x = jnp.maximum(o + x, 0.0)
    return x


# ----------------------------------- main ------------------------------------
if __name__ == "__main__":
    key = jax.random.PRNGKey(0)
    k_x, k_b0, k_b1 = jax.random.split(key, 3)

    N, C, H, W = 2, 4, 16, 16                     # Encoder(in_ch=4, out_ch=4)
    x = jax.random.normal(k_x, (N, C, H, W), jnp.float32)

    params = [_init_block_params(k_b0, C), _init_block_params(k_b1, C)]

    out = jax.block_until_ready(encoder_forward(x, params))
    ref = jax.block_until_ready(_encoder_ref(x, params))

    assert out.shape == (N, C, H, W)
    assert jnp.allclose(out, ref, rtol=1e-3, atol=1e-3), "mismatch vs reference"

    print("KERNEL_OK")
</pallas_src>

<mosaic_0001>
module attributes {stable_mosaic.version = 11 : i64} {
  func.func @_encoder_kernel(%arg0: i32, %arg1: memref<2x4x288xf32, #tpu.memory_space<vmem>>, %arg2: memref<4x9x4x4xbf16, #tpu.memory_space<vmem>>, %arg3: memref<4x4x1xf32, #tpu.memory_space<vmem>>, %arg4: memref<4x4x1xf32, #tpu.memory_space<vmem>>, %arg5: memref<1x1x288xf32, #tpu.memory_space<vmem>>, %arg6: memref<2x4x288xf32, #tpu.memory_space<vmem>>, %arg7: memref<2x4x326xf32, #tpu.memory_space<vmem>>) attributes {dimension_semantics = [#tpu.dimension_semantics<arbitrary>], iteration_bounds = array<i64: 1>, scalar_prefetch = 0 : i64, scratch_operands = 1 : i64, tpu.core_type = #tpu.core_type<tc>, window_params = [{pipeline_mode = #tpu.pipeline_mode<synchronous>, transform_indices = @transform_0, window_bounds = array<i64: 2, 4, 288>}, {pipeline_mode = #tpu.pipeline_mode<synchronous>, transform_indices = @transform_1, window_bounds = array<i64: 4, 9, 4, 4>}, {pipeline_mode = #tpu.pipeline_mode<synchronous>, transform_indices = @transform_2, window_bounds = array<i64: 4, 4, 1>}, {pipeline_mode = #tpu.pipeline_mode<synchronous>, transform_indices = @transform_3, window_bounds = array<i64: 4, 4, 1>}, {pipeline_mode = #tpu.pipeline_mode<synchronous>, transform_indices = @transform_4, window_bounds = array<i64: 1, 1, 288>}, {pipeline_mode = #tpu.pipeline_mode<synchronous>, transform_indices = @transform_5, window_bounds = array<i64: 2, 4, 288>}]} {
    %c0 = arith.constant 0 : index
    %c0_0 = arith.constant 0 : index
    %c0_1 = arith.constant 0 : index
    %0 = vector.load %arg5[%c0, %c0_0, %c0_1] : memref<1x1x288xf32, #tpu.memory_space<vmem>>, vector<1x1x288xf32>
    %cst = arith.constant 0.000000e+00 : f32
    %1 = vector.broadcast %cst : f32 to vector<2x4x19xf32>
    %c0_2 = arith.constant 0 : index
    %c0_3 = arith.constant 0 : index
    %c0_4 = arith.constant 0 : index
    %2 = vector.load %arg7[%c0_2, %c0_3, %c0_4] : memref<2x4x326xf32, #tpu.memory_space<vmem>>, vector<2x4x19xf32>
    tpu.vector_store %arg7[%c0_2, %c0_3, %c0_4], %1 {strides = array<i32>} : memref<2x4x326xf32, #tpu.memory_space<vmem>>, vector<2x4x19xf32>,
    %cst_5 = arith.constant 0.000000e+00 : f32
    %3 = vector.broadcast %cst_5 : f32 to vector<2x4x19xf32>
    %c0_6 = arith.constant 0 : index
    %c0_7 = arith.constant 0 : index
    %c307 = arith.constant 307 : index
    %4 = vector.load %arg7[%c0_6, %c0_7, %c307] : memref<2x4x326xf32, #tpu.memory_space<vmem>>, vector<2x4x19xf32>
    tpu.vector_store %arg7[%c0_6, %c0_7, %c307], %3 {strides = array<i32>} : memref<2x4x326xf32, #tpu.memory_space<vmem>>, vector<2x4x19xf32>,
    %c0_8 = arith.constant 0 : index
    %c0_9 = arith.constant 0 : index
    %c0_10 = arith.constant 0 : index
    %5 = vector.load %arg1[%c0_8, %c0_9, %c0_10] : memref<2x4x288xf32, #tpu.memory_space<vmem>>, vector<2x4x288xf32>
    %6 = vector.broadcast %0 : vector<1x1x288xf32> to vector<2x4x288xf32>
    %7 = arith.mulf %5, %6 : vector<2x4x288xf32>
    %c0_11 = arith.constant 0 : index
    %c0_12 = arith.constant 0 : index
    %c19 = arith.constant 19 : index
    %8 = vector.load %arg7[%c0_11, %c0_12, %c19] : memref<2x4x326xf32, #tpu.memory_space<vmem>>, vector<2x4x288xf32>
    tpu.vector_store %arg7[%c0_11, %c0_12, %c19], %7 {strides = array<i32>} : memref<2x4x326xf32, #tpu.memory_space<vmem>>, vector<2x4x288xf32>,
    %cst_13 = arith.constant 0.000000e+00 : f32
    %9 = vector.broadcast %cst_13 : f32 to vector<4x288xf32>
    %c0_14 = arith.constant 0 : index
    %c0_15 = arith.constant 0 : index
    %c0_16 = arith.constant 0 : index
    %10 = vector.load %arg7[%c0_14, %c0_15, %c0_16] : memref<2x4x326xf32, #tpu.memory_space<vmem>>, vector<1x4x288xf32>
    %11 = vector.shape_cast %10 : vector<1x4x288xf32> to vector<4x288xf32>
    %12 = arith.truncf %11 : vector<4x288xf32> to vector<4x288xbf16>
    %c0_17 = arith.constant 0 : index
    %c0_18 = arith.constant 0 : index
    %c0_19 = arith.constant 0 : index
    %c0_20 = arith.constant 0 : index
    %13 = vector.load %arg2[%c0_17, %c0_18, %c0_19, %c0_20] : memref<4x9x4x4xbf16, #tpu.memory_space<vmem>>, vector<1x1x4x4xbf16>
    %14 = vector.shape_cast %13 : vector<1x1x4x4xbf16> to vector<4x4xbf16>
    %cst_21 = arith.constant dense<0.000000e+00> : vector<4x288xf32>
    %15 = tpu.matmul %14, %12, %cst_21 {dimension_numbers = #tpu.dot_dimension_numbers<[1], [0], [0], [1], [0, 0, 1, 1], [], []>} : vector<4x4xbf16>, vector<4x288xbf16>, vector<4x288xf32> -> vector<4x288xf32>
    %16 = arith.addf %9, %15 : vector<4x288xf32>
    %c0_22 = arith.constant 0 : index
    %c0_23 = arith.constant 0 : index
    %c1 = arith.constant 1 : index
    %17 = vector.load %arg7[%c0_22, %c0_23, %c1] : memref<2x4x326xf32, #tpu.memory_space<vmem>>, vector<1x4x288xf32>
    %18 = vector.shape_cast %17 : vector<1x4x288xf32> to vector<4x288xf32>
    %19 = arith.truncf %18 : vector<4x288xf32> to vector<4x288xbf16>
    %c0_24 = arith.constant 0 : index
    %c1_25 = arith.constant 1 : index
    %c0_26 = arith.constant 0 : index
    %c0_27 = arith.constant 0 : index
    %20 = vector.load %arg2[%c0_24, %c1_25, %c0_26, %c0_27] : memref<4x9x4x4xbf16, #tpu.memory_space<vmem>>, vector<1x1x4x4xbf16>
    %21 = vector.shape_cast %20 : vector<1x1x4x4xbf16> to vector<4x4xbf16>
    %cst_28 = arith.constant dense<0.000000e+00> : vector<4x288xf32>
    %22 = tpu.matmul %21, %19, %cst_28 {dimension_numbers = #tpu.dot_dimension_numbers<[1], [0], [0], [1], [0, 0, 1, 1], [], []>} : vector<4x4xbf16>, vector<4x288xbf16>, vector<4x288xf32> -> vector<4x288xf32>
    %23 = arith.addf %16, %22 : vector<4x288xf32>
    %c0_29 = arith.constant 0 : index
    %c0_30 = arith.constant 0 : index
    %c2 = arith.constant 2 : index
    %24 = vector.load %arg7[%c0_29, %c0_30, %c2] : memref<2x4x326xf32, #tpu.memory_space<vmem>>, vector<1x4x288xf32>
    %25 = vector.shape_cast %24 : vector<1x4x288xf32> to vector<4x288xf32>
    %26 = arith.truncf %25 : vector<4x288xf32> to vector<4x288xbf16>
    %c0_31 = arith.constant 0 : index
    %c2_32 = arith.constant 2 : index
    %c0_33 = arith.constant 0 : index
    %c0_34 = arith.constant 0 : index
    %27 = vector.load %arg2[%c0_31, %c2_32, %c0_33, %c0_34] : memref<4x9x4x4xbf16, #tpu.memory_space<vmem>>, vector<1x1x4x4xbf16>
    %28 = vector.shape_cast %27 : vector<1x1x4x4xbf16> to vector<4x4xbf16>
    %cst_35 = arith.constant dense<0.000000e+00> : vector<4x288xf32>
    %29 = tpu.matmul %28, %26, %cst_35 {dimension_numbers = #tpu.dot_dimension_numbers<[1], [0], [0], [1], [0, 0, 1, 1], [], []>} : vector<4x4xbf16>, vector<4x288xbf16>, vector<4x288xf32> -> vector<4x288xf32>
    %30 = arith.addf %23, %29 : vector<4x288xf32>
    %c0_36 = arith.constant 0 : index
    %c0_37 = arith.constant 0 : index
    %c18 = arith.constant 18 : index
    %31 = vector.load %arg7[%c0_36, %c0_37, %c18] : memref<2x4x326xf32, #tpu.memory_space<vmem>>, vector<1x4x288xf32>
    %32 = vector.shape_cast %31 : vector<1x4x288xf32> to vector<4x288xf32>
    %33 = arith.truncf %32 : vector<4x288xf32> to vector<4x288xbf16>
    %c0_38 = arith.constant 0 : index
    %c3 = arith.constant 3 : index
    %c0_39 = arith.constant 0 : index
    %c0_40 = arith.constant 0 : index
    %34 = vector.load %arg2[%c0_38, %c3, %c0_39, %c0_40] : memref<4x9x4x4xbf16, #tpu.memory_space<vmem>>, vector<1x1x4x4xbf16>
    %35 = vector.shape_cast %34 : vector<1x1x4x4xbf16> to vector<4x4xbf16>
    %cst_41 = arith.constant dense<0.000000e+00> : vector<4x288xf32>
    %36 = tpu.matmul %35, %33, %cst_41 {dimension_numbers = #tpu.dot_dimension_numbers<[1], [0], [0], [1], [0, 0, 1, 1], [], []>} : vector<4x4xbf16>, vector<4x288xbf16>, vector<4x288xf32> -> vector<4x288xf32>
    %37 = arith.addf %30, %36 : vector<4x288xf32>
    %c0_42 = arith.constant 0 : index
    %c0_43 = arith.constant 0 : index
    %c19_44 = arith.constant 19 : index
    %38 = vector.load %arg7[%c0_42, %c0_43, %c19_44] : memref<2x4x326xf32, #tpu.memory_space<vmem>>, vector<1x4x288xf32>
    %39 = vector.shape_cast %38 : vector<1x4x288xf32> to vector<4x288xf32>
    %40 = arith.truncf %39 : vector<4x288xf32> to vector<4x288xbf16>
    %c0_45 = arith.constant 0 : index
    %c4 = arith.constant 4 : index
    %c0_46 = arith.constant 0 : index
    %c0_47 = arith.constant 0 : index
    %41 = vector.load %arg2[%c0_45, %c4, %c0_46, %c0_47] : memref<4x9x4x4xbf16, #tpu.memory_space<vmem>>, vector<1x1x4x4xbf16>
    %42 = vector.shape_cast %41 : vector<1x1x4x4xbf16> to vector<4x4xbf16>
    %cst_48 = arith.constant dense<0.000000e+00> : vector<4x288xf32>
    %43 = tpu.matmul %42, %40, %cst_48 {dimension_numbers = #tpu.dot_dimension_numbers<[1], [0], [0], [1], [0, 0, 1, 1], [], []>} : vector<4x4xbf16>, vector<4x288xbf16>, vector<4x288xf32> -> vector<4x288xf32>
    %44 = arith.addf %37, %43 : vector<4x288xf32>
    %c0_49 = arith.constant 0 : index
    %c0_50 = arith.constant 0 : index
    %c20 = arith.constant 20 : index
    %45 = vector.load %arg7[%c0_49, %c0_50, %c20] : memref<2x4x326xf32, #tpu.memory_space<vmem>>, vector<1x4x288xf32>
    %46 = vector.shape_cast %45 : vector<1x4x288xf32> to vector<4x288xf32>
    %47 = arith.truncf %46 : vector<4x288xf32> to vector<4x288xbf16>
    %c0_51 = arith.constant 0 : index
    %c5 = arith.constant 5 : index
    %c0_52 = arith.constant 0 : index
    %c0_53 = arith.constant 0 : index
    %48 = vector.load %arg2[%c0_51, %c5, %c0_52, %c0_53] : memref<4x9x4x4xbf16, #tpu.memory_space<vmem>>, vector<1x1x4x4xbf16>
    %49 = vector.shape_cast %48 : vector<1x1x4x4xbf16> to vector<4x4xbf16>
    %cst_54 = arith.constant dense<0.000000e+00> : vector<4x288xf32>
    %50 = tpu.matmul %49, %47, %cst_54 {dimension_numbers = #tpu.dot_dimension_numbers<[1], [0], [0], [1], [0, 0, 1, 1], [], []>} : vector<4x4xbf16>, vector<4x288xbf16>, vector<4x288xf32> -> vector<4x288xf32>
    %51 = arith.addf %44, %50 : vector<4x288xf32>
    %c0_55 = arith.constant 0 : index
    %c0_56 = arith.constant 0 : index
    %c36 = arith.constant 36 : index
    %52 = vector.load %arg7[%c0_55, %c0_56, %c36] : memref<2x4x326xf32, #tpu.memory_space<vmem>>, vector<1x4x288xf32>
    %53 = vector.shape_cast %52 : vector<1x4x288xf32> to vector<4x288xf32>
    %54 = arith.truncf %53 : vector<4x288xf32> to vector<4x288xbf16>
    %c0_57 = arith.constant 0 : index
    %c6 = arith.constant 6 : index
    %c0_58 = arith.constant 0 : index
    %c0_59 = arith.constant 0 : index
    %55 = vector.load %arg2[%c0_57, %c6, %c0_58, %c0_59] : memref<4x9x4x4xbf16, #tpu.memory_space<vmem>>, vector<1x1x4x4xbf16>
    %56 = vector.shape_cast %55 : vector<1x1x4x4xbf16> to vector<4x4xbf16>
    %cst_60 = arith.constant dense<0.000000e+00> : vector<4x288xf32>
    %57 = tpu.matmul %56, %54, %cst_60 {dimension_numbers = #tpu.dot_dimension_numbers<[1], [0], [0], [1], [0, 0, 1, 1], [], []>} : vector<4x4xbf16>, vector<4x288xbf16>, vector<4x288xf32> -> vector<4x288xf32>
    %58 = arith.addf %51, %57 : vector<4x288xf32>
    %c0_61 = arith.constant 0 : index
    %c0_62 = arith.constant 0 : index
    %c37 = arith.constant 37 : index
    %59 = vector.load %arg7[%c0_61, %c0_62, %c37] : memref<2x4x326xf32, #tpu.memory_space<vmem>>, vector<1x4x288xf32>
    %60 = vector.shape_cast %59 : vector<1x4x288xf32> to vector<4x288xf32>
    %61 = arith.truncf %60 : vector<4x288xf32> to vector<4x288xbf16>
    %c0_63 = arith.constant 0 : index
    %c7 = arith.constant 7 : index
    %c0_64 = arith.constant 0 : index
    %c0_65 = arith.constant 0 : index
    %62 = vector.load %arg2[%c0_63, %c7, %c0_64, %c0_65] : memref<4x9x4x4xbf16, #tpu.memory_space<vmem>>, vector<1x1x4x4xbf16>
    %63 = vector.shape_cast %62 : vector<1x1x4x4xbf16> to vector<4x4xbf16>
    %cst_66 = arith.constant dense<0.000000e+00> : vector<4x288xf32>
    %64 = tpu.matmul %63, %61, %cst_66 {dimension_numbers = #tpu.dot_dimension_numbers<[1], [0], [0], [1], [0, 0, 1, 1], [], []>} : vector<4x4xbf16>, vector<4x288xbf16>, vector<4x288xf32> -> vector<4x288xf32>
    %65 = arith.addf %58, %64 : vector<4x288xf32>
    %c0_67 = arith.constant 0 : index
    %c0_68 = arith.constant 0 : index
    %c38 = arith.constant 38 : index
    %66 = vector.load %arg7[%c0_67, %c0_68, %c38] : memref<2x4x326xf32, #tpu.memory_space<vmem>>, vector<1x4x288xf32>
    %67 = vector.shape_cast %66 : vector<1x4x288xf32> to vector<4x288xf32>
    %68 = arith.truncf %67 : vector<4x288xf32> to vector<4x288xbf16>
    %c0_69 = arith.constant 0 : index
    %c8 = arith.constant 8 : index
    %c0_70 = arith.constant 0 : index
    %c0_71 = arith.constant 0 : index
    %69 = vector.load %arg2[%c0_69, %c8, %c0_70, %c0_71] : memref<4x9x4x4xbf16, #tpu.memory_space<vmem>>, vector<1x1x4x4xbf16>
    %70 = vector.shape_cast %69 : vector<1x1x4x4xbf16> to vector<4x4xbf16>
    %cst_72 = arith.constant dense<0.000000e+00> : vector<4x288xf32>
    %71 = tpu.matmul %70, %68, %cst_72 {dimension_numbers = #tpu.dot_dimension_numbers<[1], [0], [0], [1], [0, 0, 1, 1], [], []>} : vector<4x4xbf16>, vector<4x288xbf16>, vector<4x288xf32> -> vector<4x288xf32>
    %72 = arith.addf %65, %71 : vector<4x288xf32>
    %cst_73 = arith.constant 0.000000e+00 : f32
    %73 = vector.broadcast %cst_73 : f32 to vector<4x288xf32>
    %c1_74 = arith.constant 1 : index
    %c0_75 = arith.constant 0 : index
    %c0_76 = arith.constant 0 : index
    %74 = vector.load %arg7[%c1_74, %c0_75, %c0_76] : memref<2x4x326xf32, #tpu.memory_space<vmem>>, vector<1x4x288xf32>
    %75 = vector.shape_cast %74 : vector<1x4x288xf32> to vector<4x288xf32>
    %76 = arith.truncf %75 : vector<4x288xf32> to vector<4x288xbf16>
    %c0_77 = arith.constant 0 : index
    %c0_78 = arith.constant 0 : index
    %c0_79 = arith.constant 0 : index
    %c0_80 = arith.constant 0 : index
    %77 = vector.load %arg2[%c0_77, %c0_78, %c0_79, %c0_80] : memref<4x9x4x4xbf16, #tpu.memory_space<vmem>>, vector<1x1x4x4xbf16>
    %78 = vector.shape_cast %77 : vector<1x1x4x4xbf16> to vector<4x4xbf16>
    %cst_81 = arith.constant dense<0.000000e+00> : vector<4x288xf32>
    %79 = tpu.matmul %78, %76, %cst_81 {dimension_numbers = #tpu.dot_dimension_numbers<[1], [0], [0], [1], [0, 0, 1, 1], [], []>} : vector<4x4xbf16>, vector<4x288xbf16>, vector<4x288xf32> -> vector<4x288xf32>
    %80 = arith.addf %73, %79 : vector<4x288xf32>
    %c1_82 = arith.constant 1 : index
    %c0_83 = arith.constant 0 : index
    %c1_84 = arith.constant 1 : index
    %81 = vector.load %arg7[%c1_82, %c0_83, %c1_84] : memref<2x4x326xf32, #tpu.memory_space<vmem>>, vector<1x4x288xf32>
    %82 = vector.shape_cast %81 : vector<1x4x288xf32> to vector<4x288xf32>
    %83 = arith.truncf %82 : vector<4x288xf32> to vector<4x288xbf16>
    %c0_85 = arith.constant 0 : index
    %c1_86 = arith.constant 1 : index
    %c0_87 = arith.constant 0 : index
    %c0_88 = arith.constant 0 : index
    %84 = vector.load %arg2[%c0_85, %c1_86, %c0_87, %c0_88] : memref<4x9x4x4xbf16, #tpu.memory_space<vmem>>, vector<1x1x4x4xbf16>
    %85 = vector.shape_cast %84 : vector<1x1x4x4xbf16> to vector<4x4xbf16>
    %cst_89 = arith.constant dense<0.000000e+00> : vector<4x288xf32>
    %86 = tpu.matmul %85, %83, %cst_89 {dimension_numbers = #tpu.dot_dimension_numbers<[1], [0], [0], [1], [0, 0, 1, 1], [], []>} : vector<4x4xbf16>, vector<4x288xbf16>, vector<4x288xf32> -> vector<4x288xf32>
    %87 = arith.addf %80, %86 : vector<4x288xf32>
    %c1_90 = arith.constant 1 : index
    %c0_91 = arith.constant 0 : index
    %c2_92 = arith.constant 2 : index
    %88 = vector.load %arg7[%c1_90, %c0_91, %c2_92] : memref<2x4x326xf32, #tpu.memory_space<vmem>>, vector<1x4x288xf32>
    %89 = vector.shape_cast %88 : vector<1x4x288xf32> to vector<4x288xf32>
    %90 = arith.truncf %89 : vector<4x288xf32> to vector<4x288xbf16>
    %c0_93 = arith.constant 0 : index
    %c2_94 = arith.constant 2 : index
    %c0_95 = arith.constant 0 : index
    %c0_96 = arith.constant 0 : index
    %91 = vector.load %arg2[%c0_93, %c2_94, %c0_95, %c0_96] : memref<4x9x4x4xbf16, #tpu.memory_space<vmem>>, vector<1x1x4x4xbf16>
    %92 = vector.shape_cast %91 : vector<1x1x4x4xbf16> to vector<4x4xbf16>
    %cst_97 = arith.constant dense<0.000000e+00> : vector<4x288xf32>
    %93 = tpu.matmul %92, %90, %cst_97 {dimension_numbers = #tpu.dot_dimension_numbers<[1], [0], [0], [1], [0, 0, 1, 1], [], []>} : vector<4x4xbf16>, vector<4x288xbf16>, vector<4x288xf32> -> vector<4x288xf32>
    %94 = arith.addf %87, %93 : vector<4x288xf32>
    %c1_98 = arith.constant 1 : index
    %c0_99 = arith.constant 0 : index
    %c18_100 = arith.constant 18 : index
    %95 = vector.load %arg7[%c1_98, %c0_99, %c18_100] : memref<2x4x326xf32, #tpu.memory_space<vmem>>, vector<1x4x288xf32>
    %96 = vector.shape_cast %95 : vector<1x4x288xf32> to vector<4x288xf32>
    %97 = arith.truncf %96 : vector<4x288xf32> to vector<4x288xbf16>
    %c0_101 = arith.constant 0 : index
    %c3_102 = arith.constant 3 : index
    %c0_103 = arith.constant 0 : index
    %c0_104 = arith.constant 0 : index
    %98 = vector.load %arg2[%c0_101, %c3_102, %c0_103, %c0_104] : memref<4x9x4x4xbf16, #tpu.memory_space<vmem>>, vector<1x1x4x4xbf16>
    %99 = vector.shape_cast %98 : vector<1x1x4x4xbf16> to vector<4x4xbf16>
    %cst_105 = arith.constant dense<0.000000e+00> : vector<4x288xf32>
    %100 = tpu.matmul %99, %97, %cst_105 {dimension_numbers = #tpu.dot_dimension_numbers<[1], [0], [0], [1], [0, 0, 1, 1], [], []>} : vector<4x4xbf16>, vector<4x288xbf16>, vector<4x288xf32> -> vector<4x288xf32>
    %101 = arith.addf %94, %100 : vector<4x288xf32>
    %c1_106 = arith.constant 1 : index
    %c0_107 = arith.constant 0 : index
    %c19_108 = arith.constant 19 : index
    %102 = vector.load %arg7[%c1_106, %c0_107, %c19_108] : memref<2x4x326xf32, #tpu.memory_space<vmem>>, vector<1x4x288xf32>
    %103 = vector.shape_cast %102 : vector<1x4x288xf32> to vector<4x288xf32>
    %104 = arith.truncf %103 : vector<4x288xf32> to vector<4x288xbf16>
    %c0_109 = arith.constant 0 : index
    %c4_110 = arith.constant 4 : index
    %c0_111 = arith.constant 0 : index
    %c0_112 = arith.constant 0 : index
    %105 = vector.load %arg2[%c0_109, %c4_110, %c0_111, %c0_112] : memref<4x9x4x4xbf16, #tpu.memory_space<vmem>>, vector<1x1x4x4xbf16>
    %106 = vector.shape_cast %105 : vector<1x1x4x4xbf16> to vector<4x4xbf16>
    %cst_113 = arith.constant dense<0.000000e+00> : vector<4x288xf32>
    %107 = tpu.matmul %106, %104, %cst_113 {dimension_numbers = #tpu.dot_dimension_numbers<[1], [0], [0], [1], [0, 0, 1, 1], [], []>} : vector<4x4xbf16>, vector<4x288xbf16>, vector<4x288xf32> -> vector<4x288xf32>
    %108 = arith.addf %101, %107 : vector<4x288xf32>
    %c1_114 = arith.constant 1 : index
    %c0_115 = arith.constant 0 : index
    %c20_116 = arith.constant 20 : index
    %109 = vector.load %arg7[%c1_114, %c0_115, %c20_116] : memref<2x4x326xf32, #tpu.memory_space<vmem>>, vector<1x4x288xf32>
    %110 = vector.shape_cast %109 : vector<1x4x288xf32> to vector<4x288xf32>
    %111 = arith.truncf %110 : vector<4x288xf32> to vector<4x288xbf16>
    %c0_117 = arith.constant 0 : index
    %c5_118 = arith.constant 5 : index
    %c0_119 = arith.constant 0 : index
    %c0_120 = arith.constant 0 : index
    %112 = vector.load %arg2[%c0_117, %c5_118, %c0_119, %c0_120] : memref<4x9x4x4xbf16, #tpu.memory_space<vmem>>, vector<1x1x4x4xbf16>
    %113 = vector.shape_cast %112 : vector<1x1x4x4xbf16> to vector<4x4xbf16>
    %cst_121 = arith.constant dense<0.000000e+00> : vector<4x288xf32>
    %114 = tpu.matmul %113, %111, %cst_121 {dimension_numbers = #tpu.dot_dimension_numbers<[1], [0], [0], [1], [0, 0, 1, 1], [], []>} : vector<4x4xbf16>, vector<4x288xbf16>, vector<4x288xf32> -> vector<4x288xf32>
    %115 = arith.addf %108, %114 : vector<4x288xf32>
    %c1_122 = arith.constant 1 : index
    %c0_123 = arith.constant 0 : index
    %c36_124 = arith.constant 36 : index
    %116 = vector.load %arg7[%c1_122, %c0_123, %c36_124] : memref<2x4x326xf32, #tpu.memory_space<vmem>>, vector<1x4x288xf32>
    %117 = vector.shape_cast %116 : vector<1x4x288xf32> to vector<4x288xf32>
    %118 = arith.truncf %117 : vector<4x288xf32> to vector<4x288xbf16>
    %c0_125 = arith.constant 0 : index
    %c6_126 = arith.constant 6 : index
    %c0_127 = arith.constant 0 : index
    %c0_128 = arith.constant 0 : index
    %119 = vector.load %arg2[%c0_125, %c6_126, %c0_127, %c0_128] : memref<4x9x4x4xbf16, #tpu.memory_space<vmem>>, vector<1x1x4x4xbf16>
    %120 = vector.shape_cast %119 : vector<1x1x4x4xbf16> to vector<4x4xbf16>
    %cst_129 = arith.constant dense<0.000000e+00> : vector<4x288xf32>
    %121 = tpu.matmul %120, %118, %cst_129 {dimension_numbers = #tpu.dot_dimension_numbers<[1], [0], [0], [1], [0, 0, 1, 1], [], []>} : vector<4x4xbf16>, vector<4x288xbf16>, vector<4x288xf32> -> vector<4x288xf32>
    %122 = arith.addf %115, %121 : vector<4x288xf32>
    %c1_130 = arith.constant 1 : index
    %c0_131 = arith.constant 0 : index
    %c37_132 = arith.constant 37 : index
    %123 = vector.load %arg7[%c1_130, %c0_131, %c37_132] : memref<2x4x326xf32, #tpu.memory_space<vmem>>, vector<1x4x288xf32>
    %124 = vector.shape_cast %123 : vector<1x4x288xf32> to vector<4x288xf32>
    %125 = arith.truncf %124 : vector<4x288xf32> to vector<4x288xbf16>
    %c0_133 = arith.constant 0 : index
    %c7_134 = arith.constant 7 : index
    %c0_135 = arith.constant 0 : index
    %c0_136 = arith.constant 0 : index
    %126 = vector.load %arg2[%c0_133, %c7_134, %c0_135, %c0_136] : memref<4x9x4x4xbf16, #tpu.memory_space<vmem>>, vector<1x1x4x4xbf16>
    %127 = vector.shape_cast %126 : vector<1x1x4x4xbf16> to vector<4x4xbf16>
    %cst_137 = arith.constant dense<0.000000e+00> : vector<4x288xf32>
    %128 = tpu.matmul %127, %125, %cst_137 {dimension_numbers = #tpu.dot_dimension_numbers<[1], [0], [0], [1], [0, 0, 1, 1], [], []>} : vector<4x4xbf16>, vector<4x288xbf16>, vector<4x288xf32> -> vector<4x288xf32>
    %129 = arith.addf %122, %128 : vector<4x288xf32>
    %c1_138 = arith.constant 1 : index
    %c0_139 = arith.constant 0 : index
    %c38_140 = arith.constant 38 : index
    %130 = vector.load %arg7[%c1_138, %c0_139, %c38_140] : memref<2x4x326xf32, #tpu.memory_space<vmem>>, vector<1x4x288xf32>
    %131 = vector.shape_cast %130 : vector<1x4x288xf32> to vector<4x288xf32>
    %132 = arith.truncf %131 : vector<4x288xf32> to vector<4x288xbf16>
    %c0_141 = arith.constant 0 : index
    %c8_142 = arith.constant 8 : index
    %c0_143 = arith.constant 0 : index
    %c0_144 = arith.constant 0 : index
    %133 = vector.load %arg2[%c0_141, %c8_142, %c0_143, %c0_144] : memref<4x9x4x4xbf16, #tpu.memory_space<vmem>>, vector<1x1x4x4xbf16>
    %134 = vector.shape_cast %133 : vector<1x1x4x4xbf16> to vector<4x4xbf16>
    %cst_145 = arith.constant dense<0.000000e+00> : vector<4x288xf32>
    %135 = tpu.matmul %134, %132, %cst_145 {dimension_numbers = #tpu.dot_dimension_numbers<[1], [0], [0], [1], [0, 0, 1, 1], [], []>} : vector<4x4xbf16>, vector<4x288xbf16>, vector<4x288xf32> -> vector<4x288xf32>
    %136 = arith.addf %129, %135 : vector<4x288xf32>
    %137 = vector.shape_cast %72 : vector<4x288xf32> to vector<1x4x288xf32>
    %138 = vector.shape_cast %136 : vector<4x288xf32> to vector<1x4x288xf32>
    %139 = tpu.concatenate %137, %138 in 0 : vector<1x4x288xf32>, vector<1x4x288xf32> -> vector<2x4x288xf32>
    %c0_146 = arith.constant 0 : index
    %c0_147 = arith.constant 0 : index
    %c0_148 = arith.constant 0 : index
    %140 = vector.load %arg3[%c0_146, %c0_147, %c0_148] : memref<4x4x1xf32, #tpu.memory_space<vmem>>, vector<1x4x1xf32>
    %141 = vector.shape_cast %140 : vector<1x4x1xf32> to vector<4x1xf32>
    %142 = vector.shape_cast %141 : vector<4x1xf32> to vector<1x4x1xf32>
    %143 = vector.broadcast %142 : vector<1x4x1xf32> to vector<2x4x288xf32>
    %144 = arith.mulf %139, %143 : vector<2x4x288xf32>
    %c0_149 = arith.constant 0 : index
    %c0_150 = arith.constant 0 : index
    %c0_151 = arith.constant 0 : index
    %145 = vector.load %arg4[%c0_149, %c0_150, %c0_151] : memref<4x4x1xf32, #tpu.memory_space<vmem>>, vector<1x4x1xf32>
    %146 = vector.shape_cast %145 : vector<1x4x1xf32> to vector<4x1xf32>
    %147 = vector.shape_cast %146 : vector<4x1xf32> to vector<1x4x1xf32>
    %148 = vector.broadcast %147 : vector<1x4x1xf32> to vector<2x4x288xf32>
    %149 = arith.addf %144, %148 : vector<2x4x288xf32>
    %cst_152 = arith.constant 0.000000e+00 : f32
    %150 = vector.broadcast %cst_152 : f32 to vector<2x4x288xf32>
    %151 = arith.maximumf %149, %150 : vector<2x4x288xf32>
    %152 = vector.broadcast %0 : vector<1x1x288xf32> to vector<2x4x288xf32>
    %153 = arith.mulf %151, %152 : vector<2x4x288xf32>
    %c0_153 = arith.constant 0 : index
    %c0_154 = arith.constant 0 : index
    %c19_155 = arith.constant 19 : index
    %154 = vector.load %arg7[%c0_153, %c0_154, %c19_155] : memref<2x4x326xf32, #tpu.memory_space<vmem>>, vector<2x4x288xf32>
    tpu.vector_store %arg7[%c0_153, %c0_154, %c19_155], %153 {strides = array<i32>} : memref<2x4x326xf32, #tpu.memory_space<vmem>>, vector<2x4x288xf32>,
    %cst_156 = arith.constant 0.000000e+00 : f32
    %155 = vector.broadcast %cst_156 : f32 to vector<4x288xf32>
    %c0_157 = arith.constant 0 : index
    %c0_158 = arith.constant 0 : index
    %c0_159 = arith.constant 0 : index
    %156 = vector.load %arg7[%c0_157, %c0_158, %c0_159] : memref<2x4x326xf32, #tpu.memory_space<vmem>>, vector<1x4x288xf32>
    %157 = vector.shape_cast %156 : vector<1x4x288xf32> to vector<4x288xf32>
    %158 = arith.truncf %157 : vector<4x288xf32> to vector<4x288xbf16>
    %c1_160 = arith.constant 1 : index
    %c0_161 = arith.constant 0 : index
    %c0_162 = arith.constant 0 : index
    %c0_163 = arith.constant 0 : index
    %159 = vector.load %arg2[%c1_160, %c0_161, %c0_162, %c0_163] : memref<4x9x4x4xbf16, #tpu.memory_space<vmem>>, vector<1x1x4x4xbf16>
    %160 = vector.shape_cast %159 : vector<1x1x4x4xbf16> to vector<4x4xbf16>
    %cst_164 = arith.constant dense<0.000000e+00> : vector<4x288xf32>
    %161 = tpu.matmul %160, %158, %cst_164 {dimension_numbers = #tpu.dot_dimension_numbers<[1], [0], [0], [1], [0, 0, 1, 1], [], []>} : vector<4x4xbf16>, vector<4x288xbf16>, vector<4x288xf32> -> vector<4x288xf32>
    %162 = arith.addf %155, %161 : vector<4x288xf32>
    %c0_165 = arith.constant 0 : index
    %c0_166 = arith.constant 0 : index
    %c1_167 = arith.constant 1 : index
    %163 = vector.load %arg7[%c0_165, %c0_166, %c1_167] : memref<2x4x326xf32, #tpu.memory_space<vmem>>, vector<1x4x288xf32>
    %164 = vector.shape_cast %163 : vector<1x4x288xf32> to vector<4x288xf32>
    %165 = arith.truncf %164 : vector<4x288xf32> to vector<4x288xbf16>
    %c1_168 = arith.constant 1 : index
    %c1_169 = arith.constant 1 : index
    %c0_170 = arith.constant 0 : index
    %c0_171 = arith.constant 0 : index
    %166 = vector.load %arg2[%c1_168, %c1_169, %c0_170, %c0_171] : memref<4x9x4x4xbf16, #tpu.memory_space<vmem>>, vector<1x1x4x4xbf16>
    %167 = vector.shape_cast %166 : vector<1x1x4x4xbf16> to vector<4x4xbf16>
    %cst_172 = arith.constant dense<0.000000e+00> : vector<4x288xf32>
    %168 = tpu.matmul %167, %165, %cst_172 {dimension_numbers = #tpu.dot_dimension_numbers<[1], [0], [0], [1], [0, 0, 1, 1], [], []>} : vector<4x4xbf16>, vector<4x288xbf16>, vector<4x288xf32> -> vector<4x288xf32>
    %169 = arith.addf %162, %168 : vector<4x288xf32>
    %c0_173 = arith.constant 0 : index
    %c0_174 = arith.constant 0 : index
    %c2_175 = arith.constant 2 : index
    %170 = vector.load %arg7[%c0_173, %c0_174, %c2_175] : memref<2x4x326xf32, #tpu.memory_space<vmem>>, vector<1x4x288xf32>
    %171 = vector.shape_cast %170 : vector<1x4x288xf32> to vector<4x288xf32>
    %172 = arith.truncf %171 : vector<4x288xf32> to vector<4x288xbf16>
    %c1_176 = arith.constant 1 : index
    %c2_177 = arith.constant 2 : index
    %c0_178 = arith.constant 0 : index
    %c0_179 = arith.constant 0 : index
    %173 = vector.load %arg2[%c1_176, %c2_177, %c0_178, %c0_179] : memref<4x9x4x4xbf16, #tpu.memory_space<vmem>>, vector<1x1x4x4xbf16>
    %174 = vector.shape_cast %173 : vector<1x1x4x4xbf16> to vector<4x4xbf16>
    %cst_180 = arith.constant dense<0.000000e+00> : vector<4x288xf32>
    %175 = tpu.matmul %174, %172, %cst_180 {dimension_numbers = #tpu.dot_dimension_numbers<[1], [0], [0], [1], [0, 0, 1, 1], [], []>} : vector<4x4xbf16>, vector<4x288xbf16>, vector<4x288xf32> -> vector<4x288xf32>
    %176 = arith.addf %169, %175 : vector<4x288xf32>
    %c0_181 = arith.constant 0 : index
    %c0_182 = arith.constant 0 : index
    %c18_183 = arith.constant 18 : index
    %177 = vector.load %arg7[%c0_181, %c0_182, %c18_183] : memref<2x4x326xf32, #tpu.memory_space<vmem>>, vector<1x4x288xf32>
    %178 = vector.shape_cast %177 : vector<1x4x288xf32> to vector<4x288xf32>
    %179 = arith.truncf %178 : vector<4x288xf32> to vector<4x288xbf16>
    %c1_184 = arith.constant 1 : index
    %c3_185 = arith.constant 3 : index
    %c0_186 = arith.constant 0 : index
    %c0_187 = arith.constant 0 : index
    %180 = vector.load %arg2[%c1_184, %c3_185, %c0_186, %c0_187] : memref<4x9x4x4xbf16, #tpu.memory_space<vmem>>, vector<1x1x4x4xbf16>
    %181 = vector.shape_cast %180 : vector<1x1x4x4xbf16> to vector<4x4xbf16>
    %cst_188 = arith.constant dense<0.000000e+00> : vector<4x288xf32>
    %182 = tpu.matmul %181, %179, %cst_188 {dimension_numbers = #tpu.dot_dimension_numbers<[1], [0], [0], [1], [0, 0, 1, 1], [], []>} : vector<4x4xbf16>, vector<4x288xbf16>, vector<4x288xf32> -> vector<4x288xf32>
    %183 = arith.addf %176, %182 : vector<4x288xf32>
    %c0_189 = arith.constant 0 : index
    %c0_190 = arith.constant 0 : index
    %c19_191 = arith.constant 19 : index
    %184 = vector.load %arg7[%c0_189, %c0_190, %c19_191] : memref<2x4x326xf32, #tpu.memory_space<vmem>>, vector<1x4x288xf32>
    %185 = vector.shape_cast %184 : vector<1x4x288xf32> to vector<4x288xf32>
    %186 = arith.truncf %185 : vector<4x288xf32> to vector<4x288xbf16>
    %c1_192 = arith.constant 1 : index
    %c4_193 = arith.constant 4 : index
    %c0_194 = arith.constant 0 : index
    %c0_195 = arith.constant 0 : index
    %187 = vector.load %arg2[%c1_192, %c4_193, %c0_194, %c0_195] : memref<4x9x4x4xbf16, #tpu.memory_space<vmem>>, vector<1x1x4x4xbf16>
    %188 = vector.shape_cast %187 : vector<1x1x4x4xbf16> to vector<4x4xbf16>
    %cst_196 = arith.constant dense<0.000000e+00> : vector<4x288xf32>
    %189 = tpu.matmul %188, %186, %cst_196 {dimension_numbers = #tpu.dot_dimension_numbers<[1], [0], [0], [1], [0, 0, 1, 1], [], []>} : vector<4x4xbf16>, vector<4x288xbf16>, vector<4x288xf32> -> vector<4x288xf32>
    %190 = arith.addf %183, %189 : vector<4x288xf32>
    %c0_197 = arith.constant 0 : index
    %c0_198 = arith.constant 0 : index
    %c20_199 = arith.constant 20 : index
    %191 = vector.load %arg7[%c0_197, %c0_198, %c20_199] : memref<2x4x326xf32, #tpu.memory_space<vmem>>, vector<1x4x288xf32>
    %192 = vector.shape_cast %191 : vector<1x4x288xf32> to vector<4x288xf32>
    %193 = arith.truncf %192 : vector<4x288xf32> to vector<4x288xbf16>
    %c1_200 = arith.constant 1 : index
    %c5_201 = arith.constant 5 : index
    %c0_202 = arith.constant 0 : index
    %c0_203 = arith.constant 0 : index
    %194 = vector.load %arg2[%c1_200, %c5_201, %c0_202, %c0_203] : memref<4x9x4x4xbf16, #tpu.memory_space<vmem>>, vector<1x1x4x4xbf16>
    %195 = vector.shape_cast %194 : vector<1x1x4x4xbf16> to vector<4x4xbf16>
    %cst_204 = arith.constant dense<0.000000e+00> : vector<4x288xf32>
    %196 = tpu.matmul %195, %193, %cst_204 {dimension_numbers = #tpu.dot_dimension_numbers<[1], [0], [0], [1], [0, 0, 1, 1], [], []>} : vector<4x4xbf16>, vector<4x288xbf16>, vector<4x288xf32> -> vector<4x288xf32>
    %197 = arith.addf %190, %196 : vector<4x288xf32>
    %c0_205 = arith.constant 0 : index
    %c0_206 = arith.constant 0 : index
    %c36_207 = arith.constant 36 : index
    %198 = vector.load %arg7[%c0_205, %c0_206, %c36_207] : memref<2x4x326xf32, #tpu.memory_space<vmem>>, vector<1x4x288xf32>
    %199 = vector.shape_cast %198 : vector<1x4x288xf32> to vector<4x288xf32>
    %200 = arith.truncf %199 : vector<4x288xf32> to vector<4x288xbf16>
    %c1_208 = arith.constant 1 : index
    %c6_209 = arith.constant 6 : index
    %c0_210 = arith.constant 0 : index
    %c0_211 = arith.constant 0 : index
    %201 = vector.load %arg2[%c1_208, %c6_209, %c0_210, %c0_211] : memref<4x9x4x4xbf16, #tpu.memory_space<vmem>>, vector<1x1x4x4xbf16>
    %202 = vector.shape_cast %201 : vector<1x1x4x4xbf16> to vector<4x4xbf16>
    %cst_212 = arith.constant dense<0.000000e+00> : vector<4x288xf32>
    %203 = tpu.matmul %202, %200, %cst_212 {dimension_numbers = #tpu.dot_dimension_numbers<[1], [0], [0], [1], [0, 0, 1, 1], [], []>} : vector<4x4xbf16>, vector<4x288xbf16>, vector<4x288xf32> -> vector<4x288xf32>
    %204 = arith.addf %197, %203 : vector<4x288xf32>
    %c0_213 = arith.constant 0 : index
    %c0_214 = arith.constant 0 : index
    %c37_215 = arith.constant 37 : index
    %205 = vector.load %arg7[%c0_213, %c0_214, %c37_215] : memref<2x4x326xf32, #tpu.memory_space<vmem>>, vector<1x4x288xf32>
    %206 = vector.shape_cast %205 : vector<1x4x288xf32> to vector<4x288xf32>
    %207 = arith.truncf %206 : vector<4x288xf32> to vector<4x288xbf16>
    %c1_216 = arith.constant 1 : index
    %c7_217 = arith.constant 7 : index
    %c0_218 = arith.constant 0 : index
    %c0_219 = arith.constant 0 : index
    %208 = vector.load %arg2[%c1_216, %c7_217, %c0_218, %c0_219] : memref<4x9x4x4xbf16, #tpu.memory_space<vmem>>, vector<1x1x4x4xbf16>
    %209 = vector.shape_cast %208 : vector<1x1x4x4xbf16> to vector<4x4xbf16>
    %cst_220 = arith.constant dense<0.000000e+00> : vector<4x288xf32>
    %210 = tpu.matmul %209, %207, %cst_220 {dimension_numbers = #tpu.dot_dimension_numbers<[1], [0], [0], [1], [0, 0, 1, 1], [], []>} : vector<4x4xbf16>, vector<4x288xbf16>, vector<4x288xf32> -> vector<4x288xf32>
    %211 = arith.addf %204, %210 : vector<4x288xf32>
    %c0_221 = arith.constant 0 : index
    %c0_222 = arith.constant 0 : index
    %c38_223 = arith.constant 38 : index
    %212 = vector.load %arg7[%c0_221, %c0_222, %c38_223] : memref<2x4x326xf32, #tpu.memory_space<vmem>>, vector<1x4x288xf32>
    %213 = vector.shape_cast %212 : vector<1x4x288xf32> to vector<4x288xf32>
    %214 = arith.truncf %213 : vector<4x288xf32> to vector<4x288xbf16>
    %c1_224 = arith.constant 1 : index
    %c8_225 = arith.constant 8 : index
    %c0_226 = arith.constant 0 : index
    %c0_227 = arith.constant 0 : index
    %215 = vector.load %arg2[%c1_224, %c8_225, %c0_226, %c0_227] : memref<4x9x4x4xbf16, #tpu.memory_space<vmem>>, vector<1x1x4x4xbf16>
    %216 = vector.shape_cast %215 : vector<1x1x4x4xbf16> to vector<4x4xbf16>
    %cst_228 = arith.constant dense<0.000000e+00> : vector<4x288xf32>
    %217 = tpu.matmul %216, %214, %cst_228 {dimension_numbers = #tpu.dot_dimension_numbers<[1], [0], [0], [1], [0, 0, 1, 1], [], []>} : vector<4x4xbf16>, vector<4x288xbf16>, vector<4x288xf32> -> vector<4x288xf32>
    %218 = arith.addf %211, %217 : vector<4x288xf32>
    %cst_229 = arith.constant 0.000000e+00 : f32
    %219 = vector.broadcast %cst_229 : f32 to vector<4x288xf32>
    %c1_230 = arith.constant 1 : index
    %c0_231 = arith.constant 0 : index
    %c0_232 = arith.constant 0 : index
    %220 = vector.load %arg7[%c1_230, %c0_231, %c0_232] : memref<2x4x326xf32, #tpu.memory_space<vmem>>, vector<1x4x288xf32>
    %221 = vector.shape_cast %220 : vector<1x4x288xf32> to vector<4x288xf32>
    %222 = arith.truncf %221 : vector<4x288xf32> to vector<4x288xbf16>
    %c1_233 = arith.constant 1 : index
    %c0_234 = arith.constant 0 : index
    %c0_235 = arith.constant 0 : index
    %c0_236 = arith.constant 0 : index
    %223 = vector.load %arg2[%c1_233, %c0_234, %c0_235, %c0_236] : memref<4x9x4x4xbf16, #tpu.memory_space<vmem>>, vector<1x1x4x4xbf16>
    %224 = vector.shape_cast %223 : vector<1x1x4x4xbf16> to vector<4x4xbf16>
    %cst_237 = arith.constant dense<0.000000e+00> : vector<4x288xf32>
    %225 = tpu.matmul %224, %222, %cst_237 {dimension_numbers = #tpu.dot_dimension_numbers<[1], [0], [0], [1], [0, 0, 1, 1], [], []>} : vector<4x4xbf16>, vector<4x288xbf16>, vector<4x288xf32> -> vector<4x288xf32>
    %226 = arith.addf %219, %225 : vector<4x288xf32>
    %c1_238 = arith.constant 1 : index
    %c0_239 = arith.constant 0 : index
    %c1_240 = arith.constant 1 : index
    %227 = vector.load %arg7[%c1_238, %c0_239, %c1_240] : memref<2x4x326xf32, #tpu.memory_space<vmem>>, vector<1x4x288xf32>
    %228 = vector.shape_cast %227 : vector<1x4x288xf32> to vector<4x288xf32>
    %229 = arith.truncf %228 : vector<4x288xf32> to vector<4x288xbf16>
    %c1_241 = arith.constant 1 : index
    %c1_242 = arith.constant 1 : index
    %c0_243 = arith.constant 0 : index
    %c0_244 = arith.constant 0 : index
    %230 = vector.load %arg2[%c1_241, %c1_242, %c0_243, %c0_244] : memref<4x9x4x4xbf16, #tpu.memory_space<vmem>>, vector<1x1x4x4xbf16>
    %231 = vector.shape_cast %230 : vector<1x1x4x4xbf16> to vector<4x4xbf16>
    %cst_245 = arith.constant dense<0.000000e+00> : vector<4x288xf32>
    %232 = tpu.matmul %231, %229, %cst_245 {dimension_numbers = #tpu.dot_dimension_numbers<[1], [0], [0], [1], [0, 0, 1, 1], [], []>} : vector<4x4xbf16>, vector<4x288xbf16>, vector<4x288xf32> -> vector<4x288xf32>
    %233 = arith.addf %226, %232 : vector<4x288xf32>
    %c1_246 = arith.constant 1 : index
    %c0_247 = arith.constant 0 : index
    %c2_248 = arith.constant 2 : index
    %234 = vector.load %arg7[%c1_246, %c0_247, %c2_248] : memref<2x4x326xf32, #tpu.memory_space<vmem>>, vector<1x4x288xf32>
    %235 = vector.shape_cast %234 : vector<1x4x288xf32> to vector<4x288xf32>
    %236 = arith.truncf %235 : vector<4x288xf32> to vector<4x288xbf16>
    %c1_249 = arith.constant 1 : index
    %c2_250 = arith.constant 2 : index
    %c0_251 = arith.constant 0 : index
    %c0_252 = arith.constant 0 : index
    %237 = vector.load %arg2[%c1_249, %c2_250, %c0_251, %c0_252] : memref<4x9x4x4xbf16, #tpu.memory_space<vmem>>, vector<1x1x4x4xbf16>
    %238 = vector.shape_cast %237 : vector<1x1x4x4xbf16> to vector<4x4xbf16>
    %cst_253 = arith.constant dense<0.000000e+00> : vector<4x288xf32>
    %239 = tpu.matmul %238, %236, %cst_253 {dimension_numbers = #tpu.dot_dimension_numbers<[1], [0], [0], [1], [0, 0, 1, 1], [], []>} : vector<4x4xbf16>, vector<4x288xbf16>, vector<4x288xf32> -> vector<4x288xf32>
    %240 = arith.addf %233, %239 : vector<4x288xf32>
    %c1_254 = arith.constant 1 : index
    %c0_255 = arith.constant 0 : index
    %c18_256 = arith.constant 18 : index
    %241 = vector.load %arg7[%c1_254, %c0_255, %c18_256] : memref<2x4x326xf32, #tpu.memory_space<vmem>>, vector<1x4x288xf32>
    %242 = vector.shape_cast %241 : vector<1x4x288xf32> to vector<4x288xf32>
    %243 = arith.truncf %242 : vector<4x288xf32> to vector<4x288xbf16>
    %c1_257 = arith.constant 1 : index
    %c3_258 = arith.constant 3 : index
    %c0_259 = arith.constant 0 : index
    %c0_260 = arith.constant 0 : index
    %244 = vector.load %arg2[%c1_257, %c3_258, %c0_259, %c0_260] : memref<4x9x4x4xbf16, #tpu.memory_space<vmem>>, vector<1x1x4x4xbf16>
    %245 = vector.shape_cast %244 : vector<1x1x4x4xbf16> to vector<4x4xbf16>
    %cst_261 = arith.constant dense<0.000000e+00> : vector<4x288xf32>
    %246 = tpu.matmul %245, %243, %cst_261 {dimension_numbers = #tpu.dot_dimension_numbers<[1], [0], [0], [1], [0, 0, 1, 1], [], []>} : vector<4x4xbf16>, vector<4x288xbf16>, vector<4x288xf32> -> vector<4x288xf32>
    %247 = arith.addf %240, %246 : vector<4x288xf32>
    %c1_262 = arith.constant 1 : index
    %c0_263 = arith.constant 0 : index
    %c19_264 = arith.constant 19 : index
    %248 = vector.load %arg7[%c1_262, %c0_263, %c19_264] : memref<2x4x326xf32, #tpu.memory_space<vmem>>, vector<1x4x288xf32>
    %249 = vector.shape_cast %248 : vector<1x4x288xf32> to vector<4x288xf32>
    %250 = arith.truncf %249 : vector<4x288xf32> to vector<4x288xbf16>
    %c1_265 = arith.constant 1 : index
    %c4_266 = arith.constant 4 : index
    %c0_267 = arith.constant 0 : index
    %c0_268 = arith.constant 0 : index
    %251 = vector.load %arg2[%c1_265, %c4_266, %c0_267, %c0_268] : memref<4x9x4x4xbf16, #tpu.memory_space<vmem>>, vector<1x1x4x4xbf16>
    %252 = vector.shape_cast %251 : vector<1x1x4x4xbf16> to vector<4x4xbf16>
    %cst_269 = arith.constant dense<0.000000e+00> : vector<4x288xf32>
    %253 = tpu.matmul %252, %250, %cst_269 {dimension_numbers = #tpu.dot_dimension_numbers<[1], [0], [0], [1], [0, 0, 1, 1], [], []>} : vector<4x4xbf16>, vector<4x288xbf16>, vector<4x288xf32> -> vector<4x288xf32>
    %254 = arith.addf %247, %253 : vector<4x288xf32>
    %c1_270 = arith.constant 1 : index
    %c0_271 = arith.constant 0 : index
    %c20_272 = arith.constant 20 : index
    %255 = vector.load %arg7[%c1_270, %c0_271, %c20_272] : memref<2x4x326xf32, #tpu.memory_space<vmem>>, vector<1x4x288xf32>
    %256 = vector.shape_cast %255 : vector<1x4x288xf32> to vector<4x288xf32>
    %257 = arith.truncf %256 : vector<4x288xf32> to vector<4x288xbf16>
    %c1_273 = arith.constant 1 : index
    %c5_274 = arith.constant 5 : index
    %c0_275 = arith.constant 0 : index
    %c0_276 = arith.constant 0 : index
    %258 = vector.load %arg2[%c1_273, %c5_274, %c0_275, %c0_276] : memref<4x9x4x4xbf16, #tpu.memory_space<vmem>>, vector<1x1x4x4xbf16>
    %259 = vector.shape_cast %258 : vector<1x1x4x4xbf16> to vector<4x4xbf16>
    %cst_277 = arith.constant dense<0.000000e+00> : vector<4x288xf32>
    %260 = tpu.matmul %259, %257, %cst_277 {dimension_numbers = #tpu.dot_dimension_numbers<[1], [0], [0], [1], [0, 0, 1, 1], [], []>} : vector<4x4xbf16>, vector<4x288xbf16>, vector<4x288xf32> -> vector<4x288xf32>
    %261 = arith.addf %254, %260 : vector<4x288xf32>
    %c1_278 = arith.constant 1 : index
    %c0_279 = arith.constant 0 : index
    %c36_280 = arith.constant 36 : index
    %262 = vector.load %arg7[%c1_278, %c0_279, %c36_280] : memref<2x4x326xf32, #tpu.memory_space<vmem>>, vector<1x4x288xf32>
    %263 = vector.shape_cast %262 : vector<1x4x288xf32> to vector<4x288xf32>
    %264 = arith.truncf %263 : vector<4x288xf32> to vector<4x288xbf16>
    %c1_281 = arith.constant 1 : index
    %c6_282 = arith.constant 6 : index
    %c0_283 = arith.constant 0 : index
    %c0_284 = arith.constant 0 : index
    %265 = vector.load %arg2[%c1_281, %c6_282, %c0_283, %c0_284] : memref<4x9x4x4xbf16, #tpu.memory_space<vmem>>, vector<1x1x4x4xbf16>
    %266 = vector.shape_cast %265 : vector<1x1x4x4xbf16> to vector<4x4xbf16>
    %cst_285 = arith.constant dense<0.000000e+00> : vector<4x288xf32>
    %267 = tpu.matmul %266, %264, %cst_285 {dimension_numbers = #tpu.dot_dimension_numbers<[1], [0], [0], [1], [0, 0, 1, 1], [], []>} : vector<4x4xbf16>, vector<4x288xbf16>, vector<4x288xf32> -> vector<4x288xf32>
    %268 = arith.addf %261, %267 : vector<4x288xf32>
    %c1_286 = arith.constant 1 : index
    %c0_287 = arith.constant 0 : index
    %c37_288 = arith.constant 37 : index
    %269 = vector.load %arg7[%c1_286, %c0_287, %c37_288] : memref<2x4x326xf32, #tpu.memory_space<vmem>>, vector<1x4x288xf32>
    %270 = vector.shape_cast %269 : vector<1x4x288xf32> to vector<4x288xf32>
    %271 = arith.truncf %270 : vector<4x288xf32> to vector<4x288xbf16>
    %c1_289 = arith.constant 1 : index
    %c7_290 = arith.constant 7 : index
    %c0_291 = arith.constant 0 : index
    %c0_292 = arith.constant 0 : index
    %272 = vector.load %arg2[%c1_289, %c7_290, %c0_291, %c0_292] : memref<4x9x4x4xbf16, #tpu.memory_space<vmem>>, vector<1x1x4x4xbf16>
    %273 = vector.shape_cast %272 : vector<1x1x4x4xbf16> to vector<4x4xbf16>
    %cst_293 = arith.constant dense<0.000000e+00> : vector<4x288xf32>
    %274 = tpu.matmul %273, %271, %cst_293 {dimension_numbers = #tpu.dot_dimension_numbers<[1], [0], [0], [1], [0, 0, 1, 1], [], []>} : vector<4x4xbf16>, vector<4x288xbf16>, vector<4x288xf32> -> vector<4x288xf32>
    %275 = arith.addf %268, %274 : vector<4x288xf32>
    %c1_294 = arith.constant 1 : index
    %c0_295 = arith.constant 0 : index
    %c38_296 = arith.constant 38 : index
    %276 = vector.load %arg7[%c1_294, %c0_295, %c38_296] : memref<2x4x326xf32, #tpu.memory_space<vmem>>, vector<1x4x288xf32>
    %277 = vector.shape_cast %276 : vector<1x4x288xf32> to vector<4x288xf32>
    %278 = arith.truncf %277 : vector<4x288xf32> to vector<4x288xbf16>
    %c1_297 = arith.constant 1 : index
    %c8_298 = arith.constant 8 : index
    %c0_299 = arith.constant 0 : index
    %c0_300 = arith.constant 0 : index
    %279 = vector.load %arg2[%c1_297, %c8_298, %c0_299, %c0_300] : memref<4x9x4x4xbf16, #tpu.memory_space<vmem>>, vector<1x1x4x4xbf16>
    %280 = vector.shape_cast %279 : vector<1x1x4x4xbf16> to vector<4x4xbf16>
    %cst_301 = arith.constant dense<0.000000e+00> : vector<4x288xf32>
    %281 = tpu.matmul %280, %278, %cst_301 {dimension_numbers = #tpu.dot_dimension_numbers<[1], [0], [0], [1], [0, 0, 1, 1], [], []>} : vector<4x4xbf16>, vector<4x288xbf16>, vector<4x288xf32> -> vector<4x288xf32>
    %282 = arith.addf %275, %281 : vector<4x288xf32>
    %283 = vector.shape_cast %218 : vector<4x288xf32> to vector<1x4x288xf32>
    %284 = vector.shape_cast %282 : vector<4x288xf32> to vector<1x4x288xf32>
    %285 = tpu.concatenate %283, %284 in 0 : vector<1x4x288xf32>, vector<1x4x288xf32> -> vector<2x4x288xf32>
    %c1_302 = arith.constant 1 : index
    %c0_303 = arith.constant 0 : index
    %c0_304 = arith.constant 0 : index
    %286 = vector.load %arg3[%c1_302, %c0_303, %c0_304] : memref<4x4x1xf32, #tpu.memory_space<vmem>>, vector<1x4x1xf32>
    %287 = vector.shape_cast %286 : vector<1x4x1xf32> to vector<4x1xf32>
    %288 = vector.shape_cast %287 : vector<4x1xf32> to vector<1x4x1xf32>
    %289 = vector.broadcast %288 : vector<1x4x1xf32> to vector<2x4x288xf32>
    %290 = arith.mulf %285, %289 : vector<2x4x288xf32>
    %c1_305 = arith.constant 1 : index
    %c0_306 = arith.constant 0 : index
    %c0_307 = arith.constant 0 : index
    %291 = vector.load %arg4[%c1_305, %c0_306, %c0_307] : memref<4x4x1xf32, #tpu.memory_space<vmem>>, vector<1x4x1xf32>
    %292 = vector.shape_cast %291 : vector<1x4x1xf32> to vector<4x1xf32>
    %293 = vector.shape_cast %292 : vector<4x1xf32> to vector<1x4x1xf32>
    %294 = vector.broadcast %293 : vector<1x4x1xf32> to vector<2x4x288xf32>
    %295 = arith.addf %290, %294 : vector<2x4x288xf32>
    %296 = arith.addf %295, %5 : vector<2x4x288xf32>
    %cst_308 = arith.constant 0.000000e+00 : f32
    %297 = vector.broadcast %cst_308 : f32 to vector<2x4x288xf32>
    %298 = arith.maximumf %296, %297 : vector<2x4x288xf32>
    %299 = vector.broadcast %0 : vector<1x1x288xf32> to vector<2x4x288xf32>
    %300 = arith.mulf %298, %299 : vector<2x4x288xf32>
    %c0_309 = arith.constant 0 : index
    %c0_310 = arith.constant 0 : index
    %c19_311 = arith.constant 19 : index
    %301 = vector.load %arg7[%c0_309, %c0_310, %c19_311] : memref<2x4x326xf32, #tpu.memory_space<vmem>>, vector<2x4x288xf32>
    tpu.vector_store %arg7[%c0_309, %c0_310, %c19_311], %300 {strides = array<i32>} : memref<2x4x326xf32, #tpu.memory_space<vmem>>, vector<2x4x288xf32>,
    %cst_312 = arith.constant 0.000000e+00 : f32
    %302 = vector.broadcast %cst_312 : f32 to vector<4x288xf32>
    %c0_313 = arith.constant 0 : index
    %c0_314 = arith.constant 0 : index
    %c0_315 = arith.constant 0 : index
    %303 = vector.load %arg7[%c0_313, %c0_314, %c0_315] : memref<2x4x326xf32, #tpu.memory_space<vmem>>, vector<1x4x288xf32>
    %304 = vector.shape_cast %303 : vector<1x4x288xf32> to vector<4x288xf32>
    %305 = arith.truncf %304 : vector<4x288xf32> to vector<4x288xbf16>
    %c2_316 = arith.constant 2 : index
    %c0_317 = arith.constant 0 : index
    %c0_318 = arith.constant 0 : index
    %c0_319 = arith.constant 0 : index
    %306 = vector.load %arg2[%c2_316, %c0_317, %c0_318, %c0_319] : memref<4x9x4x4xbf16, #tpu.memory_space<vmem>>, vector<1x1x4x4xbf16>
    %307 = vector.shape_cast %306 : vector<1x1x4x4xbf16> to vector<4x4xbf16>
    %cst_320 = arith.constant dense<0.000000e+00> : vector<4x288xf32>
    %308 = tpu.matmul %307, %305, %cst_320 {dimension_numbers = #tpu.dot_dimension_numbers<[1], [0], [0], [1], [0, 0, 1, 1], [], []>} : vector<4x4xbf16>, vector<4x288xbf16>, vector<4x288xf32> -> vector<4x288xf32>
    %309 = arith.addf %302, %308 : vector<4x288xf32>
    %c0_321 = arith.constant 0 : index
    %c0_322 = arith.constant 0 : index
    %c1_323 = arith.constant 1 : index
    %310 = vector.load %arg7[%c0_321, %c0_322, %c1_323] : memref<2x4x326xf32, #tpu.memory_space<vmem>>, vector<1x4x288xf32>
    %311 = vector.shape_cast %310 : vector<1x4x288xf32> to vector<4x288xf32>
    %312 = arith.truncf %311 : vector<4x288xf32> to vector<4x288xbf16>
    %c2_324 = arith.constant 2 : index
    %c1_325 = arith.constant 1 : index
    %c0_326 = arith.constant 0 : index
    %c0_327 = arith.constant 0 : index
    %313 = vector.load %arg2[%c2_324, %c1_325, %c0_326, %c0_327] : memref<4x9x4x4xbf16, #tpu.memory_space<vmem>>, vector<1x1x4x4xbf16>
    %314 = vector.shape_cast %313 : vector<1x1x4x4xbf16> to vector<4x4xbf16>
    %cst_328 = arith.constant dense<0.000000e+00> : vector<4x288xf32>
    %315 = tpu.matmul %314, %312, %cst_328 {dimension_numbers = #tpu.dot_dimension_numbers<[1], [0], [0], [1], [0, 0, 1, 1], [], []>} : vector<4x4xbf16>, vector<4x288xbf16>, vector<4x288xf32> -> vector<4x288xf32>
    %316 = arith.addf %309, %315 : vector<4x288xf32>
    %c0_329 = arith.constant 0 : index
    %c0_330 = arith.constant 0 : index
    %c2_331 = arith.constant 2 : index
    %317 = vector.load %arg7[%c0_329, %c0_330, %c2_331] : memref<2x4x326xf32, #tpu.memory_space<vmem>>, vector<1x4x288xf32>
    %318 = vector.shape_cast %317 : vector<1x4x288xf32> to vector<4x288xf32>
    %319 = arith.truncf %318 : vector<4x288xf32> to vector<4x288xbf16>
    %c2_332 = arith.constant 2 : index
    %c2_333 = arith.constant 2 : index
    %c0_334 = arith.constant 0 : index
    %c0_335 = arith.constant 0 : index
    %320 = vector.load %arg2[%c2_332, %c2_333, %c0_334, %c0_335] : memref<4x9x4x4xbf16, #tpu.memory_space<vmem>>, vector<1x1x4x4xbf16>
    %321 = vector.shape_cast %320 : vector<1x1x4x4xbf16> to vector<4x4xbf16>
    %cst_336 = arith.constant dense<0.000000e+00> : vector<4x288xf32>
    %322 = tpu.matmul %321, %319, %cst_336 {dimension_numbers = #tpu.dot_dimension_numbers<[1], [0], [0], [1], [0, 0, 1, 1], [], []>} : vector<4x4xbf16>, vector<4x288xbf16>, vector<4x288xf32> -> vector<4x288xf32>
    %323 = arith.addf %316, %322 : vector<4x288xf32>
    %c0_337 = arith.constant 0 : index
    %c0_338 = arith.constant 0 : index
    %c18_339 = arith.constant 18 : index
    %324 = vector.load %arg7[%c0_337, %c0_338, %c18_339] : memref<2x4x326xf32, #tpu.memory_space<vmem>>, vector<1x4x288xf32>
    %325 = vector.shape_cast %324 : vector<1x4x288xf32> to vector<4x288xf32>
    %326 = arith.truncf %325 : vector<4x288xf32> to vector<4x288xbf16>
    %c2_340 = arith.constant 2 : index
    %c3_341 = arith.constant 3 : index
    %c0_342 = arith.constant 0 : index
    %c0_343 = arith.constant 0 : index
    %327 = vector.load %arg2[%c2_340, %c3_341, %c0_342, %c0_343] : memref<4x9x4x4xbf16, #tpu.memory_space<vmem>>, vector<1x1x4x4xbf16>
    %328 = vector.shape_cast %327 : vector<1x1x4x4xbf16> to vector<4x4xbf16>
    %cst_344 = arith.constant dense<0.000000e+00> : vector<4x288xf32>
    %329 = tpu.matmul %328, %326, %cst_344 {dimension_numbers = #tpu.dot_dimension_numbers<[1], [0], [0], [1], [0, 0, 1, 1], [], []>} : vector<4x4xbf16>, vector<4x288xbf16>, vector<4x288xf32> -> vector<4x288xf32>
    %330 = arith.addf %323, %329 : vector<4x288xf32>
    %c0_345 = arith.constant 0 : index
    %c0_346 = arith.constant 0 : index
    %c19_347 = arith.constant 19 : index
    %331 = vector.load %arg7[%c0_345, %c0_346, %c19_347] : memref<2x4x326xf32, #tpu.memory_space<vmem>>, vector<1x4x288xf32>
    %332 = vector.shape_cast %331 : vector<1x4x288xf32> to vector<4x288xf32>
    %333 = arith.truncf %332 : vector<4x288xf32> to vector<4x288xbf16>
    %c2_348 = arith.constant 2 : index
    %c4_349 = arith.constant 4 : index
    %c0_350 = arith.constant 0 : index
    %c0_351 = arith.constant 0 : index
    %334 = vector.load %arg2[%c2_348, %c4_349, %c0_350, %c0_351] : memref<4x9x4x4xbf16, #tpu.memory_space<vmem>>, vector<1x1x4x4xbf16>
    %335 = vector.shape_cast %334 : vector<1x1x4x4xbf16> to vector<4x4xbf16>
    %cst_352 = arith.constant dense<0.000000e+00> : vector<4x288xf32>
    %336 = tpu.matmul %335, %333, %cst_352 {dimension_numbers = #tpu.dot_dimension_numbers<[1], [0], [0], [1], [0, 0, 1, 1], [], []>} : vector<4x4xbf16>, vector<4x288xbf16>, vector<4x288xf32> -> vector<4x288xf32>
    %337 = arith.addf %330, %336 : vector<4x288xf32>
    %c0_353 = arith.constant 0 : index
    %c0_354 = arith.constant 0 : index
    %c20_355 = arith.constant 20 : index
    %338 = vector.load %arg7[%c0_353, %c0_354, %c20_355] : memref<2x4x326xf32, #tpu.memory_space<vmem>>, vector<1x4x288xf32>
    %339 = vector.shape_cast %338 : vector<1x4x288xf32> to vector<4x288xf32>
    %340 = arith.truncf %339 : vector<4x288xf32> to vector<4x288xbf16>
    %c2_356 = arith.constant 2 : index
    %c5_357 = arith.constant 5 : index
    %c0_358 = arith.constant 0 : index
    %c0_359 = arith.constant 0 : index
    %341 = vector.load %arg2[%c2_356, %c5_357, %c0_358, %c0_359] : memref<4x9x4x4xbf16, #tpu.memory_space<vmem>>, vector<1x1x4x4xbf16>
    %342 = vector.shape_cast %341 : vector<1x1x4x4xbf16> to vector<4x4xbf16>
    %cst_360 = arith.constant dense<0.000000e+00> : vector<4x288xf32>
    %343 = tpu.matmul %342, %340, %cst_360 {dimension_numbers = #tpu.dot_dimension_numbers<[1], [0], [0], [1], [0, 0, 1, 1], [], []>} : vector<4x4xbf16>, vector<4x288xbf16>, vector<4x288xf32> -> vector<4x288xf32>
    %344 = arith.addf %337, %343 : vector<4x288xf32>
    %c0_361 = arith.constant 0 : index
    %c0_362 = arith.constant 0 : index
    %c36_363 = arith.constant 36 : index
    %345 = vector.load %arg7[%c0_361, %c0_362, %c36_363] : memref<2x4x326xf32, #tpu.memory_space<vmem>>, vector<1x4x288xf32>
    %346 = vector.shape_cast %345 : vector<1x4x288xf32> to vector<4x288xf32>
    %347 = arith.truncf %346 : vector<4x288xf32> to vector<4x288xbf16>
    %c2_364 = arith.constant 2 : index
    %c6_365 = arith.constant 6 : index
    %c0_366 = arith.constant 0 : index
    %c0_367 = arith.constant 0 : index
    %348 = vector.load %arg2[%c2_364, %c6_365, %c0_366, %c0_367] : memref<4x9x4x4xbf16, #tpu.memory_space<vmem>>, vector<1x1x4x4xbf16>
    %349 = vector.shape_cast %348 : vector<1x1x4x4xbf16> to vector<4x4xbf16>
    %cst_368 = arith.constant dense<0.000000e+00> : vector<4x288xf32>
    %350 = tpu.matmul %349, %347, %cst_368 {dimension_numbers = #tpu.dot_dimension_numbers<[1], [0], [0], [1], [0, 0, 1, 1], [], []>} : vector<4x4xbf16>, vector<4x288xbf16>, vector<4x288xf32> -> vector<4x288xf32>
    %351 = arith.addf %344, %350 : vector<4x288xf32>
    %c0_369 = arith.constant 0 : index
    %c0_370 = arith.constant 0 : index
    %c37_371 = arith.constant 37 : index
    %352 = vector.load %arg7[%c0_369, %c0_370, %c37_371] : memref<2x4x326xf32, #tpu.memory_space<vmem>>, vector<1x4x288xf32>
    %353 = vector.shape_cast %352 : vector<1x4x288xf32> to vector<4x288xf32>
    %354 = arith.truncf %353 : vector<4x288xf32> to vector<4x288xbf16>
    %c2_372 = arith.constant 2 : index
    %c7_373 = arith.constant 7 : index
    %c0_374 = arith.constant 0 : index
    %c0_375 = arith.constant 0 : index
    %355 = vector.load %arg2[%c2_372, %c7_373, %c0_374, %c0_375] : memref<4x9x4x4xbf16, #tpu.memory_space<vmem>>, vector<1x1x4x4xbf16>
    %356 = vector.shape_cast %355 : vector<1x1x4x4xbf16> to vector<4x4xbf16>
    %cst_376 = arith.constant dense<0.000000e+00> : vector<4x288xf32>
    %357 = tpu.matmul %356, %354, %cst_376 {dimension_numbers = #tpu.dot_dimension_numbers<[1], [0], [0], [1], [0, 0, 1, 1], [], []>} : vector<4x4xbf16>, vector<4x288xbf16>, vector<4x288xf32> -> vector<4x288xf32>
    %358 = arith.addf %351, %357 : vector<4x288xf32>
    %c0_377 = arith.constant 0 : index
    %c0_378 = arith.constant 0 : index
    %c38_379 = arith.constant 38 : index
    %359 = vector.load %arg7[%c0_377, %c0_378, %c38_379] : memref<2x4x326xf32, #tpu.memory_space<vmem>>, vector<1x4x288xf32>
    %360 = vector.shape_cast %359 : vector<1x4x288xf32> to vector<4x288xf32>
    %361 = arith.truncf %360 : vector<4x288xf32> to vector<4x288xbf16>
    %c2_380 = arith.constant 2 : index
    %c8_381 = arith.constant 8 : index
    %c0_382 = arith.constant 0 : index
    %c0_383 = arith.constant 0 : index
    %362 = vector.load %arg2[%c2_380, %c8_381, %c0_382, %c0_383] : memref<4x9x4x4xbf16, #tpu.memory_space<vmem>>, vector<1x1x4x4xbf16>
    %363 = vector.shape_cast %362 : vector<1x1x4x4xbf16> to vector<4x4xbf16>
    %cst_384 = arith.constant dense<0.000000e+00> : vector<4x288xf32>
    %364 = tpu.matmul %363, %361, %cst_384 {dimension_numbers = #tpu.dot_dimension_numbers<[1], [0], [0], [1], [0, 0, 1, 1], [], []>} : vector<4x4xbf16>, vector<4x288xbf16>, vector<4x288xf32> -> vector<4x288xf32>
    %365 = arith.addf %358, %364 : vector<4x288xf32>
    %cst_385 = arith.constant 0.000000e+00 : f32
    %366 = vector.broadcast %cst_385 : f32 to vector<4x288xf32>
    %c1_386 = arith.constant 1 : index
    %c0_387 = arith.constant 0 : index
    %c0_388 = arith.constant 0 : index
    %367 = vector.load %arg7[%c1_386, %c0_387, %c0_388] : memref<2x4x326xf32, #tpu.memory_space<vmem>>, vector<1x4x288xf32>
    %368 = vector.shape_cast %367 : vector<1x4x288xf32> to vector<4x288xf32>
    %369 = arith.truncf %368 : vector<4x288xf32> to vector<4x288xbf16>
    %c2_389 = arith.constant 2 : index
    %c0_390 = arith.constant 0 : index
    %c0_391 = arith.constant 0 : index
    %c0_392 = arith.constant 0 : index
    %370 = vector.load %arg2[%c2_389, %c0_390, %c0_391, %c0_392] : memref<4x9x4x4xbf16, #tpu.memory_space<vmem>>, vector<1x1x4x4xbf16>
    %371 = vector.shape_cast %370 : vector<1x1x4x4xbf16> to vector<4x4xbf16>
    %cst_393 = arith.constant dense<0.000000e+00> : vector<4x288xf32>
    %372 = tpu.matmul %371, %369, %cst_393 {dimension_numbers = #tpu.dot_dimension_numbers<[1], [0], [0], [1], [0, 0, 1, 1], [], []>} : vector<4x4xbf16>, vector<4x288xbf16>, vector<4x288xf32> -> vector<4x288xf32>
    %373 = arith.addf %366, %372 : vector<4x288xf32>
    %c1_394 = arith.constant 1 : index
    %c0_395 = arith.constant 0 : index
    %c1_396 = arith.constant 1 : index
    %374 = vector.load %arg7[%c1_394, %c0_395, %c1_396] : memref<2x4x326xf32, #tpu.memory_space<vmem>>, vector<1x4x288xf32>
    %375 = vector.shape_cast %374 : vector<1x4x288xf32> to vector<4x288xf32>
    %376 = arith.truncf %375 : vector<4x288xf32> to vector<4x288xbf16>
    %c2_397 = arith.constant 2 : index
    %c1_398 = arith.constant 1 : index
    %c0_399 = arith.constant 0 : index
    %c0_400 = arith.constant 0 : index
    %377 = vector.load %arg2[%c2_397, %c1_398, %c0_399, %c0_400] : memref<4x9x4x4xbf16, #tpu.memory_space<vmem>>, vector<1x1x4x4xbf16>
    %378 = vector.shape_cast %377 : vector<1x1x4x4xbf16> to vector<4x4xbf16>
    %cst_401 = arith.constant dense<0.000000e+00> : vector<4x288xf32>
    %379 = tpu.matmul %378, %376, %cst_401 {dimension_numbers = #tpu.dot_dimension_numbers<[1], [0], [0], [1], [0, 0, 1, 1], [], []>} : vector<4x4xbf16>, vector<4x288xbf16>, vector<4x288xf32> -> vector<4x288xf32>
    %380 = arith.addf %373, %379 : vector<4x288xf32>
    %c1_402 = arith.constant 1 : index
    %c0_403 = arith.constant 0 : index
    %c2_404 = arith.constant 2 : index
    %381 = vector.load %arg7[%c1_402, %c0_403, %c2_404] : memref<2x4x326xf32, #tpu.memory_space<vmem>>, vector<1x4x288xf32>
    %382 = vector.shape_cast %381 : vector<1x4x288xf32> to vector<4x288xf32>
    %383 = arith.truncf %382 : vector<4x288xf32> to vector<4x288xbf16>
    %c2_405 = arith.constant 2 : index
    %c2_406 = arith.constant 2 : index
    %c0_407 = arith.constant 0 : index
    %c0_408 = arith.constant 0 : index
    %384 = vector.load %arg2[%c2_405, %c2_406, %c0_407, %c0_408] : memref<4x9x4x4xbf16, #tpu.memory_space<vmem>>, vector<1x1x4x4xbf16>
    %385 = vector.shape_cast %384 : vector<1x1x4x4xbf16> to vector<4x4xbf16>
    %cst_409 = arith.constant dense<0.000000e+00> : vector<4x288xf32>
    %386 = tpu.matmul %385, %383, %cst_409 {dimension_numbers = #tpu.dot_dimension_numbers<[1], [0], [0], [1], [0, 0, 1, 1], [], []>} : vector<4x4xbf16>, vector<4x288xbf16>, vector<4x288xf32> -> vector<4x288xf32>
    %387 = arith.addf %380, %386 : vector<4x288xf32>
    %c1_410 = arith.constant 1 : index
    %c0_411 = arith.constant 0 : index
    %c18_412 = arith.constant 18 : index
    %388 = vector.load %arg7[%c1_410, %c0_411, %c18_412] : memref<2x4x326xf32, #tpu.memory_space<vmem>>, vector<1x4x288xf32>
    %389 = vector.shape_cast %388 : vector<1x4x288xf32> to vector<4x288xf32>
    %390 = arith.truncf %389 : vector<4x288xf32> to vector<4x288xbf16>
    %c2_413 = arith.constant 2 : index
    %c3_414 = arith.constant 3 : index
    %c0_415 = arith.constant 0 : index
    %c0_416 = arith.constant 0 : index
    %391 = vector.load %arg2[%c2_413, %c3_414, %c0_415, %c0_416] : memref<4x9x4x4xbf16, #tpu.memory_space<vmem>>, vector<1x1x4x4xbf16>
    %392 = vector.shape_cast %391 : vector<1x1x4x4xbf16> to vector<4x4xbf16>
    %cst_417 = arith.constant dense<0.000000e+00> : vector<4x288xf32>
    %393 = tpu.matmul %392, %390, %cst_417 {dimension_numbers = #tpu.dot_dimension_numbers<[1], [0], [0], [1], [0, 0, 1, 1], [], []>} : vector<4x4xbf16>, vector<4x288xbf16>, vector<4x288xf32> -> vector<4x288xf32>
    %394 = arith.addf %387, %393 : vector<4x288xf32>
    %c1_418 = arith.constant 1 : index
    %c0_419 = arith.constant 0 : index
    %c19_420 = arith.constant 19 : index
    %395 = vector.load %arg7[%c1_418, %c0_419, %c19_420] : memref<2x4x326xf32, #tpu.memory_space<vmem>>, vector<1x4x288xf32>
    %396 = vector.shape_cast %395 : vector<1x4x288xf32> to vector<4x288xf32>
    %397 = arith.truncf %396 : vector<4x288xf32> to vector<4x288xbf16>
    %c2_421 = arith.constant 2 : index
    %c4_422 = arith.constant 4 : index
    %c0_423 = arith.constant 0 : index
    %c0_424 = arith.constant 0 : index
    %398 = vector.load %arg2[%c2_421, %c4_422, %c0_423, %c0_424] : memref<4x9x4x4xbf16, #tpu.memory_space<vmem>>, vector<1x1x4x4xbf16>
    %399 = vector.shape_cast %398 : vector<1x1x4x4xbf16> to vector<4x4xbf16>
    %cst_425 = arith.constant dense<0.000000e+00> : vector<4x288xf32>
    %400 = tpu.matmul %399, %397, %cst_425 {dimension_numbers = #tpu.dot_dimension_numbers<[1], [0], [0], [1], [0, 0, 1, 1], [], []>} : vector<4x4xbf16>, vector<4x288xbf16>, vector<4x288xf32> -> vector<4x288xf32>
    %401 = arith.addf %394, %400 : vector<4x288xf32>
    %c1_426 = arith.constant 1 : index
    %c0_427 = arith.constant 0 : index
    %c20_428 = arith.constant 20 : index
    %402 = vector.load %arg7[%c1_426, %c0_427, %c20_428] : memref<2x4x326xf32, #tpu.memory_space<vmem>>, vector<1x4x288xf32>
    %403 = vector.shape_cast %402 : vector<1x4x288xf32> to vector<4x288xf32>
    %404 = arith.truncf %403 : vector<4x288xf32> to vector<4x288xbf16>
    %c2_429 = arith.constant 2 : index
    %c5_430 = arith.constant 5 : index
    %c0_431 = arith.constant 0 : index
    %c0_432 = arith.constant 0 : index
    %405 = vector.load %arg2[%c2_429, %c5_430, %c0_431, %c0_432] : memref<4x9x4x4xbf16, #tpu.memory_space<vmem>>, vector<1x1x4x4xbf16>
    %406 = vector.shape_cast %405 : vector<1x1x4x4xbf16> to vector<4x4xbf16>
    %cst_433 = arith.constant dense<0.000000e+00> : vector<4x288xf32>
    %407 = tpu.matmul %406, %404, %cst_433 {dimension_numbers = #tpu.dot_dimension_numbers<[1], [0], [0], [1], [0, 0, 1, 1], [], []>} : vector<4x4xbf16>, vector<4x288xbf16>, vector<4x288xf32> -> vector<4x288xf32>
    %408 = arith.addf %401, %407 : vector<4x288xf32>
    %c1_434 = arith.constant 1 : index
    %c0_435 = arith.constant 0 : index
    %c36_436 = arith.constant 36 : index
    %409 = vector.load %arg7[%c1_434, %c0_435, %c36_436] : memref<2x4x326xf32, #tpu.memory_space<vmem>>, vector<1x4x288xf32>
    %410 = vector.shape_cast %409 : vector<1x4x288xf32> to vector<4x288xf32>
    %411 = arith.truncf %410 : vector<4x288xf32> to vector<4x288xbf16>
    %c2_437 = arith.constant 2 : index
    %c6_438 = arith.constant 6 : index
    %c0_439 = arith.constant 0 : index
    %c0_440 = arith.constant 0 : index
    %412 = vector.load %arg2[%c2_437, %c6_438, %c0_439, %c0_440] : memref<4x9x4x4xbf16, #tpu.memory_space<vmem>>, vector<1x1x4x4xbf16>
    %413 = vector.shape_cast %412 : vector<1x1x4x4xbf16> to vector<4x4xbf16>
    %cst_441 = arith.constant dense<0.000000e+00> : vector<4x288xf32>
    %414 = tpu.matmul %413, %411, %cst_441 {dimension_numbers = #tpu.dot_dimension_numbers<[1], [0], [0], [1], [0, 0, 1, 1], [], []>} : vector<4x4xbf16>, vector<4x288xbf16>, vector<4x288xf32> -> vector<4x288xf32>
    %415 = arith.addf %408, %414 : vector<4x288xf32>
    %c1_442 = arith.constant 1 : index
    %c0_443 = arith.constant 0 : index
    %c37_444 = arith.constant 37 : index
    %416 = vector.load %arg7[%c1_442, %c0_443, %c37_444] : memref<2x4x326xf32, #tpu.memory_space<vmem>>, vector<1x4x288xf32>
    %417 = vector.shape_cast %416 : vector<1x4x288xf32> to vector<4x288xf32>
    %418 = arith.truncf %417 : vector<4x288xf32> to vector<4x288xbf16>
    %c2_445 = arith.constant 2 : index
    %c7_446 = arith.constant 7 : index
    %c0_447 = arith.constant 0 : index
    %c0_448 = arith.constant 0 : index
    %419 = vector.load %arg2[%c2_445, %c7_446, %c0_447, %c0_448] : memref<4x9x4x4xbf16, #tpu.memory_space<vmem>>, vector<1x1x4x4xbf16>
    %420 = vector.shape_cast %419 : vector<1x1x4x4xbf16> to vector<4x4xbf16>
    %cst_449 = arith.constant dense<0.000000e+00> : vector<4x288xf32>
    %421 = tpu.matmul %420, %418, %cst_449 {dimension_numbers = #tpu.dot_dimension_numbers<[1], [0], [0], [1], [0, 0, 1, 1], [], []>} : vector<4x4xbf16>, vector<4x288xbf16>, vector<4x288xf32> -> vector<4x288xf32>
    %422 = arith.addf %415, %421 : vector<4x288xf32>
    %c1_450 = arith.constant 1 : index
    %c0_451 = arith.constant 0 : index
    %c38_452 = arith.constant 38 : index
    %423 = vector.load %arg7[%c1_450, %c0_451, %c38_452] : memref<2x4x326xf32, #tpu.memory_space<vmem>>, vector<1x4x288xf32>
    %424 = vector.shape_cast %423 : vector<1x4x288xf32> to vector<4x288xf32>
    %425 = arith.truncf %424 : vector<4x288xf32> to vector<4x288xbf16>
    %c2_453 = arith.constant 2 : index
    %c8_454 = arith.constant 8 : index
    %c0_455 = arith.constant 0 : index
    %c0_456 = arith.constant 0 : index
    %426 = vector.load %arg2[%c2_453, %c8_454, %c0_455, %c0_456] : memref<4x9x4x4xbf16, #tpu.memory_space<vmem>>, vector<1x1x4x4xbf16>
    %427 = vector.shape_cast %426 : vector<1x1x4x4xbf16> to vector<4x4xbf16>
    %cst_457 = arith.constant dense<0.000000e+00> : vector<4x288xf32>
    %428 = tpu.matmul %427, %425, %cst_457 {dimension_numbers = #tpu.dot_dimension_numbers<[1], [0], [0], [1], [0, 0, 1, 1], [], []>} : vector<4x4xbf16>, vector<4x288xbf16>, vector<4x288xf32> -> vector<4x288xf32>
    %429 = arith.addf %422, %428 : vector<4x288xf32>
    %430 = vector.shape_cast %365 : vector<4x288xf32> to vector<1x4x288xf32>
    %431 = vector.shape_cast %429 : vector<4x288xf32> to vector<1x4x288xf32>
    %432 = tpu.concatenate %430, %431 in 0 : vector<1x4x288xf32>, vector<1x4x288xf32> -> vector<2x4x288xf32>
    %c2_458 = arith.constant 2 : index
    %c0_459 = arith.constant 0 : index
    %c0_460 = arith.constant 0 : index
    %433 = vector.load %arg3[%c2_458, %c0_459, %c0_460] : memref<4x4x1xf32, #tpu.memory_space<vmem>>, vector<1x4x1xf32>
    %434 = vector.shape_cast %433 : vector<1x4x1xf32> to vector<4x1xf32>
    %435 = vector.shape_cast %434 : vector<4x1xf32> to vector<1x4x1xf32>
    %436 = vector.broadcast %435 : vector<1x4x1xf32> to vector<2x4x288xf32>
    %437 = arith.mulf %432, %436 : vector<2x4x288xf32>
    %c2_461 = arith.constant 2 : index
    %c0_462 = arith.constant 0 : index
    %c0_463 = arith.constant 0 : index
    %438 = vector.load %arg4[%c2_461, %c0_462, %c0_463] : memref<4x4x1xf32, #tpu.memory_space<vmem>>, vector<1x4x1xf32>
    %439 = vector.shape_cast %438 : vector<1x4x1xf32> to vector<4x1xf32>
    %440 = vector.shape_cast %439 : vector<4x1xf32> to vector<1x4x1xf32>
    %441 = vector.broadcast %440 : vector<1x4x1xf32> to vector<2x4x288xf32>
    %442 = arith.addf %437, %441 : vector<2x4x288xf32>
    %cst_464 = arith.constant 0.000000e+00 : f32
    %443 = vector.broadcast %cst_464 : f32 to vector<2x4x288xf32>
    %444 = arith.maximumf %442, %443 : vector<2x4x288xf32>
    %445 = vector.broadcast %0 : vector<1x1x288xf32> to vector<2x4x288xf32>
    %446 = arith.mulf %444, %445 : vector<2x4x288xf32>
    %c0_465 = arith.constant 0 : index
    %c0_466 = arith.constant 0 : index
    %c19_467 = arith.constant 19 : index
    %447 = vector.load %arg7[%c0_465, %c0_466, %c19_467] : memref<2x4x326xf32, #tpu.memory_space<vmem>>, vector<2x4x288xf32>
    tpu.vector_store %arg7[%c0_465, %c0_466, %c19_467], %446 {strides = array<i32>} : memref<2x4x326xf32, #tpu.memory_space<vmem>>, vector<2x4x288xf32>,
    %cst_468 = arith.constant 0.000000e+00 : f32
    %448 = vector.broadcast %cst_468 : f32 to vector<4x288xf32>
    %c0_469 = arith.constant 0 : index
    %c0_470 = arith.constant 0 : index
    %c0_471 = arith.constant 0 : index
    %449 = vector.load %arg7[%c0_469, %c0_470, %c0_471] : memref<2x4x326xf32, #tpu.memory_space<vmem>>, vector<1x4x288xf32>
    %450 = vector.shape_cast %449 : vector<1x4x288xf32> to vector<4x288xf32>
    %451 = arith.truncf %450 : vector<4x288xf32> to vector<4x288xbf16>
    %c3_472 = arith.constant 3 : index
    %c0_473 = arith.constant 0 : index
    %c0_474 = arith.constant 0 : index
    %c0_475 = arith.constant 0 : index
    %452 = vector.load %arg2[%c3_472, %c0_473, %c0_474, %c0_475] : memref<4x9x4x4xbf16, #tpu.memory_space<vmem>>, vector<1x1x4x4xbf16>
    %453 = vector.shape_cast %452 : vector<1x1x4x4xbf16> to vector<4x4xbf16>
    %cst_476 = arith.constant dense<0.000000e+00> : vector<4x288xf32>
    %454 = tpu.matmul %453, %451, %cst_476 {dimension_numbers = #tpu.dot_dimension_numbers<[1], [0], [0], [1], [0, 0, 1, 1], [], []>} : vector<4x4xbf16>, vector<4x288xbf16>, vector<4x288xf32> -> vector<4x288xf32>
    %455 = arith.addf %448, %454 : vector<4x288xf32>
    %c0_477 = arith.constant 0 : index
    %c0_478 = arith.constant 0 : index
    %c1_479 = arith.constant 1 : index
    %456 = vector.load %arg7[%c0_477, %c0_478, %c1_479] : memref<2x4x326xf32, #tpu.memory_space<vmem>>, vector<1x4x288xf32>
    %457 = vector.shape_cast %456 : vector<1x4x288xf32> to vector<4x288xf32>
    %458 = arith.truncf %457 : vector<4x288xf32> to vector<4x288xbf16>
    %c3_480 = arith.constant 3 : index
    %c1_481 = arith.constant 1 : index
    %c0_482 = arith.constant 0 : index
    %c0_483 = arith.constant 0 : index
    %459 = vector.load %arg2[%c3_480, %c1_481, %c0_482, %c0_483] : memref<4x9x4x4xbf16, #tpu.memory_space<vmem>>, vector<1x1x4x4xbf16>
    %460 = vector.shape_cast %459 : vector<1x1x4x4xbf16> to vector<4x4xbf16>
    %cst_484 = arith.constant dense<0.000000e+00> : vector<4x288xf32>
    %461 = tpu.matmul %460, %458, %cst_484 {dimension_numbers = #tpu.dot_dimension_numbers<[1], [0], [0], [1], [0, 0, 1, 1], [], []>} : vector<4x4xbf16>, vector<4x288xbf16>, vector<4x288xf32> -> vector<4x288xf32>
    %462 = arith.addf %455, %461 : vector<4x288xf32>
    %c0_485 = arith.constant 0 : index
    %c0_486 = arith.constant 0 : index
    %c2_487 = arith.constant 2 : index
    %463 = vector.load %arg7[%c0_485, %c0_486, %c2_487] : memref<2x4x326xf32, #tpu.memory_space<vmem>>, vector<1x4x288xf32>
    %464 = vector.shape_cast %463 : vector<1x4x288xf32> to vector<4x288xf32>
    %465 = arith.truncf %464 : vector<4x288xf32> to vector<4x288xbf16>
    %c3_488 = arith.constant 3 : index
    %c2_489 = arith.constant 2 : index
    %c0_490 = arith.constant 0 : index
    %c0_491 = arith.constant 0 : index
    %466 = vector.load %arg2[%c3_488, %c2_489, %c0_490, %c0_491] : memref<4x9x4x4xbf16, #tpu.memory_space<vmem>>, vector<1x1x4x4xbf16>
    %467 = vector.shape_cast %466 : vector<1x1x4x4xbf16> to vector<4x4xbf16>
    %cst_492 = arith.constant dense<0.000000e+00> : vector<4x288xf32>
    %468 = tpu.matmul %467, %465, %cst_492 {dimension_numbers = #tpu.dot_dimension_numbers<[1], [0], [0], [1], [0, 0, 1, 1], [], []>} : vector<4x4xbf16>, vector<4x288xbf16>, vector<4x288xf32> -> vector<4x288xf32>
    %469 = arith.addf %462, %468 : vector<4x288xf32>
    %c0_493 = arith.constant 0 : index
    %c0_494 = arith.constant 0 : index
    %c18_495 = arith.constant 18 : index
    %470 = vector.load %arg7[%c0_493, %c0_494, %c18_495] : memref<2x4x326xf32, #tpu.memory_space<vmem>>, vector<1x4x288xf32>
    %471 = vector.shape_cast %470 : vector<1x4x288xf32> to vector<4x288xf32>
    %472 = arith.truncf %471 : vector<4x288xf32> to vector<4x288xbf16>
    %c3_496 = arith.constant 3 : index
    %c3_497 = arith.constant 3 : index
    %c0_498 = arith.constant 0 : index
    %c0_499 = arith.constant 0 : index
    %473 = vector.load %arg2[%c3_496, %c3_497, %c0_498, %c0_499] : memref<4x9x4x4xbf16, #tpu.memory_space<vmem>>, vector<1x1x4x4xbf16>
    %474 = vector.shape_cast %473 : vector<1x1x4x4xbf16> to vector<4x4xbf16>
    %cst_500 = arith.constant dense<0.000000e+00> : vector<4x288xf32>
    %475 = tpu.matmul %474, %472, %cst_500 {dimension_numbers = #tpu.dot_dimension_numbers<[1], [0], [0], [1], [0, 0, 1, 1], [], []>} : vector<4x4xbf16>, vector<4x288xbf16>, vector<4x288xf32> -> vector<4x288xf32>
    %476 = arith.addf %469, %475 : vector<4x288xf32>
    %c0_501 = arith.constant 0 : index
    %c0_502 = arith.constant 0 : index
    %c19_503 = arith.constant 19 : index
    %477 = vector.load %arg7[%c0_501, %c0_502, %c19_503] : memref<2x4x326xf32, #tpu.memory_space<vmem>>, vector<1x4x288xf32>
    %478 = vector.shape_cast %477 : vector<1x4x288xf32> to vector<4x288xf32>
    %479 = arith.truncf %478 : vector<4x288xf32> to vector<4x288xbf16>
    %c3_504 = arith.constant 3 : index
    %c4_505 = arith.constant 4 : index
    %c0_506 = arith.constant 0 : index
    %c0_507 = arith.constant 0 : index
    %480 = vector.load %arg2[%c3_504, %c4_505, %c0_506, %c0_507] : memref<4x9x4x4xbf16, #tpu.memory_space<vmem>>, vector<1x1x4x4xbf16>
    %481 = vector.shape_cast %480 : vector<1x1x4x4xbf16> to vector<4x4xbf16>
    %cst_508 = arith.constant dense<0.000000e+00> : vector<4x288xf32>
    %482 = tpu.matmul %481, %479, %cst_508 {dimension_numbers = #tpu.dot_dimension_numbers<[1], [0], [0], [1], [0, 0, 1, 1], [], []>} : vector<4x4xbf16>, vector<4x288xbf16>, vector<4x288xf32> -> vector<4x288xf32>
    %483 = arith.addf %476, %482 : vector<4x288xf32>
    %c0_509 = arith.constant 0 : index
    %c0_510 = arith.constant 0 : index
    %c20_511 = arith.constant 20 : index
    %484 = vector.load %arg7[%c0_509, %c0_510, %c20_511] : memref<2x4x326xf32, #tpu.memory_space<vmem>>, vector<1x4x288xf32>
    %485 = vector.shape_cast %484 : vector<1x4x288xf32> to vector<4x288xf32>
    %486 = arith.truncf %485 : vector<4x288xf32> to vector<4x288xbf16>
    %c3_512 = arith.constant 3 : index
    %c5_513 = arith.constant 5 : index
    %c0_514 = arith.constant 0 : index
    %c0_515 = arith.constant 0 : index
    %487 = vector.load %arg2[%c3_512, %c5_513, %c0_514, %c0_515] : memref<4x9x4x4xbf16, #tpu.memory_space<vmem>>, vector<1x1x4x4xbf16>
    %488 = vector.shape_cast %487 : vector<1x1x4x4xbf16> to vector<4x4xbf16>
    %cst_516 = arith.constant dense<0.000000e+00> : vector<4x288xf32>
    %489 = tpu.matmul %488, %486, %cst_516 {dimension_numbers = #tpu.dot_dimension_numbers<[1], [0], [0], [1], [0, 0, 1, 1], [], []>} : vector<4x4xbf16>, vector<4x288xbf16>, vector<4x288xf32> -> vector<4x288xf32>
    %490 = arith.addf %483, %489 : vector<4x288xf32>
    %c0_517 = arith.constant 0 : index
    %c0_518 = arith.constant 0 : index
    %c36_519 = arith.constant 36 : index
    %491 = vector.load %arg7[%c0_517, %c0_518, %c36_519] : memref<2x4x326xf32, #tpu.memory_space<vmem>>, vector<1x4x288xf32>
    %492 = vector.shape_cast %491 : vector<1x4x288xf32> to vector<4x288xf32>
    %493 = arith.truncf %492 : vector<4x288xf32> to vector<4x288xbf16>
    %c3_520 = arith.constant 3 : index
    %c6_521 = arith.constant 6 : index
    %c0_522 = arith.constant 0 : index
    %c0_523 = arith.constant 0 : index
    %494 = vector.load %arg2[%c3_520, %c6_521, %c0_522, %c0_523] : memref<4x9x4x4xbf16, #tpu.memory_space<vmem>>, vector<1x1x4x4xbf16>
    %495 = vector.shape_cast %494 : vector<1x1x4x4xbf16> to vector<4x4xbf16>
    %cst_524 = arith.constant dense<0.000000e+00> : vector<4x288xf32>
    %496 = tpu.matmul %495, %493, %cst_524 {dimension_numbers = #tpu.dot_dimension_numbers<[1], [0], [0], [1], [0, 0, 1, 1], [], []>} : vector<4x4xbf16>, vector<4x288xbf16>, vector<4x288xf32> -> vector<4x288xf32>
    %497 = arith.addf %490, %496 : vector<4x288xf32>
    %c0_525 = arith.constant 0 : index
    %c0_526 = arith.constant 0 : index
    %c37_527 = arith.constant 37 : index
    %498 = vector.load %arg7[%c0_525, %c0_526, %c37_527] : memref<2x4x326xf32, #tpu.memory_space<vmem>>, vector<1x4x288xf32>
    %499 = vector.shape_cast %498 : vector<1x4x288xf32> to vector<4x288xf32>
    %500 = arith.truncf %499 : vector<4x288xf32> to vector<4x288xbf16>
    %c3_528 = arith.constant 3 : index
    %c7_529 = arith.constant 7 : index
    %c0_530 = arith.constant 0 : index
    %c0_531 = arith.constant 0 : index
    %501 = vector.load %arg2[%c3_528, %c7_529, %c0_530, %c0_531] : memref<4x9x4x4xbf16, #tpu.memory_space<vmem>>, vector<1x1x4x4xbf16>
    %502 = vector.shape_cast %501 : vector<1x1x4x4xbf16> to vector<4x4xbf16>
    %cst_532 = arith.constant dense<0.000000e+00> : vector<4x288xf32>
    %503 = tpu.matmul %502, %500, %cst_532 {dimension_numbers = #tpu.dot_dimension_numbers<[1], [0], [0], [1], [0, 0, 1, 1], [], []>} : vector<4x4xbf16>, vector<4x288xbf16>, vector<4x288xf32> -> vector<4x288xf32>
    %504 = arith.addf %497, %503 : vector<4x288xf32>
    %c0_533 = arith.constant 0 : index
    %c0_534 = arith.constant 0 : index
    %c38_535 = arith.constant 38 : index
    %505 = vector.load %arg7[%c0_533, %c0_534, %c38_535] : memref<2x4x326xf32, #tpu.memory_space<vmem>>, vector<1x4x288xf32>
    %506 = vector.shape_cast %505 : vector<1x4x288xf32> to vector<4x288xf32>
    %507 = arith.truncf %506 : vector<4x288xf32> to vector<4x288xbf16>
    %c3_536 = arith.constant 3 : index
    %c8_537 = arith.constant 8 : index
    %c0_538 = arith.constant 0 : index
    %c0_539 = arith.constant 0 : index
    %508 = vector.load %arg2[%c3_536, %c8_537, %c0_538, %c0_539] : memref<4x9x4x4xbf16, #tpu.memory_space<vmem>>, vector<1x1x4x4xbf16>
    %509 = vector.shape_cast %508 : vector<1x1x4x4xbf16> to vector<4x4xbf16>
    %cst_540 = arith.constant dense<0.000000e+00> : vector<4x288xf32>
    %510 = tpu.matmul %509, %507, %cst_540 {dimension_numbers = #tpu.dot_dimension_numbers<[1], [0], [0], [1], [0, 0, 1, 1], [], []>} : vector<4x4xbf16>, vector<4x288xbf16>, vector<4x288xf32> -> vector<4x288xf32>
    %511 = arith.addf %504, %510 : vector<4x288xf32>
    %cst_541 = arith.constant 0.000000e+00 : f32
    %512 = vector.broadcast %cst_541 : f32 to vector<4x288xf32>
    %c1_542 = arith.constant 1 : index
    %c0_543 = arith.constant 0 : index
    %c0_544 = arith.constant 0 : index
    %513 = vector.load %arg7[%c1_542, %c0_543, %c0_544] : memref<2x4x326xf32, #tpu.memory_space<vmem>>, vector<1x4x288xf32>
    %514 = vector.shape_cast %513 : vector<1x4x288xf32> to vector<4x288xf32>
    %515 = arith.truncf %514 : vector<4x288xf32> to vector<4x288xbf16>
    %c3_545 = arith.constant 3 : index
    %c0_546 = arith.constant 0 : index
    %c0_547 = arith.constant 0 : index
    %c0_548 = arith.constant 0 : index
    %516 = vector.load %arg2[%c3_545, %c0_546, %c0_547, %c0_548] : memref<4x9x4x4xbf16, #tpu.memory_space<vmem>>, vector<1x1x4x4xbf16>
    %517 = vector.shape_cast %516 : vector<1x1x4x4xbf16> to vector<4x4xbf16>
    %cst_549 = arith.constant dense<0.000000e+00> : vector<4x288xf32>
    %518 = tpu.matmul %517, %515, %cst_549 {dimension_numbers = #tpu.dot_dimension_numbers<[1], [0], [0], [1], [0, 0, 1, 1], [], []>} : vector<4x4xbf16>, vector<4x288xbf16>, vector<4x288xf32> -> vector<4x288xf32>
    %519 = arith.addf %512, %518 : vector<4x288xf32>
    %c1_550 = arith.constant 1 : index
    %c0_551 = arith.constant 0 : index
    %c1_552 = arith.constant 1 : index
    %520 = vector.load %arg7[%c1_550, %c0_551, %c1_552] : memref<2x4x326xf32, #tpu.memory_space<vmem>>, vector<1x4x288xf32>
    %521 = vector.shape_cast %520 : vector<1x4x288xf32> to vector<4x288xf32>
    %522 = arith.truncf %521 : vector<4x288xf32> to vector<4x288xbf16>
    %c3_553 = arith.constant 3 : index
    %c1_554 = arith.constant 1 : index
    %c0_555 = arith.constant 0 : index
    %c0_556 = arith.constant 0 : index
    %523 = vector.load %arg2[%c3_553, %c1_554, %c0_555, %c0_556] : memref<4x9x4x4xbf16, #tpu.memory_space<vmem>>, vector<1x1x4x4xbf16>
    %524 = vector.shape_cast %523 : vector<1x1x4x4xbf16> to vector<4x4xbf16>
    %cst_557 = arith.constant dense<0.000000e+00> : vector<4x288xf32>
    %525 = tpu.matmul %524, %522, %cst_557 {dimension_numbers = #tpu.dot_dimension_numbers<[1], [0], [0], [1], [0, 0, 1, 1], [], []>} : vector<4x4xbf16>, vector<4x288xbf16>, vector<4x288xf32> -> vector<4x288xf32>
    %526 = arith.addf %519, %525 : vector<4x288xf32>
    %c1_558 = arith.constant 1 : index
    %c0_559 = arith.constant 0 : index
    %c2_560 = arith.constant 2 : index
    %527 = vector.load %arg7[%c1_558, %c0_559, %c2_560] : memref<2x4x326xf32, #tpu.memory_space<vmem>>, vector<1x4x288xf32>
    %528 = vector.shape_cast %527 : vector<1x4x288xf32> to vector<4x288xf32>
    %529 = arith.truncf %528 : vector<4x288xf32> to vector<4x288xbf16>
    %c3_561 = arith.constant 3 : index
    %c2_562 = arith.constant 2 : index
    %c0_563 = arith.constant 0 : index
    %c0_564 = arith.constant 0 : index
    %530 = vector.load %arg2[%c3_561, %c2_562, %c0_563, %c0_564] : memref<4x9x4x4xbf16, #tpu.memory_space<vmem>>, vector<1x1x4x4xbf16>
    %531 = vector.shape_cast %530 : vector<1x1x4x4xbf16> to vector<4x4xbf16>
    %cst_565 = arith.constant dense<0.000000e+00> : vector<4x288xf32>
    %532 = tpu.matmul %531, %529, %cst_565 {dimension_numbers = #tpu.dot_dimension_numbers<[1], [0], [0], [1], [0, 0, 1, 1], [], []>} : vector<4x4xbf16>, vector<4x288xbf16>, vector<4x288xf32> -> vector<4x288xf32>
    %533 = arith.addf %526, %532 : vector<4x288xf32>
    %c1_566 = arith.constant 1 : index
    %c0_567 = arith.constant 0 : index
    %c18_568 = arith.constant 18 : index
    %534 = vector.load %arg7[%c1_566, %c0_567, %c18_568] : memref<2x4x326xf32, #tpu.memory_space<vmem>>, vector<1x4x288xf32>
    %535 = vector.shape_cast %534 : vector<1x4x288xf32> to vector<4x288xf32>
    %536 = arith.truncf %535 : vector<4x288xf32> to vector<4x288xbf16>
    %c3_569 = arith.constant 3 : index
    %c3_570 = arith.constant 3 : index
    %c0_571 = arith.constant 0 : index
    %c0_572 = arith.constant 0 : index
    %537 = vector.load %arg2[%c3_569, %c3_570, %c0_571, %c0_572] : memref<4x9x4x4xbf16, #tpu.memory_space<vmem>>, vector<1x1x4x4xbf16>
    %538 = vector.shape_cast %537 : vector<1x1x4x4xbf16> to vector<4x4xbf16>
    %cst_573 = arith.constant dense<0.000000e+00> : vector<4x288xf32>
    %539 = tpu.matmul %538, %536, %cst_573 {dimension_numbers = #tpu.dot_dimension_numbers<[1], [0], [0], [1], [0, 0, 1, 1], [], []>} : vector<4x4xbf16>, vector<4x288xbf16>, vector<4x288xf32> -> vector<4x288xf32>
    %540 = arith.addf %533, %539 : vector<4x288xf32>
    %c1_574 = arith.constant 1 : index
    %c0_575 = arith.constant 0 : index
    %c19_576 = arith.constant 19 : index
    %541 = vector.load %arg7[%c1_574, %c0_575, %c19_576] : memref<2x4x326xf32, #tpu.memory_space<vmem>>, vector<1x4x288xf32>
    %542 = vector.shape_cast %541 : vector<1x4x288xf32> to vector<4x288xf32>
    %543 = arith.truncf %542 : vector<4x288xf32> to vector<4x288xbf16>
    %c3_577 = arith.constant 3 : index
    %c4_578 = arith.constant 4 : index
    %c0_579 = arith.constant 0 : index
    %c0_580 = arith.constant 0 : index
    %544 = vector.load %arg2[%c3_577, %c4_578, %c0_579, %c0_580] : memref<4x9x4x4xbf16, #tpu.memory_space<vmem>>, vector<1x1x4x4xbf16>
    %545 = vector.shape_cast %544 : vector<1x1x4x4xbf16> to vector<4x4xbf16>
    %cst_581 = arith.constant dense<0.000000e+00> : vector<4x288xf32>
    %546 = tpu.matmul %545, %543, %cst_581 {dimension_numbers = #tpu.dot_dimension_numbers<[1], [0], [0], [1], [0, 0, 1, 1], [], []>} : vector<4x4xbf16>, vector<4x288xbf16>, vector<4x288xf32> -> vector<4x288xf32>
    %547 = arith.addf %540, %546 : vector<4x288xf32>
    %c1_582 = arith.constant 1 : index
    %c0_583 = arith.constant 0 : index
    %c20_584 = arith.constant 20 : index
    %548 = vector.load %arg7[%c1_582, %c0_583, %c20_584] : memref<2x4x326xf32, #tpu.memory_space<vmem>>, vector<1x4x288xf32>
    %549 = vector.shape_cast %548 : vector<1x4x288xf32> to vector<4x288xf32>
    %550 = arith.truncf %549 : vector<4x288xf32> to vector<4x288xbf16>
    %c3_585 = arith.constant 3 : index
    %c5_586 = arith.constant 5 : index
    %c0_587 = arith.constant 0 : index
    %c0_588 = arith.constant 0 : index
    %551 = vector.load %arg2[%c3_585, %c5_586, %c0_587, %c0_588] : memref<4x9x4x4xbf16, #tpu.memory_space<vmem>>, vector<1x1x4x4xbf16>
    %552 = vector.shape_cast %551 : vector<1x1x4x4xbf16> to vector<4x4xbf16>
    %cst_589 = arith.constant dense<0.000000e+00> : vector<4x288xf32>
    %553 = tpu.matmul %552, %550, %cst_589 {dimension_numbers = #tpu.dot_dimension_numbers<[1], [0], [0], [1], [0, 0, 1, 1], [], []>} : vector<4x4xbf16>, vector<4x288xbf16>, vector<4x288xf32> -> vector<4x288xf32>
    %554 = arith.addf %547, %553 : vector<4x288xf32>
    %c1_590 = arith.constant 1 : index
    %c0_591 = arith.constant 0 : index
    %c36_592 = arith.constant 36 : index
    %555 = vector.load %arg7[%c1_590, %c0_591, %c36_592] : memref<2x4x326xf32, #tpu.memory_space<vmem>>, vector<1x4x288xf32>
    %556 = vector.shape_cast %555 : vector<1x4x288xf32> to vector<4x288xf32>
    %557 = arith.truncf %556 : vector<4x288xf32> to vector<4x288xbf16>
    %c3_593 = arith.constant 3 : index
    %c6_594 = arith.constant 6 : index
    %c0_595 = arith.constant 0 : index
    %c0_596 = arith.constant 0 : index
    %558 = vector.load %arg2[%c3_593, %c6_594, %c0_595, %c0_596] : memref<4x9x4x4xbf16, #tpu.memory_space<vmem>>, vector<1x1x4x4xbf16>
    %559 = vector.shape_cast %558 : vector<1x1x4x4xbf16> to vector<4x4xbf16>
    %cst_597 = arith.constant dense<0.000000e+00> : vector<4x288xf32>
    %560 = tpu.matmul %559, %557, %cst_597 {dimension_numbers = #tpu.dot_dimension_numbers<[1], [0], [0], [1], [0, 0, 1, 1], [], []>} : vector<4x4xbf16>, vector<4x288xbf16>, vector<4x288xf32> -> vector<4x288xf32>
    %561 = arith.addf %554, %560 : vector<4x288xf32>
    %c1_598 = arith.constant 1 : index
    %c0_599 = arith.constant 0 : index
    %c37_600 = arith.constant 37 : index
    %562 = vector.load %arg7[%c1_598, %c0_599, %c37_600] : memref<2x4x326xf32, #tpu.memory_space<vmem>>, vector<1x4x288xf32>
    %563 = vector.shape_cast %562 : vector<1x4x288xf32> to vector<4x288xf32>
    %564 = arith.truncf %563 : vector<4x288xf32> to vector<4x288xbf16>
    %c3_601 = arith.constant 3 : index
    %c7_602 = arith.constant 7 : index
    %c0_603 = arith.constant 0 : index
    %c0_604 = arith.constant 0 : index
    %565 = vector.load %arg2[%c3_601, %c7_602, %c0_603, %c0_604] : memref<4x9x4x4xbf16, #tpu.memory_space<vmem>>, vector<1x1x4x4xbf16>
    %566 = vector.shape_cast %565 : vector<1x1x4x4xbf16> to vector<4x4xbf16>
    %cst_605 = arith.constant dense<0.000000e+00> : vector<4x288xf32>
    %567 = tpu.matmul %566, %564, %cst_605 {dimension_numbers = #tpu.dot_dimension_numbers<[1], [0], [0], [1], [0, 0, 1, 1], [], []>} : vector<4x4xbf16>, vector<4x288xbf16>, vector<4x288xf32> -> vector<4x288xf32>
    %568 = arith.addf %561, %567 : vector<4x288xf32>
    %c1_606 = arith.constant 1 : index
    %c0_607 = arith.constant 0 : index
    %c38_608 = arith.constant 38 : index
    %569 = vector.load %arg7[%c1_606, %c0_607, %c38_608] : memref<2x4x326xf32, #tpu.memory_space<vmem>>, vector<1x4x288xf32>
    %570 = vector.shape_cast %569 : vector<1x4x288xf32> to vector<4x288xf32>
    %571 = arith.truncf %570 : vector<4x288xf32> to vector<4x288xbf16>
    %c3_609 = arith.constant 3 : index
    %c8_610 = arith.constant 8 : index
    %c0_611 = arith.constant 0 : index
    %c0_612 = arith.constant 0 : index
    %572 = vector.load %arg2[%c3_609, %c8_610, %c0_611, %c0_612] : memref<4x9x4x4xbf16, #tpu.memory_space<vmem>>, vector<1x1x4x4xbf16>
    %573 = vector.shape_cast %572 : vector<1x1x4x4xbf16> to vector<4x4xbf16>
    %cst_613 = arith.constant dense<0.000000e+00> : vector<4x288xf32>
    %574 = tpu.matmul %573, %571, %cst_613 {dimension_numbers = #tpu.dot_dimension_numbers<[1], [0], [0], [1], [0, 0, 1, 1], [], []>} : vector<4x4xbf16>, vector<4x288xbf16>, vector<4x288xf32> -> vector<4x288xf32>
    %575 = arith.addf %568, %574 : vector<4x288xf32>
    %576 = vector.shape_cast %511 : vector<4x288xf32> to vector<1x4x288xf32>
    %577 = vector.shape_cast %575 : vector<4x288xf32> to vector<1x4x288xf32>
    %578 = tpu.concatenate %576, %577 in 0 : vector<1x4x288xf32>, vector<1x4x288xf32> -> vector<2x4x288xf32>
    %c3_614 = arith.constant 3 : index
    %c0_615 = arith.constant 0 : index
    %c0_616 = arith.constant 0 : index
    %579 = vector.load %arg3[%c3_614, %c0_615, %c0_616] : memref<4x4x1xf32, #tpu.memory_space<vmem>>, vector<1x4x1xf32>
    %580 = vector.shape_cast %579 : vector<1x4x1xf32> to vector<4x1xf32>
    %581 = vector.shape_cast %580 : vector<4x1xf32> to vector<1x4x1xf32>
    %582 = vector.broadcast %581 : vector<1x4x1xf32> to vector<2x4x288xf32>
    %583 = arith.mulf %578, %582 : vector<2x4x288xf32>
    %c3_617 = arith.constant 3 : index
    %c0_618 = arith.constant 0 : index
    %c0_619 = arith.constant 0 : index
    %584 = vector.load %arg4[%c3_617, %c0_618, %c0_619] : memref<4x4x1xf32, #tpu.memory_space<vmem>>, vector<1x4x1xf32>
    %585 = vector.shape_cast %584 : vector<1x4x1xf32> to vector<4x1xf32>
    %586 = vector.shape_cast %585 : vector<4x1xf32> to vector<1x4x1xf32>
    %587 = vector.broadcast %586 : vector<1x4x1xf32> to vector<2x4x288xf32>
    %588 = arith.addf %583, %587 : vector<2x4x288xf32>
    %589 = arith.addf %588, %298 : vector<2x4x288xf32>
    %cst_620 = arith.constant 0.000000e+00 : f32
    %590 = vector.broadcast %cst_620 : f32 to vector<2x4x288xf32>
    %591 = arith.maximumf %589, %590 : vector<2x4x288xf32>
    %c0_621 = arith.constant 0 : index
    %c0_622 = arith.constant 0 : index
    %c0_623 = arith.constant 0 : index
    %592 = vector.load %arg6[%c0_621, %c0_622, %c0_623] : memref<2x4x288xf32, #tpu.memory_space<vmem>>, vector<2x4x288xf32>
    tpu.vector_store %arg6[%c0_621, %c0_622, %c0_623], %591 {strides = array<i32>} : memref<2x4x288xf32, #tpu.memory_space<vmem>>, vector<2x4x288xf32>,
    return
  }
  func.func @transform_0(%arg0: i32) -> (i32, i32, i32) {
    %c0_i32 = arith.constant 0 : i32
    %c0_i32_0 = arith.constant 0 : i32
    %c0_i32_1 = arith.constant 0 : i32
    %c0_i32_2 = arith.constant 0 : i32
    return %c0_i32, %c0_i32_0, %c0_i32_1 : i32, i32, i32
  }
  func.func @transform_1(%arg0: i32) -> (i32, i32, i32, i32) {
    %c0_i32 = arith.constant 0 : i32
    %c0_i32_0 = arith.constant 0 : i32
    %c0_i32_1 = arith.constant 0 : i32
    %c0_i32_2 = arith.constant 0 : i32
    %c0_i32_3 = arith.constant 0 : i32
    return %c0_i32, %c0_i32_0, %c0_i32_1, %c0_i32_2 : i32, i32, i32, i32
  }
  func.func @transform_2(%arg0: i32) -> (i32, i32, i32) {
    %c0_i32 = arith.constant 0 : i32
    %c0_i32_0 = arith.constant 0 : i32
    %c0_i32_1 = arith.constant 0 : i32
    %c0_i32_2 = arith.constant 0 : i32
    return %c0_i32, %c0_i32_0, %c0_i32_1 : i32, i32, i32
  }
  func.func @transform_3(%arg0: i32) -> (i32, i32, i32) {
    %c0_i32 = arith.constant 0 : i32
    %c0_i32_0 = arith.constant 0 : i32
    %c0_i32_1 = arith.constant 0 : i32
    %c0_i32_2 = arith.constant 0 : i32
    return %c0_i32, %c0_i32_0, %c0_i32_1 : i32, i32, i32
  }
  func.func @transform_4(%arg0: i32) -> (i32, i32, i32) {
    %c0_i32 = arith.constant 0 : i32
    %c0_i32_0 = arith.constant 0 : i32
    %c0_i32_1 = arith.constant 0 : i32
    %c0_i32_2 = arith.constant 0 : i32
    return %c0_i32, %c0_i32_0, %c0_i32_1 : i32, i32, i32
  }
  func.func @transform_5(%arg0: i32) -> (i32, i32, i32) {
    %c0_i32 = arith.constant 0 : i32
    %c0_i32_0 = arith.constant 0 : i32
    %c0_i32_1 = arith.constant 0 : i32
    %c0_i32_2 = arith.constant 0 : i32
    return %c0_i32, %c0_i32_0, %c0_i32_1 : i32, i32, i32
  }
}

</mosaic_0001>

<llo_original>
// kernel: tpu_custom_call.1
$region0: #{tpu_custom_call.1}
  #allocation0 [shape = 'u32[]', space=smem, size = 0x4, offset = 0x4, fixed_abs, tag = 'smem constant byte address 0x4 - core index']
  #allocation1 [shape = 'u32[144,128]{1,0:T(1,128)}', space=vmem, size = 0x12000, scoped, tag = 'internal scratch']
  #allocation2 [shape = 'f32[2,4,326]{2,1,0:T(4,128)}', space=vmem, size = 0x3000, scoped, tag = 'scratch operand']
  %s0 = inlined_call_operand.vmem [shape: f32[2,4,288], index: 0, kind: input, shape index: {}]
  %s1 = inlined_call_operand.vmem [shape: bf16[4,9,4,4], index: 1, kind: input, shape index: {}]
  %s2 = inlined_call_operand.vmem [shape: f32[4,4,1], index: 2, kind: input, shape index: {}]
  %s3 = inlined_call_operand.vmem [shape: f32[4,4,1], index: 3, kind: input, shape index: {}]
  %s4 = inlined_call_operand.vmem [shape: f32[1,1,288], index: 4, kind: input, shape index: {}]
  %s5 = inlined_call_operand.hbm [shape: f32[2,4,288], index: 5, kind: output, shape index: {}]
  %s6 = sld [smem:[#allocation0]]
  $region30: #{tpu_custom_call.1} parent=0
    _
  %s8 = ssub.s32 1, %s6
  %s9 = scalar_select 0, %s8, %s6
  $region1: #{tpu_custom_call.1} parent=0
    #allocation3 [shape = 'u8[12288]{0}', space=vmem, size = 0x3000, scoped, tag = 'output window, operand 0, single buffered']
    #allocation4 [shape = 's32[1]{0}', space=sflag, size = 0x4, scoped, tag = 'scoped memory for tpu_custom_call.1']
    %10 = vsyncpa [#allocation4], 0
    // Predicated region
    $region2: #{tpu_custom_call.1} parent=1 // pred_check
      _
    $region3: #{tpu_custom_call.1} parent=1 // pred_check_branch
      %12 = sbr.rel (0) target = $region5
    $region4: #{tpu_custom_call.1} parent=1 // pred_region
      _
    $region5: #{tpu_custom_call.1} parent=1 // pred_fallthru
      _
    // Predicated region
    $region6: #{tpu_custom_call.1} parent=1 // pred_check
      _
    $region7: #{tpu_custom_call.1} parent=1 // pred_check_branch
      %14 = sbr.rel (0) target = $region9
    $region8: #{tpu_custom_call.1} parent=1 // pred_region
      _
    $region9: #{tpu_custom_call.1} parent=1 // pred_fallthru
      _
    // Predicated region
    $region10: #{tpu_custom_call.1} parent=1 // pred_check
      _
    $region11: #{tpu_custom_call.1} parent=1 // pred_check_branch
      %16 = sbr.rel (0) target = $region13
    $region12: #{tpu_custom_call.1} parent=1 // pred_region
      _
    $region13: #{tpu_custom_call.1} parent=1 // pred_fallthru
      _
    // Predicated region
    $region14: #{tpu_custom_call.1} parent=1 // pred_check
      _
    $region15: #{tpu_custom_call.1} parent=1 // pred_check_branch
      %18 = sbr.rel (0) target = $region17
    $region16: #{tpu_custom_call.1} parent=1 // pred_region
      _
    $region17: #{tpu_custom_call.1} parent=1 // pred_fallthru
      _
    // Predicated region
    $region18: #{tpu_custom_call.1} parent=1 // pred_check
      _
    $region19: #{tpu_custom_call.1} parent=1 // pred_check_branch
      %20 = sbr.rel (0) target = $region21
    $region20: #{tpu_custom_call.1} parent=1 // pred_region
      _
    $region21: #{tpu_custom_call.1} parent=1 // pred_fallthru
      _
    %v22 = vld [vmem:[%s4] sm:$0x7]
    %vm23 = vcmask 150528
    %24 = vst.msk [vmem:[#allocation2] sm:$0xf] %vm23, 0.0
    %25 = vst.msk [vmem:[#allocation2 + $0xc] sm:$0xf] %vm23, 0.0
    %vm26 = vcmask 568728
    %27 = vst.msk [vmem:[#allocation2 + $0x8] sm:$0xf] %vm26, 0.0
    %28 = vst.msk [vmem:[#allocation2 + $0x14] sm:$0xf] %vm26, 0.0
    %v29 = vld [vmem:[%s0] sm:$0xff]
    %v30 = vld [vmem:[%s0 + $0x8] sm:$0xf]
    %v31 = vld [vmem:[%s0 + $0xc] sm:$0xff]
    %v32 = vld [vmem:[%s0 + $0x14] sm:$0xf]
    %v34 = vlaneseq
    %v35 = vshrl.u32 %v34, 7
    %v36 = vsub.s32 0, %v35
    %v37 = vrot.slane %v22, %v36
    %v38 = vlaneseq
    %v39 = vshrl.u32 %v38, 7
    %v40 = vsub.s32 1, %v39
    %v41 = vrot.slane %v22, %v40
    %v42 = vlaneseq
    %v43 = vshrl.u32 %v42, 7
    %v44 = vsub.s32 2, %v43
    %v45 = vrot.slane %v22, %v44
    %v49 = vcombine.low %v37, %v41
    %v51 = vmul.f32 %v29, %v49
    %v52 = vmul.f32 %v30, %v45
    %v53 = vmul.f32 %v31, %v49
    %v54 = vmul.f32 %v32, %v45
    %59 = vrot.lane.b32.xlu0 %v51, 19
    %v60 = vpop.permute.xlu0 %59
    %61 = vrot.lane.b32.xlu0 %v52, 19
    %v62 = vpop.permute.xlu0 %61
    %63 = vrot.lane.b32.xlu0 %v53, 19
    %v64 = vpop.permute.xlu0 %63
    %65 = vrot.lane.b32.xlu0 %v54, 19
    %v66 = vpop.permute.xlu0 %65
    %v67 = vrot.slane %v60, 4
    %v68 = vrot.slane %v64, 4
    %vm69 = vcmask 154624
    %v70 = vsel %vm69, %v67, %v60
    %v71 = vsel %vm69, %v67, %v62
    %v72 = vsel %vm69, %v68, %v64
    %v73 = vsel %vm69, %v68, %v66
    %vm78 = vcmask 1043608
    %vm79 = vcmask 1047556
    %vm80 = vmor %vm79, %vm78
    %81 = vst.msk [vmem:[#allocation2] sm:$0xff] %vm80, %v70
    %vm82 = vcmask 412672
    %83 = vst.msk [vmem:[#allocation2 + $0x8] sm:$0xf] %vm82, %v71
    %84 = vst.msk [vmem:[#allocation2 + $0xc] sm:$0xff] %vm80, %v72
    %85 = vst.msk [vmem:[#allocation2 + $0x14] sm:$0xf] %vm82, %v73
    %v86 = vld [vmem:[#allocation2] sm:$0xff]
    %v87 = vld [vmem:[#allocation2 + $0x8] sm:$0xf]
    %v89 = vcombine.high %v86, %v86
    %v91 = vpack.c.bf16 %v86, %v86
    %v92 = vpack.c.bf16 %v89, %v89
    %v93 = vpack.c.bf16 %v87, %v87
    %v94 = vld [vmem:[%s1] sm:$0x3]
    %s95 = scalar_lea.vmem %s1, 2
    %v96 = vld [vmem:[%s95] sm:$0x3]
    %100 = vrot.lane.b32.xlu0 %v91, 127
    %v101 = vpop.permute.xlu0 %100
    %102 = vrot.lane.b32.xlu0 %v92, 127
    %v103 = vpop.permute.xlu0 %102
    %104 = vrot.lane.b32.xlu0 %v93, 127
    %v105 = vpop.permute.xlu0 %104
    %vm106 = vcmask 1039360
    %v107 = vsel %vm106, %v101, %v103
    %v108 = vsel %vm106, %v103, %v105
    %vm109 = vcmask 31744
    %v111 = vsel %vm109, %v96, 0
    %vm113 = vcmask 1041408
    %v115 = vsel %vm113, %v107, 0
    %v118 = vsel %vm113, %v108, 0
    %v121 = vsel %vm113, %v105, 0
    %123 = vmatprep.subr.bf16.mxu0 %v118
    %124 = vmatpush1.bf16.msra.mxu0 %v115
    %125 = vmatprep.subr.bf16.mxu0 0
    %126 = vmatpush1.bf16.msra.mxu0 0
    %127 = vmatprep.subr.bf16.mxu0 0
    %128 = vmatpush1.bf16.msra.mxu0 0
    %129 = vmatprep.subr.bf16.mxu0 0
    %130 = vmatpush1.bf16.msra.mxu0 0
    %131 = vmatprep.subr.bf16.mxu0 0
    %132 = vmatpush1.bf16.msra.mxu0 0
    %133 = vmatprep.subr.bf16.mxu0 0
    %134 = vmatpush1.bf16.msra.mxu0 0
    %135 = vmatprep.subr.bf16.mxu0 0
    %136 = vmatpush1.bf16.msra.mxu0 0
    %137 = vmatprep.subr.bf16.mxu0 0
    %138 = vmatpush1.bf16.msra.mxu0 0
    %139 = vmatprep.subr.bf16.mxu0 0
    %140 = vmatpush1.bf16.msra.mxu0 0
    %141 = vmatprep.subr.bf16.mxu0 0
    %142 = vmatpush1.bf16.msra.mxu0 0
    %143 = vmatprep.subr.bf16.mxu0 0
    %144 = vmatpush1.bf16.msra.mxu0 0
    %145 = vmatprep.subr.bf16.mxu0 0
    %146 = vmatpush1.bf16.msra.mxu0 0
    %147 = vmatprep.subr.bf16.mxu0 0
    %148 = vmatpush1.bf16.msra.mxu0 0
    %149 = vmatprep.subr.bf16.mxu0 0
    %150 = vmatpush1.bf16.msra.mxu0 0
    %151 = vmatprep.subr.bf16.mxu0 0
    %152 = vmatpush1.bf16.msra.mxu0 0
    %153 = vmatprep.subr.bf16.mxu0 0
    %154 = vmatpush1.bf16.msra.mxu0 0
    %155 = vmatprep.mubr.bf16.mxu0 0
    %156 = vmatmul.mubr.bf16.gmra.mrb[0].mxu0 %v111
    %v157 = vpop.f32.mrb[0].mxu0
    %v158 = vadd.f32 0.0, %v157
    %v159 = vpop.f32.mrb[0].mxu0
    %v160 = vadd.f32 0.0, %v159
    %v161 = vpop.f32.mrb[0].mxu0
    %v162 = vpop.f32.mrb[0].mxu0
    %163 = vdwg.mxu0
    %164 = vmatprep.subr.bf16.mxu0 0
    %165 = vmatpush1.bf16.msra.mxu0 %v121
    %166 = vmatprep.subr.bf16.mxu0 0
    %167 = vmatpush1.bf16.msra.mxu0 0
    %168 = vmatprep.subr.bf16.mxu0 0
    %169 = vmatpush1.bf16.msra.mxu0 0
    %170 = vmatprep.subr.bf16.mxu0 0
    %171 = vmatpush1.bf16.msra.mxu0 0
    %172 = vmatprep.subr.bf16.mxu0 0
    %173 = vmatpush1.bf16.msra.mxu0 0
    %174 = vmatprep.subr.bf16.mxu0 0
    %175 = vmatpush1.bf16.msra.mxu0 0
    %176 = vmatprep.subr.bf16.mxu0 0
    %177 = vmatpush1.bf16.msra.mxu0 0
    %178 = vmatprep.subr.bf16.mxu0 0
    %179 = vmatpush1.bf16.msra.mxu0 0
    %180 = vmatprep.subr.bf16.mxu0 0
    %181 = vmatpush1.bf16.msra.mxu0 0
    %182 = vmatprep.subr.bf16.mxu0 0
    %183 = vmatpush1.bf16.msra.mxu0 0
    %184 = vmatprep.subr.bf16.mxu0 0
    %185 = vmatpush1.bf16.msra.mxu0 0
    %186 = vmatprep.subr.bf16.mxu0 0
    %187 = vmatpush1.bf16.msra.mxu0 0
    %188 = vmatprep.subr.bf16.mxu0 0
    %189 = vmatpush1.bf16.msra.mxu0 0
    %190 = vmatprep.subr.bf16.mxu0 0
    %191 = vmatpush1.bf16.msra.mxu0 0
    %192 = vmatprep.subr.bf16.mxu0 0
    %193 = vmatpush1.bf16.msra.mxu0 0
    %194 = vmatprep.subr.bf16.mxu0 0
    %195 = vmatpush1.bf16.msra.mxu0 0
    %196 = vmatprep.mubr.bf16.mxu0 0
    %197 = vmatmul.mubr.bf16.gmra.mrb[0].mxu0 %v111
    %v198 = vpop.f32.mrb[0].mxu0
    %v199 = vadd.f32 0.0, %v198
    %v200 = vpop.f32.mrb[0].mxu0
    %v201 = vpop.f32.mrb[0].mxu0
    %v202 = vpop.f32.mrb[0].mxu0
    %203 = vdwg.mxu0
    %v205 = vsel %vm109, %v94, 0
    %v208 = vsel %vm113, %v91, 0
    %v211 = vsel %vm113, %v92, 0
    %v214 = vsel %vm113, %v93, 0
    %216 = vmatprep.subr.bf16.mxu0 %v211
    %217 = vmatpush1.bf16.msra.mxu0 %v208
    %218 = vmatprep.subr.bf16.mxu0 0
    %219 = vmatpush1.bf16.msra.mxu0 0
    %220 = vmatprep.subr.bf16.mxu0 0
    %221 = vmatpush1.bf16.msra.mxu0 0
    %222 = vmatprep.subr.bf16.mxu0 0
    %223 = vmatpush1.bf16.msra.mxu0 0
    %224 = vmatprep.subr.bf16.mxu0 0
    %225 = vmatpush1.bf16.msra.mxu0 0
    %226 = vmatprep.subr.bf16.mxu0 0
    %227 = vmatpush1.bf16.msra.mxu0 0
    %228 = vmatprep.subr.bf16.mxu0 0
    %229 = vmatpush1.bf16.msra.mxu0 0
    %230 = vmatprep.subr.bf16.mxu0 0
    %231 = vmatpush1.bf16.msra.mxu0 0
    %232 = vmatprep.subr.bf16.mxu0 0
    %233 = vmatpush1.bf16.msra.mxu0 0
    %234 = vmatprep.subr.bf16.mxu0 0
    %235 = vmatpush1.bf16.msra.mxu0 0
    %236 = vmatprep.subr.bf16.mxu0 0
    %237 = vmatpush1.bf16.msra.mxu0 0
    %238 = vmatprep.subr.bf16.mxu0 0
    %239 = vmatpush1.bf16.msra.mxu0 0
    %240 = vmatprep.subr.bf16.mxu0 0
    %241 = vmatpush1.bf16.msra.mxu0 0
    %242 = vmatprep.subr.bf16.mxu0 0
    %243 = vmatpush1.bf16.msra.mxu0 0
    %244 = vmatprep.subr.bf16.mxu0 0
    %245 = vmatpush1.bf16.msra.mxu0 0
    %246 = vmatprep.subr.bf16.mxu0 0
    %247 = vmatpush1.bf16.msra.mxu0 0
    %248 = vmatprep.mubr.bf16.mxu0 0
    %249 = vmatmul.mubr.bf16.gmra.mrb[0].mxu0 %v205
    %v250 = vpop.f32.mrb[0].mxu0
    %v251 = vadd.f32 %v158, %v250
    %v252 = vpop.f32.mrb[0].mxu0
    %v253 = vadd.f32 %v160, %v252
    %v254 = vpop.f32.mrb[0].mxu0
    %v255 = vpop.f32.mrb[0].mxu0
    %256 = vdwg.mxu0
    %257 = vmatprep.subr.bf16.mxu0 0
    %258 = vmatpush1.bf16.msra.mxu0 %v214
    %259 = vmatprep.subr.bf16.mxu0 0
    %260 = vmatpush1.bf16.msra.mxu0 0
    %261 = vmatprep.subr.bf16.mxu0 0
    %262 = vmatpush1.bf16.msra.mxu0 0
    %263 = vmatprep.subr.bf16.mxu0 0
    %264 = vmatpush1.bf16.msra.mxu0 0
    %265 = vmatprep.subr.bf16.mxu0 0
    %266 = vmatpush1.bf16.msra.mxu0 0
    %267 = vmatprep.subr.bf16.mxu0 0
    %268 = vmatpush1.bf16.msra.mxu0 0
    %269 = vmatprep.subr.bf16.mxu0 0
    %270 = vmatpush1.bf16.msra.mxu0 0
    %271 = vmatprep.subr.bf16.mxu0 0
    %272 = vmatpush1.bf16.msra.mxu0 0
    %273 = vmatprep.subr.bf16.mxu0 0
    %274 = vmatpush1.bf16.msra.mxu0 0
    %275 = vmatprep.subr.bf16.mxu0 0
    %276 = vmatpush1.bf16.msra.mxu0 0
    %277 = vmatprep.subr.bf16.mxu0 0
    %278 = vmatpush1.bf16.msra.mxu0 0
    %279 = vmatprep.subr.bf16.mxu0 0
    %280 = vmatpush1.bf16.msra.mxu0 0
    %281 = vmatprep.subr.bf16.mxu0 0
    %282 = vmatpush1.bf16.msra.mxu0 0
    %283 = vmatprep.subr.bf16.mxu0 0
    %284 = vmatpush1.bf16.msra.mxu0 0
    %285 = vmatprep.subr.bf16.mxu0 0
    %286 = vmatpush1.bf16.msra.mxu0 0
    %287 = vmatprep.subr.bf16.mxu0 0
    %288 = vmatpush1.bf16.msra.mxu0 0
    %289 = vmatprep.mubr.bf16.mxu0 0
    %290 = vmatmul.mubr.bf16.gmra.mrb[0].mxu0 %v205
    %v291 = vpop.f32.mrb[0].mxu0
    %v292 = vadd.f32 %v199, %v291
    %v293 = vpop.f32.mrb[0].mxu0
    %v294 = vpop.f32.mrb[0].mxu0
    %v295 = vpop.f32.mrb[0].mxu0
    %296 = vdwg.mxu0
    %v297 = vld [vmem:[#allocation2] sm:$0xff]
    %v298 = vld [vmem:[#allocation2 + $0x8] sm:$0xf]
    %v300 = vcombine.high %v297, %v297
    %v302 = vpack.c.bf16 %v297, %v297
    %v303 = vpack.c.bf16 %v300, %v300
    %v304 = vpack.c.bf16 %v298, %v298
    %s305 = scalar_lea.vmem %s1, 4
    %v306 = vld [vmem:[%s305] sm:$0x3]
    %310 = vrot.lane.b32.xlu0 %v302, 126
    %v311 = vpop.permute.xlu0 %310
    %312 = vrot.lane.b32.xlu0 %v303, 126
    %v313 = vpop.permute.xlu0 %312
    %314 = vrot.lane.b32.xlu0 %v304, 126
    %v315 = vpop.permute.xlu0 %314
    %vm316 = vcmask 1031168
    %v317 = vsel %vm316, %v311, %v313
    %v318 = vsel %vm316, %v313, %v315
    %v320 = vsel %vm109, %v306, 0
    %v323 = vsel %vm113, %v317, 0
    %v326 = vsel %vm113, %v318, 0
    %v329 = vsel %vm113, %v315, 0
    %331 = vmatprep.subr.bf16.mxu0 %v326
    %332 = vmatpush1.bf16.msra.mxu0 %v323
    %333 = vmatprep.subr.bf16.mxu0 0
    %334 = vmatpush1.bf16.msra.mxu0 0
    %335 = vmatprep.subr.bf16.mxu0 0
    %336 = vmatpush1.bf16.msra.mxu0 0
    %337 = vmatprep.subr.bf16.mxu0 0
    %338 = vmatpush1.bf16.msra.mxu0 0
    %339 = vmatprep.subr.bf16.mxu0 0
    %340 = vmatpush1.bf16.msra.mxu0 0
    %341 = vmatprep.subr.bf16.mxu0 0
    %342 = vmatpush1.bf16.msra.mxu0 0
    %343 = vmatprep.subr.bf16.mxu0 0
    %344 = vmatpush1.bf16.msra.mxu0 0
    %345 = vmatprep.subr.bf16.mxu0 0
    %346 = vmatpush1.bf16.msra.mxu0 0
    %347 = vmatprep.subr.bf16.mxu0 0
    %348 = vmatpush1.bf16.msra.mxu0 0
    %349 = vmatprep.subr.bf16.mxu0 0
    %350 = vmatpush1.bf16.msra.mxu0 0
    %351 = vmatprep.subr.bf16.mxu0 0
    %352 = vmatpush1.bf16.msra.mxu0 0
    %353 = vmatprep.subr.bf16.mxu0 0
    %354 = vmatpush1.bf16.msra.mxu0 0
    %355 = vmatprep.subr.bf16.mxu0 0
    %356 = vmatpush1.bf16.msra.mxu0 0
    %357 = vmatprep.subr.bf16.mxu0 0
    %358 = vmatpush1.bf16.msra.mxu0 0
    %359 = vmatprep.subr.bf16.mxu0 0
    %360 = vmatpush1.bf16.msra.mxu0 0
    %361 = vmatprep.subr.bf16.mxu0 0
    %362 = vmatpush1.bf16.msra.mxu0 0
    %363 = vmatprep.mubr.bf16.mxu0 0
    %364 = vmatmul.mubr.bf16.gmra.mrb[0].mxu0 %v320
    %v365 = vpop.f32.mrb[0].mxu0
    %v366 = vadd.f32 0.0, %v365
    %v367 = vpop.f32.mrb[0].mxu0
    %v368 = vadd.f32 0.0, %v367
    %v369 = vpop.f32.mrb[0].mxu0
    %v370 = vpop.f32.mrb[0].mxu0
    %371 = vdwg.mxu0
    %372 = vmatprep.subr.bf16.mxu0 0
    %373 = vmatpush1.bf16.msra.mxu0 %v329
    %374 = vmatprep.subr.bf16.mxu0 0
    %375 = vmatpush1.bf16.msra.mxu0 0
    %376 = vmatprep.subr.bf16.mxu0 0
    %377 = vmatpush1.bf16.msra.mxu0 0
    %378 = vmatprep.subr.bf16.mxu0 0
    %379 = vmatpush1.bf16.msra.mxu0 0
    %380 = vmatprep.subr.bf16.mxu0 0
    %381 = vmatpush1.bf16.msra.mxu0 0
    %382 = vmatprep.subr.bf16.mxu0 0
    %383 = vmatpush1.bf16.msra.mxu0 0
    %384 = vmatprep.subr.bf16.mxu0 0
    %385 = vmatpush1.bf16.msra.mxu0 0
    %386 = vmatprep.subr.bf16.mxu0 0
    %387 = vmatpush1.bf16.msra.mxu0 0
    %388 = vmatprep.subr.bf16.mxu0 0
    %389 = vmatpush1.bf16.msra.mxu0 0
    %390 = vmatprep.subr.bf16.mxu0 0
    %391 = vmatpush1.bf16.msra.mxu0 0
    %392 = vmatprep.subr.bf16.mxu0 0
    %393 = vmatpush1.bf16.msra.mxu0 0
    %394 = vmatprep.subr.bf16.mxu0 0
    %395 = vmatpush1.bf16.msra.mxu0 0
    %396 = vmatprep.subr.bf16.mxu0 0
    %397 = vmatpush1.bf16.msra.mxu0 0
    %398 = vmatprep.subr.bf16.mxu0 0
    %399 = vmatpush1.bf16.msra.mxu0 0
    %400 = vmatprep.subr.bf16.mxu0 0
    %401 = vmatpush1.bf16.msra.mxu0 0
    %402 = vmatprep.subr.bf16.mxu0 0
    %403 = vmatpush1.bf16.msra.mxu0 0
    %404 = vmatprep.mubr.bf16.mxu0 0
    %405 = vmatmul.mubr.bf16.gmra.mrb[0].mxu0 %v320
    %v406 = vpop.f32.mrb[0].mxu0
    %v407 = vadd.f32 0.0, %v406
    %v408 = vpop.f32.mrb[0].mxu0
    %v409 = vpop.f32.mrb[0].mxu0
    %v410 = vpop.f32.mrb[0].mxu0
    %411 = vdwg.mxu0
    %v412 = vadd.f32 %v251, %v366
    %v413 = vadd.f32 %v253, %v368
    %v414 = vadd.f32 %v292, %v407
    %v415 = vld [vmem:[#allocation2] sm:$0xff]
    %v416 = vld [vmem:[#allocation2 + $0x8] sm:$0xf]
    %v418 = vcombine.high %v415, %v415
    %v420 = vpack.c.bf16 %v415, %v415
    %v421 = vpack.c.bf16 %v418, %v418
    %v422 = vpack.c.bf16 %v416, %v416
    %s423 = scalar_lea.vmem %s1, 6
    %v424 = vld [vmem:[%s423] sm:$0x3]
    %428 = vrot.lane.b32.xlu0 %v420, 110
    %v429 = vpop.permute.xlu0 %428
    %430 = vrot.lane.b32.xlu0 %v421, 110
    %v431 = vpop.permute.xlu0 %430
    %432 = vrot.lane.b32.xlu0 %v422, 110
    %v433 = vpop.permute.xlu0 %432
    %vm434 = vcmask 900096
    %v435 = vsel %vm434, %v429, %v431
    %v436 = vsel %vm434, %v431, %v433
    %v438 = vsel %vm109, %v424, 0
    %v441 = vsel %vm113, %v435, 0
    %v444 = vsel %vm113, %v436, 0
    %v447 = vsel %vm113, %v433, 0
    %449 = vmatprep.subr.bf16.mxu0 %v444
    %450 = vmatpush1.bf16.msra.mxu0 %v441
    %451 = vmatprep.subr.bf16.mxu0 0
    %452 = vmatpush1.bf16.msra.mxu0 0
    %453 = vmatprep.subr.bf16.mxu0 0
    %454 = vmatpush1.bf16.msra.mxu0 0
    %455 = vmatprep.subr.bf16.mxu0 0
    %456 = vmatpush1.bf16.msra.mxu0 0
    %457 = vmatprep.subr.bf16.mxu0 0
    %458 = vmatpush1.bf16.msra.mxu0 0
    %459 = vmatprep.subr.bf16.mxu0 0
    %460 = vmatpush1.bf16.msra.mxu0 0
    %461 = vmatprep.subr.bf16.mxu0 0
    %462 = vmatpush1.bf16.msra.mxu0 0
    %463 = vmatprep.subr.bf16.mxu0 0
    %464 = vmatpush1.bf16.msra.mxu0 0
    %465 = vmatprep.subr.bf16.mxu0 0
    %466 = vmatpush1.bf16.msra.mxu0 0
    %467 = vmatprep.subr.bf16.mxu0 0
    %468 = vmatpush1.bf16.msra.mxu0 0
    %469 = vmatprep.subr.bf16.mxu0 0
    %470 = vmatpush1.bf16.msra.mxu0 0
    %471 = vmatprep.subr.bf16.mxu0 0
    %472 = vmatpush1.bf16.msra.mxu0 0
    %473 = vmatprep.subr.bf16.mxu0 0
    %474 = vmatpush1.bf16.msra.mxu0 0
    %475 = vmatprep.subr.bf16.mxu0 0
    %476 = vmatpush1.bf16.msra.mxu0 0
    %477 = vmatprep.subr.bf16.mxu0 0
    %478 = vmatpush1.bf16.msra.mxu0 0
    %479 = vmatprep.subr.bf16.mxu0 0
    %480 = vmatpush1.bf16.msra.mxu0 0
    %481 = vmatprep.mubr.bf16.mxu0 0
    %482 = vmatmul.mubr.bf16.gmra.mrb[0].mxu0 %v438
    %v483 = vpop.f32.mrb[0].mxu0
    %v484 = vadd.f32 0.0, %v483
    %v485 = vpop.f32.mrb[0].mxu0
    %v486 = vadd.f32 0.0, %v485
    %v487 = vpop.f32.mrb[0].mxu0
    %v488 = vpop.f32.mrb[0].mxu0
    %489 = vdwg.mxu0
    %490 = vmatprep.subr.bf16.mxu0 0
    %491 = vmatpush1.bf16.msra.mxu0 %v447
    %492 = vmatprep.subr.bf16.mxu0 0
    %493 = vmatpush1.bf16.msra.mxu0 0
    %494 = vmatprep.subr.bf16.mxu0 0
    %495 = vmatpush1.bf16.msra.mxu0 0
    %496 = vmatprep.subr.bf16.mxu0 0
    %497 = vmatpush1.bf16.msra.mxu0 0
    %498 = vmatprep.subr.bf16.mxu0 0
    %499 = vmatpush1.bf16.msra.mxu0 0
    %500 = vmatprep.subr.bf16.mxu0 0
    %501 = vmatpush1.bf16.msra.mxu0 0
    %502 = vmatprep.subr.bf16.mxu0 0
    %503 = vmatpush1.bf16.msra.mxu0 0
    %504 = vmatprep.subr.bf16.mxu0 0
    %505 = vmatpush1.bf16.msra.mxu0 0
    %506 = vmatprep.subr.bf16.mxu0 0
    %507 = vmatpush1.bf16.msra.mxu0 0
    %508 = vmatprep.subr.bf16.mxu0 0
    %509 = vmatpush1.bf16.msra.mxu0 0
    %510 = vmatprep.subr.bf16.mxu0 0
    %511 = vmatpush1.bf16.msra.mxu0 0
    %512 = vmatprep.subr.bf16.mxu0 0
    %513 = vmatpush1.bf16.msra.mxu0 0
    %514 = vmatprep.subr.bf16.mxu0 0
    %515 = vmatpush1.bf16.msra.mxu0 0
    %516 = vmatprep.subr.bf16.mxu0 0
    %517 = vmatpush1.bf16.msra.mxu0 0
    %518 = vmatprep.subr.bf16.mxu0 0
    %519 = vmatpush1.bf16.msra.mxu0 0
    %520 = vmatprep.subr.bf16.mxu0 0
    %521 = vmatpush1.bf16.msra.mxu0 0
    %522 = vmatprep.mubr.bf16.mxu0 0
    %523 = vmatmul.mubr.bf16.gmra.mrb[0].mxu0 %v438
    %v524 = vpop.f32.mrb[0].mxu0
    %v525 = vadd.f32 0.0, %v524
    %v526 = vpop.f32.mrb[0].mxu0
    %v527 = vpop.f32.mrb[0].mxu0
    %v528 = vpop.f32.mrb[0].mxu0
    %529 = vdwg.mxu0
    %v530 = vadd.f32 %v412, %v484
    %v531 = vadd.f32 %v413, %v486
    %v532 = vadd.f32 %v414, %v525
    %v533 = vld [vmem:[#allocation2] sm:$0xff]
    %v534 = vld [vmem:[#allocation2 + $0x8] sm:$0xf]
    %v536 = vcombine.high %v533, %v533
    %v538 = vpack.c.bf16 %v533, %v533
    %v539 = vpack.c.bf16 %v536, %v536
    %v540 = vpack.c.bf16 %v534, %v534
    %s541 = scalar_lea.vmem %s1, 8
    %v542 = vld [vmem:[%s541] sm:$0x3]
    %546 = vrot.lane.b32.xlu0 %v538, 109
    %v547 = vpop.permute.xlu0 %546
    %548 = vrot.lane.b32.xlu0 %v539, 109
    %v549 = vpop.permute.xlu0 %548
    %550 = vrot.lane.b32.xlu0 %v540, 109
    %v551 = vpop.permute.xlu0 %550
    %vm552 = vcmask 891904
    %v553 = vsel %vm552, %v547, %v549
    %v554 = vsel %vm552, %v549, %v551
    %v556 = vsel %vm109, %v542, 0
    %v559 = vsel %vm113, %v553, 0
    %v562 = vsel %vm113, %v554, 0
    %v565 = vsel %vm113, %v551, 0
    %567 = vmatprep.subr.bf16.mxu0 %v562
    %568 = vmatpush1.bf16.msra.mxu0 %v559
    %569 = vmatprep.subr.bf16.mxu0 0
    %570 = vmatpush1.bf16.msra.mxu0 0
    %571 = vmatprep.subr.bf16.mxu0 0
    %572 = vmatpush1.bf16.msra.mxu0 0
    %573 = vmatprep.subr.bf16.mxu0 0
    %574 = vmatpush1.bf16.msra.mxu0 0
    %575 = vmatprep.subr.bf16.mxu0 0
    %576 = vmatpush1.bf16.msra.mxu0 0
    %577 = vmatprep.subr.bf16.mxu0 0
    %578 = vmatpush1.bf16.msra.mxu0 0
    %579 = vmatprep.subr.bf16.mxu0 0
    %580 = vmatpush1.bf16.msra.mxu0 0
    %581 = vmatprep.subr.bf16.mxu0 0
    %582 = vmatpush1.bf16.msra.mxu0 0
    %583 = vmatprep.subr.bf16.mxu0 0
    %584 = vmatpush1.bf16.msra.mxu0 0
    %585 = vmatprep.subr.bf16.mxu0 0
    %586 = vmatpush1.bf16.msra.mxu0 0
    %587 = vmatprep.subr.bf16.mxu0 0
    %588 = vmatpush1.bf16.msra.mxu0 0
    %589 = vmatprep.subr.bf16.mxu0 0
    %590 = vmatpush1.bf16.msra.mxu0 0
    %591 = vmatprep.subr.bf16.mxu0 0
    %592 = vmatpush1.bf16.msra.mxu0 0
    %593 = vmatprep.subr.bf16.mxu0 0
    %594 = vmatpush1.bf16.msra.mxu0 0
    %595 = vmatprep.subr.bf16.mxu0 0
    %596 = vmatpush1.bf16.msra.mxu0 0
    %597 = vmatprep.subr.bf16.mxu0 0
    %598 = vmatpush1.bf16.msra.mxu0 0
    %599 = vmatprep.mubr.bf16.mxu0 0
    %600 = vmatmul.mubr.bf16.gmra.mrb[0].mxu0 %v556
    %v601 = vpop.f32.mrb[0].mxu0
    %v602 = vadd.f32 0.0, %v601
    %v603 = vpop.f32.mrb[0].mxu0
    %v604 = vadd.f32 0.0, %v603
    %v605 = vpop.f32.mrb[0].mxu0
    %v606 = vpop.f32.mrb[0].mxu0
    %607 = vdwg.mxu0
    %608 = vmatprep.subr.bf16.mxu0 0
    %609 = vmatpush1.bf16.msra.mxu0 %v565
    %610 = vmatprep.subr.bf16.mxu0 0
    %611 = vmatpush1.bf16.msra.mxu0 0
    %612 = vmatprep.subr.bf16.mxu0 0
    %613 = vmatpush1.bf16.msra.mxu0 0
    %614 = vmatprep.subr.bf16.mxu0 0
    %615 = vmatpush1.bf16.msra.mxu0 0
    %616 = vmatprep.subr.bf16.mxu0 0
    %617 = vmatpush1.bf16.msra.mxu0 0
    %618 = vmatprep.subr.bf16.mxu0 0
    %619 = vmatpush1.bf16.msra.mxu0 0
    %620 = vmatprep.subr.bf16.mxu0 0
    %621 = vmatpush1.bf16.msra.mxu0 0
    %622 = vmatprep.subr.bf16.mxu0 0
    %623 = vmatpush1.bf16.msra.mxu0 0
    %624 = vmatprep.subr.bf16.mxu0 0
    %625 = vmatpush1.bf16.msra.mxu0 0
    %626 = vmatprep.subr.bf16.mxu0 0
    %627 = vmatpush1.bf16.msra.mxu0 0
    %628 = vmatprep.subr.bf16.mxu0 0
    %629 = vmatpush1.bf16.msra.mxu0 0
    %630 = vmatprep.subr.bf16.mxu0 0
    %631 = vmatpush1.bf16.msra.mxu0 0
    %632 = vmatprep.subr.bf16.mxu0 0
    %633 = vmatpush1.bf16.msra.mxu0 0
    %634 = vmatprep.subr.bf16.mxu0 0
    %635 = vmatpush1.bf16.msra.mxu0 0
    %636 = vmatprep.subr.bf16.mxu0 0
    %637 = vmatpush1.bf16.msra.mxu0 0
    %638 = vmatprep.subr.bf16.mxu0 0
    %639 = vmatpush1.bf16.msra.mxu0 0
    %640 = vmatprep.mubr.bf16.mxu0 0
    %641 = vmatmul.mubr.bf16.gmra.mrb[0].mxu0 %v556
    %v642 = vpop.f32.mrb[0].mxu0
    %v643 = vadd.f32 0.0, %v642
    %v644 = vpop.f32.mrb[0].mxu0
    %v645 = vpop.f32.mrb[0].mxu0
    %v646 = vpop.f32.mrb[0].mxu0
    %647 = vdwg.mxu0
    %v648 = vadd.f32 %v530, %v602
    %v649 = vadd.f32 %v531, %v604
    %v650 = vadd.f32 %v532, %v643
    %v651 = vld [vmem:[#allocation2] sm:$0xff]
    %v652 = vld [vmem:[#allocation2 + $0x8] sm:$0xf]
    %v654 = vcombine.high %v651, %v651
    %v656 = vpack.c.bf16 %v651, %v651
    %v657 = vpack.c.bf16 %v654, %v654
    %v658 = vpack.c.bf16 %v652, %v652
    %s659 = scalar_lea.vmem %s1, 10
    %v660 = vld [vmem:[%s659] sm:$0x3]
    %664 = vrot.lane.b32.xlu0 %v656, 108
    %v665 = vpop.permute.xlu0 %664
    %666 = vrot.lane.b32.xlu0 %v657, 108
    %v667 = vpop.permute.xlu0 %666
    %668 = vrot.lane.b32.xlu0 %v658, 108
    %v669 = vpop.permute.xlu0 %668
    %vm670 = vcmask 883712
    %v671 = vsel %vm670, %v665, %v667
    %v672 = vsel %vm670, %v667, %v669
    %v674 = vsel %vm109, %v660, 0
    %v677 = vsel %vm113, %v671, 0
    %v680 = vsel %vm113, %v672, 0
    %v683 = vsel %vm113, %v669, 0
    %685 = vmatprep.subr.bf16.mxu0 %v680
    %686 = vmatpush1.bf16.msra.mxu0 %v677
    %687 = vmatprep.subr.bf16.mxu0 0
    %688 = vmatpush1.bf16.msra.mxu0 0
    %689 = vmatprep.subr.bf16.mxu0 0
    %690 = vmatpush1.bf16.msra.mxu0 0
    %691 = vmatprep.subr.bf16.mxu0 0
    %692 = vmatpush1.bf16.msra.mxu0 0
    %693 = vmatprep.subr.bf16.mxu0 0
    %694 = vmatpush1.bf16.msra.mxu0 0
    %695 = vmatprep.subr.bf16.mxu0 0
    %696 = vmatpush1.bf16.msra.mxu0 0
    %697 = vmatprep.subr.bf16.mxu0 0
    %698 = vmatpush1.bf16.msra.mxu0 0
    %699 = vmatprep.subr.bf16.mxu0 0
    %700 = vmatpush1.bf16.msra.mxu0 0
    %701 = vmatprep.subr.bf16.mxu0 0
    %702 = vmatpush1.bf16.msra.mxu0 0
    %703 = vmatprep.subr.bf16.mxu0 0
    %704 = vmatpush1.bf16.msra.mxu0 0
    %705 = vmatprep.subr.bf16.mxu0 0
    %706 = vmatpush1.bf16.msra.mxu0 0
    %707 = vmatprep.subr.bf16.mxu0 0
    %708 = vmatpush1.bf16.msra.mxu0 0
    %709 = vmatprep.subr.bf16.mxu0 0
    %710 = vmatpush1.bf16.msra.mxu0 0
    %711 = vmatprep.subr.bf16.mxu0 0
    %712 = vmatpush1.bf16.msra.mxu0 0
    %713 = vmatprep.subr.bf16.mxu0 0
    %714 = vmatpush1.bf16.msra.mxu0 0
    %715 = vmatprep.subr.bf16.mxu0 0
    %716 = vmatpush1.bf16.msra.mxu0 0
    %717 = vmatprep.mubr.bf16.mxu0 0
    %718 = vmatmul.mubr.bf16.gmra.mrb[0].mxu0 %v674
    %v719 = vpop.f32.mrb[0].mxu0
    %v720 = vadd.f32 0.0, %v719
    %v721 = vpop.f32.mrb[0].mxu0
    %v722 = vadd.f32 0.0, %v721
    %v723 = vpop.f32.mrb[0].mxu0
    %v724 = vpop.f32.mrb[0].mxu0
    %725 = vdwg.mxu0
    %726 = vmatprep.subr.bf16.mxu0 0
    %727 = vmatpush1.bf16.msra.mxu0 %v683
    %728 = vmatprep.subr.bf16.mxu0 0
    %729 = vmatpush1.bf16.msra.mxu0 0
    %730 = vmatprep.subr.bf16.mxu0 0
    %731 = vmatpush1.bf16.msra.mxu0 0
    %732 = vmatprep.subr.bf16.mxu0 0
    %733 = vmatpush1.bf16.msra.mxu0 0
    %734 = vmatprep.subr.bf16.mxu0 0
    %735 = vmatpush1.bf16.msra.mxu0 0
    %736 = vmatprep.subr.bf16.mxu0 0
    %737 = vmatpush1.bf16.msra.mxu0 0
    %738 = vmatprep.subr.bf16.mxu0 0
    %739 = vmatpush1.bf16.msra.mxu0 0
    %740 = vmatprep.subr.bf16.mxu0 0
    %741 = vmatpush1.bf16.msra.mxu0 0
    %742 = vmatprep.subr.bf16.mxu0 0
    %743 = vmatpush1.bf16.msra.mxu0 0
    %744 = vmatprep.subr.bf16.mxu0 0
    %745 = vmatpush1.bf16.msra.mxu0 0
    %746 = vmatprep.subr.bf16.mxu0 0
    %747 = vmatpush1.bf16.msra.mxu0 0
    %748 = vmatprep.subr.bf16.mxu0 0
    %749 = vmatpush1.bf16.msra.mxu0 0
    %750 = vmatprep.subr.bf16.mxu0 0
    %751 = vmatpush1.bf16.msra.mxu0 0
    %752 = vmatprep.subr.bf16.mxu0 0
    %753 = vmatpush1.bf16.msra.mxu0 0
    %754 = vmatprep.subr.bf16.mxu0 0
    %755 = vmatpush1.bf16.msra.mxu0 0
    %756 = vmatprep.subr.bf16.mxu0 0
    %757 = vmatpush1.bf16.msra.mxu0 0
    %758 = vmatprep.mubr.bf16.mxu0 0
    %759 = vmatmul.mubr.bf16.gmra.mrb[0].mxu0 %v674
    %v760 = vpop.f32.mrb[0].mxu0
    %v761 = vadd.f32 0.0, %v760
    %v762 = vpop.f32.mrb[0].mxu0
    %v763 = vpop.f32.mrb[0].mxu0
    %v764 = vpop.f32.mrb[0].mxu0
    %765 = vdwg.mxu0
    %v766 = vadd.f32 %v648, %v720
    %v767 = vadd.f32 %v649, %v722
    %v768 = vadd.f32 %v650, %v761
    %v769 = vld [vmem:[#allocation2] sm:$0xff]
    %v770 = vld [vmem:[#allocation2 + $0x8] sm:$0xf]
    %v772 = vcombine.high %v769, %v769
    %v774 = vpack.c.bf16 %v769, %v769
    %v775 = vpack.c.bf16 %v772, %v772
    %v776 = vpack.c.bf16 %v770, %v770
    %s777 = scalar_lea.vmem %s1, 12
    %v778 = vld [vmem:[%s777] sm:$0x3]
    %782 = vrot.lane.b32.xlu0 %v774, 92
    %v783 = vpop.permute.xlu0 %782
    %784 = vrot.lane.b32.xlu0 %v775, 92
    %v785 = vpop.permute.xlu0 %784
    %786 = vrot.lane.b32.xlu0 %v776, 92
    %v787 = vpop.permute.xlu0 %786
    %vm788 = vcmask 752640
    %v789 = vsel %vm788, %v783, %v785
    %v790 = vsel %vm788, %v785, %v787
    %v792 = vsel %vm109, %v778, 0
    %v795 = vsel %vm113, %v789, 0
    %v798 = vsel %vm113, %v790, 0
    %v801 = vsel %vm113, %v787, 0
    %803 = vmatprep.subr.bf16.mxu0 %v798
    %804 = vmatpush1.bf16.msra.mxu0 %v795
    %805 = vmatprep.subr.bf16.mxu0 0
    %806 = vmatpush1.bf16.msra.mxu0 0
    %807 = vmatprep.subr.bf16.mxu0 0
    %808 = vmatpush1.bf16.msra.mxu0 0
    %809 = vmatprep.subr.bf16.mxu0 0
    %810 = vmatpush1.bf16.msra.mxu0 0
    %811 = vmatprep.subr.bf16.mxu0 0
    %812 = vmatpush1.bf16.msra.mxu0 0
    %813 = vmatprep.subr.bf16.mxu0 0
    %814 = vmatpush1.bf16.msra.mxu0 0
    %815 = vmatprep.subr.bf16.mxu0 0
    %816 = vmatpush1.bf16.msra.mxu0 0
    %817 = vmatprep.subr.bf16.mxu0 0
    %818 = vmatpush1.bf16.msra.mxu0 0
    %819 = vmatprep.subr.bf16.mxu0 0
    %820 = vmatpush1.bf16.msra.mxu0 0
    %821 = vmatprep.subr.bf16.mxu0 0
    %822 = vmatpush1.bf16.msra.mxu0 0
    %823 = vmatprep.subr.bf16.mxu0 0
    %824 = vmatpush1.bf16.msra.mxu0 0
    %825 = vmatprep.subr.bf16.mxu0 0
    %826 = vmatpush1.bf16.msra.mxu0 0
    %827 = vmatprep.subr.bf16.mxu0 0
    %828 = vmatpush1.bf16.msra.mxu0 0
    %829 = vmatprep.subr.bf16.mxu0 0
    %830 = vmatpush1.bf16.msra.mxu0 0
    %831 = vmatprep.subr.bf16.mxu0 0
    %832 = vmatpush1.bf16.msra.mxu0 0
    %833 = vmatprep.subr.bf16.mxu0 0
    %834 = vmatpush1.bf16.msra.mxu0 0
    %835 = vmatprep.mubr.bf16.mxu0 0
    %836 = vmatmul.mubr.bf16.gmra.mrb[0].mxu0 %v792
    %v837 = vpop.f32.mrb[0].mxu0
    %v838 = vadd.f32 0.0, %v837
    %v839 = vpop.f32.mrb[0].mxu0
    %v840 = vadd.f32 0.0, %v839
    %v841 = vpop.f32.mrb[0].mxu0
    %v842 = vpop.f32.mrb[0].mxu0
    %843 = vdwg.mxu0
    %844 = vmatprep.subr.bf16.mxu0 0
    %845 = vmatpush1.bf16.msra.mxu0 %v801
    %846 = vmatprep.subr.bf16.mxu0 0
    %847 = vmatpush1.bf16.msra.mxu0 0
    %848 = vmatprep.subr.bf16.mxu0 0
    %849 = vmatpush1.bf16.msra.mxu0 0
    %850 = vmatprep.subr.bf16.mxu0 0
    %851 = vmatpush1.bf16.msra.mxu0 0
    %852 = vmatprep.subr.bf16.mxu0 0
    %853 = vmatpush1.bf16.msra.mxu0 0
    %854 = vmatprep.subr.bf16.mxu0 0
    %855 = vmatpush1.bf16.msra.mxu0 0
    %856 = vmatprep.subr.bf16.mxu0 0
    %857 = vmatpush1.bf16.msra.mxu0 0
    %858 = vmatprep.subr.bf16.mxu0 0
    %859 = vmatpush1.bf16.msra.mxu0 0
    %860 = vmatprep.subr.bf16.mxu0 0
    %861 = vmatpush1.bf16.msra.mxu0 0
    %862 = vmatprep.subr.bf16.mxu0 0
    %863 = vmatpush1.bf16.msra.mxu0 0
    %864 = vmatprep.subr.bf16.mxu0 0
    %865 = vmatpush1.bf16.msra.mxu0 0
    %866 = vmatprep.subr.bf16.mxu0 0
    %867 = vmatpush1.bf16.msra.mxu0 0
    %868 = vmatprep.subr.bf16.mxu0 0
    %869 = vmatpush1.bf16.msra.mxu0 0
    %870 = vmatprep.subr.bf16.mxu0 0
    %871 = vmatpush1.bf16.msra.mxu0 0
    %872 = vmatprep.subr.bf16.mxu0 0
    %873 = vmatpush1.bf16.msra.mxu0 0
    %874 = vmatprep.subr.bf16.mxu0 0
    %875 = vmatpush1.bf16.msra.mxu0 0
    %876 = vmatprep.mubr.bf16.mxu0 0
    %877 = vmatmul.mubr.bf16.gmra.mrb[0].mxu0 %v792
    %v878 = vpop.f32.mrb[0].mxu0
    %v879 = vadd.f32 0.0, %v878
    %v880 = vpop.f32.mrb[0].mxu0
    %v881 = vpop.f32.mrb[0].mxu0
    %v882 = vpop.f32.mrb[0].mxu0
    %883 = vdwg.mxu0
    %v884 = vadd.f32 %v766, %v838
    %v885 = vadd.f32 %v767, %v840
    %v886 = vadd.f32 %v768, %v879
    %v887 = vld [vmem:[#allocation2] sm:$0xff]
    %v888 = vld [vmem:[#allocation2 + $0x8] sm:$0xf]
    %v890 = vcombine.high %v887, %v887
    %v892 = vpack.c.bf16 %v887, %v887
    %v893 = vpack.c.bf16 %v890, %v890
    %v894 = vpack.c.bf16 %v888, %v888
    %s895 = scalar_lea.vmem %s1, 14
    %v896 = vld [vmem:[%s895] sm:$0x3]
    %900 = vrot.lane.b32.xlu0 %v892, 91
    %v901 = vpop.permute.xlu0 %900
    %902 = vrot.lane.b32.xlu0 %v893, 91
    %v903 = vpop.permute.xlu0 %902
    %904 = vrot.lane.b32.xlu0 %v894, 91
    %v905 = vpop.permute.xlu0 %904
    %vm906 = vcmask 744448
    %v907 = vsel %vm906, %v901, %v903
    %v908 = vsel %vm906, %v903, %v905
    %v910 = vsel %vm109, %v896, 0
    %v913 = vsel %vm113, %v907, 0
    %v916 = vsel %vm113, %v908, 0
    %v919 = vsel %vm113, %v905, 0
    %921 = vmatprep.subr.bf16.mxu0 %v916
    %922 = vmatpush1.bf16.msra.mxu0 %v913
    %923 = vmatprep.subr.bf16.mxu0 0
    %924 = vmatpush1.bf16.msra.mxu0 0
    %925 = vmatprep.subr.bf16.mxu0 0
    %926 = vmatpush1.bf16.msra.mxu0 0
    %927 = vmatprep.subr.bf16.mxu0 0
    %928 = vmatpush1.bf16.msra.mxu0 0
    %929 = vmatprep.subr.bf16.mxu0 0
    %930 = vmatpush1.bf16.msra.mxu0 0
    %931 = vmatprep.subr.bf16.mxu0 0
    %932 = vmatpush1.bf16.msra.mxu0 0
    %933 = vmatprep.subr.bf16.mxu0 0
    %934 = vmatpush1.bf16.msra.mxu0 0
    %935 = vmatprep.subr.bf16.mxu0 0
    %936 = vmatpush1.bf16.msra.mxu0 0
    %937 = vmatprep.subr.bf16.mxu0 0
    %938 = vmatpush1.bf16.msra.mxu0 0
    %939 = vmatprep.subr.bf16.mxu0 0
    %940 = vmatpush1.bf16.msra.mxu0 0
    %941 = vmatprep.subr.bf16.mxu0 0
    %942 = vmatpush1.bf16.msra.mxu0 0
    %943 = vmatprep.subr.bf16.mxu0 0
    %944 = vmatpush1.bf16.msra.mxu0 0
    %945 = vmatprep.subr.bf16.mxu0 0
    %946 = vmatpush1.bf16.msra.mxu0 0
    %947 = vmatprep.subr.bf16.mxu0 0
    %948 = vmatpush1.bf16.msra.mxu0 0
    %949 = vmatprep.subr.bf16.mxu0 0
    %950 = vmatpush1.bf16.msra.mxu0 0
    %951 = vmatprep.subr.bf16.mxu0 0
    %952 = vmatpush1.bf16.msra.mxu0 0
    %953 = vmatprep.mubr.bf16.mxu0 0
    %954 = vmatmul.mubr.bf16.gmra.mrb[0].mxu0 %v910
    %v955 = vpop.f32.mrb[0].mxu0
    %v956 = vadd.f32 0.0, %v955
    %v957 = vpop.f32.mrb[0].mxu0
    %v958 = vadd.f32 0.0, %v957
    %v959 = vpop.f32.mrb[0].mxu0
    %v960 = vpop.f32.mrb[0].mxu0
    %961 = vdwg.mxu0
    %962 = vmatprep.subr.bf16.mxu0 0
    %963 = vmatpush1.bf16.msra.mxu0 %v919
    %964 = vmatprep.subr.bf16.mxu0 0
    %965 = vmatpush1.bf16.msra.mxu0 0
    %966 = vmatprep.subr.bf16.mxu0 0
    %967 = vmatpush1.bf16.msra.mxu0 0
    %968 = vmatprep.subr.bf16.mxu0 0
    %969 = vmatpush1.bf16.msra.mxu0 0
    %970 = vmatprep.subr.bf16.mxu0 0
    %971 = vmatpush1.bf16.msra.mxu0 0
    %972 = vmatprep.subr.bf16.mxu0 0
    %973 = vmatpush1.bf16.msra.mxu0 0
    %974 = vmatprep.subr.bf16.mxu0 0
    %975 = vmatpush1.bf16.msra.mxu0 0
    %976 = vmatprep.subr.bf16.mxu0 0
    %977 = vmatpush1.bf16.msra.mxu0 0
    %978 = vmatprep.subr.bf16.mxu0 0
    %979 = vmatpush1.bf16.msra.mxu0 0
    %980 = vmatprep.subr.bf16.mxu0 0
    %981 = vmatpush1.bf16.msra.mxu0 0
    %982 = vmatprep.subr.bf16.mxu0 0
    %983 = vmatpush1.bf16.msra.mxu0 0
    %984 = vmatprep.subr.bf16.mxu0 0
    %985 = vmatpush1.bf16.msra.mxu0 0
    %986 = vmatprep.subr.bf16.mxu0 0
    %987 = vmatpush1.bf16.msra.mxu0 0
    %988 = vmatprep.subr.bf16.mxu0 0
    %989 = vmatpush1.bf16.msra.mxu0 0
    %990 = vmatprep.subr.bf16.mxu0 0
    %991 = vmatpush1.bf16.msra.mxu0 0
    %992 = vmatprep.subr.bf16.mxu0 0
    %993 = vmatpush1.bf16.msra.mxu0 0
    %994 = vmatprep.mubr.bf16.mxu0 0
    %995 = vmatmul.mubr.bf16.gmra.mrb[0].mxu0 %v910
    %v996 = vpop.f32.mrb[0].mxu0
    %v997 = vadd.f32 0.0, %v996
    %v998 = vpop.f32.mrb[0].mxu0
    %v999 = vpop.f32.mrb[0].mxu0
    %v1000 = vpop.f32.mrb[0].mxu0
    %1001 = vdwg.mxu0
    %v1002 = vadd.f32 %v884, %v956
    %v1003 = vadd.f32 %v885, %v958
    %v1004 = vadd.f32 %v886, %v997
    %v1005 = vld [vmem:[#allocation2] sm:$0xff]
    %v1006 = vld [vmem:[#allocation2 + $0x8] sm:$0xf]
    %v1008 = vcombine.high %v1005, %v1005
    %v1010 = vpack.c.bf16 %v1005, %v1005
    %v1011 = vpack.c.bf16 %v1008, %v1008
    %v1012 = vpack.c.bf16 %v1006, %v1006
    %s1013 = scalar_lea.vmem %s1, 16
    %v1014 = vld [vmem:[%s1013] sm:$0x3]
    %1018 = vrot.lane.b32.xlu0 %v1010, 90
    %v1019 = vpop.permute.xlu0 %1018
    %1020 = vrot.lane.b32.xlu0 %v1011, 90
    %v1021 = vpop.permute.xlu0 %1020
    %1022 = vrot.lane.b32.xlu0 %v1012, 90
    %v1023 = vpop.permute.xlu0 %1022
    %vm1024 = vcmask 736256
    %v1025 = vsel %vm1024, %v1019, %v1021
    %v1026 = vsel %vm1024, %v1021, %v1023
    %v1028 = vsel %vm109, %v1014, 0
    %v1031 = vsel %vm113, %v1025, 0
    %v1034 = vsel %vm113, %v1026, 0
    %v1037 = vsel %vm113, %v1023, 0
    %1039 = vmatprep.subr.bf16.mxu0 %v1034
    %1040 = vmatpush1.bf16.msra.mxu0 %v1031
    %1041 = vmatprep.subr.bf16.mxu0 0
    %1042 = vmatpush1.bf16.msra.mxu0 0
    %1043 = vmatprep.subr.bf16.mxu0 0
    %1044 = vmatpush1.bf16.msra.mxu0 0
    %1045 = vmatprep.subr.bf16.mxu0 0
    %1046 = vmatpush1.bf16.msra.mxu0 0
    %1047 = vmatprep.subr.bf16.mxu0 0
    %1048 = vmatpush1.bf16.msra.mxu0 0
    %1049 = vmatprep.subr.bf16.mxu0 0
    %1050 = vmatpush1.bf16.msra.mxu0 0
    %1051 = vmatprep.subr.bf16.mxu0 0
    %1052 = vmatpush1.bf16.msra.mxu0 0
    %1053 = vmatprep.subr.bf16.mxu0 0
    %1054 = vmatpush1.bf16.msra.mxu0 0
    %1055 = vmatprep.subr.bf16.mxu0 0
    %1056 = vmatpush1.bf16.msra.mxu0 0
    %1057 = vmatprep.subr.bf16.mxu0 0
    %1058 = vmatpush1.bf16.msra.mxu0 0
    %1059 = vmatprep.subr.bf16.mxu0 0
    %1060 = vmatpush1.bf16.msra.mxu0 0
    %1061 = vmatprep.subr.bf16.mxu0 0
    %1062 = vmatpush1.bf16.msra.mxu0 0
    %1063 = vmatprep.subr.bf16.mxu0 0
    %1064 = vmatpush1.bf16.msra.mxu0 0
    %1065 = vmatprep.subr.bf16.mxu0 0
    %1066 = vmatpush1.bf16.msra.mxu0 0
    %1067 = vmatprep.subr.bf16.mxu0 0
    %1068 = vmatpush1.bf16.msra.mxu0 0
    %1069 = vmatprep.subr.bf16.mxu0 0
    %1070 = vmatpush1.bf16.msra.mxu0 0
    %1071 = vmatprep.mubr.bf16.mxu0 0
    %1072 = vmatmul.mubr.bf16.gmra.mrb[0].mxu0 %v1028
    %v1073 = vpop.f32.mrb[0].mxu0
    %v1074 = vadd.f32 0.0, %v1073
    %v1075 = vpop.f32.mrb[0].mxu0
    %v1076 = vadd.f32 0.0, %v1075
    %v1077 = vpop.f32.mrb[0].mxu0
    %v1078 = vpop.f32.mrb[0].mxu0
    %1079 = vdwg.mxu0
    %1080 = vmatprep.subr.bf16.mxu0 0
    %1081 = vmatpush1.bf16.msra.mxu0 %v1037
    %1082 = vmatprep.subr.bf16.mxu0 0
    %1083 = vmatpush1.bf16.msra.mxu0 0
    %1084 = vmatprep.subr.bf16.mxu0 0
    %1085 = vmatpush1.bf16.msra.mxu0 0
    %1086 = vmatprep.subr.bf16.mxu0 0
    %1087 = vmatpush1.bf16.msra.mxu0 0
    %1088 = vmatprep.subr.bf16.mxu0 0
    %1089 = vmatpush1.bf16.msra.mxu0 0
    %1090 = vmatprep.subr.bf16.mxu0 0
    %1091 = vmatpush1.bf16.msra.mxu0 0
    %1092 = vmatprep.subr.bf16.mxu0 0
    %1093 = vmatpush1.bf16.msra.mxu0 0
    %1094 = vmatprep.subr.bf16.mxu0 0
    %1095 = vmatpush1.bf16.msra.mxu0 0
    %1096 = vmatprep.subr.bf16.mxu0 0
    %1097 = vmatpush1.bf16.msra.mxu0 0
    %1098 = vmatprep.subr.bf16.mxu0 0
    %1099 = vmatpush1.bf16.msra.mxu0 0
    %1100 = vmatprep.subr.bf16.mxu0 0
    %1101 = vmatpush1.bf16.msra.mxu0 0
    %1102 = vmatprep.subr.bf16.mxu0 0
    %1103 = vmatpush1.bf16.msra.mxu0 0
    %1104 = vmatprep.subr.bf16.mxu0 0
    %1105 = vmatpush1.bf16.msra.mxu0 0
    %1106 = vmatprep.subr.bf16.mxu0 0
    %1107 = vmatpush1.bf16.msra.mxu0 0
    %1108 = vmatprep.subr.bf16.mxu0 0
    %1109 = vmatpush1.bf16.msra.mxu0 0
    %1110 = vmatprep.subr.bf16.mxu0 0
    %1111 = vmatpush1.bf16.msra.mxu0 0
    %1112 = vmatprep.mubr.bf16.mxu0 0
    %1113 = vmatmul.mubr.bf16.gmra.mrb[0].mxu0 %v1028
    %v1114 = vpop.f32.mrb[0].mxu0
    %v1115 = vadd.f32 0.0, %v1114
    %v1116 = vpop.f32.mrb[0].mxu0
    %v1117 = vpop.f32.mrb[0].mxu0
    %v1118 = vpop.f32.mrb[0].mxu0
    %1119 = vdwg.mxu0
    %v1120 = vadd.f32 %v1002, %v1074
    %v1121 = vadd.f32 %v1003, %v1076
    %v1122 = vadd.f32 %v1004, %v1115
    %s1123 = scalar_lea.vmem [#allocation2], 12
    %v1124 = vld [vmem:[%s1123] sm:$0xff]
    %v1125 = vld [vmem:[%s1123 + $0x8] sm:$0xf]
    %v1127 = vcombine.high %v1124, %v1124
    %v1129 = vpack.c.bf16 %v1124, %v1124
    %v1130 = vpack.c.bf16 %v1127, %v1127
    %v1131 = vpack.c.bf16 %v1125, %v1125
    %1135 = vrot.lane.b32.xlu0 %v1129, 127
    %v1136 = vpop.permute.xlu0 %1135
    %1137 = vrot.lane.b32.xlu0 %v1130, 127
    %v1138 = vpop.permute.xlu0 %1137
    %1139 = vrot.lane.b32.xlu0 %v1131, 127
    %v1140 = vpop.permute.xlu0 %1139
    %v1141 = vsel %vm106, %v1136, %v1138
    %v1142 = vsel %vm106, %v1138, %v1140
    %v1144 = vsel %vm113, %v1141, 0
    %v1147 = vsel %vm113, %v1142, 0
    %v1150 = vsel %vm113, %v1140, 0
    %1152 = vmatprep.subr.bf16.mxu0 %v1147
    %1153 = vmatpush1.bf16.msra.mxu0 %v1144
    %1154 = vmatprep.subr.bf16.mxu0 0
    %1155 = vmatpush1.bf16.msra.mxu0 0
    %1156 = vmatprep.subr.bf16.mxu0 0
    %1157 = vmatpush1.bf16.msra.mxu0 0
    %1158 = vmatprep.subr.bf16.mxu0 0
    %1159 = vmatpush1.bf16.msra.mxu0 0
    %1160 = vmatprep.subr.bf16.mxu0 0
    %1161 = vmatpush1.bf16.msra.mxu0 0
    %1162 = vmatprep.subr.bf16.mxu0 0
    %1163 = vmatpush1.bf16.msra.mxu0 0
    %1164 = vmatprep.subr.bf16.mxu0 0
    %1165 = vmatpush1.bf16.msra.mxu0 0
    %1166 = vmatprep.subr.bf16.mxu0 0
    %1167 = vmatpush1.bf16.msra.mxu0 0
    %1168 = vmatprep.subr.bf16.mxu0 0
    %1169 = vmatpush1.bf16.msra.mxu0 0
    %1170 = vmatprep.subr.bf16.mxu0 0
    %1171 = vmatpush1.bf16.msra.mxu0 0
    %1172 = vmatprep.subr.bf16.mxu0 0
    %1173 = vmatpush1.bf16.msra.mxu0 0
    %1174 = vmatprep.subr.bf16.mxu0 0
    %1175 = vmatpush1.bf16.msra.mxu0 0
    %1176 = vmatprep.subr.bf16.mxu0 0
    %1177 = vmatpush1.bf16.msra.mxu0 0
    %1178 = vmatprep.subr.bf16.mxu0 0
    %1179 = vmatpush1.bf16.msra.mxu0 0
    %1180 = vmatprep.subr.bf16.mxu0 0
    %1181 = vmatpush1.bf16.msra.mxu0 0
    %1182 = vmatprep.subr.bf16.mxu0 0
    %1183 = vmatpush1.bf16.msra.mxu0 0
    %1184 = vmatprep.mubr.bf16.mxu0 0
    %1185 = vmatmul.mubr.bf16.gmra.mrb[0].mxu0 %v111
    %v1186 = vpop.f32.mrb[0].mxu0
    %v1187 = vadd.f32 0.0, %v1186
    %v1188 = vpop.f32.mrb[0].mxu0
    %v1189 = vadd.f32 0.0, %v1188
    %v1190 = vpop.f32.mrb[0].mxu0
    %v1191 = vpop.f32.mrb[0].mxu0
    %1192 = vdwg.mxu0
    %1193 = vmatprep.subr.bf16.mxu0 0
    %1194 = vmatpush1.bf16.msra.mxu0 %v1150
    %1195 = vmatprep.subr.bf16.mxu0 0
    %1196 = vmatpush1.bf16.msra.mxu0 0
    %1197 = vmatprep.subr.bf16.mxu0 0
    %1198 = vmatpush1.bf16.msra.mxu0 0
    %1199 = vmatprep.subr.bf16.mxu0 0
    %1200 = vmatpush1.bf16.msra.mxu0 0
    %1201 = vmatprep.subr.bf16.mxu0 0
    %1202 = vmatpush1.bf16.msra.mxu0 0
    %1203 = vmatprep.subr.bf16.mxu0 0
    %1204 = vmatpush1.bf16.msra.mxu0 0
    %1205 = vmatprep.subr.bf16.mxu0 0
    %1206 = vmatpush1.bf16.msra.mxu0 0
    %1207 = vmatprep.subr.bf16.mxu0 0
    %1208 = vmatpush1.bf16.msra.mxu0 0
    %1209 = vmatprep.subr.bf16.mxu0 0
    %1210 = vmatpush1.bf16.msra.mxu0 0
    %1211 = vmatprep.subr.bf16.mxu0 0
    %1212 = vmatpush1.bf16.msra.mxu0 0
    %1213 = vmatprep.subr.bf16.mxu0 0
    %1214 = vmatpush1.bf16.msra.mxu0 0
    %1215 = vmatprep.subr.bf16.mxu0 0
    %1216 = vmatpush1.bf16.msra.mxu0 0
    %1217 = vmatprep.subr.bf16.mxu0 0
    %1218 = vmatpush1.bf16.msra.mxu0 0
    %1219 = vmatprep.subr.bf16.mxu0 0
    %1220 = vmatpush1.bf16.msra.mxu0 0
    %1221 = vmatprep.subr.bf16.mxu0 0
    %1222 = vmatpush1.bf16.msra.mxu0 0
    %1223 = vmatprep.subr.bf16.mxu0 0
    %1224 = vmatpush1.bf16.msra.mxu0 0
    %1225 = vmatprep.mubr.bf16.mxu0 0
    %1226 = vmatmul.mubr.bf16.gmra.mrb[0].mxu0 %v111
    %v1227 = vpop.f32.mrb[0].mxu0
    %v1228 = vadd.f32 0.0, %v1227
    %v1229 = vpop.f32.mrb[0].mxu0
    %v1230 = vpop.f32.mrb[0].mxu0
    %v1231 = vpop.f32.mrb[0].mxu0
    %1232 = vdwg.mxu0
    %v1234 = vsel %vm113, %v1129, 0
    %v1237 = vsel %vm113, %v1130, 0
    %v1240 = vsel %vm113, %v1131, 0
    %1242 = vmatprep.subr.bf16.mxu0 %v1237
    %1243 = vmatpush1.bf16.msra.mxu0 %v1234
    %1244 = vmatprep.subr.bf16.mxu0 0
    %1245 = vmatpush1.bf16.msra.mxu0 0
    %1246 = vmatprep.subr.bf16.mxu0 0
    %1247 = vmatpush1.bf16.msra.mxu0 0
    %1248 = vmatprep.subr.bf16.mxu0 0
    %1249 = vmatpush1.bf16.msra.mxu0 0
    %1250 = vmatprep.subr.bf16.mxu0 0
    %1251 = vmatpush1.bf16.msra.mxu0 0
    %1252 = vmatprep.subr.bf16.mxu0 0
    %1253 = vmatpush1.bf16.msra.mxu0 0
    %1254 = vmatprep.subr.bf16.mxu0 0
    %1255 = vmatpush1.bf16.msra.mxu0 0
    %1256 = vmatprep.subr.bf16.mxu0 0
    %1257 = vmatpush1.bf16.msra.mxu0 0
    %1258 = vmatprep.subr.bf16.mxu0 0
    %1259 = vmatpush1.bf16.msra.mxu0 0
    %1260 = vmatprep.subr.bf16.mxu0 0
    %1261 = vmatpush1.bf16.msra.mxu0 0
    %1262 = vmatprep.subr.bf16.mxu0 0
    %1263 = vmatpush1.bf16.msra.mxu0 0
    %1264 = vmatprep.subr.bf16.mxu0 0
    %1265 = vmatpush1.bf16.msra.mxu0 0
    %1266 = vmatprep.subr.bf16.mxu0 0
    %1267 = vmatpush1.bf16.msra.mxu0 0
    %1268 = vmatprep.subr.bf16.mxu0 0
    %1269 = vmatpush1.bf16.msra.mxu0 0
    %1270 = vmatprep.subr.bf16.mxu0 0
    %1271 = vmatpush1.bf16.msra.mxu0 0
    %1272 = vmatprep.subr.bf16.mxu0 0
    %1273 = vmatpush1.bf16.msra.mxu0 0
    %1274 = vmatprep.mubr.bf16.mxu0 0
    %1275 = vmatmul.mubr.bf16.gmra.mrb[0].mxu0 %v205
    %v1276 = vpop.f32.mrb[0].mxu0
    %v1277 = vadd.f32 %v1187, %v1276
    %v1278 = vpop.f32.mrb[0].mxu0
    %v1279 = vadd.f32 %v1189, %v1278
    %v1280 = vpop.f32.mrb[0].mxu0
    %v1281 = vpop.f32.mrb[0].mxu0
    %1282 = vdwg.mxu0
    %1283 = vmatprep.subr.bf16.mxu0 0
    %1284 = vmatpush1.bf16.msra.mxu0 %v1240
    %1285 = vmatprep.subr.bf16.mxu0 0
    %1286 = vmatpush1.bf16.msra.mxu0 0
    %1287 = vmatprep.subr.bf16.mxu0 0
    %1288 = vmatpush1.bf16.msra.mxu0 0
    %1289 = vmatprep.subr.bf16.mxu0 0
    %1290 = vmatpush1.bf16.msra.mxu0 0
    %1291 = vmatprep.subr.bf16.mxu0 0
    %1292 = vmatpush1.bf16.msra.mxu0 0
    %1293 = vmatprep.subr.bf16.mxu0 0
    %1294 = vmatpush1.bf16.msra.mxu0 0
    %1295 = vmatprep.subr.bf16.mxu0 0
    %1296 = vmatpush1.bf16.msra.mxu0 0
    %1297 = vmatprep.subr.bf16.mxu0 0
    %1298 = vmatpush1.bf16.msra.mxu0 0
    %1299 = vmatprep.subr.bf16.mxu0 0
    %1300 = vmatpush1.bf16.msra.mxu0 0
    %1301 = vmatprep.subr.bf16.mxu0 0
    %1302 = vmatpush1.bf16.msra.mxu0 0
    %1303 = vmatprep.subr.bf16.mxu0 0
    %1304 = vmatpush1.bf16.msra.mxu0 0
    %1305 = vmatprep.subr.bf16.mxu0 0
    %1306 = vmatpush1.bf16.msra.mxu0 0
    %1307 = vmatprep.subr.bf16.mxu0 0
    %1308 = vmatpush1.bf16.msra.mxu0 0
    %1309 = vmatprep.subr.bf16.mxu0 0
    %1310 = vmatpush1.bf16.msra.mxu0 0
    %1311 = vmatprep.subr.bf16.mxu0 0
    %1312 = vmatpush1.bf16.msra.mxu0 0
    %1313 = vmatprep.subr.bf16.mxu0 0
    %1314 = vmatpush1.bf16.msra.mxu0 0
    %1315 = vmatprep.mubr.bf16.mxu0 0
    %1316 = vmatmul.mubr.bf16.gmra.mrb[0].mxu0 %v205
    %v1317 = vpop.f32.mrb[0].mxu0
    %v1318 = vadd.f32 %v1228, %v1317
    %v1319 = vpop.f32.mrb[0].mxu0
    %v1320 = vpop.f32.mrb[0].mxu0
    %v1321 = vpop.f32.mrb[0].mxu0
    %1322 = vdwg.mxu0
    %v1323 = vld [vmem:[%s1123] sm:$0xff]
    %v1324 = vld [vmem:[%s1123 + $0x8] sm:$0xf]
    %v1326 = vcombine.high %v1323, %v1323
    %v1328 = vpack.c.bf16 %v1323, %v1323
    %v1329 = vpack.c.bf16 %v1326, %v1326
    %v1330 = vpack.c.bf16 %v1324, %v1324
    %1334 = vrot.lane.b32.xlu0 %v1328, 126
    %v1335 = vpop.permute.xlu0 %1334
    %1336 = vrot.lane.b32.xlu0 %v1329, 126
    %v1337 = vpop.permute.xlu0 %1336
    %1338 = vrot.lane.b32.xlu0 %v1330, 126
    %v1339 = vpop.permute.xlu0 %1338
    %v1340 = vsel %vm316, %v1335, %v1337
    %v1341 = vsel %vm316, %v1337, %v1339
    %v1343 = vsel %vm113, %v1340, 0
    %v1346 = vsel %vm113, %v1341, 0
    %v1349 = vsel %vm113, %v1339, 0
    %1351 = vmatprep.subr.bf16.mxu0 %v1346
    %1352 = vmatpush1.bf16.msra.mxu0 %v1343
    %1353 = vmatprep.subr.bf16.mxu0 0
    %1354 = vmatpush1.bf16.msra.mxu0 0
    %1355 = vmatprep.subr.bf16.mxu0 0
    %1356 = vmatpush1.bf16.msra.mxu0 0
    %1357 = vmatprep.subr.bf16.mxu0 0
    %1358 = vmatpush1.bf16.msra.mxu0 0
    %1359 = vmatprep.subr.bf16.mxu0 0
    %1360 = vmatpush1.bf16.msra.mxu0 0
    %1361 = vmatprep.subr.bf16.mxu0 0
    %1362 = vmatpush1.bf16.msra.mxu0 0
    %1363 = vmatprep.subr.bf16.mxu0 0
    %1364 = vmatpush1.bf16.msra.mxu0 0
    %1365 = vmatprep.subr.bf16.mxu0 0
    %1366 = vmatpush1.bf16.msra.mxu0 0
    %1367 = vmatprep.subr.bf16.mxu0 0
    %1368 = vmatpush1.bf16.msra.mxu0 0
    %1369 = vmatprep.subr.bf16.mxu0 0
    %1370 = vmatpush1.bf16.msra.mxu0 0
    %1371 = vmatprep.subr.bf16.mxu0 0
    %1372 = vmatpush1.bf16.msra.mxu0 0
    %1373 = vmatprep.subr.bf16.mxu0 0
    %1374 = vmatpush1.bf16.msra.mxu0 0
    %1375 = vmatprep.subr.bf16.mxu0 0
    %1376 = vmatpush1.bf16.msra.mxu0 0
    %1377 = vmatprep.subr.bf16.mxu0 0
    %1378 = vmatpush1.bf16.msra.mxu0 0
    %1379 = vmatprep.subr.bf16.mxu0 0
    %1380 = vmatpush1.bf16.msra.mxu0 0
    %1381 = vmatprep.subr.bf16.mxu0 0
    %1382 = vmatpush1.bf16.msra.mxu0 0
    %1383 = vmatprep.mubr.bf16.mxu0 0
    %1384 = vmatmul.mubr.bf16.gmra.mrb[0].mxu0 %v320
    %v1385 = vpop.f32.mrb[0].mxu0
    %v1386 = vadd.f32 0.0, %v1385
    %v1387 = vpop.f32.mrb[0].mxu0
    %v1388 = vadd.f32 0.0, %v1387
    %v1389 = vpop.f32.mrb[0].mxu0
    %v1390 = vpop.f32.mrb[0].mxu0
    %1391 = vdwg.mxu0
    %1392 = vmatprep.subr.bf16.mxu0 0
    %1393 = vmatpush1.bf16.msra.mxu0 %v1349
    %1394 = vmatprep.subr.bf16.mxu0 0
    %1395 = vmatpush1.bf16.msra.mxu0 0
    %1396 = vmatprep.subr.bf16.mxu0 0
    %1397 = vmatpush1.bf16.msra.mxu0 0
    %1398 = vmatprep.subr.bf16.mxu0 0
    %1399 = vmatpush1.bf16.msra.mxu0 0
    %1400 = vmatprep.subr.bf16.mxu0 0
    %1401 = vmatpush1.bf16.msra.mxu0 0
    %1402 = vmatprep.subr.bf16.mxu0 0
    %1403 = vmatpush1.bf16.msra.mxu0 0
    %1404 = vmatprep.subr.bf16.mxu0 0
    %1405 = vmatpush1.bf16.msra.mxu0 0
    %1406 = vmatprep.subr.bf16.mxu0 0
    %1407 = vmatpush1.bf16.msra.mxu0 0
    %1408 = vmatprep.subr.bf16.mxu0 0
    %1409 = vmatpush1.bf16.msra.mxu0 0
    %1410 = vmatprep.subr.bf16.mxu0 0
    %1411 = vmatpush1.bf16.msra.mxu0 0
    %1412 = vmatprep.subr.bf16.mxu0 0
    %1413 = vmatpush1.bf16.msra.mxu0 0
    %1414 = vmatprep.subr.bf16.mxu0 0
    %1415 = vmatpush1.bf16.msra.mxu0 0
    %1416 = vmatprep.subr.bf16.mxu0 0
    %1417 = vmatpush1.bf16.msra.mxu0 0
    %1418 = vmatprep.subr.bf16.mxu0 0
    %1419 = vmatpush1.bf16.msra.mxu0 0
    %1420 = vmatprep.subr.bf16.mxu0 0
    %1421 = vmatpush1.bf16.msra.mxu0 0
    %1422 = vmatprep.subr.bf16.mxu0 0
    %1423 = vmatpush1.bf16.msra.mxu0 0
    %1424 = vmatprep.mubr.bf16.mxu0 0
    %1425 = vmatmul.mubr.bf16.gmra.mrb[0].mxu0 %v320
    %v1426 = vpop.f32.mrb[0].mxu0
    %v1427 = vadd.f32 0.0, %v1426
    %v1428 = vpop.f32.mrb[0].mxu0
    %v1429 = vpop.f32.mrb[0].mxu0
    %v1430 = vpop.f32.mrb[0].mxu0
    %1431 = vdwg.mxu0
    %v1432 = vadd.f32 %v1277, %v1386
    %v1433 = vadd.f32 %v1279, %v1388
    %v1434 = vadd.f32 %v1318, %v1427
    %v1435 = vld [vmem:[%s1123] sm:$0xff]
    %v1436 = vld [vmem:[%s1123 + $0x8] sm:$0xf]
    %v1438 = vcombine.high %v1435, %v1435
    %v1440 = vpack.c.bf16 %v1435, %v1435
    %v1441 = vpack.c.bf16 %v1438, %v1438
    %v1442 = vpack.c.bf16 %v1436, %v1436
    %1446 = vrot.lane.b32.xlu0 %v1440, 110
    %v1447 = vpop.permute.xlu0 %1446
    %1448 = vrot.lane.b32.xlu0 %v1441, 110
    %v1449 = vpop.permute.xlu0 %1448
    %1450 = vrot.lane.b32.xlu0 %v1442, 110
    %v1451 = vpop.permute.xlu0 %1450
    %v1452 = vsel %vm434, %v1447, %v1449
    %v1453 = vsel %vm434, %v1449, %v1451
    %v1455 = vsel %vm113, %v1452, 0
    %v1458 = vsel %vm113, %v1453, 0
    %v1461 = vsel %vm113, %v1451, 0
    %1463 = vmatprep.subr.bf16.mxu0 %v1458
    %1464 = vmatpush1.bf16.msra.mxu0 %v1455
    %1465 = vmatprep.subr.bf16.mxu0 0
    %1466 = vmatpush1.bf16.msra.mxu0 0
    %1467 = vmatprep.subr.bf16.mxu0 0
    %1468 = vmatpush1.bf16.msra.mxu0 0
    %1469 = vmatprep.subr.bf16.mxu0 0
    %1470 = vmatpush1.bf16.msra.mxu0 0
    %1471 = vmatprep.subr.bf16.mxu0 0
    %1472 = vmatpush1.bf16.msra.mxu0 0
    %1473 = vmatprep.subr.bf16.mxu0 0
    %1474 = vmatpush1.bf16.msra.mxu0 0
    %1475 = vmatprep.subr.bf16.mxu0 0
    %1476 = vmatpush1.bf16.msra.mxu0 0
    %1477 = vmatprep.subr.bf16.mxu0 0
    %1478 = vmatpush1.bf16.msra.mxu0 0
    %1479 = vmatprep.subr.bf16.mxu0 0
    %1480 = vmatpush1.bf16.msra.mxu0 0
    %1481 = vmatprep.subr.bf16.mxu0 0
    %1482 = vmatpush1.bf16.msra.mxu0 0
    %1483 = vmatprep.subr.bf16.mxu0 0
    %1484 = vmatpush1.bf16.msra.mxu0 0
    %1485 = vmatprep.subr.bf16.mxu0 0
    %1486 = vmatpush1.bf16.msra.mxu0 0
    %1487 = vmatprep.subr.bf16.mxu0 0
    %1488 = vmatpush1.bf16.msra.mxu0 0
    %1489 = vmatprep.subr.bf16.mxu0 0
    %1490 = vmatpush1.bf16.msra.mxu0 0
    %1491 = vmatprep.subr.bf16.mxu0 0
    %1492 = vmatpush1.bf16.msra.mxu0 0
    %1493 = vmatprep.subr.bf16.mxu0 0
    %1494 = vmatpush1.bf16.msra.mxu0 0
    %1495 = vmatprep.mubr.bf16.mxu0 0
    %1496 = vmatmul.mubr.bf16.gmra.mrb[0].mxu0 %v438
    %v1497 = vpop.f32.mrb[0].mxu0
    %v1498 = vadd.f32 0.0, %v1497
    %v1499 = vpop.f32.mrb[0].mxu0
    %v1500 = vadd.f32 0.0, %v1499
    %v1501 = vpop.f32.mrb[0].mxu0
    %v1502 = vpop.f32.mrb[0].mxu0
    %1503 = vdwg.mxu0
    %1504 = vmatprep.subr.bf16.mxu0 0
    %1505 = vmatpush1.bf16.msra.mxu0 %v1461
    %1506 = vmatprep.subr.bf16.mxu0 0
    %1507 = vmatpush1.bf16.msra.mxu0 0
    %1508 = vmatprep.subr.bf16.mxu0 0
    %1509 = vmatpush1.bf16.msra.mxu0 0
    %1510 = vmatprep.subr.bf16.mxu0 0
    %1511 = vmatpush1.bf16.msra.mxu0 0
    %1512 = vmatprep.subr.bf16.mxu0 0
    %1513 = vmatpush1.bf16.msra.mxu0 0
    %1514 = vmatprep.subr.bf16.mxu0 0
    %1515 = vmatpush1.bf16.msra.mxu0 0
    %1516 = vmatprep.subr.bf16.mxu0 0
    %1517 = vmatpush1.bf16.msra.mxu0 0
    %1518 = vmatprep.subr.bf16.mxu0 0
    %1519 = vmatpush1.bf16.msra.mxu0 0
    %1520 = vmatprep.subr.bf16.mxu0 0
    %1521 = vmatpush1.bf16.msra.mxu0 0
    %1522 = vmatprep.subr.bf16.mxu0 0
    %1523 = vmatpush1.bf16.msra.mxu0 0
    %1524 = vmatprep.subr.bf16.mxu0 0
    %1525 = vmatpush1.bf16.msra.mxu0 0
    %1526 = vmatprep.subr.bf16.mxu0 0
    %1527 = vmatpush1.bf16.msra.mxu0 0
    %1528 = vmatprep.subr.bf16.mxu0 0
    %1529 = vmatpush1.bf16.msra.mxu0 0
    %1530 = vmatprep.subr.bf16.mxu0 0
    %1531 = vmatpush1.bf16.msra.mxu0 0
    %1532 = vmatprep.subr.bf16.mxu0 0
    %1533 = vmatpush1.bf16.msra.mxu0 0
    %1534 = vmatprep.subr.bf16.mxu0 0
    %1535 = vmatpush1.bf16.msra.mxu0 0
    %1536 = vmatprep.mubr.bf16.mxu0 0
    %1537 = vmatmul.mubr.bf16.gmra.mrb[0].mxu0 %v438
    %v1538 = vpop.f32.mrb[0].mxu0
    %v1539 = vadd.f32 0.0, %v1538
    %v1540 = vpop.f32.mrb[0].mxu0
    %v1541 = vpop.f32.mrb[0].mxu0
    %v1542 = vpop.f32.mrb[0].mxu0
    %1543 = vdwg.mxu0
    %v1544 = vadd.f32 %v1432, %v1498
    %v1545 = vadd.f32 %v1433, %v1500
    %v1546 = vadd.f32 %v1434, %v1539
    %v1547 = vld [vmem:[%s1123] sm:$0xff]
    %v1548 = vld [vmem:[%s1123 + $0x8] sm:$0xf]
    %v1550 = vcombine.high %v1547, %v1547
    %v1552 = vpack.c.bf16 %v1547, %v1547
    %v1553 = vpack.c.bf16 %v1550, %v1550
    %v1554 = vpack.c.bf16 %v1548, %v1548
    %1558 = vrot.lane.b32.xlu0 %v1552, 109
    %v1559 = vpop.permute.xlu0 %1558
    %1560 = vrot.lane.b32.xlu0 %v1553, 109
    %v1561 = vpop.permute.xlu0 %1560
    %1562 = vrot.lane.b32.xlu0 %v1554, 109
    %v1563 = vpop.permute.xlu0 %1562
    %v1564 = vsel %vm552, %v1559, %v1561
    %v1565 = vsel %vm552, %v1561, %v1563
    %v1567 = vsel %vm113, %v1564, 0
    %v1570 = vsel %vm113, %v1565, 0
    %v1573 = vsel %vm113, %v1563, 0
    %1575 = vmatprep.subr.bf16.mxu0 %v1570
    %1576 = vmatpush1.bf16.msra.mxu0 %v1567
    %1577 = vmatprep.subr.bf16.mxu0 0
    %1578 = vmatpush1.bf16.msra.mxu0 0
    %1579 = vmatprep.subr.bf16.mxu0 0
    %1580 = vmatpush1.bf16.msra.mxu0 0
    %1581 = vmatprep.subr.bf16.mxu0 0
    %1582 = vmatpush1.bf16.msra.mxu0 0
    %1583 = vmatprep.subr.bf16.mxu0 0
    %1584 = vmatpush1.bf16.msra.mxu0 0
    %1585 = vmatprep.subr.bf16.mxu0 0
    %1586 = vmatpush1.bf16.msra.mxu0 0
    %1587 = vmatprep.subr.bf16.mxu0 0
    %1588 = vmatpush1.bf16.msra.mxu0 0
    %1589 = vmatprep.subr.bf16.mxu0 0
    %1590 = vmatpush1.bf16.msra.mxu0 0
    %1591 = vmatprep.subr.bf16.mxu0 0
    %1592 = vmatpush1.bf16.msra.mxu0 0
    %1593 = vmatprep.subr.bf16.mxu0 0
    %1594 = vmatpush1.bf16.msra.mxu0 0
    %1595 = vmatprep.subr.bf16.mxu0 0
    %1596 = vmatpush1.bf16.msra.mxu0 0
    %1597 = vmatprep.subr.bf16.mxu0 0
    %1598 = vmatpush1.bf16.msra.mxu0 0
    %1599 = vmatprep.subr.bf16.mxu0 0
    %1600 = vmatpush1.bf16.msra.mxu0 0
    %1601 = vmatprep.subr.bf16.mxu0 0
    %1602 = vmatpush1.bf16.msra.mxu0 0
    %1603 = vmatprep.subr.bf16.mxu0 0
    %1604 = vmatpush1.bf16.msra.mxu0 0
    %1605 = vmatprep.subr.bf16.mxu0 0
    %1606 = vmatpush1.bf16.msra.mxu0 0
    %1607 = vmatprep.mubr.bf16.mxu0 0
    %1608 = vmatmul.mubr.bf16.gmra.mrb[0].mxu0 %v556
    %v1609 = vpop.f32.mrb[0].mxu0
    %v1610 = vadd.f32 0.0, %v1609
    %v1611 = vpop.f32.mrb[0].mxu0
    %v1612 = vadd.f32 0.0, %v1611
    %v1613 = vpop.f32.mrb[0].mxu0
    %v1614 = vpop.f32.mrb[0].mxu0
    %1615 = vdwg.mxu0
    %1616 = vmatprep.subr.bf16.mxu0 0
    %1617 = vmatpush1.bf16.msra.mxu0 %v1573
    %1618 = vmatprep.subr.bf16.mxu0 0
    %1619 = vmatpush1.bf16.msra.mxu0 0
    %1620 = vmatprep.subr.bf16.mxu0 0
    %1621 = vmatpush1.bf16.msra.mxu0 0
    %1622 = vmatprep.subr.bf16.mxu0 0
    %1623 = vmatpush1.bf16.msra.mxu0 0
    %1624 = vmatprep.subr.bf16.mxu0 0
    %1625 = vmatpush1.bf16.msra.mxu0 0
    %1626 = vmatprep.subr.bf16.mxu0 0
    %1627 = vmatpush1.bf16.msra.mxu0 0
    %1628 = vmatprep.subr.bf16.mxu0 0
    %1629 = vmatpush1.bf16.msra.mxu0 0
    %1630 = vmatprep.subr.bf16.mxu0 0
    %1631 = vmatpush1.bf16.msra.mxu0 0
    %1632 = vmatprep.subr.bf16.mxu0 0
    %1633 = vmatpush1.bf16.msra.mxu0 0
    %1634 = vmatprep.subr.bf16.mxu0 0
    %1635 = vmatpush1.bf16.msra.mxu0 0
    %1636 = vmatprep.subr.bf16.mxu0 0
    %1637 = vmatpush1.bf16.msra.mxu0 0
    %1638 = vmatprep.subr.bf16.mxu0 0
    %1639 = vmatpush1.bf16.msra.mxu0 0
    %1640 = vmatprep.subr.bf16.mxu0 0
    %1641 = vmatpush1.bf16.msra.mxu0 0
    %1642 = vmatprep.subr.bf16.mxu0 0
    %1643 = vmatpush1.bf16.msra.mxu0 0
    %1644 = vmatprep.subr.bf16.mxu0 0
    %1645 = vmatpush1.bf16.msra.mxu0 0
    %1646 = vmatprep.subr.bf16.mxu0 0
    %1647 = vmatpush1.bf16.msra.mxu0 0
    %1648 = vmatprep.mubr.bf16.mxu0 0
    %1649 = vmatmul.mubr.bf16.gmra.mrb[0].mxu0 %v556
    %v1650 = vpop.f32.mrb[0].mxu0
    %v1651 = vadd.f32 0.0, %v1650
    %v1652 = vpop.f32.mrb[0].mxu0
    %v1653 = vpop.f32.mrb[0].mxu0
    %v1654 = vpop.f32.mrb[0].mxu0
    %1655 = vdwg.mxu0
    %v1656 = vadd.f32 %v1544, %v1610
    %v1657 = vadd.f32 %v1545, %v1612
    %v1658 = vadd.f32 %v1546, %v1651
    %v1659 = vld [vmem:[%s1123] sm:$0xff]
    %v1660 = vld [vmem:[%s1123 + $0x8] sm:$0xf]
    %v1662 = vcombine.high %v1659, %v1659
    %v1664 = vpack.c.bf16 %v1659, %v1659
    %v1665 = vpack.c.bf16 %v1662, %v1662
    %v1666 = vpack.c.bf16 %v1660, %v1660
    %1670 = vrot.lane.b32.xlu0 %v1664, 108
    %v1671 = vpop.permute.xlu0 %1670
    %1672 = vrot.lane.b32.xlu0 %v1665, 108
    %v1673 = vpop.permute.xlu0 %1672
    %1674 = vrot.lane.b32.xlu0 %v1666, 108
    %v1675 = vpop.permute.xlu0 %1674
    %v1676 = vsel %vm670, %v1671, %v1673
    %v1677 = vsel %vm670, %v1673, %v1675
    %v1679 = vsel %vm113, %v1676, 0
    %v1682 = vsel %vm113, %v1677, 0
    %v1685 = vsel %vm113, %v1675, 0
    %1687 = vmatprep.subr.bf16.mxu0 %v1682
    %1688 = vmatpush1.bf16.msra.mxu0 %v1679
    %1689 = vmatprep.subr.bf16.mxu0 0
    %1690 = vmatpush1.bf16.msra.mxu0 0
    %1691 = vmatprep.subr.bf16.mxu0 0
    %1692 = vmatpush1.bf16.msra.mxu0 0
    %1693 = vmatprep.subr.bf16.mxu0 0
    %1694 = vmatpush1.bf16.msra.mxu0 0
    %1695 = vmatprep.subr.bf16.mxu0 0
    %1696 = vmatpush1.bf16.msra.mxu0 0
    %1697 = vmatprep.subr.bf16.mxu0 0
    %1698 = vmatpush1.bf16.msra.mxu0 0
    %1699 = vmatprep.subr.bf16.mxu0 0
    %1700 = vmatpush1.bf16.msra.mxu0 0
    %1701 = vmatprep.subr.bf16.mxu0 0
    %1702 = vmatpush1.bf16.msra.mxu0 0
    %1703 = vmatprep.subr.bf16.mxu0 0
    %1704 = vmatpush1.bf16.msra.mxu0 0
    %1705 = vmatprep.subr.bf16.mxu0 0
    %1706 = vmatpush1.bf16.msra.mxu0 0
    %1707 = vmatprep.subr.bf16.mxu0 0
    %1708 = vmatpush1.bf16.msra.mxu0 0
    %1709 = vmatprep.subr.bf16.mxu0 0
    %1710 = vmatpush1.bf16.msra.mxu0 0
    %1711 = vmatprep.subr.bf16.mxu0 0
    %1712 = vmatpush1.bf16.msra.mxu0 0
    %1713 = vmatprep.subr.bf16.mxu0 0
    %1714 = vmatpush1.bf16.msra.mxu0 0
    %1715 = vmatprep.subr.bf16.mxu0 0
    %1716 = vmatpush1.bf16.msra.mxu0 0
    %1717 = vmatprep.subr.bf16.mxu0 0
    %1718 = vmatpush1.bf16.msra.mxu0 0
    %1719 = vmatprep.mubr.bf16.mxu0 0
    %1720 = vmatmul.mubr.bf16.gmra.mrb[0].mxu0 %v674
    %v1721 = vpop.f32.mrb[0].mxu0
    %v1722 = vadd.f32 0.0, %v1721
    %v1723 = vpop.f32.mrb[0].mxu0
    %v1724 = vadd.f32 0.0, %v1723
    %v1725 = vpop.f32.mrb[0].mxu0
    %v1726 = vpop.f32.mrb[0].mxu0
    %1727 = vdwg.mxu0
    %1728 = vmatprep.subr.bf16.mxu0 0
    %1729 = vmatpush1.bf16.msra.mxu0 %v1685
    %1730 = vmatprep.subr.bf16.mxu0 0
    %1731 = vmatpush1.bf16.msra.mxu0 0
    %1732 = vmatprep.subr.bf16.mxu0 0
    %1733 = vmatpush1.bf16.msra.mxu0 0
    %1734 = vmatprep.subr.bf16.mxu0 0
    %1735 = vmatpush1.bf16.msra.mxu0 0
    %1736 = vmatprep.subr.bf16.mxu0 0
    %1737 = vmatpush1.bf16.msra.mxu0 0
    %1738 = vmatprep.subr.bf16.mxu0 0
    %1739 = vmatpush1.bf16.msra.mxu0 0
    %1740 = vmatprep.subr.bf16.mxu0 0
    %1741 = vmatpush1.bf16.msra.mxu0 0
    %1742 = vmatprep.subr.bf16.mxu0 0
    %1743 = vmatpush1.bf16.msra.mxu0 0
    %1744 = vmatprep.subr.bf16.mxu0 0
    %1745 = vmatpush1.bf16.msra.mxu0 0
    %1746 = vmatprep.subr.bf16.mxu0 0
    %1747 = vmatpush1.bf16.msra.mxu0 0
    %1748 = vmatprep.subr.bf16.mxu0 0
    %1749 = vmatpush1.bf16.msra.mxu0 0
    %1750 = vmatprep.subr.bf16.mxu0 0
    %1751 = vmatpush1.bf16.msra.mxu0 0
    %1752 = vmatprep.subr.bf16.mxu0 0
    %1753 = vmatpush1.bf16.msra.mxu0 0
    %1754 = vmatprep.subr.bf16.mxu0 0
    %1755 = vmatpush1.bf16.msra.mxu0 0
    %1756 = vmatprep.subr.bf16.mxu0 0
    %1757 = vmatpush1.bf16.msra.mxu0 0
    %1758 = vmatprep.subr.bf16.mxu0 0
    %1759 = vmatpush1.bf16.msra.mxu0 0
    %1760 = vmatprep.mubr.bf16.mxu0 0
    %1761 = vmatmul.mubr.bf16.gmra.mrb[0].mxu0 %v674
    %v1762 = vpop.f32.mrb[0].mxu0
    %v1763 = vadd.f32 0.0, %v1762
    %v1764 = vpop.f32.mrb[0].mxu0
    %v1765 = vpop.f32.mrb[0].mxu0
    %v1766 = vpop.f32.mrb[0].mxu0
    %1767 = vdwg.mxu0
    %v1768 = vadd.f32 %v1656, %v1722
    %v1769 = vadd.f32 %v1657, %v1724
    %v1770 = vadd.f32 %v1658, %v1763
    %v1771 = vld [vmem:[%s1123] sm:$0xff]
    %v1772 = vld [vmem:[%s1123 + $0x8] sm:$0xf]
    %v1774 = vcombine.high %v1771, %v1771
    %v1776 = vpack.c.bf16 %v1771, %v1771
    %v1777 = vpack.c.bf16 %v1774, %v1774
    %v1778 = vpack.c.bf16 %v1772, %v1772
    %1782 = vrot.lane.b32.xlu0 %v1776, 92
    %v1783 = vpop.permute.xlu0 %1782
    %1784 = vrot.lane.b32.xlu0 %v1777, 92
    %v1785 = vpop.permute.xlu0 %1784
    %1786 = vrot.lane.b32.xlu0 %v1778, 92
    %v1787 = vpop.permute.xlu0 %1786
    %v1788 = vsel %vm788, %v1783, %v1785
    %v1789 = vsel %vm788, %v1785, %v1787
    %v1791 = vsel %vm113, %v1788, 0
    %v1794 = vsel %vm113, %v1789, 0
    %v1797 = vsel %vm113, %v1787, 0
    %1799 = vmatprep.subr.bf16.mxu0 %v1794
    %1800 = vmatpush1.bf16.msra.mxu0 %v1791
    %1801 = vmatprep.subr.bf16.mxu0 0
    %1802 = vmatpush1.bf16.msra.mxu0 0
    %1803 = vmatprep.subr.bf16.mxu0 0
    %1804 = vmatpush1.bf16.msra.mxu0 0
    %1805 = vmatprep.subr.bf16.mxu0 0
    %1806 = vmatpush1.bf16.msra.mxu0 0
    %1807 = vmatprep.subr.bf16.mxu0 0
    %1808 = vmatpush1.bf16.msra.mxu0 0
    %1809 = vmatprep.subr.bf16.mxu0 0
    %1810 = vmatpush1.bf16.msra.mxu0 0
    %1811 = vmatprep.subr.bf16.mxu0 0
    %1812 = vmatpush1.bf16.msra.mxu0 0
    %1813 = vmatprep.subr.bf16.mxu0 0
    %1814 = vmatpush1.bf16.msra.mxu0 0
    %1815 = vmatprep.subr.bf16.mxu0 0
    %1816 = vmatpush1.bf16.msra.mxu0 0
    %1817 = vmatprep.subr.bf16.mxu0 0
    %1818 = vmatpush1.bf16.msra.mxu0 0
    %1819 = vmatprep.subr.bf16.mxu0 0
    %1820 = vmatpush1.bf16.msra.mxu0 0
    %1821 = vmatprep.subr.bf16.mxu0 0
    %1822 = vmatpush1.bf16.msra.mxu0 0
    %1823 = vmatprep.subr.bf16.mxu0 0
    %1824 = vmatpush1.bf16.msra.mxu0 0
    %1825 = vmatprep.subr.bf16.mxu0 0
    %1826 = vmatpush1.bf16.msra.mxu0 0
    %1827 = vmatprep.subr.bf16.mxu0 0
    %1828 = vmatpush1.bf16.msra.mxu0 0
    %1829 = vmatprep.subr.bf16.mxu0 0
    %1830 = vmatpush1.bf16.msra.mxu0 0
    %1831 = vmatprep.mubr.bf16.mxu0 0
    %1832 = vmatmul.mubr.bf16.gmra.mrb[0].mxu0 %v792
    %v1833 = vpop.f32.mrb[0].mxu0
    %v1834 = vadd.f32 0.0, %v1833
    %v1835 = vpop.f32.mrb[0].mxu0
    %v1836 = vadd.f32 0.0, %v1835
    %v1837 = vpop.f32.mrb[0].mxu0
    %v1838 = vpop.f32.mrb[0].mxu0
    %1839 = vdwg.mxu0
    %1840 = vmatprep.subr.bf16.mxu0 0
    %1841 = vmatpush1.bf16.msra.mxu0 %v1797
    %1842 = vmatprep.subr.bf16.mxu0 0
    %1843 = vmatpush1.bf16.msra.mxu0 0
    %1844 = vmatprep.subr.bf16.mxu0 0
    %1845 = vmatpush1.bf16.msra.mxu0 0
    %1846 = vmatprep.subr.bf16.mxu0 0
    %1847 = vmatpush1.bf16.msra.mxu0 0
    %1848 = vmatprep.subr.bf16.mxu0 0
    %1849 = vmatpush1.bf16.msra.mxu0 0
    %1850 = vmatprep.subr.bf16.mxu0 0
    %1851 = vmatpush1.bf16.msra.mxu0 0
    %1852 = vmatprep.subr.bf16.mxu0 0
    %1853 = vmatpush1.bf16.msra.mxu0 0
    %1854 = vmatprep.subr.bf16.mxu0 0
    %1855 = vmatpush1.bf16.msra.mxu0 0
    %1856 = vmatprep.subr.bf16.mxu0 0
    %1857 = vmatpush1.bf16.msra.mxu0 0
    %1858 = vmatprep.subr.bf16.mxu0 0
    %1859 = vmatpush1.bf16.msra.mxu0 0
    %1860 = vmatprep.subr.bf16.mxu0 0
    %1861 = vmatpush1.bf16.msra.mxu0 0
    %1862 = vmatprep.subr.bf16.mxu0 0
    %1863 = vmatpush1.bf16.msra.mxu0 0
    %1864 = vmatprep.subr.bf16.mxu0 0
    %1865 = vmatpush1.bf16.msra.mxu0 0
    %1866 = vmatprep.subr.bf16.mxu0 0
    %1867 = vmatpush1.bf16.msra.mxu0 0
    %1868 = vmatprep.subr.bf16.mxu0 0
    %1869 = vmatpush1.bf16.msra.mxu0 0
    %1870 = vmatprep.subr.bf16.mxu0 0
    %1871 = vmatpush1.bf16.msra.mxu0 0
    %1872 = vmatprep.mubr.bf16.mxu0 0
    %1873 = vmatmul.mubr.bf16.gmra.mrb[0].mxu0 %v792
    %v1874 = vpop.f32.mrb[0].mxu0
    %v1875 = vadd.f32 0.0, %v1874
    %v1876 = vpop.f32.mrb[0].mxu0
    %v1877 = vpop.f32.mrb[0].mxu0
    %v1878 = vpop.f32.mrb[0].mxu0
    %1879 = vdwg.mxu0
    %v1880 = vadd.f32 %v1768, %v1834
    %v1881 = vadd.f32 %v1769, %v1836
    %v1882 = vadd.f32 %v1770, %v1875
    %v1883 = vld [vmem:[%s1123] sm:$0xff]
    %v1884 = vld [vmem:[%s1123 + $0x8] sm:$0xf]
    %v1886 = vcombine.high %v1883, %v1883
    %v1888 = vpack.c.bf16 %v1883, %v1883
    %v1889 = vpack.c.bf16 %v1886, %v1886
    %v1890 = vpack.c.bf16 %v1884, %v1884
    %1894 = vrot.lane.b32.xlu0 %v1888, 91
    %v1895 = vpop.permute.xlu0 %1894
    %1896 = vrot.lane.b32.xlu0 %v1889, 91
    %v1897 = vpop.permute.xlu0 %1896
    %1898 = vrot.lane.b32.xlu0 %v1890, 91
    %v1899 = vpop.permute.xlu0 %1898
    %v1900 = vsel %vm906, %v1895, %v1897
    %v1901 = vsel %vm906, %v1897, %v1899
    %v1903 = vsel %vm113, %v1900, 0
    %v1906 = vsel %vm113, %v1901, 0
    %v1909 = vsel %vm113, %v1899, 0
    %1911 = vmatprep.subr.bf16.mxu0 %v1906
    %1912 = vmatpush1.bf16.msra.mxu0 %v1903
    %1913 = vmatprep.subr.bf16.mxu0 0
    %1914 = vmatpush1.bf16.msra.mxu0 0
    %1915 = vmatprep.subr.bf16.mxu0 0
    %1916 = vmatpush1.bf16.msra.mxu0 0
    %1917 = vmatprep.subr.bf16.mxu0 0
    %1918 = vmatpush1.bf16.msra.mxu0 0
    %1919 = vmatprep.subr.bf16.mxu0 0
    %1920 = vmatpush1.bf16.msra.mxu0 0
    %1921 = vmatprep.subr.bf16.mxu0 0
    %1922 = vmatpush1.bf16.msra.mxu0 0
    %1923 = vmatprep.subr.bf16.mxu0 0
    %1924 = vmatpush1.bf16.msra.mxu0 0
    %1925 = vmatprep.subr.bf16.mxu0 0
    %1926 = vmatpush1.bf16.msra.mxu0 0
    %1927 = vmatprep.subr.bf16.mxu0 0
    %1928 = vmatpush1.bf16.msra.mxu0 0
    %1929 = vmatprep.subr.bf16.mxu0 0
    %1930 = vmatpush1.bf16.msra.mxu0 0
    %1931 = vmatprep.subr.bf16.mxu0 0
    %1932 = vmatpush1.bf16.msra.mxu0 0
    %1933 = vmatprep.subr.bf16.mxu0 0
    %1934 = vmatpush1.bf16.msra.mxu0 0
    %1935 = vmatprep.subr.bf16.mxu0 0
    %1936 = vmatpush1.bf16.msra.mxu0 0
    %1937 = vmatprep.subr.bf16.mxu0 0
    %1938 = vmatpush1.bf16.msra.mxu0 0
    %1939 = vmatprep.subr.bf16.mxu0 0
    %1940 = vmatpush1.bf16.msra.mxu0 0
    %1941 = vmatprep.subr.bf16.mxu0 0
    %1942 = vmatpush1.bf16.msra.mxu0 0
    %1943 = vmatprep.mubr.bf16.mxu0 0
    %1944 = vmatmul.mubr.bf16.gmra.mrb[0].mxu0 %v910
    %v1945 = vpop.f32.mrb[0].mxu0
    %v1946 = vadd.f32 0.0, %v1945
    %v1947 = vpop.f32.mrb[0].mxu0
    %v1948 = vadd.f32 0.0, %v1947
    %v1949 = vpop.f32.mrb[0].mxu0
    %v1950 = vpop.f32.mrb[0].mxu0
    %1951 = vdwg.mxu0
    %1952 = vmatprep.subr.bf16.mxu0 0
    %1953 = vmatpush1.bf16.msra.mxu0 %v1909
    %1954 = vmatprep.subr.bf16.mxu0 0
    %1955 = vmatpush1.bf16.msra.mxu0 0
    %1956 = vmatprep.subr.bf16.mxu0 0
    %1957 = vmatpush1.bf16.msra.mxu0 0
    %1958 = vmatprep.subr.bf16.mxu0 0
    %1959 = vmatpush1.bf16.msra.mxu0 0
    %1960 = vmatprep.subr.bf16.mxu0 0
    %1961 = vmatpush1.bf16.msra.mxu0 0
    %1962 = vmatprep.subr.bf16.mxu0 0
    %1963 = vmatpush1.bf16.msra.mxu0 0
    %1964 = vmatprep.subr.bf16.mxu0 0
    %1965 = vmatpush1.bf16.msra.mxu0 0
    %1966 = vmatprep.subr.bf16.mxu0 0
    %1967 = vmatpush1.bf16.msra.mxu0 0
    %1968 = vmatprep.subr.bf16.mxu0 0
    %1969 = vmatpush1.bf16.msra.mxu0 0
    %1970 = vmatprep.subr.bf16.mxu0 0
    %1971 = vmatpush1.bf16.msra.mxu0 0
    %1972 = vmatprep.subr.bf16.mxu0 0
    %1973 = vmatpush1.bf16.msra.mxu0 0
    %1974 = vmatprep.subr.bf16.mxu0 0
    %1975 = vmatpush1.bf16.msra.mxu0 0
    %1976 = vmatprep.subr.bf16.mxu0 0
    %1977 = vmatpush1.bf16.msra.mxu0 0
    %1978 = vmatprep.subr.bf16.mxu0 0
    %1979 = vmatpush1.bf16.msra.mxu0 0
    %1980 = vmatprep.subr.bf16.mxu0 0
    %1981 = vmatpush1.bf16.msra.mxu0 0
    %1982 = vmatprep.subr.bf16.mxu0 0
    %1983 = vmatpush1.bf16.msra.mxu0 0
    %1984 = vmatprep.mubr.bf16.mxu0 0
    %1985 = vmatmul.mubr.bf16.gmra.mrb[0].mxu0 %v910
    %v1986 = vpop.f32.mrb[0].mxu0
    %v1987 = vadd.f32 0.0, %v1986
    %v1988 = vpop.f32.mrb[0].mxu0
    %v1989 = vpop.f32.mrb[0].mxu0
    %v1990 = vpop.f32.mrb[0].mxu0
    %1991 = vdwg.mxu0
    %v1992 = vadd.f32 %v1880, %v1946
    %v1993 = vadd.f32 %v1881, %v1948
    %v1994 = vadd.f32 %v1882, %v1987
    %v1995 = vld [vmem:[%s1123] sm:$0xff]
    %v1996 = vld [vmem:[%s1123 + $0x8] sm:$0xf]
    %v1998 = vcombine.high %v1995, %v1995
    %v2000 = vpack.c.bf16 %v1995, %v1995
    %v2001 = vpack.c.bf16 %v1998, %v1998
    %v2002 = vpack.c.bf16 %v1996, %v1996
    %2006 = vrot.lane.b32.xlu0 %v2000, 90
    %v2007 = vpop.permute.xlu0 %2006
    %2008 = vrot.lane.b32.xlu0 %v2001, 90
    %v2009 = vpop.permute.xlu0 %2008
    %2010 = vrot.lane.b32.xlu0 %v2002, 90
    %v2011 = vpop.permute.xlu0 %2010
    %v2012 = vsel %vm1024, %v2007, %v2009
    %v2013 = vsel %vm1024, %v2009, %v2011
    %v2015 = vsel %vm113, %v2012, 0
    %v2018 = vsel %vm113, %v2013, 0
    %v2021 = vsel %vm113, %v2011, 0
    %2023 = vmatprep.subr.bf16.mxu0 %v2018
    %2024 = vmatpush1.bf16.msra.mxu0 %v2015
    %2025 = vmatprep.subr.bf16.mxu0 0
    %2026 = vmatpush1.bf16.msra.mxu0 0
    %2027 = vmatprep.subr.bf16.mxu0 0
    %2028 = vmatpush1.bf16.msra.mxu0 0
    %2029 = vmatprep.subr.bf16.mxu0 0
    %2030 = vmatpush1.bf16.msra.mxu0 0
    %2031 = vmatprep.subr.bf16.mxu0 0
    %2032 = vmatpush1.bf16.msra.mxu0 0
    %2033 = vmatprep.subr.bf16.mxu0 0
    %2034 = vmatpush1.bf16.msra.mxu0 0
    %2035 = vmatprep.subr.bf16.mxu0 0
    %2036 = vmatpush1.bf16.msra.mxu0 0
    %2037 = vmatprep.subr.bf16.mxu0 0
    %2038 = vmatpush1.bf16.msra.mxu0 0
    %2039 = vmatprep.subr.bf16.mxu0 0
    %2040 = vmatpush1.bf16.msra.mxu0 0
    %2041 = vmatprep.subr.bf16.mxu0 0
    %2042 = vmatpush1.bf16.msra.mxu0 0
    %2043 = vmatprep.subr.bf16.mxu0 0
    %2044 = vmatpush1.bf16.msra.mxu0 0
    %2045 = vmatprep.subr.bf16.mxu0 0
    %2046 = vmatpush1.bf16.msra.mxu0 0
    %2047 = vmatprep.subr.bf16.mxu0 0
    %2048 = vmatpush1.bf16.msra.mxu0 0
    %2049 = vmatprep.subr.bf16.mxu0 0
    %2050 = vmatpush1.bf16.msra.mxu0 0
    %2051 = vmatprep.subr.bf16.mxu0 0
    %2052 = vmatpush1.bf16.msra.mxu0 0
    %2053 = vmatprep.subr.bf16.mxu0 0
    %2054 = vmatpush1.bf16.msra.mxu0 0
    %2055 = vmatprep.mubr.bf16.mxu0 0
    %2056 = vmatmul.mubr.bf16.gmra.mrb[0].mxu0 %v1028
    %v2057 = vpop.f32.mrb[0].mxu0
    %v2058 = vadd.f32 0.0, %v2057
    %v2059 = vpop.f32.mrb[0].mxu0
    %v2060 = vadd.f32 0.0, %v2059
    %v2061 = vpop.f32.mrb[0].mxu0
    %v2062 = vpop.f32.mrb[0].mxu0
    %2063 = vdwg.mxu0
    %2064 = vmatprep.subr.bf16.mxu0 0
    %2065 = vmatpush1.bf16.msra.mxu0 %v2021
    %2066 = vmatprep.subr.bf16.mxu0 0
    %2067 = vmatpush1.bf16.msra.mxu0 0
    %2068 = vmatprep.subr.bf16.mxu0 0
    %2069 = vmatpush1.bf16.msra.mxu0 0
    %2070 = vmatprep.subr.bf16.mxu0 0
    %2071 = vmatpush1.bf16.msra.mxu0 0
    %2072 = vmatprep.subr.bf16.mxu0 0
    %2073 = vmatpush1.bf16.msra.mxu0 0
    %2074 = vmatprep.subr.bf16.mxu0 0
    %2075 = vmatpush1.bf16.msra.mxu0 0
    %2076 = vmatprep.subr.bf16.mxu0 0
    %2077 = vmatpush1.bf16.msra.mxu0 0
    %2078 = vmatprep.subr.bf16.mxu0 0
    %2079 = vmatpush1.bf16.msra.mxu0 0
    %2080 = vmatprep.subr.bf16.mxu0 0
    %2081 = vmatpush1.bf16.msra.mxu0 0
    %2082 = vmatprep.subr.bf16.mxu0 0
    %2083 = vmatpush1.bf16.msra.mxu0 0
    %2084 = vmatprep.subr.bf16.mxu0 0
    %2085 = vmatpush1.bf16.msra.mxu0 0
    %2086 = vmatprep.subr.bf16.mxu0 0
    %2087 = vmatpush1.bf16.msra.mxu0 0
    %2088 = vmatprep.subr.bf16.mxu0 0
    %2089 = vmatpush1.bf16.msra.mxu0 0
    %2090 = vmatprep.subr.bf16.mxu0 0
    %2091 = vmatpush1.bf16.msra.mxu0 0
    %2092 = vmatprep.subr.bf16.mxu0 0
    %2093 = vmatpush1.bf16.msra.mxu0 0
    %2094 = vmatprep.subr.bf16.mxu0 0
    %2095 = vmatpush1.bf16.msra.mxu0 0
    %2096 = vmatprep.mubr.bf16.mxu0 0
    %2097 = vmatmul.mubr.bf16.gmra.mrb[0].mxu0 %v1028
    %v2098 = vpop.f32.mrb[0].mxu0
    %v2099 = vadd.f32 0.0, %v2098
    %v2100 = vpop.f32.mrb[0].mxu0
    %v2101 = vpop.f32.mrb[0].mxu0
    %v2102 = vpop.f32.mrb[0].mxu0
    %2103 = vdwg.mxu0
    %v2104 = vadd.f32 %v1992, %v2058
    %v2105 = vadd.f32 %v1993, %v2060
    %v2106 = vadd.f32 %v1994, %v2099
    %v2107 = vld [vmem:[%s2] sm:$0xf]
    %2109 = vset.pattern.permute.xlu0 0
    %2110 = vperm.xlu0 %2109, %v2107
    %v2111 = vpop.permute.xlu0 %2110
    %v2113 = vmul.f32 %v1120, %v2111
    %v2114 = vmul.f32 %v1121, %v2111
    %v2115 = vmul.f32 %v1122, %v2111
    %v2116 = vmul.f32 %v2104, %v2111
    %v2117 = vmul.f32 %v2105, %v2111
    %v2118 = vmul.f32 %v2106, %v2111
    %v2119 = vld [vmem:[%s3] sm:$0xf]
    %2121 = vset.pattern.permute.xlu0 0
    %2122 = vperm.xlu0 %2121, %v2119
    %v2123 = vpop.permute.xlu0 %2122
    %v2125 = vadd.f32 %v2113, %v2123
    %v2126 = vadd.f32 %v2114, %v2123
    %v2127 = vadd.f32 %v2115, %v2123
    %v2128 = vadd.f32 %v2116, %v2123
    %v2129 = vadd.f32 %v2117, %v2123
    %v2130 = vadd.f32 %v2118, %v2123
    %v2131 = vmax.f32 %v2125, 0.0
    %v2132 = vmax.f32 %v2126, 0.0
    %v2133 = vmax.f32 %v2127, 0.0
    %v2134 = vmax.f32 %v2128, 0.0
    %v2135 = vmax.f32 %v2129, 0.0
    %v2136 = vmax.f32 %v2130, 0.0
    %v2137 = vmul.f32 %v2131, %v37
    %v2138 = vmul.f32 %v2132, %v41
    %v2139 = vmul.f32 %v2133, %v45
    %v2140 = vmul.f32 %v2134, %v37
    %v2141 = vmul.f32 %v2135, %v41
    %v2142 = vmul.f32 %v2136, %v45
    %v2149 = vcombine.low %v2137, %v2138
    %v2150 = vcombine.low %v2140, %v2141
    %2151 = vrot.lane.b32.xlu0 %v2149, 19
    %v2152 = vpop.permute.xlu0 %2151
    %2153 = vrot.lane.b32.xlu0 %v2139, 19
    %v2154 = vpop.permute.xlu0 %2153
    %2155 = vrot.lane.b32.xlu0 %v2150, 19
    %v2156 = vpop.permute.xlu0 %2155
    %2157 = vrot.lane.b32.xlu0 %v2142, 19
    %v2158 = vpop.permute.xlu0 %2157
    %v2159 = vrot.slane %v2152, 4
    %v2160 = vrot.slane %v2156, 4
    %v2161 = vsel %vm69, %v2159, %v2152
    %v2162 = vsel %vm69, %v2159, %v2154
    %v2163 = vsel %vm69, %v2160, %v2156
    %v2164 = vsel %vm69, %v2160, %v2158
    %2169 = vst.msk [vmem:[#allocation2] sm:$0xff] %vm80, %v2161
    %2170 = vst.msk [vmem:[#allocation2 + $0x8] sm:$0xf] %vm82, %v2162
    %2171 = vst.msk [vmem:[#allocation2 + $0xc] sm:$0xff] %vm80, %v2163
    %2172 = vst.msk [vmem:[#allocation2 + $0x14] sm:$0xf] %vm82, %v2164
    %v2173 = vld [vmem:[#allocation2] sm:$0xff]
    %v2174 = vld [vmem:[#allocation2 + $0x8] sm:$0xf]
    %v2176 = vcombine.high %v2173, %v2173
    %v2178 = vpack.c.bf16 %v2173, %v2173
    %v2179 = vpack.c.bf16 %v2176, %v2176
    %v2180 = vpack.c.bf16 %v2174, %v2174
    %s2181 = scalar_lea.vmem %s1, 18
    %v2182 = vld [vmem:[%s2181] sm:$0x3]
    %s2183 = scalar_lea.vmem %s1, 20
    %v2184 = vld [vmem:[%s2183] sm:$0x3]
    %2188 = vrot.lane.b32.xlu0 %v2178, 127
    %v2189 = vpop.permute.xlu0 %2188
    %2190 = vrot.lane.b32.xlu0 %v2179, 127
    %v2191 = vpop.permute.xlu0 %2190
    %2192 = vrot.lane.b32.xlu0 %v2180, 127
    %v2193 = vpop.permute.xlu0 %2192
    %v2194 = vsel %vm106, %v2189, %v2191
    %v2195 = vsel %vm106, %v2191, %v2193
    %v2197 = vsel %vm109, %v2184, 0
    %v2200 = vsel %vm113, %v2194, 0
    %v2203 = vsel %vm113, %v2195, 0
    %v2206 = vsel %vm113, %v2193, 0
    %2208 = vmatprep.subr.bf16.mxu0 %v2203
    %2209 = vmatpush1.bf16.msra.mxu0 %v2200
    %2210 = vmatprep.subr.bf16.mxu0 0
    %2211 = vmatpush1.bf16.msra.mxu0 0
    %2212 = vmatprep.subr.bf16.mxu0 0
    %2213 = vmatpush1.bf16.msra.mxu0 0
    %2214 = vmatprep.subr.bf16.mxu0 0
    %2215 = vmatpush1.bf16.msra.mxu0 0
    %2216 = vmatprep.subr.bf16.mxu0 0
    %2217 = vmatpush1.bf16.msra.mxu0 0
    %2218 = vmatprep.subr.bf16.mxu0 0
    %2219 = vmatpush1.bf16.msra.mxu0 0
    %2220 = vmatprep.subr.bf16.mxu0 0
    %2221 = vmatpush1.bf16.msra.mxu0 0
    %2222 = vmatprep.subr.bf16.mxu0 0
    %2223 = vmatpush1.bf16.msra.mxu0 0
    %2224 = vmatprep.subr.bf16.mxu0 0
    %2225 = vmatpush1.bf16.msra.mxu0 0
    %2226 = vmatprep.subr.bf16.mxu0 0
    %2227 = vmatpush1.bf16.msra.mxu0 0
    %2228 = vmatprep.subr.bf16.mxu0 0
    %2229 = vmatpush1.bf16.msra.mxu0 0
    %2230 = vmatprep.subr.bf16.mxu0 0
    %2231 = vmatpush1.bf16.msra.mxu0 0
    %2232 = vmatprep.subr.bf16.mxu0 0
    %2233 = vmatpush1.bf16.msra.mxu0 0
    %2234 = vmatprep.subr.bf16.mxu0 0
    %2235 = vmatpush1.bf16.msra.mxu0 0
    %2236 = vmatprep.subr.bf16.mxu0 0
    %2237 = vmatpush1.bf16.msra.mxu0 0
    %2238 = vmatprep.subr.bf16.mxu0 0
    %2239 = vmatpush1.bf16.msra.mxu0 0
    %2240 = vmatprep.mubr.bf16.mxu0 0
    %2241 = vmatmul.mubr.bf16.gmra.mrb[0].mxu0 %v2197
    %v2242 = vpop.f32.mrb[0].mxu0
    %v2243 = vadd.f32 0.0, %v2242
    %v2244 = vpop.f32.mrb[0].mxu0
    %v2245 = vadd.f32 0.0, %v2244
    %v2246 = vpop.f32.mrb[0].mxu0
    %v2247 = vpop.f32.mrb[0].mxu0
    %2248 = vdwg.mxu0
    %2249 = vmatprep.subr.bf16.mxu0 0
    %2250 = vmatpush1.bf16.msra.mxu0 %v2206
    %2251 = vmatprep.subr.bf16.mxu0 0
    %2252 = vmatpush1.bf16.msra.mxu0 0
    %2253 = vmatprep.subr.bf16.mxu0 0
    %2254 = vmatpush1.bf16.msra.mxu0 0
    %2255 = vmatprep.subr.bf16.mxu0 0
    %2256 = vmatpush1.bf16.msra.mxu0 0
    %2257 = vmatprep.subr.bf16.mxu0 0
    %2258 = vmatpush1.bf16.msra.mxu0 0
    %2259 = vmatprep.subr.bf16.mxu0 0
    %2260 = vmatpush1.bf16.msra.mxu0 0
    %2261 = vmatprep.subr.bf16.mxu0 0
    %2262 = vmatpush1.bf16.msra.mxu0 0
    %2263 = vmatprep.subr.bf16.mxu0 0
    %2264 = vmatpush1.bf16.msra.mxu0 0
    %2265 = vmatprep.subr.bf16.mxu0 0
    %2266 = vmatpush1.bf16.msra.mxu0 0
    %2267 = vmatprep.subr.bf16.mxu0 0
    %2268 = vmatpush1.bf16.msra.mxu0 0
    %2269 = vmatprep.subr.bf16.mxu0 0
    %2270 = vmatpush1.bf16.msra.mxu0 0
    %2271 = vmatprep.subr.bf16.mxu0 0
    %2272 = vmatpush1.bf16.msra.mxu0 0
    %2273 = vmatprep.subr.bf16.mxu0 0
    %2274 = vmatpush1.bf16.msra.mxu0 0
    %2275 = vmatprep.subr.bf16.mxu0 0
    %2276 = vmatpush1.bf16.msra.mxu0 0
    %2277 = vmatprep.subr.bf16.mxu0 0
    %2278 = vmatpush1.bf16.msra.mxu0 0
    %2279 = vmatprep.subr.bf16.mxu0 0
    %2280 = vmatpush1.bf16.msra.mxu0 0
    %2281 = vmatprep.mubr.bf16.mxu0 0
    %2282 = vmatmul.mubr.bf16.gmra.mrb[0].mxu0 %v2197
    %v2283 = vpop.f32.mrb[0].mxu0
    %v2284 = vadd.f32 0.0, %v2283
    %v2285 = vpop.f32.mrb[0].mxu0
    %v2286 = vpop.f32.mrb[0].mxu0
    %v2287 = vpop.f32.mrb[0].mxu0
    %2288 = vdwg.mxu0
    %v2290 = vsel %vm109, %v2182, 0
    %v2293 = vsel %vm113, %v2178, 0
    %v2296 = vsel %vm113, %v2179, 0
    %v2299 = vsel %vm113, %v2180, 0
    %2301 = vmatprep.subr.bf16.mxu0 %v2296
    %2302 = vmatpush1.bf16.msra.mxu0 %v2293
    %2303 = vmatprep.subr.bf16.mxu0 0
    %2304 = vmatpush1.bf16.msra.mxu0 0
    %2305 = vmatprep.subr.bf16.mxu0 0
    %2306 = vmatpush1.bf16.msra.mxu0 0
    %2307 = vmatprep.subr.bf16.mxu0 0
    %2308 = vmatpush1.bf16.msra.mxu0 0
    %2309 = vmatprep.subr.bf16.mxu0 0
    %2310 = vmatpush1.bf16.msra.mxu0 0
    %2311 = vmatprep.subr.bf16.mxu0 0
    %2312 = vmatpush1.bf16.msra.mxu0 0
    %2313 = vmatprep.subr.bf16.mxu0 0
    %2314 = vmatpush1.bf16.msra.mxu0 0
    %2315 = vmatprep.subr.bf16.mxu0 0
    %2316 = vmatpush1.bf16.msra.mxu0 0
    %2317 = vmatprep.subr.bf16.mxu0 0
    %2318 = vmatpush1.bf16.msra.mxu0 0
    %2319 = vmatprep.subr.bf16.mxu0 0
    %2320 = vmatpush1.bf16.msra.mxu0 0
    %2321 = vmatprep.subr.bf16.mxu0 0
    %2322 = vmatpush1.bf16.msra.mxu0 0
    %2323 = vmatprep.subr.bf16.mxu0 0
    %2324 = vmatpush1.bf16.msra.mxu0 0
    %2325 = vmatprep.subr.bf16.mxu0 0
    %2326 = vmatpush1.bf16.msra.mxu0 0
    %2327 = vmatprep.subr.bf16.mxu0 0
    %2328 = vmatpush1.bf16.msra.mxu0 0
    %2329 = vmatprep.subr.bf16.mxu0 0
    %2330 = vmatpush1.bf16.msra.mxu0 0
    %2331 = vmatprep.subr.bf16.mxu0 0
    %2332 = vmatpush1.bf16.msra.mxu0 0
    %2333 = vmatprep.mubr.bf16.mxu0 0
    %2334 = vmatmul.mubr.bf16.gmra.mrb[0].mxu0 %v2290
    %v2335 = vpop.f32.mrb[0].mxu0
    %v2336 = vadd.f32 %v2243, %v2335
    %v2337 = vpop.f32.mrb[0].mxu0
    %v2338 = vadd.f32 %v2245, %v2337
    %v2339 = vpop.f32.mrb[0].mxu0
    %v2340 = vpop.f32.mrb[0].mxu0
    %2341 = vdwg.mxu0
    %2342 = vmatprep.subr.bf16.mxu0 0
    %2343 = vmatpush1.bf16.msra.mxu0 %v2299
    %2344 = vmatprep.subr.bf16.mxu0 0
    %2345 = vmatpush1.bf16.msra.mxu0 0
    %2346 = vmatprep.subr.bf16.mxu0 0
    %2347 = vmatpush1.bf16.msra.mxu0 0
    %2348 = vmatprep.subr.bf16.mxu0 0
    %2349 = vmatpush1.bf16.msra.mxu0 0
    %2350 = vmatprep.subr.bf16.mxu0 0
    %2351 = vmatpush1.bf16.msra.mxu0 0
    %2352 = vmatprep.subr.bf16.mxu0 0
    %2353 = vmatpush1.bf16.msra.mxu0 0
    %2354 = vmatprep.subr.bf16.mxu0 0
    %2355 = vmatpush1.bf16.msra.mxu0 0
    %2356 = vmatprep.subr.bf16.mxu0 0
    %2357 = vmatpush1.bf16.msra.mxu0 0
    %2358 = vmatprep.subr.bf16.mxu0 0
    %2359 = vmatpush1.bf16.msra.mxu0 0
    %2360 = vmatprep.subr.bf16.mxu0 0
    %2361 = vmatpush1.bf16.msra.mxu0 0
    %2362 = vmatprep.subr.bf16.mxu0 0
    %2363 = vmatpush1.bf16.msra.mxu0 0
    %2364 = vmatprep.subr.bf16.mxu0 0
    %2365 = vmatpush1.bf16.msra.mxu0 0
    %2366 = vmatprep.subr.bf16.mxu0 0
    %2367 = vmatpush1.bf16.msra.mxu0 0
    %2368 = vmatprep.subr.bf16.mxu0 0
    %2369 = vmatpush1.bf16.msra.mxu0 0
    %2370 = vmatprep.subr.bf16.mxu0 0
    %2371 = vmatpush1.bf16.msra.mxu0 0
    %2372 = vmatprep.subr.bf16.mxu0 0
    %2373 = vmatpush1.bf16.msra.mxu0 0
    %2374 = vmatprep.mubr.bf16.mxu0 0
    %2375 = vmatmul.mubr.bf16.gmra.mrb[0].mxu0 %v2290
    %v2376 = vpop.f32.mrb[0].mxu0
    %v2377 = vadd.f32 %v2284, %v2376
    %v2378 = vpop.f32.mrb[0].mxu0
    %v2379 = vpop.f32.mrb[0].mxu0
    %v2380 = vpop.f32.mrb[0].mxu0
    %2381 = vdwg.mxu0
    %v2382 = vld [vmem:[#allocation2] sm:$0xff]
    %v2383 = vld [vmem:[#allocation2 + $0x8] sm:$0xf]
    %v2385 = vcombine.high %v2382, %v2382
    %v2387 = vpack.c.bf16 %v2382, %v2382
    %v2388 = vpack.c.bf16 %v2385, %v2385
    %v2389 = vpack.c.bf16 %v2383, %v2383
    %s2390 = scalar_lea.vmem %s1, 22
    %v2391 = vld [vmem:[%s2390] sm:$0x3]
    %2395 = vrot.lane.b32.xlu0 %v2387, 126
    %v2396 = vpop.permute.xlu0 %2395
    %2397 = vrot.lane.b32.xlu0 %v2388, 126
    %v2398 = vpop.permute.xlu0 %2397
    %2399 = vrot.lane.b32.xlu0 %v2389, 126
    %v2400 = vpop.permute.xlu0 %2399
    %v2401 = vsel %vm316, %v2396, %v2398
    %v2402 = vsel %vm316, %v2398, %v2400
    %v2404 = vsel %vm109, %v2391, 0
    %v2407 = vsel %vm113, %v2401, 0
    %v2410 = vsel %vm113, %v2402, 0
    %v2413 = vsel %vm113, %v2400, 0
    %2415 = vmatprep.subr.bf16.mxu0 %v2410
    %2416 = vmatpush1.bf16.msra.mxu0 %v2407
    %2417 = vmatprep.subr.bf16.mxu0 0
    %2418 = vmatpush1.bf16.msra.mxu0 0
    %2419 = vmatprep.subr.bf16.mxu0 0
    %2420 = vmatpush1.bf16.msra.mxu0 0
    %2421 = vmatprep.subr.bf16.mxu0 0
    %2422 = vmatpush1.bf16.msra.mxu0 0
    %2423 = vmatprep.subr.bf16.mxu0 0
    %2424 = vmatpush1.bf16.msra.mxu0 0
    %2425 = vmatprep.subr.bf16.mxu0 0
    %2426 = vmatpush1.bf16.msra.mxu0 0
    %2427 = vmatprep.subr.bf16.mxu0 0
    %2428 = vmatpush1.bf16.msra.mxu0 0
    %2429 = vmatprep.subr.bf16.mxu0 0
    %2430 = vmatpush1.bf16.msra.mxu0 0
    %2431 = vmatprep.subr.bf16.mxu0 0
    %2432 = vmatpush1.bf16.msra.mxu0 0
    %2433 = vmatprep.subr.bf16.mxu0 0
    %2434 = vmatpush1.bf16.msra.mxu0 0
    %2435 = vmatprep.subr.bf16.mxu0 0
    %2436 = vmatpush1.bf16.msra.mxu0 0
    %2437 = vmatprep.subr.bf16.mxu0 0
    %2438 = vmatpush1.bf16.msra.mxu0 0
    %2439 = vmatprep.subr.bf16.mxu0 0
    %2440 = vmatpush1.bf16.msra.mxu0 0
    %2441 = vmatprep.subr.bf16.mxu0 0
    %2442 = vmatpush1.bf16.msra.mxu0 0
    %2443 = vmatprep.subr.bf16.mxu0 0
    %2444 = vmatpush1.bf16.msra.mxu0 0
    %2445 = vmatprep.subr.bf16.mxu0 0
    %2446 = vmatpush1.bf16.msra.mxu0 0
    %2447 = vmatprep.mubr.bf16.mxu0 0
    %2448 = vmatmul.mubr.bf16.gmra.mrb[0].mxu0 %v2404
    %v2449 = vpop.f32.mrb[0].mxu0
    %v2450 = vadd.f32 0.0, %v2449
    %v2451 = vpop.f32.mrb[0].mxu0
    %v2452 = vadd.f32 0.0, %v2451
    %v2453 = vpop.f32.mrb[0].mxu0
    %v2454 = vpop.f32.mrb[0].mxu0
    %2455 = vdwg.mxu0
    %2456 = vmatprep.subr.bf16.mxu0 0
    %2457 = vmatpush1.bf16.msra.mxu0 %v2413
    %2458 = vmatprep.subr.bf16.mxu0 0
    %2459 = vmatpush1.bf16.msra.mxu0 0
    %2460 = vmatprep.subr.bf16.mxu0 0
    %2461 = vmatpush1.bf16.msra.mxu0 0
    %2462 = vmatprep.subr.bf16.mxu0 0
    %2463 = vmatpush1.bf16.msra.mxu0 0
    %2464 = vmatprep.subr.bf16.mxu0 0
    %2465 = vmatpush1.bf16.msra.mxu0 0
    %2466 = vmatprep.subr.bf16.mxu0 0
    %2467 = vmatpush1.bf16.msra.mxu0 0
    %2468 = vmatprep.subr.bf16.mxu0 0
    %2469 = vmatpush1.bf16.msra.mxu0 0
    %2470 = vmatprep.subr.bf16.mxu0 0
    %2471 = vmatpush1.bf16.msra.mxu0 0
    %2472 = vmatprep.subr.bf16.mxu0 0
    %2473 = vmatpush1.bf16.msra.mxu0 0
    %2474 = vmatprep.subr.bf16.mxu0 0
    %2475 = vmatpush1.bf16.msra.mxu0 0
    %2476 = vmatprep.subr.bf16.mxu0 0
    %2477 = vmatpush1.bf16.msra.mxu0 0
    %2478 = vmatprep.subr.bf16.mxu0 0
    %2479 = vmatpush1.bf16.msra.mxu0 0
    %2480 = vmatprep.subr.bf16.mxu0 0
    %2481 = vmatpush1.bf16.msra.mxu0 0
    %2482 = vmatprep.subr.bf16.mxu0 0
    %2483 = vmatpush1.bf16.msra.mxu0 0
    %2484 = vmatprep.subr.bf16.mxu0 0
    %2485 = vmatpush1.bf16.msra.mxu0 0
    %2486 = vmatprep.subr.bf16.mxu0 0
    %2487 = vmatpush1.bf16.msra.mxu0 0
    %2488 = vmatprep.mubr.bf16.mxu0 0
    %2489 = vmatmul.mubr.bf16.gmra.mrb[0].mxu0 %v2404
    %v2490 = vpop.f32.mrb[0].mxu0
    %v2491 = vadd.f32 0.0, %v2490
    %v2492 = vpop.f32.mrb[0].mxu0
    %v2493 = vpop.f32.mrb[0].mxu0
    %v2494 = vpop.f32.mrb[0].mxu0
    %2495 = vdwg.mxu0
    %v2496 = vadd.f32 %v2336, %v2450
    %v2497 = vadd.f32 %v2338, %v2452
    %v2498 = vadd.f32 %v2377, %v2491
    %v2499 = vld [vmem:[#allocation2] sm:$0xff]
    %v2500 = vld [vmem:[#allocation2 + $0x8] sm:$0xf]
    %v2502 = vcombine.high %v2499, %v2499
    %v2504 = vpack.c.bf16 %v2499, %v2499
    %v2505 = vpack.c.bf16 %v2502, %v2502
    %v2506 = vpack.c.bf16 %v2500, %v2500
    %s2507 = scalar_lea.vmem %s1, 24
    %v2508 = vld [vmem:[%s2507] sm:$0x3]
    %2512 = vrot.lane.b32.xlu0 %v2504, 110
    %v2513 = vpop.permute.xlu0 %2512
    %2514 = vrot.lane.b32.xlu0 %v2505, 110
    %v2515 = vpop.permute.xlu0 %2514
    %2516 = vrot.lane.b32.xlu0 %v2506, 110
    %v2517 = vpop.permute.xlu0 %2516
    %v2518 = vsel %vm434, %v2513, %v2515
    %v2519 = vsel %vm434, %v2515, %v2517
    %v2521 = vsel %vm109, %v2508, 0
    %v2524 = vsel %vm113, %v2518, 0
    %v2527 = vsel %vm113, %v2519, 0
    %v2530 = vsel %vm113, %v2517, 0
    %2532 = vmatprep.subr.bf16.mxu0 %v2527
    %2533 = vmatpush1.bf16.msra.mxu0 %v2524
    %2534 = vmatprep.subr.bf16.mxu0 0
    %2535 = vmatpush1.bf16.msra.mxu0 0
    %2536 = vmatprep.subr.bf16.mxu0 0
    %2537 = vmatpush1.bf16.msra.mxu0 0
    %2538 = vmatprep.subr.bf16.mxu0 0
    %2539 = vmatpush1.bf16.msra.mxu0 0
    %2540 = vmatprep.subr.bf16.mxu0 0
    %2541 = vmatpush1.bf16.msra.mxu0 0
    %2542 = vmatprep.subr.bf16.mxu0 0
    %2543 = vmatpush1.bf16.msra.mxu0 0
    %2544 = vmatprep.subr.bf16.mxu0 0
    %2545 = vmatpush1.bf16.msra.mxu0 0
    %2546 = vmatprep.subr.bf16.mxu0 0
    %2547 = vmatpush1.bf16.msra.mxu0 0
    %2548 = vmatprep.subr.bf16.mxu0 0
    %2549 = vmatpush1.bf16.msra.mxu0 0
    %2550 = vmatprep.subr.bf16.mxu0 0
    %2551 = vmatpush1.bf16.msra.mxu0 0
    %2552 = vmatprep.subr.bf16.mxu0 0
    %2553 = vmatpush1.bf16.msra.mxu0 0
    %2554 = vmatprep.subr.bf16.mxu0 0
    %2555 = vmatpush1.bf16.msra.mxu0 0
    %2556 = vmatprep.subr.bf16.mxu0 0
    %2557 = vmatpush1.bf16.msra.mxu0 0
    %2558 = vmatprep.subr.bf16.mxu0 0
    %2559 = vmatpush1.bf16.msra.mxu0 0
    %2560 = vmatprep.subr.bf16.mxu0 0
    %2561 = vmatpush1.bf16.msra.mxu0 0
    %2562 = vmatprep.subr.bf16.mxu0 0
    %2563 = vmatpush1.bf16.msra.mxu0 0
    %2564 = vmatprep.mubr.bf16.mxu0 0
    %2565 = vmatmul.mubr.bf16.gmra.mrb[0].mxu0 %v2521
    %v2566 = vpop.f32.mrb[0].mxu0
    %v2567 = vadd.f32 0.0, %v2566
    %v2568 = vpop.f32.mrb[0].mxu0
    %v2569 = vadd.f32 0.0, %v2568
    %v2570 = vpop.f32.mrb[0].mxu0
    %v2571 = vpop.f32.mrb[0].mxu0
    %2572 = vdwg.mxu0
    %2573 = vmatprep.subr.bf16.mxu0 0
    %2574 = vmatpush1.bf16.msra.mxu0 %v2530
    %2575 = vmatprep.subr.bf16.mxu0 0
    %2576 = vmatpush1.bf16.msra.mxu0 0
    %2577 = vmatprep.subr.bf16.mxu0 0
    %2578 = vmatpush1.bf16.msra.mxu0 0
    %2579 = vmatprep.subr.bf16.mxu0 0
    %2580 = vmatpush1.bf16.msra.mxu0 0
    %2581 = vmatprep.subr.bf16.mxu0 0
    %2582 = vmatpush1.bf16.msra.mxu0 0
    %2583 = vmatprep.subr.bf16.mxu0 0
    %2584 = vmatpush1.bf16.msra.mxu0 0
    %2585 = vmatprep.subr.bf16.mxu0 0
    %2586 = vmatpush1.bf16.msra.mxu0 0
    %2587 = vmatprep.subr.bf16.mxu0 0
    %2588 = vmatpush1.bf16.msra.mxu0 0
    %2589 = vmatprep.subr.bf16.mxu0 0
    %2590 = vmatpush1.bf16.msra.mxu0 0
    %2591 = vmatprep.subr.bf16.mxu0 0
    %2592 = vmatpush1.bf16.msra.mxu0 0
    %2593 = vmatprep.subr.bf16.mxu0 0
    %2594 = vmatpush1.bf16.msra.mxu0 0
    %2595 = vmatprep.subr.bf16.mxu0 0
    %2596 = vmatpush1.bf16.msra.mxu0 0
    %2597 = vmatprep.subr.bf16.mxu0 0
    %2598 = vmatpush1.bf16.msra.mxu0 0
    %2599 = vmatprep.subr.bf16.mxu0 0
    %2600 = vmatpush1.bf16.msra.mxu0 0
    %2601 = vmatprep.subr.bf16.mxu0 0
    %2602 = vmatpush1.bf16.msra.mxu0 0
    %2603 = vmatprep.subr.bf16.mxu0 0
    %2604 = vmatpush1.bf16.msra.mxu0 0
    %2605 = vmatprep.mubr.bf16.mxu0 0
    %2606 = vmatmul.mubr.bf16.gmra.mrb[0].mxu0 %v2521
    %v2607 = vpop.f32.mrb[0].mxu0
    %v2608 = vadd.f32 0.0, %v2607
    %v2609 = vpop.f32.mrb[0].mxu0
    %v2610 = vpop.f32.mrb[0].mxu0
    %v2611 = vpop.f32.mrb[0].mxu0
    %2612 = vdwg.mxu0
    %v2613 = vadd.f32 %v2496, %v2567
    %v2614 = vadd.f32 %v2497, %v2569
    %v2615 = vadd.f32 %v2498, %v2608
    %v2616 = vld [vmem:[#allocation2] sm:$0xff]
    %v2617 = vld [vmem:[#allocation2 + $0x8] sm:$0xf]
    %v2619 = vcombine.high %v2616, %v2616
    %v2621 = vpack.c.bf16 %v2616, %v2616
    %v2622 = vpack.c.bf16 %v2619, %v2619
    %v2623 = vpack.c.bf16 %v2617, %v2617
    %s2624 = scalar_lea.vmem %s1, 26
    %v2625 = vld [vmem:[%s2624] sm:$0x3]
    %2629 = vrot.lane.b32.xlu0 %v2621, 109
    %v2630 = vpop.permute.xlu0 %2629
    %2631 = vrot.lane.b32.xlu0 %v2622, 109
    %v2632 = vpop.permute.xlu0 %2631
    %2633 = vrot.lane.b32.xlu0 %v2623, 109
    %v2634 = vpop.permute.xlu0 %2633
    %v2635 = vsel %vm552, %v2630, %v2632
    %v2636 = vsel %vm552, %v2632, %v2634
    %v2638 = vsel %vm109, %v2625, 0
    %v2641 = vsel %vm113, %v2635, 0
    %v2644 = vsel %vm113, %v2636, 0
    %v2647 = vsel %vm113, %v2634, 0
    %2649 = vmatprep.subr.bf16.mxu0 %v2644
    %2650 = vmatpush1.bf16.msra.mxu0 %v2641
    %2651 = vmatprep.subr.bf16.mxu0 0
    %2652 = vmatpush1.bf16.msra.mxu0 0
    %2653 = vmatprep.subr.bf16.mxu0 0
    %2654 = vmatpush1.bf16.msra.mxu0 0
    %2655 = vmatprep.subr.bf16.mxu0 0
    %2656 = vmatpush1.bf16.msra.mxu0 0
    %2657 = vmatprep.subr.bf16.mxu0 0
    %2658 = vmatpush1.bf16.msra.mxu0 0
    %2659 = vmatprep.subr.bf16.mxu0 0
    %2660 = vmatpush1.bf16.msra.mxu0 0
    %2661 = vmatprep.subr.bf16.mxu0 0
    %2662 = vmatpush1.bf16.msra.mxu0 0
    %2663 = vmatprep.subr.bf16.mxu0 0
    %2664 = vmatpush1.bf16.msra.mxu0 0
    %2665 = vmatprep.subr.bf16.mxu0 0
    %2666 = vmatpush1.bf16.msra.mxu0 0
    %2667 = vmatprep.subr.bf16.mxu0 0
    %2668 = vmatpush1.bf16.msra.mxu0 0
    %2669 = vmatprep.subr.bf16.mxu0 0
    %2670 = vmatpush1.bf16.msra.mxu0 0
    %2671 = vmatprep.subr.bf16.mxu0 0
    %2672 = vmatpush1.bf16.msra.mxu0 0
    %2673 = vmatprep.subr.bf16.mxu0 0
    %2674 = vmatpush1.bf16.msra.mxu0 0
    %2675 = vmatprep.subr.bf16.mxu0 0
    %2676 = vmatpush1.bf16.msra.mxu0 0
    %2677 = vmatprep.subr.bf16.mxu0 0
    %2678 = vmatpush1.bf16.msra.mxu0 0
    %2679 = vmatprep.subr.bf16.mxu0 0
    %2680 = vmatpush1.bf16.msra.mxu0 0
    %2681 = vmatprep.mubr.bf16.mxu0 0
    %2682 = vmatmul.mubr.bf16.gmra.mrb[0].mxu0 %v2638
    %v2683 = vpop.f32.mrb[0].mxu0
    %v2684 = vadd.f32 0.0, %v2683
    %v2685 = vpop.f32.mrb[0].mxu0
    %v2686 = vadd.f32 0.0, %v2685
    %v2687 = vpop.f32.mrb[0].mxu0
    %v2688 = vpop.f32.mrb[0].mxu0
    %2689 = vdwg.mxu0
    %2690 = vmatprep.subr.bf16.mxu0 0
    %2691 = vmatpush1.bf16.msra.mxu0 %v2647
    %2692 = vmatprep.subr.bf16.mxu0 0
    %2693 = vmatpush1.bf16.msra.mxu0 0
    %2694 = vmatprep.subr.bf16.mxu0 0
    %2695 = vmatpush1.bf16.msra.mxu0 0
    %2696 = vmatprep.subr.bf16.mxu0 0
    %2697 = vmatpush1.bf16.msra.mxu0 0
    %2698 = vmatprep.subr.bf16.mxu0 0
    %2699 = vmatpush1.bf16.msra.mxu0 0
    %2700 = vmatprep.subr.bf16.mxu0 0
    %2701 = vmatpush1.bf16.msra.mxu0 0
    %2702 = vmatprep.subr.bf16.mxu0 0
    %2703 = vmatpush1.bf16.msra.mxu0 0
    %2704 = vmatprep.subr.bf16.mxu0 0
    %2705 = vmatpush1.bf16.msra.mxu0 0
    %2706 = vmatprep.subr.bf16.mxu0 0
    %2707 = vmatpush1.bf16.msra.mxu0 0
    %2708 = vmatprep.subr.bf16.mxu0 0
    %2709 = vmatpush1.bf16.msra.mxu0 0
    %2710 = vmatprep.subr.bf16.mxu0 0
    %2711 = vmatpush1.bf16.msra.mxu0 0
    %2712 = vmatprep.subr.bf16.mxu0 0
    %2713 = vmatpush1.bf16.msra.mxu0 0
    %2714 = vmatprep.subr.bf16.mxu0 0
    %2715 = vmatpush1.bf16.msra.mxu0 0
    %2716 = vmatprep.subr.bf16.mxu0 0
    %2717 = vmatpush1.bf16.msra.mxu0 0
    %2718 = vmatprep.subr.bf16.mxu0 0
    %2719 = vmatpush1.bf16.msra.mxu0 0
    %2720 = vmatprep.subr.bf16.mxu0 0
    %2721 = vmatpush1.bf16.msra.mxu0 0
    %2722 = vmatprep.mubr.bf16.mxu0 0
    %2723 = vmatmul.mubr.bf16.gmra.mrb[0].mxu0 %v2638
    %v2724 = vpop.f32.mrb[0].mxu0
    %v2725 = vadd.f32 0.0, %v2724
    %v2726 = vpop.f32.mrb[0].mxu0
    %v2727 = vpop.f32.mrb[0].mxu0
    %v2728 = vpop.f32.mrb[0].mxu0
    %2729 = vdwg.mxu0
    %v2730 = vadd.f32 %v2613, %v2684
    %v2731 = vadd.f32 %v2614, %v2686
    %v2732 = vadd.f32 %v2615, %v2725
    %v2733 = vld [vmem:[#allocation2] sm:$0xff]
    %v2734 = vld [vmem:[#allocation2 + $0x8] sm:$0xf]
    %v2736 = vcombine.high %v2733, %v2733
    %v2738 = vpack.c.bf16 %v2733, %v2733
    %v2739 = vpack.c.bf16 %v2736, %v2736
    %v2740 = vpack.c.bf16 %v2734, %v2734
    %s2741 = scalar_lea.vmem %s1, 28
    %v2742 = vld [vmem:[%s2741] sm:$0x3]
    %2746 = vrot.lane.b32.xlu0 %v2738, 108
    %v2747 = vpop.permute.xlu0 %2746
    %2748 = vrot.lane.b32.xlu0 %v2739, 108
    %v2749 = vpop.permute.xlu0 %2748
    %2750 = vrot.lane.b32.xlu0 %v2740, 108
    %v2751 = vpop.permute.xlu0 %2750
    %v2752 = vsel %vm670, %v2747, %v2749
    %v2753 = vsel %vm670, %v2749, %v2751
    %v2755 = vsel %vm109, %v2742, 0
    %v2758 = vsel %vm113, %v2752, 0
    %v2761 = vsel %vm113, %v2753, 0
    %v2764 = vsel %vm113, %v2751, 0
    %2766 = vmatprep.subr.bf16.mxu0 %v2761
    %2767 = vmatpush1.bf16.msra.mxu0 %v2758
    %2768 = vmatprep.subr.bf16.mxu0 0
    %2769 = vmatpush1.bf16.msra.mxu0 0
    %2770 = vmatprep.subr.bf16.mxu0 0
    %2771 = vmatpush1.bf16.msra.mxu0 0
    %2772 = vmatprep.subr.bf16.mxu0 0
    %2773 = vmatpush1.bf16.msra.mxu0 0
    %2774 = vmatprep.subr.bf16.mxu0 0
    %2775 = vmatpush1.bf16.msra.mxu0 0
    %2776 = vmatprep.subr.bf16.mxu0 0
    %2777 = vmatpush1.bf16.msra.mxu0 0
    %2778 = vmatprep.subr.bf16.mxu0 0
    %2779 = vmatpush1.bf16.msra.mxu0 0
    %2780 = vmatprep.subr.bf16.mxu0 0
    %2781 = vmatpush1.bf16.msra.mxu0 0
    %2782 = vmatprep.subr.bf16.mxu0 0
    %2783 = vmatpush1.bf16.msra.mxu0 0
    %2784 = vmatprep.subr.bf16.mxu0 0
    %2785 = vmatpush1.bf16.msra.mxu0 0
    %2786 = vmatprep.subr.bf16.mxu0 0
    %2787 = vmatpush1.bf16.msra.mxu0 0
    %2788 = vmatprep.subr.bf16.mxu0 0
    %2789 = vmatpush1.bf16.msra.mxu0 0
    %2790 = vmatprep.subr.bf16.mxu0 0
    %2791 = vmatpush1.bf16.msra.mxu0 0
    %2792 = vmatprep.subr.bf16.mxu0 0
    %2793 = vmatpush1.bf16.msra.mxu0 0
    %2794 = vmatprep.subr.bf16.mxu0 0
    %2795 = vmatpush1.bf16.msra.mxu0 0
    %2796 = vmatprep.subr.bf16.mxu0 0
    %2797 = vmatpush1.bf16.msra.mxu0 0
    %2798 = vmatprep.mubr.bf16.mxu0 0
    %2799 = vmatmul.mubr.bf16.gmra.mrb[0].mxu0 %v2755
    %v2800 = vpop.f32.mrb[0].mxu0
    %v2801 = vadd.f32 0.0, %v2800
    %v2802 = vpop.f32.mrb[0].mxu0
    %v2803 = vadd.f32 0.0, %v2802
    %v2804 = vpop.f32.mrb[0].mxu0
    %v2805 = vpop.f32.mrb[0].mxu0
    %2806 = vdwg.mxu0
    %2807 = vmatprep.subr.bf16.mxu0 0
    %2808 = vmatpush1.bf16.msra.mxu0 %v2764
    %2809 = vmatprep.subr.bf16.mxu0 0
    %2810 = vmatpush1.bf16.msra.mxu0 0
    %2811 = vmatprep.subr.bf16.mxu0 0
    %2812 = vmatpush1.bf16.msra.mxu0 0
    %2813 = vmatprep.subr.bf16.mxu0 0
    %2814 = vmatpush1.bf16.msra.mxu0 0
    %2815 = vmatprep.subr.bf16.mxu0 0
    %2816 = vmatpush1.bf16.msra.mxu0 0
    %2817 = vmatprep.subr.bf16.mxu0 0
    %2818 = vmatpush1.bf16.msra.mxu0 0
    %2819 = vmatprep.subr.bf16.mxu0 0
    %2820 = vmatpush1.bf16.msra.mxu0 0
    %2821 = vmatprep.subr.bf16.mxu0 0
    %2822 = vmatpush1.bf16.msra.mxu0 0
    %2823 = vmatprep.subr.bf16.mxu0 0
    %2824 = vmatpush1.bf16.msra.mxu0 0
    %2825 = vmatprep.subr.bf16.mxu0 0
    %2826 = vmatpush1.bf16.msra.mxu0 0
    %2827 = vmatprep.subr.bf16.mxu0 0
    %2828 = vmatpush1.bf16.msra.mxu0 0
    %2829 = vmatprep.subr.bf16.mxu0 0
    %2830 = vmatpush1.bf16.msra.mxu0 0
    %2831 = vmatprep.subr.bf16.mxu0 0
    %2832 = vmatpush1.bf16.msra.mxu0 0
    %2833 = vmatprep.subr.bf16.mxu0 0
    %2834 = vmatpush1.bf16.msra.mxu0 0
    %2835 = vmatprep.subr.bf16.mxu0 0
    %2836 = vmatpush1.bf16.msra.mxu0 0
    %2837 = vmatprep.subr.bf16.mxu0 0
    %2838 = vmatpush1.bf16.msra.mxu0 0
    %2839 = vmatprep.mubr.bf16.mxu0 0
    %2840 = vmatmul.mubr.bf16.gmra.mrb[0].mxu0 %v2755
    %v2841 = vpop.f32.mrb[0].mxu0
    %v2842 = vadd.f32 0.0, %v2841
    %v2843 = vpop.f32.mrb[0].mxu0
    %v2844 = vpop.f32.mrb[0].mxu0
    %v2845 = vpop.f32.mrb[0].mxu0
    %2846 = vdwg.mxu0
    %v2847 = vadd.f32 %v2730, %v2801
    %v2848 = vadd.f32 %v2731, %v2803
    %v2849 = vadd.f32 %v2732, %v2842
    %v2850 = vld [vmem:[#allocation2] sm:$0xff]
    %v2851 = vld [vmem:[#allocation2 + $0x8] sm:$0xf]
    %v2853 = vcombine.high %v2850, %v2850
    %v2855 = vpack.c.bf16 %v2850, %v2850
    %v2856 = vpack.c.bf16 %v2853, %v2853
    %v2857 = vpack.c.bf16 %v2851, %v2851
    %s2858 = scalar_lea.vmem %s1, 30
    %v2859 = vld [vmem:[%s2858] sm:$0x3]
    %2863 = vrot.lane.b32.xlu0 %v2855, 92
    %v2864 = vpop.permute.xlu0 %2863
    %2865 = vrot.lane.b32.xlu0 %v2856, 92
    %v2866 = vpop.permute.xlu0 %2865
    %2867 = vrot.lane.b32.xlu0 %v2857, 92
    %v2868 = vpop.permute.xlu0 %2867
    %v2869 = vsel %vm788, %v2864, %v2866
    %v2870 = vsel %vm788, %v2866, %v2868
    %v2872 = vsel %vm109, %v2859, 0
    %v2875 = vsel %vm113, %v2869, 0
    %v2878 = vsel %vm113, %v2870, 0
    %v2881 = vsel %vm113, %v2868, 0
    %2883 = vmatprep.subr.bf16.mxu0 %v2878
    %2884 = vmatpush1.bf16.msra.mxu0 %v2875
    %2885 = vmatprep.subr.bf16.mxu0 0
    %2886 = vmatpush1.bf16.msra.mxu0 0
    %2887 = vmatprep.subr.bf16.mxu0 0
    %2888 = vmatpush1.bf16.msra.mxu0 0
    %2889 = vmatprep.subr.bf16.mxu0 0
    %2890 = vmatpush1.bf16.msra.mxu0 0
    %2891 = vmatprep.subr.bf16.mxu0 0
    %2892 = vmatpush1.bf16.msra.mxu0 0
    %2893 = vmatprep.subr.bf16.mxu0 0
    %2894 = vmatpush1.bf16.msra.mxu0 0
    %2895 = vmatprep.subr.bf16.mxu0 0
    %2896 = vmatpush1.bf16.msra.mxu0 0
    %2897 = vmatprep.subr.bf16.mxu0 0
    %2898 = vmatpush1.bf16.msra.mxu0 0
    %2899 = vmatprep.subr.bf16.mxu0 0
    %2900 = vmatpush1.bf16.msra.mxu0 0
    %2901 = vmatprep.subr.bf16.mxu0 0
    %2902 = vmatpush1.bf16.msra.mxu0 0
    %2903 = vmatprep.subr.bf16.mxu0 0
    %2904 = vmatpush1.bf16.msra.mxu0 0
    %2905 = vmatprep.subr.bf16.mxu0 0
    %2906 = vmatpush1.bf16.msra.mxu0 0
    %2907 = vmatprep.subr.bf16.mxu0 0
    %2908 = vmatpush1.bf16.msra.mxu0 0
    %2909 = vmatprep.subr.bf16.mxu0 0
    %2910 = vmatpush1.bf16.msra.mxu0 0
    %2911 = vmatprep.subr.bf16.mxu0 0
    %2912 = vmatpush1.bf16.msra.mxu0 0
    %2913 = vmatprep.subr.bf16.mxu0 0
    %2914 = vmatpush1.bf16.msra.mxu0 0
    %2915 = vmatprep.mubr.bf16.mxu0 0
    %2916 = vmatmul.mubr.bf16.gmra.mrb[0].mxu0 %v2872
    %v2917 = vpop.f32.mrb[0].mxu0
    %v2918 = vadd.f32 0.0, %v2917
    %v2919 = vpop.f32.mrb[0].mxu0
    %v2920 = vadd.f32 0.0, %v2919
    %v2921 = vpop.f32.mrb[0].mxu0
    %v2922 = vpop.f32.mrb[0].mxu0
    %2923 = vdwg.mxu0
    %2924 = vmatprep.subr.bf16.mxu0 0
    %2925 = vmatpush1.bf16.msra.mxu0 %v2881
    %2926 = vmatprep.subr.bf16.mxu0 0
    %2927 = vmatpush1.bf16.msra.mxu0 0
    %2928 = vmatprep.subr.bf16.mxu0 0
    %2929 = vmatpush1.bf16.msra.mxu0 0
    %2930 = vmatprep.subr.bf16.mxu0 0
    %2931 = vmatpush1.bf16.msra.mxu0 0
    %2932 = vmatprep.subr.bf16.mxu0 0
    %2933 = vmatpush1.bf16.msra.mxu0 0
    %2934 = vmatprep.subr.bf16.mxu0 0
    %2935 = vmatpush1.bf16.msra.mxu0 0
    %2936 = vmatprep.subr.bf16.mxu0 0
    %2937 = vmatpush1.bf16.msra.mxu0 0
    %2938 = vmatprep.subr.bf16.mxu0 0
    %2939 = vmatpush1.bf16.msra.mxu0 0
    %2940 = vmatprep.subr.bf16.mxu0 0
    %2941 = vmatpush1.bf16.msra.mxu0 0
    %2942 = vmatprep.subr.bf16.mxu0 0
    %2943 = vmatpush1.bf16.msra.mxu0 0
    %2944 = vmatprep.subr.bf16.mxu0 0
    %2945 = vmatpush1.bf16.msra.mxu0 0
    %2946 = vmatprep.subr.bf16.mxu0 0
    %2947 = vmatpush1.bf16.msra.mxu0 0
    %2948 = vmatprep.subr.bf16.mxu0 0
    %2949 = vmatpush1.bf16.msra.mxu0 0
    %2950 = vmatprep.subr.bf16.mxu0 0
    %2951 = vmatpush1.bf16.msra.mxu0 0
    %2952 = vmatprep.subr.bf16.mxu0 0
    %2953 = vmatpush1.bf16.msra.mxu0 0
    %2954 = vmatprep.subr.bf16.mxu0 0
    %2955 = vmatpush1.bf16.msra.mxu0 0
    %2956 = vmatprep.mubr.bf16.mxu0 0
    %2957 = vmatmul.mubr.bf16.gmra.mrb[0].mxu0 %v2872
    %v2958 = vpop.f32.mrb[0].mxu0
    %v2959 = vadd.f32 0.0, %v2958
    %v2960 = vpop.f32.mrb[0].mxu0
    %v2961 = vpop.f32.mrb[0].mxu0
    %v2962 = vpop.f32.mrb[0].mxu0
    %2963 = vdwg.mxu0
    %v2964 = vadd.f32 %v2847, %v2918
    %v2965 = vadd.f32 %v2848, %v2920
    %v2966 = vadd.f32 %v2849, %v2959
    %v2967 = vld [vmem:[#allocation2] sm:$0xff]
    %v2968 = vld [vmem:[#allocation2 + $0x8] sm:$0xf]
    %v2970 = vcombine.high %v2967, %v2967
    %v2972 = vpack.c.bf16 %v2967, %v2967
    %v2973 = vpack.c.bf16 %v2970, %v2970
    %v2974 = vpack.c.bf16 %v2968, %v2968
    %s2975 = scalar_lea.vmem %s1, 32
    %v2976 = vld [vmem:[%s2975] sm:$0x3]
    %2980 = vrot.lane.b32.xlu0 %v2972, 91
    %v2981 = vpop.permute.xlu0 %2980
    %2982 = vrot.lane.b32.xlu0 %v2973, 91
    %v2983 = vpop.permute.xlu0 %2982
    %2984 = vrot.lane.b32.xlu0 %v2974, 91
    %v2985 = vpop.permute.xlu0 %2984
    %v2986 = vsel %vm906, %v2981, %v2983
    %v2987 = vsel %vm906, %v2983, %v2985
    %v2989 = vsel %vm109, %v2976, 0
    %v2992 = vsel %vm113, %v2986, 0
    %v2995 = vsel %vm113, %v2987, 0
    %v2998 = vsel %vm113, %v2985, 0
    %3000 = vmatprep.subr.bf16.mxu0 %v2995
    %3001 = vmatpush1.bf16.msra.mxu0 %v2992
    %3002 = vmatprep.subr.bf16.mxu0 0
    %3003 = vmatpush1.bf16.msra.mxu0 0
    %3004 = vmatprep.subr.bf16.mxu0 0
    %3005 = vmatpush1.bf16.msra.mxu0 0
    %3006 = vmatprep.subr.bf16.mxu0 0
    %3007 = vmatpush1.bf16.msra.mxu0 0
    %3008 = vmatprep.subr.bf16.mxu0 0
    %3009 = vmatpush1.bf16.msra.mxu0 0
    %3010 = vmatprep.subr.bf16.mxu0 0
    %3011 = vmatpush1.bf16.msra.mxu0 0
    %3012 = vmatprep.subr.bf16.mxu0 0
    %3013 = vmatpush1.bf16.msra.mxu0 0
    %3014 = vmatprep.subr.bf16.mxu0 0
    %3015 = vmatpush1.bf16.msra.mxu0 0
    %3016 = vmatprep.subr.bf16.mxu0 0
    %3017 = vmatpush1.bf16.msra.mxu0 0
    %3018 = vmatprep.subr.bf16.mxu0 0
    %3019 = vmatpush1.bf16.msra.mxu0 0
    %3020 = vmatprep.subr.bf16.mxu0 0
    %3021 = vmatpush1.bf16.msra.mxu0 0
    %3022 = vmatprep.subr.bf16.mxu0 0
    %3023 = vmatpush1.bf16.msra.mxu0 0
    %3024 = vmatprep.subr.bf16.mxu0 0
    %3025 = vmatpush1.bf16.msra.mxu0 0
    %3026 = vmatprep.subr.bf16.mxu0 0
    %3027 = vmatpush1.bf16.msra.mxu0 0
    %3028 = vmatprep.subr.bf16.mxu0 0
    %3029 = vmatpush1.bf16.msra.mxu0 0
    %3030 = vmatprep.subr.bf16.mxu0 0
    %3031 = vmatpush1.bf16.msra.mxu0 0
    %3032 = vmatprep.mubr.bf16.mxu0 0
    %3033 = vmatmul.mubr.bf16.gmra.mrb[0].mxu0 %v2989
    %v3034 = vpop.f32.mrb[0].mxu0
    %v3035 = vadd.f32 0.0, %v3034
    %v3036 = vpop.f32.mrb[0].mxu0
    %v3037 = vadd.f32 0.0, %v3036
    %v3038 = vpop.f32.mrb[0].mxu0
    %v3039 = vpop.f32.mrb[0].mxu0
    %3040 = vdwg.mxu0
    %3041 = vmatprep.subr.bf16.mxu0 0
    %3042 = vmatpush1.bf16.msra.mxu0 %v2998
    %3043 = vmatprep.subr.bf16.mxu0 0
    %3044 = vmatpush1.bf16.msra.mxu0 0
    %3045 = vmatprep.subr.bf16.mxu0 0
    %3046 = vmatpush1.bf16.msra.mxu0 0
    %3047 = vmatprep.subr.bf16.mxu0 0
    %3048 = vmatpush1.bf16.msra.mxu0 0
    %3049 = vmatprep.subr.bf16.mxu0 0
    %3050 = vmatpush1.bf16.msra.mxu0 0
    %3051 = vmatprep.subr.bf16.mxu0 0
    %3052 = vmatpush1.bf16.msra.mxu0 0
    %3053 = vmatprep.subr.bf16.mxu0 0
    %3054 = vmatpush1.bf16.msra.mxu0 0
    %3055 = vmatprep.subr.bf16.mxu0 0
    %3056 = vmatpush1.bf16.msra.mxu0 0
    %3057 = vmatprep.subr.bf16.mxu0 0
    %3058 = vmatpush1.bf16.msra.mxu0 0
    %3059 = vmatprep.subr.bf16.mxu0 0
    %3060 = vmatpush1.bf16.msra.mxu0 0
    %3061 = vmatprep.subr.bf16.mxu0 0
    %3062 = vmatpush1.bf16.msra.mxu0 0
    %3063 = vmatprep.subr.bf16.mxu0 0
    %3064 = vmatpush1.bf16.msra.mxu0 0
    %3065 = vmatprep.subr.bf16.mxu0 0
    %3066 = vmatpush1.bf16.msra.mxu0 0
    %3067 = vmatprep.subr.bf16.mxu0 0
    %3068 = vmatpush1.bf16.msra.mxu0 0
    %3069 = vmatprep.subr.bf16.mxu0 0
    %3070 = vmatpush1.bf16.msra.mxu0 0
    %3071 = vmatprep.subr.bf16.mxu0 0
    %3072 = vmatpush1.bf16.msra.mxu0 0
    %3073 = vmatprep.mubr.bf16.mxu0 0
    %3074 = vmatmul.mubr.bf16.gmra.mrb[0].mxu0 %v2989
    %v3075 = vpop.f32.mrb[0].mxu0
    %v3076 = vadd.f32 0.0, %v3075
    %v3077 = vpop.f32.mrb[0].mxu0
    %v3078 = vpop.f32.mrb[0].mxu0
    %v3079 = vpop.f32.mrb[0].mxu0
    %3080 = vdwg.mxu0
    %v3081 = vadd.f32 %v2964, %v3035
    %v3082 = vadd.f32 %v2965, %v3037
    %v3083 = vadd.f32 %v2966, %v3076
    %v3084 = vld [vmem:[#allocation2] sm:$0xff]
    %v3085 = vld [vmem:[#allocation2 + $0x8] sm:$0xf]
    %v3087 = vcombine.high %v3084, %v3084
    %v3089 = vpack.c.bf16 %v3084, %v3084
    %v3090 = vpack.c.bf16 %v3087, %v3087
    %v3091 = vpack.c.bf16 %v3085, %v3085
    %s3092 = scalar_lea.vmem %s1, 34
    %v3093 = vld [vmem:[%s3092] sm:$0x3]
    %3097 = vrot.lane.b32.xlu0 %v3089, 90
    %v3098 = vpop.permute.xlu0 %3097
    %3099 = vrot.lane.b32.xlu0 %v3090, 90
    %v3100 = vpop.permute.xlu0 %3099
    %3101 = vrot.lane.b32.xlu0 %v3091, 90
    %v3102 = vpop.permute.xlu0 %3101
    %v3103 = vsel %vm1024, %v3098, %v3100
    %v3104 = vsel %vm1024, %v3100, %v3102
    %v3106 = vsel %vm109, %v3093, 0
    %v3109 = vsel %vm113, %v3103, 0
    %v3112 = vsel %vm113, %v3104, 0
    %v3115 = vsel %vm113, %v3102, 0
    %3117 = vmatprep.subr.bf16.mxu0 %v3112
    %3118 = vmatpush1.bf16.msra.mxu0 %v3109
    %3119 = vmatprep.subr.bf16.mxu0 0
    %3120 = vmatpush1.bf16.msra.mxu0 0
    %3121 = vmatprep.subr.bf16.mxu0 0
    %3122 = vmatpush1.bf16.msra.mxu0 0
    %3123 = vmatprep.subr.bf16.mxu0 0
    %3124 = vmatpush1.bf16.msra.mxu0 0
    %3125 = vmatprep.subr.bf16.mxu0 0
    %3126 = vmatpush1.bf16.msra.mxu0 0
    %3127 = vmatprep.subr.bf16.mxu0 0
    %3128 = vmatpush1.bf16.msra.mxu0 0
    %3129 = vmatprep.subr.bf16.mxu0 0
    %3130 = vmatpush1.bf16.msra.mxu0 0
    %3131 = vmatprep.subr.bf16.mxu0 0
    %3132 = vmatpush1.bf16.msra.mxu0 0
    %3133 = vmatprep.subr.bf16.mxu0 0
    %3134 = vmatpush1.bf16.msra.mxu0 0
    %3135 = vmatprep.subr.bf16.mxu0 0
    %3136 = vmatpush1.bf16.msra.mxu0 0
    %3137 = vmatprep.subr.bf16.mxu0 0
    %3138 = vmatpush1.bf16.msra.mxu0 0
    %3139 = vmatprep.subr.bf16.mxu0 0
    %3140 = vmatpush1.bf16.msra.mxu0 0
    %3141 = vmatprep.subr.bf16.mxu0 0
    %3142 = vmatpush1.bf16.msra.mxu0 0
    %3143 = vmatprep.subr.bf16.mxu0 0
    %3144 = vmatpush1.bf16.msra.mxu0 0
    %3145 = vmatprep.subr.bf16.mxu0 0
    %3146 = vmatpush1.bf16.msra.mxu0 0
    %3147 = vmatprep.subr.bf16.mxu0 0
    %3148 = vmatpush1.bf16.msra.mxu0 0
    %3149 = vmatprep.mubr.bf16.mxu0 0
    %3150 = vmatmul.mubr.bf16.gmra.mrb[0].mxu0 %v3106
    %v3151 = vpop.f32.mrb[0].mxu0
    %v3152 = vadd.f32 0.0, %v3151
    %v3153 = vpop.f32.mrb[0].mxu0
    %v3154 = vadd.f32 0.0, %v3153
    %v3155 = vpop.f32.mrb[0].mxu0
    %v3156 = vpop.f32.mrb[0].mxu0
    %3157 = vdwg.mxu0
    %3158 = vmatprep.subr.bf16.mxu0 0
    %3159 = vmatpush1.bf16.msra.mxu0 %v3115
    %3160 = vmatprep.subr.bf16.mxu0 0
    %3161 = vmatpush1.bf16.msra.mxu0 0
    %3162 = vmatprep.subr.bf16.mxu0 0
    %3163 = vmatpush1.bf16.msra.mxu0 0
    %3164 = vmatprep.subr.bf16.mxu0 0
    %3165 = vmatpush1.bf16.msra.mxu0 0
    %3166 = vmatprep.subr.bf16.mxu0 0
    %3167 = vmatpush1.bf16.msra.mxu0 0
    %3168 = vmatprep.subr.bf16.mxu0 0
    %3169 = vmatpush1.bf16.msra.mxu0 0
    %3170 = vmatprep.subr.bf16.mxu0 0
    %3171 = vmatpush1.bf16.msra.mxu0 0
    %3172 = vmatprep.subr.bf16.mxu0 0
    %3173 = vmatpush1.bf16.msra.mxu0 0
    %3174 = vmatprep.subr.bf16.mxu0 0
    %3175 = vmatpush1.bf16.msra.mxu0 0
    %3176 = vmatprep.subr.bf16.mxu0 0
    %3177 = vmatpush1.bf16.msra.mxu0 0
    %3178 = vmatprep.subr.bf16.mxu0 0
    %3179 = vmatpush1.bf16.msra.mxu0 0
    %3180 = vmatprep.subr.bf16.mxu0 0
    %3181 = vmatpush1.bf16.msra.mxu0 0
    %3182 = vmatprep.subr.bf16.mxu0 0
    %3183 = vmatpush1.bf16.msra.mxu0 0
    %3184 = vmatprep.subr.bf16.mxu0 0
    %3185 = vmatpush1.bf16.msra.mxu0 0
    %3186 = vmatprep.subr.bf16.mxu0 0
    %3187 = vmatpush1.bf16.msra.mxu0 0
    %3188 = vmatprep.subr.bf16.mxu0 0
    %3189 = vmatpush1.bf16.msra.mxu0 0
    %3190 = vmatprep.mubr.bf16.mxu0 0
    %3191 = vmatmul.mubr.bf16.gmra.mrb[0].mxu0 %v3106
    %v3192 = vpop.f32.mrb[0].mxu0
    %v3193 = vadd.f32 0.0, %v3192
    %v3194 = vpop.f32.mrb[0].mxu0
    %v3195 = vpop.f32.mrb[0].mxu0
    %v3196 = vpop.f32.mrb[0].mxu0
    %3197 = vdwg.mxu0
    %v3198 = vadd.f32 %v3081, %v3152
    %v3199 = vadd.f32 %v3082, %v3154
    %v3200 = vadd.f32 %v3083, %v3193
    %v3201 = vld [vmem:[%s1123] sm:$0xff]
    %v3202 = vld [vmem:[%s1123 + $0x8] sm:$0xf]
    %v3204 = vcombine.high %v3201, %v3201
    %v3206 = vpack.c.bf16 %v3201, %v3201
    %v3207 = vpack.c.bf16 %v3204, %v3204
    %v3208 = vpack.c.bf16 %v3202, %v3202
    %3212 = vrot.lane.b32.xlu0 %v3206, 127
    %v3213 = vpop.permute.xlu0 %3212
    %3214 = vrot.lane.b32.xlu0 %v3207, 127
    %v3215 = vpop.permute.xlu0 %3214
    %3216 = vrot.lane.b32.xlu0 %v3208, 127
    %v3217 = vpop.permute.xlu0 %3216
    %v3218 = vsel %vm106, %v3213, %v3215
    %v3219 = vsel %vm106, %v3215, %v3217
    %v3221 = vsel %vm113, %v3218, 0
    %v3224 = vsel %vm113, %v3219, 0
    %v3227 = vsel %vm113, %v3217, 0
    %3229 = vmatprep.subr.bf16.mxu0 %v3224
    %3230 = vmatpush1.bf16.msra.mxu0 %v3221
    %3231 = vmatprep.subr.bf16.mxu0 0
    %3232 = vmatpush1.bf16.msra.mxu0 0
    %3233 = vmatprep.subr.bf16.mxu0 0
    %3234 = vmatpush1.bf16.msra.mxu0 0
    %3235 = vmatprep.subr.bf16.mxu0 0
    %3236 = vmatpush1.bf16.msra.mxu0 0
    %3237 = vmatprep.subr.bf16.mxu0 0
    %3238 = vmatpush1.bf16.msra.mxu0 0
    %3239 = vmatprep.subr.bf16.mxu0 0
    %3240 = vmatpush1.bf16.msra.mxu0 0
    %3241 = vmatprep.subr.bf16.mxu0 0
    %3242 = vmatpush1.bf16.msra.mxu0 0
    %3243 = vmatprep.subr.bf16.mxu0 0
    %3244 = vmatpush1.bf16.msra.mxu0 0
    %3245 = vmatprep.subr.bf16.mxu0 0
    %3246 = vmatpush1.bf16.msra.mxu0 0
    %3247 = vmatprep.subr.bf16.mxu0 0
    %3248 = vmatpush1.bf16.msra.mxu0 0
    %3249 = vmatprep.subr.bf16.mxu0 0
    %3250 = vmatpush1.bf16.msra.mxu0 0
    %3251 = vmatprep.subr.bf16.mxu0 0
    %3252 = vmatpush1.bf16.msra.mxu0 0
    %3253 = vmatprep.subr.bf16.mxu0 0
    %3254 = vmatpush1.bf16.msra.mxu0 0
    %3255 = vmatprep.subr.bf16.mxu0 0
    %3256 = vmatpush1.bf16.msra.mxu0 0
    %3257 = vmatprep.subr.bf16.mxu0 0
    %3258 = vmatpush1.bf16.msra.mxu0 0
    %3259 = vmatprep.subr.bf16.mxu0 0
    %3260 = vmatpush1.bf16.msra.mxu0 0
    %3261 = vmatprep.mubr.bf16.mxu0 0
    %3262 = vmatmul.mubr.bf16.gmra.mrb[0].mxu0 %v2197
    %v3263 = vpop.f32.mrb[0].mxu0
    %v3264 = vadd.f32 0.0, %v3263
    %v3265 = vpop.f32.mrb[0].mxu0
    %v3266 = vadd.f32 0.0, %v3265
    %v3267 = vpop.f32.mrb[0].mxu0
    %v3268 = vpop.f32.mrb[0].mxu0
    %3269 = vdwg.mxu0
    %3270 = vmatprep.subr.bf16.mxu0 0
    %3271 = vmatpush1.bf16.msra.mxu0 %v3227
    %3272 = vmatprep.subr.bf16.mxu0 0
    %3273 = vmatpush1.bf16.msra.mxu0 0
    %3274 = vmatprep.subr.bf16.mxu0 0
    %3275 = vmatpush1.bf16.msra.mxu0 0
    %3276 = vmatprep.subr.bf16.mxu0 0
    %3277 = vmatpush1.bf16.msra.mxu0 0
    %3278 = vmatprep.subr.bf16.mxu0 0
    %3279 = vmatpush1.bf16.msra.mxu0 0
    %3280 = vmatprep.subr.bf16.mxu0 0
    %3281 = vmatpush1.bf16.msra.mxu0 0
    %3282 = vmatprep.subr.bf16.mxu0 0
    %3283 = vmatpush1.bf16.msra.mxu0 0
    %3284 = vmatprep.subr.bf16.mxu0 0
    %3285 = vmatpush1.bf16.msra.mxu0 0
    %3286 = vmatprep.subr.bf16.mxu0 0
    %3287 = vmatpush1.bf16.msra.mxu0 0
    %3288 = vmatprep.subr.bf16.mxu0 0
    %3289 = vmatpush1.bf16.msra.mxu0 0
    %3290 = vmatprep.subr.bf16.mxu0 0
    %3291 = vmatpush1.bf16.msra.mxu0 0
    %3292 = vmatprep.subr.bf16.mxu0 0
    %3293 = vmatpush1.bf16.msra.mxu0 0
    %3294 = vmatprep.subr.bf16.mxu0 0
    %3295 = vmatpush1.bf16.msra.mxu0 0
    %3296 = vmatprep.subr.bf16.mxu0 0
    %3297 = vmatpush1.bf16.msra.mxu0 0
    %3298 = vmatprep.subr.bf16.mxu0 0
    %3299 = vmatpush1.bf16.msra.mxu0 0
    %3300 = vmatprep.subr.bf16.mxu0 0
    %3301 = vmatpush1.bf16.msra.mxu0 0
    %3302 = vmatprep.mubr.bf16.mxu0 0
    %3303 = vmatmul.mubr.bf16.gmra.mrb[0].mxu0 %v2197
    %v3304 = vpop.f32.mrb[0].mxu0
    %v3305 = vadd.f32 0.0, %v3304
    %v3306 = vpop.f32.mrb[0].mxu0
    %v3307 = vpop.f32.mrb[0].mxu0
    %v3308 = vpop.f32.mrb[0].mxu0
    %3309 = vdwg.mxu0
    %v3311 = vsel %vm113, %v3206, 0
    %v3314 = vsel %vm113, %v3207, 0
    %v3317 = vsel %vm113, %v3208, 0
    %3319 = vmatprep.subr.bf16.mxu0 %v3314
    %3320 = vmatpush1.bf16.msra.mxu0 %v3311
    %3321 = vmatprep.subr.bf16.mxu0 0
    %3322 = vmatpush1.bf16.msra.mxu0 0
    %3323 = vmatprep.subr.bf16.mxu0 0
    %3324 = vmatpush1.bf16.msra.mxu0 0
    %3325 = vmatprep.subr.bf16.mxu0 0
    %3326 = vmatpush1.bf16.msra.mxu0 0
    %3327 = vmatprep.subr.bf16.mxu0 0
    %3328 = vmatpush1.bf16.msra.mxu0 0
    %3329 = vmatprep.subr.bf16.mxu0 0
    %3330 = vmatpush1.bf16.msra.mxu0 0
    %3331 = vmatprep.subr.bf16.mxu0 0
    %3332 = vmatpush1.bf16.msra.mxu0 0
    %3333 = vmatprep.subr.bf16.mxu0 0
    %3334 = vmatpush1.bf16.msra.mxu0 0
    %3335 = vmatprep.subr.bf16.mxu0 0
    %3336 = vmatpush1.bf16.msra.mxu0 0
    %3337 = vmatprep.subr.bf16.mxu0 0
    %3338 = vmatpush1.bf16.msra.mxu0 0
    %3339 = vmatprep.subr.bf16.mxu0 0
    %3340 = vmatpush1.bf16.msra.mxu0 0
    %3341 = vmatprep.subr.bf16.mxu0 0
    %3342 = vmatpush1.bf16.msra.mxu0 0
    %3343 = vmatprep.subr.bf16.mxu0 0
    %3344 = vmatpush1.bf16.msra.mxu0 0
    %3345 = vmatprep.subr.bf16.mxu0 0
    %3346 = vmatpush1.bf16.msra.mxu0 0
    %3347 = vmatprep.subr.bf16.mxu0 0
    %3348 = vmatpush1.bf16.msra.mxu0 0
    %3349 = vmatprep.subr.bf16.mxu0 0
    %3350 = vmatpush1.bf16.msra.mxu0 0
    %3351 = vmatprep.mubr.bf16.mxu0 0
    %3352 = vmatmul.mubr.bf16.gmra.mrb[0].mxu0 %v2290
    %v3353 = vpop.f32.mrb[0].mxu0
    %v3354 = vadd.f32 %v3264, %v3353
    %v3355 = vpop.f32.mrb[0].mxu0
    %v3356 = vadd.f32 %v3266, %v3355
    %v3357 = vpop.f32.mrb[0].mxu0
    %v3358 = vpop.f32.mrb[0].mxu0
    %3359 = vdwg.mxu0
    %3360 = vmatprep.subr.bf16.mxu0 0
    %3361 = vmatpush1.bf16.msra.mxu0 %v3317
    %3362 = vmatprep.subr.bf16.mxu0 0
    %3363 = vmatpush1.bf16.msra.mxu0 0
    %3364 = vmatprep.subr.bf16.mxu0 0
    %3365 = vmatpush1.bf16.msra.mxu0 0
    %3366 = vmatprep.subr.bf16.mxu0 0
    %3367 = vmatpush1.bf16.msra.mxu0 0
    %3368 = vmatprep.subr.bf16.mxu0 0
    %3369 = vmatpush1.bf16.msra.mxu0 0
    %3370 = vmatprep.subr.bf16.mxu0 0
    %3371 = vmatpush1.bf16.msra.mxu0 0
    %3372 = vmatprep.subr.bf16.mxu0 0
    %3373 = vmatpush1.bf16.msra.mxu0 0
    %3374 = vmatprep.subr.bf16.mxu0 0
    %3375 = vmatpush1.bf16.msra.mxu0 0
    %3376 = vmatprep.subr.bf16.mxu0 0
    %3377 = vmatpush1.bf16.msra.mxu0 0
    %3378 = vmatprep.subr.bf16.mxu0 0
    %3379 = vmatpush1.bf16.msra.mxu0 0
    %3380 = vmatprep.subr.bf16.mxu0 0
    %3381 = vmatpush1.bf16.msra.mxu0 0
    %3382 = vmatprep.subr.bf16.mxu0 0
    %3383 = vmatpush1.bf16.msra.mxu0 0
    %3384 = vmatprep.subr.bf16.mxu0 0
    %3385 = vmatpush1.bf16.msra.mxu0 0
    %3386 = vmatprep.subr.bf16.mxu0 0
    %3387 = vmatpush1.bf16.msra.mxu0 0
    %3388 = vmatprep.subr.bf16.mxu0 0
    %3389 = vmatpush1.bf16.msra.mxu0 0
    %3390 = vmatprep.subr.bf16.mxu0 0
    %3391 = vmatpush1.bf16.msra.mxu0 0
    %3392 = vmatprep.mubr.bf16.mxu0 0
    %3393 = vmatmul.mubr.bf16.gmra.mrb[0].mxu0 %v2290
    %v3394 = vpop.f32.mrb[0].mxu0
    %v3395 = vadd.f32 %v3305, %v3394
    %v3396 = vpop.f32.mrb[0].mxu0
    %v3397 = vpop.f32.mrb[0].mxu0
    %v3398 = vpop.f32.mrb[0].mxu0
    %3399 = vdwg.mxu0
    %v3400 = vld [vmem:[%s1123] sm:$0xff]
    %v3401 = vld [vmem:[%s1123 + $0x8] sm:$0xf]
    %v3403 = vcombine.high %v3400, %v3400
    %v3405 = vpack.c.bf16 %v3400, %v3400
    %v3406 = vpack.c.bf16 %v3403, %v3403
    %v3407 = vpack.c.bf16 %v3401, %v3401
    %3411 = vrot.lane.b32.xlu0 %v3405, 126
    %v3412 = vpop.permute.xlu0 %3411
    %3413 = vrot.lane.b32.xlu0 %v3406, 126
    %v3414 = vpop.permute.xlu0 %3413
    %3415 = vrot.lane.b32.xlu0 %v3407, 126
    %v3416 = vpop.permute.xlu0 %3415
    %v3417 = vsel %vm316, %v3412, %v3414
    %v3418 = vsel %vm316, %v3414, %v3416
    %v3420 = vsel %vm113, %v3417, 0
    %v3423 = vsel %vm113, %v3418, 0
    %v3426 = vsel %vm113, %v3416, 0
    %3428 = vmatprep.subr.bf16.mxu0 %v3423
    %3429 = vmatpush1.bf16.msra.mxu0 %v3420
    %3430 = vmatprep.subr.bf16.mxu0 0
    %3431 = vmatpush1.bf16.msra.mxu0 0
    %3432 = vmatprep.subr.bf16.mxu0 0
    %3433 = vmatpush1.bf16.msra.mxu0 0
    %3434 = vmatprep.subr.bf16.mxu0 0
    %3435 = vmatpush1.bf16.msra.mxu0 0
    %3436 = vmatprep.subr.bf16.mxu0 0
    %3437 = vmatpush1.bf16.msra.mxu0 0
    %3438 = vmatprep.subr.bf16.mxu0 0
    %3439 = vmatpush1.bf16.msra.mxu0 0
    %3440 = vmatprep.subr.bf16.mxu0 0
    %3441 = vmatpush1.bf16.msra.mxu0 0
    %3442 = vmatprep.subr.bf16.mxu0 0
    %3443 = vmatpush1.bf16.msra.mxu0 0
    %3444 = vmatprep.subr.bf16.mxu0 0
    %3445 = vmatpush1.bf16.msra.mxu0 0
    %3446 = vmatprep.subr.bf16.mxu0 0
    %3447 = vmatpush1.bf16.msra.mxu0 0
    %3448 = vmatprep.subr.bf16.mxu0 0
    %3449 = vmatpush1.bf16.msra.mxu0 0
    %3450 = vmatprep.subr.bf16.mxu0 0
    %3451 = vmatpush1.bf16.msra.mxu0 0
    %3452 = vmatprep.subr.bf16.mxu0 0
    %3453 = vmatpush1.bf16.msra.mxu0 0
    %3454 = vmatprep.subr.bf16.mxu0 0
    %3455 = vmatpush1.bf16.msra.mxu0 0
    %3456 = vmatprep.subr.bf16.mxu0 0
    %3457 = vmatpush1.bf16.msra.mxu0 0
    %3458 = vmatprep.subr.bf16.mxu0 0
    %3459 = vmatpush1.bf16.msra.mxu0 0
    %3460 = vmatprep.mubr.bf16.mxu0 0
    %3461 = vmatmul.mubr.bf16.gmra.mrb[0].mxu0 %v2404
    %v3462 = vpop.f32.mrb[0].mxu0
    %v3463 = vadd.f32 0.0, %v3462
    %v3464 = vpop.f32.mrb[0].mxu0
    %v3465 = vadd.f32 0.0, %v3464
    %v3466 = vpop.f32.mrb[0].mxu0
    %v3467 = vpop.f32.mrb[0].mxu0
    %3468 = vdwg.mxu0
    %3469 = vmatprep.subr.bf16.mxu0 0
    %3470 = vmatpush1.bf16.msra.mxu0 %v3426
    %3471 = vmatprep.subr.bf16.mxu0 0
    %3472 = vmatpush1.bf16.msra.mxu0 0
    %3473 = vmatprep.subr.bf16.mxu0 0
    %3474 = vmatpush1.bf16.msra.mxu0 0
    %3475 = vmatprep.subr.bf16.mxu0 0
    %3476 = vmatpush1.bf16.msra.mxu0 0
    %3477 = vmatprep.subr.bf16.mxu0 0
    %3478 = vmatpush1.bf16.msra.mxu0 0
    %3479 = vmatprep.subr.bf16.mxu0 0
    %3480 = vmatpush1.bf16.msra.mxu0 0
    %3481 = vmatprep.subr.bf16.mxu0 0
    %3482 = vmatpush1.bf16.msra.mxu0 0
    %3483 = vmatprep.subr.bf16.mxu0 0
    %3484 = vmatpush1.bf16.msra.mxu0 0
    %3485 = vmatprep.subr.bf16.mxu0 0
    %3486 = vmatpush1.bf16.msra.mxu0 0
    %3487 = vmatprep.subr.bf16.mxu0 0
    %3488 = vmatpush1.bf16.msra.mxu0 0
    %3489 = vmatprep.subr.bf16.mxu0 0
    %3490 = vmatpush1.bf16.msra.mxu0 0
    %3491 = vmatprep.subr.bf16.mxu0 0
    %3492 = vmatpush1.bf16.msra.mxu0 0
    %3493 = vmatprep.subr.bf16.mxu0 0
    %3494 = vmatpush1.bf16.msra.mxu0 0
    %3495 = vmatprep.subr.bf16.mxu0 0
    %3496 = vmatpush1.bf16.msra.mxu0 0
    %3497 = vmatprep.subr.bf16.mxu0 0
    %3498 = vmatpush1.bf16.msra.mxu0 0
    %3499 = vmatprep.subr.bf16.mxu0 0
    %3500 = vmatpush1.bf16.msra.mxu0 0
    %3501 = vmatprep.mubr.bf16.mxu0 0
    %3502 = vmatmul.mubr.bf16.gmra.mrb[0].mxu0 %v2404
    %v3503 = vpop.f32.mrb[0].mxu0
    %v3504 = vadd.f32 0.0, %v3503
    %v3505 = vpop.f32.mrb[0].mxu0
    %v3506 = vpop.f32.mrb[0].mxu0
    %v3507 = vpop.f32.mrb[0].mxu0
    %3508 = vdwg.mxu0
    %v3509 = vadd.f32 %v3354, %v3463
    %v3510 = vadd.f32 %v3356, %v3465
    %v3511 = vadd.f32 %v3395, %v3504
    %v3512 = vld [vmem:[%s1123] sm:$0xff]
    %v3513 = vld [vmem:[%s1123 + $0x8] sm:$0xf]
    %v3515 = vcombine.high %v3512, %v3512
    %v3517 = vpack.c.bf16 %v3512, %v3512
    %v3518 = vpack.c.bf16 %v3515, %v3515
    %v3519 = vpack.c.bf16 %v3513, %v3513
    %3523 = vrot.lane.b32.xlu0 %v3517, 110
    %v3524 = vpop.permute.xlu0 %3523
    %3525 = vrot.lane.b32.xlu0 %v3518, 110
    %v3526 = vpop.permute.xlu0 %3525
    %3527 = vrot.lane.b32.xlu0 %v3519, 110
    %v3528 = vpop.permute.xlu0 %3527
    %v3529 = vsel %vm434, %v3524, %v3526
    %v3530 = vsel %vm434, %v3526, %v3528
    %v3532 = vsel %vm113, %v3529, 0
    %v3535 = vsel %vm113, %v3530, 0
    %v3538 = vsel %vm113, %v3528, 0
    %3540 = vmatprep.subr.bf16.mxu0 %v3535
    %3541 = vmatpush1.bf16.msra.mxu0 %v3532
    %3542 = vmatprep.subr.bf16.mxu0 0
    %3543 = vmatpush1.bf16.msra.mxu0 0
    %3544 = vmatprep.subr.bf16.mxu0 0
    %3545 = vmatpush1.bf16.msra.mxu0 0
    %3546 = vmatprep.subr.bf16.mxu0 0
    %3547 = vmatpush1.bf16.msra.mxu0 0
    %3548 = vmatprep.subr.bf16.mxu0 0
    %3549 = vmatpush1.bf16.msra.mxu0 0
    %3550 = vmatprep.subr.bf16.mxu0 0
    %3551 = vmatpush1.bf16.msra.mxu0 0
    %3552 = vmatprep.subr.bf16.mxu0 0
    %3553 = vmatpush1.bf16.msra.mxu0 0
    %3554 = vmatprep.subr.bf16.mxu0 0
    %3555 = vmatpush1.bf16.msra.mxu0 0
    %3556 = vmatprep.subr.bf16.mxu0 0
    %3557 = vmatpush1.bf16.msra.mxu0 0
    %3558 = vmatprep.subr.bf16.mxu0 0
    %3559 = vmatpush1.bf16.msra.mxu0 0
    %3560 = vmatprep.subr.bf16.mxu0 0
    %3561 = vmatpush1.bf16.msra.mxu0 0
    %3562 = vmatprep.subr.bf16.mxu0 0
    %3563 = vmatpush1.bf16.msra.mxu0 0
    %3564 = vmatprep.subr.bf16.mxu0 0
    %3565 = vmatpush1.bf16.msra.mxu0 0
    %3566 = vmatprep.subr.bf16.mxu0 0
    %3567 = vmatpush1.bf16.msra.mxu0 0
    %3568 = vmatprep.subr.bf16.mxu0 0
    %3569 = vmatpush1.bf16.msra.mxu0 0
    %3570 = vmatprep.subr.bf16.mxu0 0
    %3571 = vmatpush1.bf16.msra.mxu0 0
    %3572 = vmatprep.mubr.bf16.mxu0 0
    %3573 = vmatmul.mubr.bf16.gmra.mrb[0].mxu0 %v2521
    %v3574 = vpop.f32.mrb[0].mxu0
    %v3575 = vadd.f32 0.0, %v3574
    %v3576 = vpop.f32.mrb[0].mxu0
    %v3577 = vadd.f32 0.0, %v3576
    %v3578 = vpop.f32.mrb[0].mxu0
    %v3579 = vpop.f32.mrb[0].mxu0
    %3580 = vdwg.mxu0
    %3581 = vmatprep.subr.bf16.mxu0 0
    %3582 = vmatpush1.bf16.msra.mxu0 %v3538
    %3583 = vmatprep.subr.bf16.mxu0 0
    %3584 = vmatpush1.bf16.msra.mxu0 0
    %3585 = vmatprep.subr.bf16.mxu0 0
    %3586 = vmatpush1.bf16.msra.mxu0 0
    %3587 = vmatprep.subr.bf16.mxu0 0
    %3588 = vmatpush1.bf16.msra.mxu0 0
    %3589 = vmatprep.subr.bf16.mxu0 0
    %3590 = vmatpush1.bf16.msra.mxu0 0
    %3591 = vmatprep.subr.bf16.mxu0 0
    %3592 = vmatpush1.bf16.msra.mxu0 0
    %3593 = vmatprep.subr.bf16.mxu0 0
    %3594 = vmatpush1.bf16.msra.mxu0 0
    %3595 = vmatprep.subr.bf16.mxu0 0
    %3596 = vmatpush1.bf16.msra.mxu0 0
    %3597 = vmatprep.subr.bf16.mxu0 0
    %3598 = vmatpush1.bf16.msra.mxu0 0
    %3599 = vmatprep.subr.bf16.mxu0 0
    %3600 = vmatpush1.bf16.msra.mxu0 0
    %3601 = vmatprep.subr.bf16.mxu0 0
    %3602 = vmatpush1.bf16.msra.mxu0 0
    %3603 = vmatprep.subr.bf16.mxu0 0
    %3604 = vmatpush1.bf16.msra.mxu0 0
    %3605 = vmatprep.subr.bf16.mxu0 0
    %3606 = vmatpush1.bf16.msra.mxu0 0
    %3607 = vmatprep.subr.bf16.mxu0 0
    %3608 = vmatpush1.bf16.msra.mxu0 0
    %3609 = vmatprep.subr.bf16.mxu0 0
    %3610 = vmatpush1.bf16.msra.mxu0 0
    %3611 = vmatprep.subr.bf16.mxu0 0
    %3612 = vmatpush1.bf16.msra.mxu0 0
    %3613 = vmatprep.mubr.bf16.mxu0 0
    %3614 = vmatmul.mubr.bf16.gmra.mrb[0].mxu0 %v2521
    %v3615 = vpop.f32.mrb[0].mxu0
    %v3616 = vadd.f32 0.0, %v3615
    %v3617 = vpop.f32.mrb[0].mxu0
    %v3618 = vpop.f32.mrb[0].mxu0
    %v3619 = vpop.f32.mrb[0].mxu0
    %3620 = vdwg.mxu0
    %v3621 = vadd.f32 %v3509, %v3575
    %v3622 = vadd.f32 %v3510, %v3577
    %v3623 = vadd.f32 %v3511, %v3616
    %v3624 = vld [vmem:[%s1123] sm:$0xff]
    %v3625 = vld [vmem:[%s1123 + $0x8] sm:$0xf]
    %v3627 = vcombine.high %v3624, %v3624
    %v3629 = vpack.c.bf16 %v3624, %v3624
    %v3630 = vpack.c.bf16 %v3627, %v3627
    %v3631 = vpack.c.bf16 %v3625, %v3625
    %3635 = vrot.lane.b32.xlu0 %v3629, 109
    %v3636 = vpop.permute.xlu0 %3635
    %3637 = vrot.lane.b32.xlu0 %v3630, 109
    %v3638 = vpop.permute.xlu0 %3637
    %3639 = vrot.lane.b32.xlu0 %v3631, 109
    %v3640 = vpop.permute.xlu0 %3639
    %v3641 = vsel %vm552, %v3636, %v3638
    %v3642 = vsel %vm552, %v3638, %v3640
    %v3644 = vsel %vm113, %v3641, 0
    %v3647 = vsel %vm113, %v3642, 0
    %v3650 = vsel %vm113, %v3640, 0
    %3652 = vmatprep.subr.bf16.mxu0 %v3647
    %3653 = vmatpush1.bf16.msra.mxu0 %v3644
    %3654 = vmatprep.subr.bf16.mxu0 0
    %3655 = vmatpush1.bf16.msra.mxu0 0
    %3656 = vmatprep.subr.bf16.mxu0 0
    %3657 = vmatpush1.bf16.msra.mxu0 0
    %3658 = vmatprep.subr.bf16.mxu0 0
    %3659 = vmatpush1.bf16.msra.mxu0 0
    %3660 = vmatprep.subr.bf16.mxu0 0
    %3661 = vmatpush1.bf16.msra.mxu0 0
    %3662 = vmatprep.subr.bf16.mxu0 0
    %3663 = vmatpush1.bf16.msra.mxu0 0
    %3664 = vmatprep.subr.bf16.mxu0 0
    %3665 = vmatpush1.bf16.msra.mxu0 0
    %3666 = vmatprep.subr.bf16.mxu0 0
    %3667 = vmatpush1.bf16.msra.mxu0 0
    %3668 = vmatprep.subr.bf16.mxu0 0
    %3669 = vmatpush1.bf16.msra.mxu0 0
    %3670 = vmatprep.subr.bf16.mxu0 0
    %3671 = vmatpush1.bf16.msra.mxu0 0
    %3672 = vmatprep.subr.bf16.mxu0 0
    %3673 = vmatpush1.bf16.msra.mxu0 0
    %3674 = vmatprep.subr.bf16.mxu0 0
    %3675 = vmatpush1.bf16.msra.mxu0 0
    %3676 = vmatprep.subr.bf16.mxu0 0
    %3677 = vmatpush1.bf16.msra.mxu0 0
    %3678 = vmatprep.subr.bf16.mxu0 0
    %3679 = vmatpush1.bf16.msra.mxu0 0
    %3680 = vmatprep.subr.bf16.mxu0 0
    %3681 = vmatpush1.bf16.msra.mxu0 0
    %3682 = vmatprep.subr.bf16.mxu0 0
    %3683 = vmatpush1.bf16.msra.mxu0 0
    %3684 = vmatprep.mubr.bf16.mxu0 0
    %3685 = vmatmul.mubr.bf16.gmra.mrb[0].mxu0 %v2638
    %v3686 = vpop.f32.mrb[0].mxu0
    %v3687 = vadd.f32 0.0, %v3686
    %v3688 = vpop.f32.mrb[0].mxu0
    %v3689 = vadd.f32 0.0, %v3688
    %v3690 = vpop.f32.mrb[0].mxu0
    %v3691 = vpop.f32.mrb[0].mxu0
    %3692 = vdwg.mxu0
    %3693 = vmatprep.subr.bf16.mxu0 0
    %3694 = vmatpush1.bf16.msra.mxu0 %v3650
    %3695 = vmatprep.subr.bf16.mxu0 0
    %3696 = vmatpush1.bf16.msra.mxu0 0
    %3697 = vmatprep.subr.bf16.mxu0 0
    %3698 = vmatpush1.bf16.msra.mxu0 0
    %3699 = vmatprep.subr.bf16.mxu0 0
    %3700 = vmatpush1.bf16.msra.mxu0 0
    %3701 = vmatprep.subr.bf16.mxu0 0
    %3702 = vmatpush1.bf16.msra.mxu0 0
    %3703 = vmatprep.subr.bf16.mxu0 0
    %3704 = vmatpush1.bf16.msra.mxu0 0
    %3705 = vmatprep.subr.bf16.mxu0 0
    %3706 = vmatpush1.bf16.msra.mxu0 0
    %3707 = vmatprep.subr.bf16.mxu0 0
    %3708 = vmatpush1.bf16.msra.mxu0 0
    %3709 = vmatprep.subr.bf16.mxu0 0
    %3710 = vmatpush1.bf16.msra.mxu0 0
    %3711 = vmatprep.subr.bf16.mxu0 0
    %3712 = vmatpush1.bf16.msra.mxu0 0
    %3713 = vmatprep.subr.bf16.mxu0 0
    %3714 = vmatpush1.bf16.msra.mxu0 0
    %3715 = vmatprep.subr.bf16.mxu0 0
    %3716 = vmatpush1.bf16.msra.mxu0 0
    %3717 = vmatprep.subr.bf16.mxu0 0
    %3718 = vmatpush1.bf16.msra.mxu0 0
    %3719 = vmatprep.subr.bf16.mxu0 0
    %3720 = vmatpush1.bf16.msra.mxu0 0
    %3721 = vmatprep.subr.bf16.mxu0 0
    %3722 = vmatpush1.bf16.msra.mxu0 0
    %3723 = vmatprep.subr.bf16.mxu0 0
    %3724 = vmatpush1.bf16.msra.mxu0 0
    %3725 = vmatprep.mubr.bf16.mxu0 0
    %3726 = vmatmul.mubr.bf16.gmra.mrb[0].mxu0 %v2638
    %v3727 = vpop.f32.mrb[0].mxu0
    %v3728 = vadd.f32 0.0, %v3727
    %v3729 = vpop.f32.mrb[0].mxu0
    %v3730 = vpop.f32.mrb[0].mxu0
    %v3731 = vpop.f32.mrb[0].mxu0
    %3732 = vdwg.mxu0
    %v3733 = vadd.f32 %v3621, %v3687
    %v3734 = vadd.f32 %v3622, %v3689
    %v3735 = vadd.f32 %v3623, %v3728
    %v3736 = vld [vmem:[%s1123] sm:$0xff]
    %v3737 = vld [vmem:[%s1123 + $0x8] sm:$0xf]
    %v3739 = vcombine.high %v3736, %v3736
    %v3741 = vpack.c.bf16 %v3736, %v3736
    %v3742 = vpack.c.bf16 %v3739, %v3739
    %v3743 = vpack.c.bf16 %v3737, %v3737
    %3747 = vrot.lane.b32.xlu0 %v3741, 108
    %v3748 = vpop.permute.xlu0 %3747
    %3749 = vrot.lane.b32.xlu0 %v3742, 108
    %v3750 = vpop.permute.xlu0 %3749
    %3751 = vrot.lane.b32.xlu0 %v3743, 108
    %v3752 = vpop.permute.xlu0 %3751
    %v3753 = vsel %vm670, %v3748, %v3750
    %v3754 = vsel %vm670, %v3750, %v3752
    %v3756 = vsel %vm113, %v3753, 0
    %v3759 = vsel %vm113, %v3754, 0
    %v3762 = vsel %vm113, %v3752, 0
    %3764 = vmatprep.subr.bf16.mxu0 %v3759
    %3765 = vmatpush1.bf16.msra.mxu0 %v3756
    %3766 = vmatprep.subr.bf16.mxu0 0
    %3767 = vmatpush1.bf16.msra.mxu0 0
    %3768 = vmatprep.subr.bf16.mxu0 0
    %3769 = vmatpush1.bf16.msra.mxu0 0
    %3770 = vmatprep.subr.bf16.mxu0 0
    %3771 = vmatpush1.bf16.msra.mxu0 0
    %3772 = vmatprep.subr.bf16.mxu0 0
    %3773 = vmatpush1.bf16.msra.mxu0 0
    %3774 = vmatprep.subr.bf16.mxu0 0
    %3775 = vmatpush1.bf16.msra.mxu0 0
    %3776 = vmatprep.subr.bf16.mxu0 0
    %3777 = vmatpush1.bf16.msra.mxu0 0
    %3778 = vmatprep.subr.bf16.mxu0 0
    %3779 = vmatpush1.bf16.msra.mxu0 0
    %3780 = vmatprep.subr.bf16.mxu0 0
    %3781 = vmatpush1.bf16.msra.mxu0 0
    %3782 = vmatprep.subr.bf16.mxu0 0
    %3783 = vmatpush1.bf16.msra.mxu0 0
    %3784 = vmatprep.subr.bf16.mxu0 0
    %3785 = vmatpush1.bf16.msra.mxu0 0
    %3786 = vmatprep.subr.bf16.mxu0 0
    %3787 = vmatpush1.bf16.msra.mxu0 0
    %3788 = vmatprep.subr.bf16.mxu0 0
    %3789 = vmatpush1.bf16.msra.mxu0 0
    %3790 = vmatprep.subr.bf16.mxu0 0
    %3791 = vmatpush1.bf16.msra.mxu0 0
    %3792 = vmatprep.subr.bf16.mxu0 0
    %3793 = vmatpush1.bf16.msra.mxu0 0
    %3794 = vmatprep.subr.bf16.mxu0 0
    %3795 = vmatpush1.bf16.msra.mxu0 0
    %3796 = vmatprep.mubr.bf16.mxu0 0
    %3797 = vmatmul.mubr.bf16.gmra.mrb[0].mxu0 %v2755
    %v3798 = vpop.f32.mrb[0].mxu0
    %v3799 = vadd.f32 0.0, %v3798
    %v3800 = vpop.f32.mrb[0].mxu0
    %v3801 = vadd.f32 0.0, %v3800
    %v3802 = vpop.f32.mrb[0].mxu0
    %v3803 = vpop.f32.mrb[0].mxu0
    %3804 = vdwg.mxu0
    %3805 = vmatprep.subr.bf16.mxu0 0
    %3806 = vmatpush1.bf16.msra.mxu0 %v3762
    %3807 = vmatprep.subr.bf16.mxu0 0
    %3808 = vmatpush1.bf16.msra.mxu0 0
    %3809 = vmatprep.subr.bf16.mxu0 0
    %3810 = vmatpush1.bf16.msra.mxu0 0
    %3811 = vmatprep.subr.bf16.mxu0 0
    %3812 = vmatpush1.bf16.msra.mxu0 0
    %3813 = vmatprep.subr.bf16.mxu0 0
    %3814 = vmatpush1.bf16.msra.mxu0 0
    %3815 = vmatprep.subr.bf16.mxu0 0
    %3816 = vmatpush1.bf16.msra.mxu0 0
    %3817 = vmatprep.subr.bf16.mxu0 0
    %3818 = vmatpush1.bf16.msra.mxu0 0
    %3819 = vmatprep.subr.bf16.mxu0 0
    %3820 = vmatpush1.bf16.msra.mxu0 0
    %3821 = vmatprep.subr.bf16.mxu0 0
    %3822 = vmatpush1.bf16.msra.mxu0 0
    %3823 = vmatprep.subr.bf16.mxu0 0
    %3824 = vmatpush1.bf16.msra.mxu0 0
    %3825 = vmatprep.subr.bf16.mxu0 0
    %3826 = vmatpush1.bf16.msra.mxu0 0
    %3827 = vmatprep.subr.bf16.mxu0 0
    %3828 = vmatpush1.bf16.msra.mxu0 0
    %3829 = vmatprep.subr.bf16.mxu0 0
    %3830 = vmatpush1.bf16.msra.mxu0 0
    %3831 = vmatprep.subr.bf16.mxu0 0
    %3832 = vmatpush1.bf16.msra.mxu0 0
    %3833 = vmatprep.subr.bf16.mxu0 0
    %3834 = vmatpush1.bf16.msra.mxu0 0
    %3835 = vmatprep.subr.bf16.mxu0 0
    %3836 = vmatpush1.bf16.msra.mxu0 0
    %3837 = vmatprep.mubr.bf16.mxu0 0
    %3838 = vmatmul.mubr.bf16.gmra.mrb[0].mxu0 %v2755
    %v3839 = vpop.f32.mrb[0].mxu0
    %v3840 = vadd.f32 0.0, %v3839
    %v3841 = vpop.f32.mrb[0].mxu0
    %v3842 = vpop.f32.mrb[0].mxu0
    %v3843 = vpop.f32.mrb[0].mxu0
    %3844 = vdwg.mxu0
    %v3845 = vadd.f32 %v3733, %v3799
    %v3846 = vadd.f32 %v3734, %v3801
    %v3847 = vadd.f32 %v3735, %v3840
    %v3848 = vld [vmem:[%s1123] sm:$0xff]
    %v3849 = vld [vmem:[%s1123 + $0x8] sm:$0xf]
    %v3851 = vcombine.high %v3848, %v3848
    %v3853 = vpack.c.bf16 %v3848, %v3848
    %v3854 = vpack.c.bf16 %v3851, %v3851
    %v3855 = vpack.c.bf16 %v3849, %v3849
    %3859 = vrot.lane.b32.xlu0 %v3853, 92
    %v3860 = vpop.permute.xlu0 %3859
    %3861 = vrot.lane.b32.xlu0 %v3854, 92
    %v3862 = vpop.permute.xlu0 %3861
    %3863 = vrot.lane.b32.xlu0 %v3855, 92
    %v3864 = vpop.permute.xlu0 %3863
    %v3865 = vsel %vm788, %v3860, %v3862
    %v3866 = vsel %vm788, %v3862, %v3864
    %v3868 = vsel %vm113, %v3865, 0
    %v3871 = vsel %vm113, %v3866, 0
    %v3874 = vsel %vm113, %v3864, 0
    %3876 = vmatprep.subr.bf16.mxu0 %v3871
    %3877 = vmatpush1.bf16.msra.mxu0 %v3868
    %3878 = vmatprep.subr.bf16.mxu0 0
    %3879 = vmatpush1.bf16.msra.mxu0 0
    %3880 = vmatprep.subr.bf16.mxu0 0
    %3881 = vmatpush1.bf16.msra.mxu0 0
    %3882 = vmatprep.subr.bf16.mxu0 0
    %3883 = vmatpush1.bf16.msra.mxu0 0
    %3884 = vmatprep.subr.bf16.mxu0 0
    %3885 = vmatpush1.bf16.msra.mxu0 0
    %3886 = vmatprep.subr.bf16.mxu0 0
    %3887 = vmatpush1.bf16.msra.mxu0 0
    %3888 = vmatprep.subr.bf16.mxu0 0
    %3889 = vmatpush1.bf16.msra.mxu0 0
    %3890 = vmatprep.subr.bf16.mxu0 0
    %3891 = vmatpush1.bf16.msra.mxu0 0
    %3892 = vmatprep.subr.bf16.mxu0 0
    %3893 = vmatpush1.bf16.msra.mxu0 0
    %3894 = vmatprep.subr.bf16.mxu0 0
    %3895 = vmatpush1.bf16.msra.mxu0 0
    %3896 = vmatprep.subr.bf16.mxu0 0
    %3897 = vmatpush1.bf16.msra.mxu0 0
    %3898 = vmatprep.subr.bf16.mxu0 0
    %3899 = vmatpush1.bf16.msra.mxu0 0
    %3900 = vmatprep.subr.bf16.mxu0 0
    %3901 = vmatpush1.bf16.msra.mxu0 0
    %3902 = vmatprep.subr.bf16.mxu0 0
    %3903 = vmatpush1.bf16.msra.mxu0 0
    %3904 = vmatprep.subr.bf16.mxu0 0
    %3905 = vmatpush1.bf16.msra.mxu0 0
    %3906 = vmatprep.subr.bf16.mxu0 0
    %3907 = vmatpush1.bf16.msra.mxu0 0
    %3908 = vmatprep.mubr.bf16.mxu0 0
    %3909 = vmatmul.mubr.bf16.gmra.mrb[0].mxu0 %v2872
    %v3910 = vpop.f32.mrb[0].mxu0
    %v3911 = vadd.f32 0.0, %v3910
    %v3912 = vpop.f32.mrb[0].mxu0
    %v3913 = vadd.f32 0.0, %v3912
    %v3914 = vpop.f32.mrb[0].mxu0
    %v3915 = vpop.f32.mrb[0].mxu0
    %3916 = vdwg.mxu0
    %3917 = vmatprep.subr.bf16.mxu0 0
    %3918 = vmatpush1.bf16.msra.mxu0 %v3874
    %3919 = vmatprep.subr.bf16.mxu0 0
    %3920 = vmatpush1.bf16.msra.mxu0 0
    %3921 = vmatprep.subr.bf16.mxu0 0
    %3922 = vmatpush1.bf16.msra.mxu0 0
    %3923 = vmatprep.subr.bf16.mxu0 0
    %3924 = vmatpush1.bf16.msra.mxu0 0
    %3925 = vmatprep.subr.bf16.mxu0 0
    %3926 = vmatpush1.bf16.msra.mxu0 0
    %3927 = vmatprep.subr.bf16.mxu0 0
    %3928 = vmatpush1.bf16.msra.mxu0 0
    %3929 = vmatprep.subr.bf16.mxu0 0
    %3930 = vmatpush1.bf16.msra.mxu0 0
    %3931 = vmatprep.subr.bf16.mxu0 0
    %3932 = vmatpush1.bf16.msra.mxu0 0
    %3933 = vmatprep.subr.bf16.mxu0 0
    %3934 = vmatpush1.bf16.msra.mxu0 0
    %3935 = vmatprep.subr.bf16.mxu0 0
    %3936 = vmatpush1.bf16.msra.mxu0 0
    %3937 = vmatprep.subr.bf16.mxu0 0
    %3938 = vmatpush1.bf16.msra.mxu0 0
    %3939 = vmatprep.subr.bf16.mxu0 0
    %3940 = vmatpush1.bf16.msra.mxu0 0
    %3941 = vmatprep.subr.bf16.mxu0 0
    %3942 = vmatpush1.bf16.msra.mxu0 0
    %3943 = vmatprep.subr.bf16.mxu0 0
    %3944 = vmatpush1.bf16.msra.mxu0 0
    %3945 = vmatprep.subr.bf16.mxu0 0
    %3946 = vmatpush1.bf16.msra.mxu0 0
    %3947 = vmatprep.subr.bf16.mxu0 0
    %3948 = vmatpush1.bf16.msra.mxu0 0
    %3949 = vmatprep.mubr.bf16.mxu0 0
    %3950 = vmatmul.mubr.bf16.gmra.mrb[0].mxu0 %v2872
    %v3951 = vpop.f32.mrb[0].mxu0
    %v3952 = vadd.f32 0.0, %v3951
    %v3953 = vpop.f32.mrb[0].mxu0
    %v3954 = vpop.f32.mrb[0].mxu0
    %v3955 = vpop.f32.mrb[0].mxu0
    %3956 = vdwg.mxu0
    %v3957 = vadd.f32 %v3845, %v3911
    %v3958 = vadd.f32 %v3846, %v3913
    %v3959 = vadd.f32 %v3847, %v3952
    %v3960 = vld [vmem:[%s1123] sm:$0xff]
    %v3961 = vld [vmem:[%s1123 + $0x8] sm:$0xf]
    %v3963 = vcombine.high %v3960, %v3960
    %v3965 = vpack.c.bf16 %v3960, %v3960
    %v3966 = vpack.c.bf16 %v3963, %v3963
    %v3967 = vpack.c.bf16 %v3961, %v3961
    %3971 = vrot.lane.b32.xlu0 %v3965, 91
    %v3972 = vpop.permute.xlu0 %3971
    %3973 = vrot.lane.b32.xlu0 %v3966, 91
    %v3974 = vpop.permute.xlu0 %3973
    %3975 = vrot.lane.b32.xlu0 %v3967, 91
    %v3976 = vpop.permute.xlu0 %3975
    %v3977 = vsel %vm906, %v3972, %v3974
    %v3978 = vsel %vm906, %v3974, %v3976
    %v3980 = vsel %vm113, %v3977, 0
    %v3983 = vsel %vm113, %v3978, 0
    %v3986 = vsel %vm113, %v3976, 0
    %3988 = vmatprep.subr.bf16.mxu0 %v3983
    %3989 = vmatpush1.bf16.msra.mxu0 %v3980
    %3990 = vmatprep.subr.bf16.mxu0 0
    %3991 = vmatpush1.bf16.msra.mxu0 0
    %3992 = vmatprep.subr.bf16.mxu0 0
    %3993 = vmatpush1.bf16.msra.mxu0 0
    %3994 = vmatprep.subr.bf16.mxu0 0
    %3995 = vmatpush1.bf16.msra.mxu0 0
    %3996 = vmatprep.subr.bf16.mxu0 0
    %3997 = vmatpush1.bf16.msra.mxu0 0
    %3998 = vmatprep.subr.bf16.mxu0 0
    %3999 = vmatpush1.bf16.msra.mxu0 0
    %4000 = vmatprep.subr.bf16.mxu0 0
    %4001 = vmatpush1.bf16.msra.mxu0 0
    %4002 = vmatprep.subr.bf16.mxu0 0
    %4003 = vmatpush1.bf16.msra.mxu0 0
    %4004 = vmatprep.subr.bf16.mxu0 0
    %4005 = vmatpush1.bf16.msra.mxu0 0
    %4006 = vmatprep.subr.bf16.mxu0 0
    %4007 = vmatpush1.bf16.msra.mxu0 0
    %4008 = vmatprep.subr.bf16.mxu0 0
    %4009 = vmatpush1.bf16.msra.mxu0 0
    %4010 = vmatprep.subr.bf16.mxu0 0
    %4011 = vmatpush1.bf16.msra.mxu0 0
    %4012 = vmatprep.subr.bf16.mxu0 0
    %4013 = vmatpush1.bf16.msra.mxu0 0
    %4014 = vmatprep.subr.bf16.mxu0 0
    %4015 = vmatpush1.bf16.msra.mxu0 0
    %4016 = vmatprep.subr.bf16.mxu0 0
    %4017 = vmatpush1.bf16.msra.mxu0 0
    %4018 = vmatprep.subr.bf16.mxu0 0
    %4019 = vmatpush1.bf16.msra.mxu0 0
    %4020 = vmatprep.mubr.bf16.mxu0 0
    %4021 = vmatmul.mubr.bf16.gmra.mrb[0].mxu0 %v2989
    %v4022 = vpop.f32.mrb[0].mxu0
    %v4023 = vadd.f32 0.0, %v4022
    %v4024 = vpop.f32.mrb[0].mxu0
    %v4025 = vadd.f32 0.0, %v4024
    %v4026 = vpop.f32.mrb[0].mxu0
    %v4027 = vpop.f32.mrb[0].mxu0
    %4028 = vdwg.mxu0
    %4029 = vmatprep.subr.bf16.mxu0 0
    %4030 = vmatpush1.bf16.msra.mxu0 %v3986
    %4031 = vmatprep.subr.bf16.mxu0 0
    %4032 = vmatpush1.bf16.msra.mxu0 0
    %4033 = vmatprep.subr.bf16.mxu0 0
    %4034 = vmatpush1.bf16.msra.mxu0 0
    %4035 = vmatprep.subr.bf16.mxu0 0
    %4036 = vmatpush1.bf16.msra.mxu0 0
    %4037 = vmatprep.subr.bf16.mxu0 0
    %4038 = vmatpush1.bf16.msra.mxu0 0
    %4039 = vmatprep.subr.bf16.mxu0 0
    %4040 = vmatpush1.bf16.msra.mxu0 0
    %4041 = vmatprep.subr.bf16.mxu0 0
    %4042 = vmatpush1.bf16.msra.mxu0 0
    %4043 = vmatprep.subr.bf16.mxu0 0
    %4044 = vmatpush1.bf16.msra.mxu0 0
    %4045 = vmatprep.subr.bf16.mxu0 0
    %4046 = vmatpush1.bf16.msra.mxu0 0
    %4047 = vmatprep.subr.bf16.mxu0 0
    %4048 = vmatpush1.bf16.msra.mxu0 0
    %4049 = vmatprep.subr.bf16.mxu0 0
    %4050 = vmatpush1.bf16.msra.mxu0 0
    %4051 = vmatprep.subr.bf16.mxu0 0
    %4052 = vmatpush1.bf16.msra.mxu0 0
    %4053 = vmatprep.subr.bf16.mxu0 0
    %4054 = vmatpush1.bf16.msra.mxu0 0
    %4055 = vmatprep.subr.bf16.mxu0 0
    %4056 = vmatpush1.bf16.msra.mxu0 0
    %4057 = vmatprep.subr.bf16.mxu0 0
    %4058 = vmatpush1.bf16.msra.mxu0 0
    %4059 = vmatprep.subr.bf16.mxu0 0
    %4060 = vmatpush1.bf16.msra.mxu0 0
    %4061 = vmatprep.mubr.bf16.mxu0 0
    %4062 = vmatmul.mubr.bf16.gmra.mrb[0].mxu0 %v2989
    %v4063 = vpop.f32.mrb[0].mxu0
    %v4064 = vadd.f32 0.0, %v4063
    %v4065 = vpop.f32.mrb[0].mxu0
    %v4066 = vpop.f32.mrb[0].mxu0
    %v4067 = vpop.f32.mrb[0].mxu0
    %4068 = vdwg.mxu0
    %v4069 = vadd.f32 %v3957, %v4023
    %v4070 = vadd.f32 %v3958, %v4025
    %v4071 = vadd.f32 %v3959, %v4064
    %v4072 = vld [vmem:[%s1123] sm:$0xff]
    %v4073 = vld [vmem:[%s1123 + $0x8] sm:$0xf]
    %v4075 = vcombine.high %v4072, %v4072
    %v4077 = vpack.c.bf16 %v4072, %v4072
    %v4078 = vpack.c.bf16 %v4075, %v4075
    %v4079 = vpack.c.bf16 %v4073, %v4073
    %4083 = vrot.lane.b32.xlu0 %v4077, 90
    %v4084 = vpop.permute.xlu0 %4083
    %4085 = vrot.lane.b32.xlu0 %v4078, 90
    %v4086 = vpop.permute.xlu0 %4085
    %4087 = vrot.lane.b32.xlu0 %v4079, 90
    %v4088 = vpop.permute.xlu0 %4087
    %v4089 = vsel %vm1024, %v4084, %v4086
    %v4090 = vsel %vm1024, %v4086, %v4088
    %v4092 = vsel %vm113, %v4089, 0
    %v4095 = vsel %vm113, %v4090, 0
    %v4098 = vsel %vm113, %v4088, 0
    %4100 = vmatprep.subr.bf16.mxu0 %v4095
    %4101 = vmatpush1.bf16.msra.mxu0 %v4092
    %4102 = vmatprep.subr.bf16.mxu0 0
    %4103 = vmatpush1.bf16.msra.mxu0 0
    %4104 = vmatprep.subr.bf16.mxu0 0
    %4105 = vmatpush1.bf16.msra.mxu0 0
    %4106 = vmatprep.subr.bf16.mxu0 0
    %4107 = vmatpush1.bf16.msra.mxu0 0
    %4108 = vmatprep.subr.bf16.mxu0 0
    %4109 = vmatpush1.bf16.msra.mxu0 0
    %4110 = vmatprep.subr.bf16.mxu0 0
    %4111 = vmatpush1.bf16.msra.mxu0 0
    %4112 = vmatprep.subr.bf16.mxu0 0
    %4113 = vmatpush1.bf16.msra.mxu0 0
    %4114 = vmatprep.subr.bf16.mxu0 0
    %4115 = vmatpush1.bf16.msra.mxu0 0
    %4116 = vmatprep.subr.bf16.mxu0 0
    %4117 = vmatpush1.bf16.msra.mxu0 0
    %4118 = vmatprep.subr.bf16.mxu0 0
    %4119 = vmatpush1.bf16.msra.mxu0 0
    %4120 = vmatprep.subr.bf16.mxu0 0
    %4121 = vmatpush1.bf16.msra.mxu0 0
    %4122 = vmatprep.subr.bf16.mxu0 0
    %4123 = vmatpush1.bf16.msra.mxu0 0
    %4124 = vmatprep.subr.bf16.mxu0 0
    %4125 = vmatpush1.bf16.msra.mxu0 0
    %4126 = vmatprep.subr.bf16.mxu0 0
    %4127 = vmatpush1.bf16.msra.mxu0 0
    %4128 = vmatprep.subr.bf16.mxu0 0
    %4129 = vmatpush1.bf16.msra.mxu0 0
    %4130 = vmatprep.subr.bf16.mxu0 0
    %4131 = vmatpush1.bf16.msra.mxu0 0
    %4132 = vmatprep.mubr.bf16.mxu0 0
    %4133 = vmatmul.mubr.bf16.gmra.mrb[0].mxu0 %v3106
    %v4134 = vpop.f32.mrb[0].mxu0
    %v4135 = vadd.f32 0.0, %v4134
    %v4136 = vpop.f32.mrb[0].mxu0
    %v4137 = vadd.f32 0.0, %v4136
    %v4138 = vpop.f32.mrb[0].mxu0
    %v4139 = vpop.f32.mrb[0].mxu0
    %4140 = vdwg.mxu0
    %4141 = vmatprep.subr.bf16.mxu0 0
    %4142 = vmatpush1.bf16.msra.mxu0 %v4098
    %4143 = vmatprep.subr.bf16.mxu0 0
    %4144 = vmatpush1.bf16.msra.mxu0 0
    %4145 = vmatprep.subr.bf16.mxu0 0
    %4146 = vmatpush1.bf16.msra.mxu0 0
    %4147 = vmatprep.subr.bf16.mxu0 0
    %4148 = vmatpush1.bf16.msra.mxu0 0
    %4149 = vmatprep.subr.bf16.mxu0 0
    %4150 = vmatpush1.bf16.msra.mxu0 0
    %4151 = vmatprep.subr.bf16.mxu0 0
    %4152 = vmatpush1.bf16.msra.mxu0 0
    %4153 = vmatprep.subr.bf16.mxu0 0
    %4154 = vmatpush1.bf16.msra.mxu0 0
    %4155 = vmatprep.subr.bf16.mxu0 0
    %4156 = vmatpush1.bf16.msra.mxu0 0
    %4157 = vmatprep.subr.bf16.mxu0 0
    %4158 = vmatpush1.bf16.msra.mxu0 0
    %4159 = vmatprep.subr.bf16.mxu0 0
    %4160 = vmatpush1.bf16.msra.mxu0 0
    %4161 = vmatprep.subr.bf16.mxu0 0
    %4162 = vmatpush1.bf16.msra.mxu0 0
    %4163 = vmatprep.subr.bf16.mxu0 0
    %4164 = vmatpush1.bf16.msra.mxu0 0
    %4165 = vmatprep.subr.bf16.mxu0 0
    %4166 = vmatpush1.bf16.msra.mxu0 0
    %4167 = vmatprep.subr.bf16.mxu0 0
    %4168 = vmatpush1.bf16.msra.mxu0 0
    %4169 = vmatprep.subr.bf16.mxu0 0
    %4170 = vmatpush1.bf16.msra.mxu0 0
    %4171 = vmatprep.subr.bf16.mxu0 0
    %4172 = vmatpush1.bf16.msra.mxu0 0
    %4173 = vmatprep.mubr.bf16.mxu0 0
    %4174 = vmatmul.mubr.bf16.gmra.mrb[0].mxu0 %v3106
    %v4175 = vpop.f32.mrb[0].mxu0
    %v4176 = vadd.f32 0.0, %v4175
    %v4177 = vpop.f32.mrb[0].mxu0
    %v4178 = vpop.f32.mrb[0].mxu0
    %v4179 = vpop.f32.mrb[0].mxu0
    %4180 = vdwg.mxu0
    %v4181 = vadd.f32 %v4069, %v4135
    %v4182 = vadd.f32 %v4070, %v4137
    %v4183 = vadd.f32 %v4071, %v4176
    %s4184 = scalar_lea.vmem %s2, 4
    %v4185 = vld [vmem:[%s4184] sm:$0xf]
    %4187 = vset.pattern.permute.xlu0 0
    %4188 = vperm.xlu0 %4187, %v4185
    %v4189 = vpop.permute.xlu0 %4188
    %v4191 = vmul.f32 %v3198, %v4189
    %v4192 = vmul.f32 %v3199, %v4189
    %v4193 = vmul.f32 %v3200, %v4189
    %v4194 = vmul.f32 %v4181, %v4189
    %v4195 = vmul.f32 %v4182, %v4189
    %v4196 = vmul.f32 %v4183, %v4189
    %s4197 = scalar_lea.vmem %s3, 4
    %v4198 = vld [vmem:[%s4197] sm:$0xf]
    %4200 = vset.pattern.permute.xlu0 0
    %4201 = vperm.xlu0 %4200, %v4198
    %v4202 = vpop.permute.xlu0 %4201
    %v4204 = vadd.f32 %v4191, %v4202
    %v4205 = vadd.f32 %v4192, %v4202
    %v4206 = vadd.f32 %v4193, %v4202
    %v4207 = vadd.f32 %v4194, %v4202
    %v4208 = vadd.f32 %v4195, %v4202
    %v4209 = vadd.f32 %v4196, %v4202
    %v4212 = vcombine.high %v29, %v29
    %v4213 = vcombine.high %v31, %v31
    %v4216 = vadd.f32 %v4204, %v29
    %v4217 = vadd.f32 %v4205, %v4212
    %v4218 = vadd.f32 %v4206, %v30
    %v4219 = vadd.f32 %v4207, %v31
    %v4220 = vadd.f32 %v4208, %v4213
    %v4221 = vadd.f32 %v4209, %v32
    %v4222 = vmax.f32 %v4216, 0.0
    %v4223 = vmax.f32 %v4217, 0.0
    %v4224 = vmax.f32 %v4218, 0.0
    %v4225 = vmax.f32 %v4219, 0.0
    %v4226 = vmax.f32 %v4220, 0.0
    %v4227 = vmax.f32 %v4221, 0.0
    %v4228 = vmul.f32 %v4222, %v37
    %v4229 = vmul.f32 %v4223, %v41
    %v4230 = vmul.f32 %v4224, %v45
    %v4231 = vmul.f32 %v4225, %v37
    %v4232 = vmul.f32 %v4226, %v41
    %v4233 = vmul.f32 %v4227, %v45
    %v4240 = vcombine.low %v4228, %v4229
    %v4241 = vcombine.low %v4231, %v4232
    %4242 = vrot.lane.b32.xlu0 %v4240, 19
    %v4243 = vpop.permute.xlu0 %4242
    %4244 = vrot.lane.b32.xlu0 %v4230, 19
    %v4245 = vpop.permute.xlu0 %4244
    %4246 = vrot.lane.b32.xlu0 %v4241, 19
    %v4247 = vpop.permute.xlu0 %4246
    %4248 = vrot.lane.b32.xlu0 %v4233, 19
    %v4249 = vpop.permute.xlu0 %4248
    %v4250 = vrot.slane %v4243, 4
    %v4251 = vrot.slane %v4247, 4
    %v4252 = vsel %vm69, %v4250, %v4243
    %v4253 = vsel %vm69, %v4250, %v4245
    %v4254 = vsel %vm69, %v4251, %v4247
    %v4255 = vsel %vm69, %v4251, %v4249
    %4260 = vst.msk [vmem:[#allocation2] sm:$0xff] %vm80, %v4252
    %4261 = vst.msk [vmem:[#allocation2 + $0x8] sm:$0xf] %vm82, %v4253
    %4262 = vst.msk [vmem:[#allocation2 + $0xc] sm:$0xff] %vm80, %v4254
    %4263 = vst.msk [vmem:[#allocation2 + $0x14] sm:$0xf] %vm82, %v4255
    %v4264 = vld [vmem:[#allocation2] sm:$0xff]
    %v4265 = vld [vmem:[#allocation2 + $0x8] sm:$0xf]
    %v4267 = vcombine.high %v4264, %v4264
    %v4269 = vpack.c.bf16 %v4264, %v4264
    %v4270 = vpack.c.bf16 %v4267, %v4267
    %v4271 = vpack.c.bf16 %v4265, %v4265
    %s4272 = scalar_lea.vmem %s1, 36
    %v4273 = vld [vmem:[%s4272] sm:$0x3]
    %s4274 = scalar_lea.vmem %s1, 38
    %v4275 = vld [vmem:[%s4274] sm:$0x3]
    %4279 = vrot.lane.b32.xlu0 %v4269, 127
    %v4280 = vpop.permute.xlu0 %4279
    %4281 = vrot.lane.b32.xlu0 %v4270, 127
    %v4282 = vpop.permute.xlu0 %4281
    %4283 = vrot.lane.b32.xlu0 %v4271, 127
    %v4284 = vpop.permute.xlu0 %4283
    %v4285 = vsel %vm106, %v4280, %v4282
    %v4286 = vsel %vm106, %v4282, %v4284
    %v4288 = vsel %vm109, %v4275, 0
    %v4291 = vsel %vm113, %v4285, 0
    %v4294 = vsel %vm113, %v4286, 0
    %v4297 = vsel %vm113, %v4284, 0
    %4299 = vmatprep.subr.bf16.mxu0 %v4294
    %4300 = vmatpush1.bf16.msra.mxu0 %v4291
    %4301 = vmatprep.subr.bf16.mxu0 0
    %4302 = vmatpush1.bf16.msra.mxu0 0
    %4303 = vmatprep.subr.bf16.mxu0 0
    %4304 = vmatpush1.bf16.msra.mxu0 0
    %4305 = vmatprep.subr.bf16.mxu0 0
    %4306 = vmatpush1.bf16.msra.mxu0 0
    %4307 = vmatprep.subr.bf16.mxu0 0
    %4308 = vmatpush1.bf16.msra.mxu0 0
    %4309 = vmatprep.subr.bf16.mxu0 0
    %4310 = vmatpush1.bf16.msra.mxu0 0
    %4311 = vmatprep.subr.bf16.mxu0 0
    %4312 = vmatpush1.bf16.msra.mxu0 0
    %4313 = vmatprep.subr.bf16.mxu0 0
    %4314 = vmatpush1.bf16.msra.mxu0 0
    %4315 = vmatprep.subr.bf16.mxu0 0
    %4316 = vmatpush1.bf16.msra.mxu0 0
    %4317 = vmatprep.subr.bf16.mxu0 0
    %4318 = vmatpush1.bf16.msra.mxu0 0
    %4319 = vmatprep.subr.bf16.mxu0 0
    %4320 = vmatpush1.bf16.msra.mxu0 0
    %4321 = vmatprep.subr.bf16.mxu0 0
    %4322 = vmatpush1.bf16.msra.mxu0 0
    %4323 = vmatprep.subr.bf16.mxu0 0
    %4324 = vmatpush1.bf16.msra.mxu0 0
    %4325 = vmatprep.subr.bf16.mxu0 0
    %4326 = vmatpush1.bf16.msra.mxu0 0
    %4327 = vmatprep.subr.bf16.mxu0 0
    %4328 = vmatpush1.bf16.msra.mxu0 0
    %4329 = vmatprep.subr.bf16.mxu0 0
    %4330 = vmatpush1.bf16.msra.mxu0 0
    %4331 = vmatprep.mubr.bf16.mxu0 0
    %4332 = vmatmul.mubr.bf16.gmra.mrb[0].mxu0 %v4288
    %v4333 = vpop.f32.mrb[0].mxu0
    %v4334 = vadd.f32 0.0, %v4333
    %v4335 = vpop.f32.mrb[0].mxu0
    %v4336 = vadd.f32 0.0, %v4335
    %v4337 = vpop.f32.mrb[0].mxu0
    %v4338 = vpop.f32.mrb[0].mxu0
    %4339 = vdwg.mxu0
    %4340 = vmatprep.subr.bf16.mxu0 0
    %4341 = vmatpush1.bf16.msra.mxu0 %v4297
    %4342 = vmatprep.subr.bf16.mxu0 0
    %4343 = vmatpush1.bf16.msra.mxu0 0
    %4344 = vmatprep.subr.bf16.mxu0 0
    %4345 = vmatpush1.bf16.msra.mxu0 0
    %4346 = vmatprep.subr.bf16.mxu0 0
    %4347 = vmatpush1.bf16.msra.mxu0 0
    %4348 = vmatprep.subr.bf16.mxu0 0
    %4349 = vmatpush1.bf16.msra.mxu0 0
    %4350 = vmatprep.subr.bf16.mxu0 0
    %4351 = vmatpush1.bf16.msra.mxu0 0
    %4352 = vmatprep.subr.bf16.mxu0 0
    %4353 = vmatpush1.bf16.msra.mxu0 0
    %4354 = vmatprep.subr.bf16.mxu0 0
    %4355 = vmatpush1.bf16.msra.mxu0 0
    %4356 = vmatprep.subr.bf16.mxu0 0
    %4357 = vmatpush1.bf16.msra.mxu0 0
    %4358 = vmatprep.subr.bf16.mxu0 0
    %4359 = vmatpush1.bf16.msra.mxu0 0
    %4360 = vmatprep.subr.bf16.mxu0 0
    %4361 = vmatpush1.bf16.msra.mxu0 0
    %4362 = vmatprep.subr.bf16.mxu0 0
    %4363 = vmatpush1.bf16.msra.mxu0 0
    %4364 = vmatprep.subr.bf16.mxu0 0
    %4365 = vmatpush1.bf16.msra.mxu0 0
    %4366 = vmatprep.subr.bf16.mxu0 0
    %4367 = vmatpush1.bf16.msra.mxu0 0
    %4368 = vmatprep.subr.bf16.mxu0 0
    %4369 = vmatpush1.bf16.msra.mxu0 0
    %4370 = vmatprep.subr.bf16.mxu0 0
    %4371 = vmatpush1.bf16.msra.mxu0 0
    %4372 = vmatprep.mubr.bf16.mxu0 0
    %4373 = vmatmul.mubr.bf16.gmra.mrb[0].mxu0 %v4288
    %v4374 = vpop.f32.mrb[0].mxu0
    %v4375 = vadd.f32 0.0, %v4374
    %v4376 = vpop.f32.mrb[0].mxu0
    %v4377 = vpop.f32.mrb[0].mxu0
    %v4378 = vpop.f32.mrb[0].mxu0
    %4379 = vdwg.mxu0
    %v4381 = vsel %vm109, %v4273, 0
    %v4384 = vsel %vm113, %v4269, 0
    %v4387 = vsel %vm113, %v4270, 0
    %v4390 = vsel %vm113, %v4271, 0
    %4392 = vmatprep.subr.bf16.mxu0 %v4387
    %4393 = vmatpush1.bf16.msra.mxu0 %v4384
    %4394 = vmatprep.subr.bf16.mxu0 0
    %4395 = vmatpush1.bf16.msra.mxu0 0
    %4396 = vmatprep.subr.bf16.mxu0 0
    %4397 = vmatpush1.bf16.msra.mxu0 0
    %4398 = vmatprep.subr.bf16.mxu0 0
    %4399 = vmatpush1.bf16.msra.mxu0 0
    %4400 = vmatprep.subr.bf16.mxu0 0
    %4401 = vmatpush1.bf16.msra.mxu0 0
    %4402 = vmatprep.subr.bf16.mxu0 0
    %4403 = vmatpush1.bf16.msra.mxu0 0
    %4404 = vmatprep.subr.bf16.mxu0 0
    %4405 = vmatpush1.bf16.msra.mxu0 0
    %4406 = vmatprep.subr.bf16.mxu0 0
    %4407 = vmatpush1.bf16.msra.mxu0 0
    %4408 = vmatprep.subr.bf16.mxu0 0
    %4409 = vmatpush1.bf16.msra.mxu0 0
    %4410 = vmatprep.subr.bf16.mxu0 0
    %4411 = vmatpush1.bf16.msra.mxu0 0
    %4412 = vmatprep.subr.bf16.mxu0 0
    %4413 = vmatpush1.bf16.msra.mxu0 0
    %4414 = vmatprep.subr.bf16.mxu0 0
    %4415 = vmatpush1.bf16.msra.mxu0 0
    %4416 = vmatprep.subr.bf16.mxu0 0
    %4417 = vmatpush1.bf16.msra.mxu0 0
    %4418 = vmatprep.subr.bf16.mxu0 0
    %4419 = vmatpush1.bf16.msra.mxu0 0
    %4420 = vmatprep.subr.bf16.mxu0 0
    %4421 = vmatpush1.bf16.msra.mxu0 0
    %4422 = vmatprep.subr.bf16.mxu0 0
    %4423 = vmatpush1.bf16.msra.mxu0 0
    %4424 = vmatprep.mubr.bf16.mxu0 0
    %4425 = vmatmul.mubr.bf16.gmra.mrb[0].mxu0 %v4381
    %v4426 = vpop.f32.mrb[0].mxu0
    %v4427 = vadd.f32 %v4334, %v4426
    %v4428 = vpop.f32.mrb[0].mxu0
    %v4429 = vadd.f32 %v4336, %v4428
    %v4430 = vpop.f32.mrb[0].mxu0
    %v4431 = vpop.f32.mrb[0].mxu0
    %4432 = vdwg.mxu0
    %4433 = vmatprep.subr.bf16.mxu0 0
    %4434 = vmatpush1.bf16.msra.mxu0 %v4390
    %4435 = vmatprep.subr.bf16.mxu0 0
    %4436 = vmatpush1.bf16.msra.mxu0 0
    %4437 = vmatprep.subr.bf16.mxu0 0
    %4438 = vmatpush1.bf16.msra.mxu0 0
    %4439 = vmatprep.subr.bf16.mxu0 0
    %4440 = vmatpush1.bf16.msra.mxu0 0
    %4441 = vmatprep.subr.bf16.mxu0 0
    %4442 = vmatpush1.bf16.msra.mxu0 0
    %4443 = vmatprep.subr.bf16.mxu0 0
    %4444 = vmatpush1.bf16.msra.mxu0 0
    %4445 = vmatprep.subr.bf16.mxu0 0
    %4446 = vmatpush1.bf16.msra.mxu0 0
    %4447 = vmatprep.subr.bf16.mxu0 0
    %4448 = vmatpush1.bf16.msra.mxu0 0
    %4449 = vmatprep.subr.bf16.mxu0 0
    %4450 = vmatpush1.bf16.msra.mxu0 0
    %4451 = vmatprep.subr.bf16.mxu0 0
    %4452 = vmatpush1.bf16.msra.mxu0 0
    %4453 = vmatprep.subr.bf16.mxu0 0
    %4454 = vmatpush1.bf16.msra.mxu0 0
    %4455 = vmatprep.subr.bf16.mxu0 0
    %4456 = vmatpush1.bf16.msra.mxu0 0
    %4457 = vmatprep.subr.bf16.mxu0 0
    %4458 = vmatpush1.bf16.msra.mxu0 0
    %4459 = vmatprep.subr.bf16.mxu0 0
    %4460 = vmatpush1.bf16.msra.mxu0 0
    %4461 = vmatprep.subr.bf16.mxu0 0
    %4462 = vmatpush1.bf16.msra.mxu0 0
    %4463 = vmatprep.subr.bf16.mxu0 0
    %4464 = vmatpush1.bf16.msra.mxu0 0
    %4465 = vmatprep.mubr.bf16.mxu0 0
    %4466 = vmatmul.mubr.bf16.gmra.mrb[0].mxu0 %v4381
    %v4467 = vpop.f32.mrb[0].mxu0
    %v4468 = vadd.f32 %v4375, %v4467
    %v4469 = vpop.f32.mrb[0].mxu0
    %v4470 = vpop.f32.mrb[0].mxu0
    %v4471 = vpop.f32.mrb[0].mxu0
    %4472 = vdwg.mxu0
    %v4473 = vld [vmem:[#allocation2] sm:$0xff]
    %v4474 = vld [vmem:[#allocation2 + $0x8] sm:$0xf]
    %v4476 = vcombine.high %v4473, %v4473
    %v4478 = vpack.c.bf16 %v4473, %v4473
    %v4479 = vpack.c.bf16 %v4476, %v4476
    %v4480 = vpack.c.bf16 %v4474, %v4474
    %s4481 = scalar_lea.vmem %s1, 40
    %v4482 = vld [vmem:[%s4481] sm:$0x3]
    %4486 = vrot.lane.b32.xlu0 %v4478, 126
    %v4487 = vpop.permute.xlu0 %4486
    %4488 = vrot.lane.b32.xlu0 %v4479, 126
    %v4489 = vpop.permute.xlu0 %4488
    %4490 = vrot.lane.b32.xlu0 %v4480, 126
    %v4491 = vpop.permute.xlu0 %4490
    %v4492 = vsel %vm316, %v4487, %v4489
    %v4493 = vsel %vm316, %v4489, %v4491
    %v4495 = vsel %vm109, %v4482, 0
    %v4498 = vsel %vm113, %v4492, 0
    %v4501 = vsel %vm113, %v4493, 0
    %v4504 = vsel %vm113, %v4491, 0
    %4506 = vmatprep.subr.bf16.mxu0 %v4501
    %4507 = vmatpush1.bf16.msra.mxu0 %v4498
    %4508 = vmatprep.subr.bf16.mxu0 0
    %4509 = vmatpush1.bf16.msra.mxu0 0
    %4510 = vmatprep.subr.bf16.mxu0 0
    %4511 = vmatpush1.bf16.msra.mxu0 0
    %4512 = vmatprep.subr.bf16.mxu0 0
    %4513 = vmatpush1.bf16.msra.mxu0 0
    %4514 = vmatprep.subr.bf16.mxu0 0
    %4515 = vmatpush1.bf16.msra.mxu0 0
    %4516 = vmatprep.subr.bf16.mxu0 0
    %4517 = vmatpush1.bf16.msra.mxu0 0
    %4518 = vmatprep.subr.bf16.mxu0 0
    %4519 = vmatpush1.bf16.msra.mxu0 0
    %4520 = vmatprep.subr.bf16.mxu0 0
    %4521 = vmatpush1.bf16.msra.mxu0 0
    %4522 = vmatprep.subr.bf16.mxu0 0
    %4523 = vmatpush1.bf16.msra.mxu0 0
    %4524 = vmatprep.subr.bf16.mxu0 0
    %4525 = vmatpush1.bf16.msra.mxu0 0
    %4526 = vmatprep.subr.bf16.mxu0 0
    %4527 = vmatpush1.bf16.msra.mxu0 0
    %4528 = vmatprep.subr.bf16.mxu0 0
    %4529 = vmatpush1.bf16.msra.mxu0 0
    %4530 = vmatprep.subr.bf16.mxu0 0
    %4531 = vmatpush1.bf16.msra.mxu0 0
    %4532 = vmatprep.subr.bf16.mxu0 0
    %4533 = vmatpush1.bf16.msra.mxu0 0
    %4534 = vmatprep.subr.bf16.mxu0 0
    %4535 = vmatpush1.bf16.msra.mxu0 0
    %4536 = vmatprep.subr.bf16.mxu0 0
    %4537 = vmatpush1.bf16.msra.mxu0 0
    %4538 = vmatprep.mubr.bf16.mxu0 0
    %4539 = vmatmul.mubr.bf16.gmra.mrb[0].mxu0 %v4495
    %v4540 = vpop.f32.mrb[0].mxu0
    %v4541 = vadd.f32 0.0, %v4540
    %v4542 = vpop.f32.mrb[0].mxu0
    %v4543 = vadd.f32 0.0, %v4542
    %v4544 = vpop.f32.mrb[0].mxu0
    %v4545 = vpop.f32.mrb[0].mxu0
    %4546 = vdwg.mxu0
    %4547 = vmatprep.subr.bf16.mxu0 0
    %4548 = vmatpush1.bf16.msra.mxu0 %v4504
    %4549 = vmatprep.subr.bf16.mxu0 0
    %4550 = vmatpush1.bf16.msra.mxu0 0
    %4551 = vmatprep.subr.bf16.mxu0 0
    %4552 = vmatpush1.bf16.msra.mxu0 0
    %4553 = vmatprep.subr.bf16.mxu0 0
    %4554 = vmatpush1.bf16.msra.mxu0 0
    %4555 = vmatprep.subr.bf16.mxu0 0
    %4556 = vmatpush1.bf16.msra.mxu0 0
    %4557 = vmatprep.subr.bf16.mxu0 0
    %4558 = vmatpush1.bf16.msra.mxu0 0
    %4559 = vmatprep.subr.bf16.mxu0 0
    %4560 = vmatpush1.bf16.msra.mxu0 0
    %4561 = vmatprep.subr.bf16.mxu0 0
    %4562 = vmatpush1.bf16.msra.mxu0 0
    %4563 = vmatprep.subr.bf16.mxu0 0
    %4564 = vmatpush1.bf16.msra.mxu0 0
    %4565 = vmatprep.subr.bf16.mxu0 0
    %4566 = vmatpush1.bf16.msra.mxu0 0
    %4567 = vmatprep.subr.bf16.mxu0 0
    %4568 = vmatpush1.bf16.msra.mxu0 0
    %4569 = vmatprep.subr.bf16.mxu0 0
    %4570 = vmatpush1.bf16.msra.mxu0 0
    %4571 = vmatprep.subr.bf16.mxu0 0
    %4572 = vmatpush1.bf16.msra.mxu0 0
    %4573 = vmatprep.subr.bf16.mxu0 0
    %4574 = vmatpush1.bf16.msra.mxu0 0
    %4575 = vmatprep.subr.bf16.mxu0 0
    %4576 = vmatpush1.bf16.msra.mxu0 0
    %4577 = vmatprep.subr.bf16.mxu0 0
    %4578 = vmatpush1.bf16.msra.mxu0 0
    %4579 = vmatprep.mubr.bf16.mxu0 0
    %4580 = vmatmul.mubr.bf16.gmra.mrb[0].mxu0 %v4495
    %v4581 = vpop.f32.mrb[0].mxu0
    %v4582 = vadd.f32 0.0, %v4581
    %v4583 = vpop.f32.mrb[0].mxu0
    %v4584 = vpop.f32.mrb[0].mxu0
    %v4585 = vpop.f32.mrb[0].mxu0
    %4586 = vdwg.mxu0
    %v4587 = vadd.f32 %v4427, %v4541
    %v4588 = vadd.f32 %v4429, %v4543
    %v4589 = vadd.f32 %v4468, %v4582
    %v4590 = vld [vmem:[#allocation2] sm:$0xff]
    %v4591 = vld [vmem:[#allocation2 + $0x8] sm:$0xf]
    %v4593 = vcombine.high %v4590, %v4590
    %v4595 = vpack.c.bf16 %v4590, %v4590
    %v4596 = vpack.c.bf16 %v4593, %v4593
    %v4597 = vpack.c.bf16 %v4591, %v4591
    %s4598 = scalar_lea.vmem %s1, 42
    %v4599 = vld [vmem:[%s4598] sm:$0x3]
    %4603 = vrot.lane.b32.xlu0 %v4595, 110
    %v4604 = vpop.permute.xlu0 %4603
    %4605 = vrot.lane.b32.xlu0 %v4596, 110
    %v4606 = vpop.permute.xlu0 %4605
    %4607 = vrot.lane.b32.xlu0 %v4597, 110
    %v4608 = vpop.permute.xlu0 %4607
    %v4609 = vsel %vm434, %v4604, %v4606
    %v4610 = vsel %vm434, %v4606, %v4608
    %v4612 = vsel %vm109, %v4599, 0
    %v4615 = vsel %vm113, %v4609, 0
    %v4618 = vsel %vm113, %v4610, 0
    %v4621 = vsel %vm113, %v4608, 0
    %4623 = vmatprep.subr.bf16.mxu0 %v4618
    %4624 = vmatpush1.bf16.msra.mxu0 %v4615
    %4625 = vmatprep.subr.bf16.mxu0 0
    %4626 = vmatpush1.bf16.msra.mxu0 0
    %4627 = vmatprep.subr.bf16.mxu0 0
    %4628 = vmatpush1.bf16.msra.mxu0 0
    %4629 = vmatprep.subr.bf16.mxu0 0
    %4630 = vmatpush1.bf16.msra.mxu0 0
    %4631 = vmatprep.subr.bf16.mxu0 0
    %4632 = vmatpush1.bf16.msra.mxu0 0
    %4633 = vmatprep.subr.bf16.mxu0 0
    %4634 = vmatpush1.bf16.msra.mxu0 0
    %4635 = vmatprep.subr.bf16.mxu0 0
    %4636 = vmatpush1.bf16.msra.mxu0 0
    %4637 = vmatprep.subr.bf16.mxu0 0
    %4638 = vmatpush1.bf16.msra.mxu0 0
    %4639 = vmatprep.subr.bf16.mxu0 0
    %4640 = vmatpush1.bf16.msra.mxu0 0
    %4641 = vmatprep.subr.bf16.mxu0 0
    %4642 = vmatpush1.bf16.msra.mxu0 0
    %4643 = vmatprep.subr.bf16.mxu0 0
    %4644 = vmatpush1.bf16.msra.mxu0 0
    %4645 = vmatprep.subr.bf16.mxu0 0
    %4646 = vmatpush1.bf16.msra.mxu0 0
    %4647 = vmatprep.subr.bf16.mxu0 0
    %4648 = vmatpush1.bf16.msra.mxu0 0
    %4649 = vmatprep.subr.bf16.mxu0 0
    %4650 = vmatpush1.bf16.msra.mxu0 0
    %4651 = vmatprep.subr.bf16.mxu0 0
    %4652 = vmatpush1.bf16.msra.mxu0 0
    %4653 = vmatprep.subr.bf16.mxu0 0
    %4654 = vmatpush1.bf16.msra.mxu0 0
    %4655 = vmatprep.mubr.bf16.mxu0 0
    %4656 = vmatmul.mubr.bf16.gmra.mrb[0].mxu0 %v4612
    %v4657 = vpop.f32.mrb[0].mxu0
    %v4658 = vadd.f32 0.0, %v4657
    %v4659 = vpop.f32.mrb[0].mxu0
    %v4660 = vadd.f32 0.0, %v4659
    %v4661 = vpop.f32.mrb[0].mxu0
    %v4662 = vpop.f32.mrb[0].mxu0
    %4663 = vdwg.mxu0
    %4664 = vmatprep.subr.bf16.mxu0 0
    %4665 = vmatpush1.bf16.msra.mxu0 %v4621
    %4666 = vmatprep.subr.bf16.mxu0 0
    %4667 = vmatpush1.bf16.msra.mxu0 0
    %4668 = vmatprep.subr.bf16.mxu0 0
    %4669 = vmatpush1.bf16.msra.mxu0 0
    %4670 = vmatprep.subr.bf16.mxu0 0
    %4671 = vmatpush1.bf16.msra.mxu0 0
    %4672 = vmatprep.subr.bf16.mxu0 0
    %4673 = vmatpush1.bf16.msra.mxu0 0
    %4674 = vmatprep.subr.bf16.mxu0 0
    %4675 = vmatpush1.bf16.msra.mxu0 0
    %4676 = vmatprep.subr.bf16.mxu0 0
    %4677 = vmatpush1.bf16.msra.mxu0 0
    %4678 = vmatprep.subr.bf16.mxu0 0
    %4679 = vmatpush1.bf16.msra.mxu0 0
    %4680 = vmatprep.subr.bf16.mxu0 0
    %4681 = vmatpush1.bf16.msra.mxu0 0
    %4682 = vmatprep.subr.bf16.mxu0 0
    %4683 = vmatpush1.bf16.msra.mxu0 0
    %4684 = vmatprep.subr.bf16.mxu0 0
    %4685 = vmatpush1.bf16.msra.mxu0 0
    %4686 = vmatprep.subr.bf16.mxu0 0
    %4687 = vmatpush1.bf16.msra.mxu0 0
    %4688 = vmatprep.subr.bf16.mxu0 0
    %4689 = vmatpush1.bf16.msra.mxu0 0
    %4690 = vmatprep.subr.bf16.mxu0 0
    %4691 = vmatpush1.bf16.msra.mxu0 0
    %4692 = vmatprep.subr.bf16.mxu0 0
    %4693 = vmatpush1.bf16.msra.mxu0 0
    %4694 = vmatprep.subr.bf16.mxu0 0
    %4695 = vmatpush1.bf16.msra.mxu0 0
    %4696 = vmatprep.mubr.bf16.mxu0 0
    %4697 = vmatmul.mubr.bf16.gmra.mrb[0].mxu0 %v4612
    %v4698 = vpop.f32.mrb[0].mxu0
    %v4699 = vadd.f32 0.0, %v4698
    %v4700 = vpop.f32.mrb[0].mxu0
    %v4701 = vpop.f32.mrb[0].mxu0
    %v4702 = vpop.f32.mrb[0].mxu0
    %4703 = vdwg.mxu0
    %v4704 = vadd.f32 %v4587, %v4658
    %v4705 = vadd.f32 %v4588, %v4660
    %v4706 = vadd.f32 %v4589, %v4699
    %v4707 = vld [vmem:[#allocation2] sm:$0xff]
    %v4708 = vld [vmem:[#allocation2 + $0x8] sm:$0xf]
    %v4710 = vcombine.high %v4707, %v4707
    %v4712 = vpack.c.bf16 %v4707, %v4707
    %v4713 = vpack.c.bf16 %v4710, %v4710
    %v4714 = vpack.c.bf16 %v4708, %v4708
    %s4715 = scalar_lea.vmem %s1, 44
    %v4716 = vld [vmem:[%s4715] sm:$0x3]
    %4720 = vrot.lane.b32.xlu0 %v4712, 109
    %v4721 = vpop.permute.xlu0 %4720
    %4722 = vrot.lane.b32.xlu0 %v4713, 109
    %v4723 = vpop.permute.xlu0 %4722
    %4724 = vrot.lane.b32.xlu0 %v4714, 109
    %v4725 = vpop.permute.xlu0 %4724
    %v4726 = vsel %vm552, %v4721, %v4723
    %v4727 = vsel %vm552, %v4723, %v4725
    %v4729 = vsel %vm109, %v4716, 0
    %v4732 = vsel %vm113, %v4726, 0
    %v4735 = vsel %vm113, %v4727, 0
    %v4738 = vsel %vm113, %v4725, 0
    %4740 = vmatprep.subr.bf16.mxu0 %v4735
    %4741 = vmatpush1.bf16.msra.mxu0 %v4732
    %4742 = vmatprep.subr.bf16.mxu0 0
    %4743 = vmatpush1.bf16.msra.mxu0 0
    %4744 = vmatprep.subr.bf16.mxu0 0
    %4745 = vmatpush1.bf16.msra.mxu0 0
    %4746 = vmatprep.subr.bf16.mxu0 0
    %4747 = vmatpush1.bf16.msra.mxu0 0
    %4748 = vmatprep.subr.bf16.mxu0 0
    %4749 = vmatpush1.bf16.msra.mxu0 0
    %4750 = vmatprep.subr.bf16.mxu0 0
    %4751 = vmatpush1.bf16.msra.mxu0 0
    %4752 = vmatprep.subr.bf16.mxu0 0
    %4753 = vmatpush1.bf16.msra.mxu0 0
    %4754 = vmatprep.subr.bf16.mxu0 0
    %4755 = vmatpush1.bf16.msra.mxu0 0
    %4756 = vmatprep.subr.bf16.mxu0 0
    %4757 = vmatpush1.bf16.msra.mxu0 0
    %4758 = vmatprep.subr.bf16.mxu0 0
    %4759 = vmatpush1.bf16.msra.mxu0 0
    %4760 = vmatprep.subr.bf16.mxu0 0
    %4761 = vmatpush1.bf16.msra.mxu0 0
    %4762 = vmatprep.subr.bf16.mxu0 0
    %4763 = vmatpush1.bf16.msra.mxu0 0
    %4764 = vmatprep.subr.bf16.mxu0 0
    %4765 = vmatpush1.bf16.msra.mxu0 0
    %4766 = vmatprep.subr.bf16.mxu0 0
    %4767 = vmatpush1.bf16.msra.mxu0 0
    %4768 = vmatprep.subr.bf16.mxu0 0
    %4769 = vmatpush1.bf16.msra.mxu0 0
    %4770 = vmatprep.subr.bf16.mxu0 0
    %4771 = vmatpush1.bf16.msra.mxu0 0
    %4772 = vmatprep.mubr.bf16.mxu0 0
    %4773 = vmatmul.mubr.bf16.gmra.mrb[0].mxu0 %v4729
    %v4774 = vpop.f32.mrb[0].mxu0
    %v4775 = vadd.f32 0.0, %v4774
    %v4776 = vpop.f32.mrb[0].mxu0
    %v4777 = vadd.f32 0.0, %v4776
    %v4778 = vpop.f32.mrb[0].mxu0
    %v4779 = vpop.f32.mrb[0].mxu0
    %4780 = vdwg.mxu0
    %4781 = vmatprep.subr.bf16.mxu0 0
    %4782 = vmatpush1.bf16.msra.mxu0 %v4738
    %4783 = vmatprep.subr.bf16.mxu0 0
    %4784 = vmatpush1.bf16.msra.mxu0 0
    %4785 = vmatprep.subr.bf16.mxu0 0
    %4786 = vmatpush1.bf16.msra.mxu0 0
    %4787 = vmatprep.subr.bf16.mxu0 0
    %4788 = vmatpush1.bf16.msra.mxu0 0
    %4789 = vmatprep.subr.bf16.mxu0 0
    %4790 = vmatpush1.bf16.msra.mxu0 0
    %4791 = vmatprep.subr.bf16.mxu0 0
    %4792 = vmatpush1.bf16.msra.mxu0 0
    %4793 = vmatprep.subr.bf16.mxu0 0
    %4794 = vmatpush1.bf16.msra.mxu0 0
    %4795 = vmatprep.subr.bf16.mxu0 0
    %4796 = vmatpush1.bf16.msra.mxu0 0
    %4797 = vmatprep.subr.bf16.mxu0 0
    %4798 = vmatpush1.bf16.msra.mxu0 0
    %4799 = vmatprep.subr.bf16.mxu0 0
    %4800 = vmatpush1.bf16.msra.mxu0 0
    %4801 = vmatprep.subr.bf16.mxu0 0
    %4802 = vmatpush1.bf16.msra.mxu0 0
    %4803 = vmatprep.subr.bf16.mxu0 0
    %4804 = vmatpush1.bf16.msra.mxu0 0
    %4805 = vmatprep.subr.bf16.mxu0 0
    %4806 = vmatpush1.bf16.msra.mxu0 0
    %4807 = vmatprep.subr.bf16.mxu0 0
    %4808 = vmatpush1.bf16.msra.mxu0 0
    %4809 = vmatprep.subr.bf16.mxu0 0
    %4810 = vmatpush1.bf16.msra.mxu0 0
    %4811 = vmatprep.subr.bf16.mxu0 0
    %4812 = vmatpush1.bf16.msra.mxu0 0
    %4813 = vmatprep.mubr.bf16.mxu0 0
    %4814 = vmatmul.mubr.bf16.gmra.mrb[0].mxu0 %v4729
    %v4815 = vpop.f32.mrb[0].mxu0
    %v4816 = vadd.f32 0.0, %v4815
    %v4817 = vpop.f32.mrb[0].mxu0
    %v4818 = vpop.f32.mrb[0].mxu0
    %v4819 = vpop.f32.mrb[0].mxu0
    %4820 = vdwg.mxu0
    %v4821 = vadd.f32 %v4704, %v4775
    %v4822 = vadd.f32 %v4705, %v4777
    %v4823 = vadd.f32 %v4706, %v4816
    %v4824 = vld [vmem:[#allocation2] sm:$0xff]
    %v4825 = vld [vmem:[#allocation2 + $0x8] sm:$0xf]
    %v4827 = vcombine.high %v4824, %v4824
    %v4829 = vpack.c.bf16 %v4824, %v4824
    %v4830 = vpack.c.bf16 %v4827, %v4827
    %v4831 = vpack.c.bf16 %v4825, %v4825
    %s4832 = scalar_lea.vmem %s1, 46
    %v4833 = vld [vmem:[%s4832] sm:$0x3]
    %4837 = vrot.lane.b32.xlu0 %v4829, 108
    %v4838 = vpop.permute.xlu0 %4837
    %4839 = vrot.lane.b32.xlu0 %v4830, 108
    %v4840 = vpop.permute.xlu0 %4839
    %4841 = vrot.lane.b32.xlu0 %v4831, 108
    %v4842 = vpop.permute.xlu0 %4841
    %v4843 = vsel %vm670, %v4838, %v4840
    %v4844 = vsel %vm670, %v4840, %v4842
    %v4846 = vsel %vm109, %v4833, 0
    %v4849 = vsel %vm113, %v4843, 0
    %v4852 = vsel %vm113, %v4844, 0
    %v4855 = vsel %vm113, %v4842, 0
    %4857 = vmatprep.subr.bf16.mxu0 %v4852
    %4858 = vmatpush1.bf16.msra.mxu0 %v4849
    %4859 = vmatprep.subr.bf16.mxu0 0
    %4860 = vmatpush1.bf16.msra.mxu0 0
    %4861 = vmatprep.subr.bf16.mxu0 0
    %4862 = vmatpush1.bf16.msra.mxu0 0
    %4863 = vmatprep.subr.bf16.mxu0 0
    %4864 = vmatpush1.bf16.msra.mxu0 0
    %4865 = vmatprep.subr.bf16.mxu0 0
    %4866 = vmatpush1.bf16.msra.mxu0 0
    %4867 = vmatprep.subr.bf16.mxu0 0
    %4868 = vmatpush1.bf16.msra.mxu0 0
    %4869 = vmatprep.subr.bf16.mxu0 0
    %4870 = vmatpush1.bf16.msra.mxu0 0
    %4871 = vmatprep.subr.bf16.mxu0 0
    %4872 = vmatpush1.bf16.msra.mxu0 0
    %4873 = vmatprep.subr.bf16.mxu0 0
    %4874 = vmatpush1.bf16.msra.mxu0 0
    %4875 = vmatprep.subr.bf16.mxu0 0
    %4876 = vmatpush1.bf16.msra.mxu0 0
    %4877 = vmatprep.subr.bf16.mxu0 0
    %4878 = vmatpush1.bf16.msra.mxu0 0
    %4879 = vmatprep.subr.bf16.mxu0 0
    %4880 = vmatpush1.bf16.msra.mxu0 0
    %4881 = vmatprep.subr.bf16.mxu0 0
    %4882 = vmatpush1.bf16.msra.mxu0 0
    %4883 = vmatprep.subr.bf16.mxu0 0
    %4884 = vmatpush1.bf16.msra.mxu0 0
    %4885 = vmatprep.subr.bf16.mxu0 0
    %4886 = vmatpush1.bf16.msra.mxu0 0
    %4887 = vmatprep.subr.bf16.mxu0 0
    %4888 = vmatpush1.bf16.msra.mxu0 0
    %4889 = vmatprep.mubr.bf16.mxu0 0
    %4890 = vmatmul.mubr.bf16.gmra.mrb[0].mxu0 %v4846
    %v4891 = vpop.f32.mrb[0].mxu0
    %v4892 = vadd.f32 0.0, %v4891
    %v4893 = vpop.f32.mrb[0].mxu0
    %v4894 = vadd.f32 0.0, %v4893
    %v4895 = vpop.f32.mrb[0].mxu0
    %v4896 = vpop.f32.mrb[0].mxu0
    %4897 = vdwg.mxu0
    %4898 = vmatprep.subr.bf16.mxu0 0
    %4899 = vmatpush1.bf16.msra.mxu0 %v4855
    %4900 = vmatprep.subr.bf16.mxu0 0
    %4901 = vmatpush1.bf16.msra.mxu0 0
    %4902 = vmatprep.subr.bf16.mxu0 0
    %4903 = vmatpush1.bf16.msra.mxu0 0
    %4904 = vmatprep.subr.bf16.mxu0 0
    %4905 = vmatpush1.bf16.msra.mxu0 0
    %4906 = vmatprep.subr.bf16.mxu0 0
    %4907 = vmatpush1.bf16.msra.mxu0 0
    %4908 = vmatprep.subr.bf16.mxu0 0
    %4909 = vmatpush1.bf16.msra.mxu0 0
    %4910 = vmatprep.subr.bf16.mxu0 0
    %4911 = vmatpush1.bf16.msra.mxu0 0
    %4912 = vmatprep.subr.bf16.mxu0 0
    %4913 = vmatpush1.bf16.msra.mxu0 0
    %4914 = vmatprep.subr.bf16.mxu0 0
    %4915 = vmatpush1.bf16.msra.mxu0 0
    %4916 = vmatprep.subr.bf16.mxu0 0
    %4917 = vmatpush1.bf16.msra.mxu0 0
    %4918 = vmatprep.subr.bf16.mxu0 0
    %4919 = vmatpush1.bf16.msra.mxu0 0
    %4920 = vmatprep.subr.bf16.mxu0 0
    %4921 = vmatpush1.bf16.msra.mxu0 0
    %4922 = vmatprep.subr.bf16.mxu0 0
    %4923 = vmatpush1.bf16.msra.mxu0 0
    %4924 = vmatprep.subr.bf16.mxu0 0
    %4925 = vmatpush1.bf16.msra.mxu0 0
    %4926 = vmatprep.subr.bf16.mxu0 0
    %4927 = vmatpush1.bf16.msra.mxu0 0
    %4928 = vmatprep.subr.bf16.mxu0 0
    %4929 = vmatpush1.bf16.msra.mxu0 0
    %4930 = vmatprep.mubr.bf16.mxu0 0
    %4931 = vmatmul.mubr.bf16.gmra.mrb[0].mxu0 %v4846
    %v4932 = vpop.f32.mrb[0].mxu0
    %v4933 = vadd.f32 0.0, %v4932
    %v4934 = vpop.f32.mrb[0].mxu0
    %v4935 = vpop.f32.mrb[0].mxu0
    %v4936 = vpop.f32.mrb[0].mxu0
    %4937 = vdwg.mxu0
    %v4938 = vadd.f32 %v4821, %v4892
    %v4939 = vadd.f32 %v4822, %v4894
    %v4940 = vadd.f32 %v4823, %v4933
    %v4941 = vld [vmem:[#allocation2] sm:$0xff]
    %v4942 = vld [vmem:[#allocation2 + $0x8] sm:$0xf]
    %v4944 = vcombine.high %v4941, %v4941
    %v4946 = vpack.c.bf16 %v4941, %v4941
    %v4947 = vpack.c.bf16 %v4944, %v4944
    %v4948 = vpack.c.bf16 %v4942, %v4942
    %s4949 = scalar_lea.vmem %s1, 48
    %v4950 = vld [vmem:[%s4949] sm:$0x3]
    %4954 = vrot.lane.b32.xlu0 %v4946, 92
    %v4955 = vpop.permute.xlu0 %4954
    %4956 = vrot.lane.b32.xlu0 %v4947, 92
    %v4957 = vpop.permute.xlu0 %4956
    %4958 = vrot.lane.b32.xlu0 %v4948, 92
    %v4959 = vpop.permute.xlu0 %4958
    %v4960 = vsel %vm788, %v4955, %v4957
    %v4961 = vsel %vm788, %v4957, %v4959
    %v4963 = vsel %vm109, %v4950, 0
    %v4966 = vsel %vm113, %v4960, 0
    %v4969 = vsel %vm113, %v4961, 0
    %v4972 = vsel %vm113, %v4959, 0
    %4974 = vmatprep.subr.bf16.mxu0 %v4969
    %4975 = vmatpush1.bf16.msra.mxu0 %v4966
    %4976 = vmatprep.subr.bf16.mxu0 0
    %4977 = vmatpush1.bf16.msra.mxu0 0
    %4978 = vmatprep.subr.bf16.mxu0 0
    %4979 = vmatpush1.bf16.msra.mxu0 0
    %4980 = vmatprep.subr.bf16.mxu0 0
    %4981 = vmatpush1.bf16.msra.mxu0 0
    %4982 = vmatprep.subr.bf16.mxu0 0
    %4983 = vmatpush1.bf16.msra.mxu0 0
    %4984 = vmatprep.subr.bf16.mxu0 0
    %4985 = vmatpush1.bf16.msra.mxu0 0
    %4986 = vmatprep.subr.bf16.mxu0 0
    %4987 = vmatpush1.bf16.msra.mxu0 0
    %4988 = vmatprep.subr.bf16.mxu0 0
    %4989 = vmatpush1.bf16.msra.mxu0 0
    %4990 = vmatprep.subr.bf16.mxu0 0
    %4991 = vmatpush1.bf16.msra.mxu0 0
    %4992 = vmatprep.subr.bf16.mxu0 0
    %4993 = vmatpush1.bf16.msra.mxu0 0
    %4994 = vmatprep.subr.bf16.mxu0 0
    %4995 = vmatpush1.bf16.msra.mxu0 0
    %4996 = vmatprep.subr.bf16.mxu0 0
    %4997 = vmatpush1.bf16.msra.mxu0 0
    %4998 = vmatprep.subr.bf16.mxu0 0
    %4999 = vmatpush1.bf16.msra.mxu0 0
    %5000 = vmatprep.subr.bf16.mxu0 0
    %5001 = vmatpush1.bf16.msra.mxu0 0
    %5002 = vmatprep.subr.bf16.mxu0 0
    %5003 = vmatpush1.bf16.msra.mxu0 0
    %5004 = vmatprep.subr.bf16.mxu0 0
    %5005 = vmatpush1.bf16.msra.mxu0 0
    %5006 = vmatprep.mubr.bf16.mxu0 0
    %5007 = vmatmul.mubr.bf16.gmra.mrb[0].mxu0 %v4963
    %v5008 = vpop.f32.mrb[0].mxu0
    %v5009 = vadd.f32 0.0, %v5008
    %v5010 = vpop.f32.mrb[0].mxu0
    %v5011 = vadd.f32 0.0, %v5010
    %v5012 = vpop.f32.mrb[0].mxu0
    %v5013 = vpop.f32.mrb[0].mxu0
    %5014 = vdwg.mxu0
    %5015 = vmatprep.subr.bf16.mxu0 0
    %5016 = vmatpush1.bf16.msra.mxu0 %v4972
    %5017 = vmatprep.subr.bf16.mxu0 0
    %5018 = vmatpush1.bf16.msra.mxu0 0
    %5019 = vmatprep.subr.bf16.mxu0 0
    %5020 = vmatpush1.bf16.msra.mxu0 0
    %5021 = vmatprep.subr.bf16.mxu0 0
    %5022 = vmatpush1.bf16.msra.mxu0 0
    %5023 = vmatprep.subr.bf16.mxu0 0
    %5024 = vmatpush1.bf16.msra.mxu0 0
    %5025 = vmatprep.subr.bf16.mxu0 0
    %5026 = vmatpush1.bf16.msra.mxu0 0
    %5027 = vmatprep.subr.bf16.mxu0 0
    %5028 = vmatpush1.bf16.msra.mxu0 0
    %5029 = vmatprep.subr.bf16.mxu0 0
    %5030 = vmatpush1.bf16.msra.mxu0 0
    %5031 = vmatprep.subr.bf16.mxu0 0
    %5032 = vmatpush1.bf16.msra.mxu0 0
    %5033 = vmatprep.subr.bf16.mxu0 0
    %5034 = vmatpush1.bf16.msra.mxu0 0
    %5035 = vmatprep.subr.bf16.mxu0 0
    %5036 = vmatpush1.bf16.msra.mxu0 0
    %5037 = vmatprep.subr.bf16.mxu0 0
    %5038 = vmatpush1.bf16.msra.mxu0 0
    %5039 = vmatprep.subr.bf16.mxu0 0
    %5040 = vmatpush1.bf16.msra.mxu0 0
    %5041 = vmatprep.subr.bf16.mxu0 0
    %5042 = vmatpush1.bf16.msra.mxu0 0
    %5043 = vmatprep.subr.bf16.mxu0 0
    %5044 = vmatpush1.bf16.msra.mxu0 0
    %5045 = vmatprep.subr.bf16.mxu0 0
    %5046 = vmatpush1.bf16.msra.mxu0 0
    %5047 = vmatprep.mubr.bf16.mxu0 0
    %5048 = vmatmul.mubr.bf16.gmra.mrb[0].mxu0 %v4963
    %v5049 = vpop.f32.mrb[0].mxu0
    %v5050 = vadd.f32 0.0, %v5049
    %v5051 = vpop.f32.mrb[0].mxu0
    %v5052 = vpop.f32.mrb[0].mxu0
    %v5053 = vpop.f32.mrb[0].mxu0
    %5054 = vdwg.mxu0
    %v5055 = vadd.f32 %v4938, %v5009
    %v5056 = vadd.f32 %v4939, %v5011
    %v5057 = vadd.f32 %v4940, %v5050
    %v5058 = vld [vmem:[#allocation2] sm:$0xff]
    %v5059 = vld [vmem:[#allocation2 + $0x8] sm:$0xf]
    %v5061 = vcombine.high %v5058, %v5058
    %v5063 = vpack.c.bf16 %v5058, %v5058
    %v5064 = vpack.c.bf16 %v5061, %v5061
    %v5065 = vpack.c.bf16 %v5059, %v5059
    %s5066 = scalar_lea.vmem %s1, 50
    %v5067 = vld [vmem:[%s5066] sm:$0x3]
    %5071 = vrot.lane.b32.xlu0 %v5063, 91
    %v5072 = vpop.permute.xlu0 %5071
    %5073 = vrot.lane.b32.xlu0 %v5064, 91
    %v5074 = vpop.permute.xlu0 %5073
    %5075 = vrot.lane.b32.xlu0 %v5065, 91
    %v5076 = vpop.permute.xlu0 %5075
    %v5077 = vsel %vm906, %v5072, %v5074
    %v5078 = vsel %vm906, %v5074, %v5076
    %v5080 = vsel %vm109, %v5067, 0
    %v5083 = vsel %vm113, %v5077, 0
    %v5086 = vsel %vm113, %v5078, 0
    %v5089 = vsel %vm113, %v5076, 0
    %5091 = vmatprep.subr.bf16.mxu0 %v5086
    %5092 = vmatpush1.bf16.msra.mxu0 %v5083
    %5093 = vmatprep.subr.bf16.mxu0 0
    %5094 = vmatpush1.bf16.msra.mxu0 0
    %5095 = vmatprep.subr.bf16.mxu0 0
    %5096 = vmatpush1.bf16.msra.mxu0 0
    %5097 = vmatprep.subr.bf16.mxu0 0
    %5098 = vmatpush1.bf16.msra.mxu0 0
    %5099 = vmatprep.subr.bf16.mxu0 0
    %5100 = vmatpush1.bf16.msra.mxu0 0
    %5101 = vmatprep.subr.bf16.mxu0 0
    %5102 = vmatpush1.bf16.msra.mxu0 0
    %5103 = vmatprep.subr.bf16.mxu0 0
    %5104 = vmatpush1.bf16.msra.mxu0 0
    %5105 = vmatprep.subr.bf16.mxu0 0
    %5106 = vmatpush1.bf16.msra.mxu0 0
    %5107 = vmatprep.subr.bf16.mxu0 0
    %5108 = vmatpush1.bf16.msra.mxu0 0
    %5109 = vmatprep.subr.bf16.mxu0 0
    %5110 = vmatpush1.bf16.msra.mxu0 0
    %5111 = vmatprep.subr.bf16.mxu0 0
    %5112 = vmatpush1.bf16.msra.mxu0 0
    %5113 = vmatprep.subr.bf16.mxu0 0
    %5114 = vmatpush1.bf16.msra.mxu0 0
    %5115 = vmatprep.subr.bf16.mxu0 0
    %5116 = vmatpush1.bf16.msra.mxu0 0
    %5117 = vmatprep.subr.bf16.mxu0 0
    %5118 = vmatpush1.bf16.msra.mxu0 0
    %5119 = vmatprep.subr.bf16.mxu0 0
    %5120 = vmatpush1.bf16.msra.mxu0 0
    %5121 = vmatprep.subr.bf16.mxu0 0
    %5122 = vmatpush1.bf16.msra.mxu0 0
    %5123 = vmatprep.mubr.bf16.mxu0 0
    %5124 = vmatmul.mubr.bf16.gmra.mrb[0].mxu0 %v5080
    %v5125 = vpop.f32.mrb[0].mxu0
    %v5126 = vadd.f32 0.0, %v5125
    %v5127 = vpop.f32.mrb[0].mxu0
    %v5128 = vadd.f32 0.0, %v5127
    %v5129 = vpop.f32.mrb[0].mxu0
    %v5130 = vpop.f32.mrb[0].mxu0
    %5131 = vdwg.mxu0
    %5132 = vmatprep.subr.bf16.mxu0 0
    %5133 = vmatpush1.bf16.msra.mxu0 %v5089
    %5134 = vmatprep.subr.bf16.mxu0 0
    %5135 = vmatpush1.bf16.msra.mxu0 0
    %5136 = vmatprep.subr.bf16.mxu0 0
    %5137 = vmatpush1.bf16.msra.mxu0 0
    %5138 = vmatprep.subr.bf16.mxu0 0
    %5139 = vmatpush1.bf16.msra.mxu0 0
    %5140 = vmatprep.subr.bf16.mxu0 0
    %5141 = vmatpush1.bf16.msra.mxu0 0
    %5142 = vmatprep.subr.bf16.mxu0 0
    %5143 = vmatpush1.bf16.msra.mxu0 0
    %5144 = vmatprep.subr.bf16.mxu0 0
    %5145 = vmatpush1.bf16.msra.mxu0 0
    %5146 = vmatprep.subr.bf16.mxu0 0
    %5147 = vmatpush1.bf16.msra.mxu0 0
    %5148 = vmatprep.subr.bf16.mxu0 0
    %5149 = vmatpush1.bf16.msra.mxu0 0
    %5150 = vmatprep.subr.bf16.mxu0 0
    %5151 = vmatpush1.bf16.msra.mxu0 0
    %5152 = vmatprep.subr.bf16.mxu0 0
    %5153 = vmatpush1.bf16.msra.mxu0 0
    %5154 = vmatprep.subr.bf16.mxu0 0
    %5155 = vmatpush1.bf16.msra.mxu0 0
    %5156 = vmatprep.subr.bf16.mxu0 0
    %5157 = vmatpush1.bf16.msra.mxu0 0
    %5158 = vmatprep.subr.bf16.mxu0 0
    %5159 = vmatpush1.bf16.msra.mxu0 0
    %5160 = vmatprep.subr.bf16.mxu0 0
    %5161 = vmatpush1.bf16.msra.mxu0 0
    %5162 = vmatprep.subr.bf16.mxu0 0
    %5163 = vmatpush1.bf16.msra.mxu0 0
    %5164 = vmatprep.mubr.bf16.mxu0 0
    %5165 = vmatmul.mubr.bf16.gmra.mrb[0].mxu0 %v5080
    %v5166 = vpop.f32.mrb[0].mxu0
    %v5167 = vadd.f32 0.0, %v5166
    %v5168 = vpop.f32.mrb[0].mxu0
    %v5169 = vpop.f32.mrb[0].mxu0
    %v5170 = vpop.f32.mrb[0].mxu0
    %5171 = vdwg.mxu0
    %v5172 = vadd.f32 %v5055, %v5126
    %v5173 = vadd.f32 %v5056, %v5128
    %v5174 = vadd.f32 %v5057, %v5167
    %v5175 = vld [vmem:[#allocation2] sm:$0xff]
    %v5176 = vld [vmem:[#allocation2 + $0x8] sm:$0xf]
    %v5178 = vcombine.high %v5175, %v5175
    %v5180 = vpack.c.bf16 %v5175, %v5175
    %v5181 = vpack.c.bf16 %v5178, %v5178
    %v5182 = vpack.c.bf16 %v5176, %v5176
    %s5183 = scalar_lea.vmem %s1, 52
    %v5184 = vld [vmem:[%s5183] sm:$0x3]
    %5188 = vrot.lane.b32.xlu0 %v5180, 90
    %v5189 = vpop.permute.xlu0 %5188
    %5190 = vrot.lane.b32.xlu0 %v5181, 90
    %v5191 = vpop.permute.xlu0 %5190
    %5192 = vrot.lane.b32.xlu0 %v5182, 90
    %v5193 = vpop.permute.xlu0 %5192
    %v5194 = vsel %vm1024, %v5189, %v5191
    %v5195 = vsel %vm1024, %v5191, %v5193
    %v5197 = vsel %vm109, %v5184, 0
    %v5200 = vsel %vm113, %v5194, 0
    %v5203 = vsel %vm113, %v5195, 0
    %v5206 = vsel %vm113, %v5193, 0
    %5208 = vmatprep.subr.bf16.mxu0 %v5203
    %5209 = vmatpush1.bf16.msra.mxu0 %v5200
    %5210 = vmatprep.subr.bf16.mxu0 0
    %5211 = vmatpush1.bf16.msra.mxu0 0
    %5212 = vmatprep.subr.bf16.mxu0 0
    %5213 = vmatpush1.bf16.msra.mxu0 0
    %5214 = vmatprep.subr.bf16.mxu0 0
    %5215 = vmatpush1.bf16.msra.mxu0 0
    %5216 = vmatprep.subr.bf16.mxu0 0
    %5217 = vmatpush1.bf16.msra.mxu0 0
    %5218 = vmatprep.subr.bf16.mxu0 0
    %5219 = vmatpush1.bf16.msra.mxu0 0
    %5220 = vmatprep.subr.bf16.mxu0 0
    %5221 = vmatpush1.bf16.msra.mxu0 0
    %5222 = vmatprep.subr.bf16.mxu0 0
    %5223 = vmatpush1.bf16.msra.mxu0 0
    %5224 = vmatprep.subr.bf16.mxu0 0
    %5225 = vmatpush1.bf16.msra.mxu0 0
    %5226 = vmatprep.subr.bf16.mxu0 0
    %5227 = vmatpush1.bf16.msra.mxu0 0
    %5228 = vmatprep.subr.bf16.mxu0 0
    %5229 = vmatpush1.bf16.msra.mxu0 0
    %5230 = vmatprep.subr.bf16.mxu0 0
    %5231 = vmatpush1.bf16.msra.mxu0 0
    %5232 = vmatprep.subr.bf16.mxu0 0
    %5233 = vmatpush1.bf16.msra.mxu0 0
    %5234 = vmatprep.subr.bf16.mxu0 0
    %5235 = vmatpush1.bf16.msra.mxu0 0
    %5236 = vmatprep.subr.bf16.mxu0 0
    %5237 = vmatpush1.bf16.msra.mxu0 0
    %5238 = vmatprep.subr.bf16.mxu0 0
    %5239 = vmatpush1.bf16.msra.mxu0 0
    %5240 = vmatprep.mubr.bf16.mxu0 0
    %5241 = vmatmul.mubr.bf16.gmra.mrb[0].mxu0 %v5197
    %v5242 = vpop.f32.mrb[0].mxu0
    %v5243 = vadd.f32 0.0, %v5242
    %v5244 = vpop.f32.mrb[0].mxu0
    %v5245 = vadd.f32 0.0, %v5244
    %v5246 = vpop.f32.mrb[0].mxu0
    %v5247 = vpop.f32.mrb[0].mxu0
    %5248 = vdwg.mxu0
    %5249 = vmatprep.subr.bf16.mxu0 0
    %5250 = vmatpush1.bf16.msra.mxu0 %v5206
    %5251 = vmatprep.subr.bf16.mxu0 0
    %5252 = vmatpush1.bf16.msra.mxu0 0
    %5253 = vmatprep.subr.bf16.mxu0 0
    %5254 = vmatpush1.bf16.msra.mxu0 0
    %5255 = vmatprep.subr.bf16.mxu0 0
    %5256 = vmatpush1.bf16.msra.mxu0 0
    %5257 = vmatprep.subr.bf16.mxu0 0
    %5258 = vmatpush1.bf16.msra.mxu0 0
    %5259 = vmatprep.subr.bf16.mxu0 0
    %5260 = vmatpush1.bf16.msra.mxu0 0
    %5261 = vmatprep.subr.bf16.mxu0 0
    %5262 = vmatpush1.bf16.msra.mxu0 0
    %5263 = vmatprep.subr.bf16.mxu0 0
    %5264 = vmatpush1.bf16.msra.mxu0 0
    %5265 = vmatprep.subr.bf16.mxu0 0
    %5266 = vmatpush1.bf16.msra.mxu0 0
    %5267 = vmatprep.subr.bf16.mxu0 0
    %5268 = vmatpush1.bf16.msra.mxu0 0
    %5269 = vmatprep.subr.bf16.mxu0 0
    %5270 = vmatpush1.bf16.msra.mxu0 0
    %5271 = vmatprep.subr.bf16.mxu0 0
    %5272 = vmatpush1.bf16.msra.mxu0 0
    %5273 = vmatprep.subr.bf16.mxu0 0
    %5274 = vmatpush1.bf16.msra.mxu0 0
    %5275 = vmatprep.subr.bf16.mxu0 0
    %5276 = vmatpush1.bf16.msra.mxu0 0
    %5277 = vmatprep.subr.bf16.mxu0 0
    %5278 = vmatpush1.bf16.msra.mxu0 0
    %5279 = vmatprep.subr.bf16.mxu0 0
    %5280 = vmatpush1.bf16.msra.mxu0 0
    %5281 = vmatprep.mubr.bf16.mxu0 0
    %5282 = vmatmul.mubr.bf16.gmra.mrb[0].mxu0 %v5197
    %v5283 = vpop.f32.mrb[0].mxu0
    %v5284 = vadd.f32 0.0, %v5283
    %v5285 = vpop.f32.mrb[0].mxu0
    %v5286 = vpop.f32.mrb[0].mxu0
    %v5287 = vpop.f32.mrb[0].mxu0
    %5288 = vdwg.mxu0
    %v5289 = vadd.f32 %v5172, %v5243
    %v5290 = vadd.f32 %v5173, %v5245
    %v5291 = vadd.f32 %v5174, %v5284
    %v5292 = vld [vmem:[%s1123] sm:$0xff]
    %v5293 = vld [vmem:[%s1123 + $0x8] sm:$0xf]
    %v5295 = vcombine.high %v5292, %v5292
    %v5297 = vpack.c.bf16 %v5292, %v5292
    %v5298 = vpack.c.bf16 %v5295, %v5295
    %v5299 = vpack.c.bf16 %v5293, %v5293
    %5303 = vrot.lane.b32.xlu0 %v5297, 127
    %v5304 = vpop.permute.xlu0 %5303
    %5305 = vrot.lane.b32.xlu0 %v5298, 127
    %v5306 = vpop.permute.xlu0 %5305
    %5307 = vrot.lane.b32.xlu0 %v5299, 127
    %v5308 = vpop.permute.xlu0 %5307
    %v5309 = vsel %vm106, %v5304, %v5306
    %v5310 = vsel %vm106, %v5306, %v5308
    %v5312 = vsel %vm113, %v5309, 0
    %v5315 = vsel %vm113, %v5310, 0
    %v5318 = vsel %vm113, %v5308, 0
    %5320 = vmatprep.subr.bf16.mxu0 %v5315
    %5321 = vmatpush1.bf16.msra.mxu0 %v5312
    %5322 = vmatprep.subr.bf16.mxu0 0
    %5323 = vmatpush1.bf16.msra.mxu0 0
    %5324 = vmatprep.subr.bf16.mxu0 0
    %5325 = vmatpush1.bf16.msra.mxu0 0
    %5326 = vmatprep.subr.bf16.mxu0 0
    %5327 = vmatpush1.bf16.msra.mxu0 0
    %5328 = vmatprep.subr.bf16.mxu0 0
    %5329 = vmatpush1.bf16.msra.mxu0 0
    %5330 = vmatprep.subr.bf16.mxu0 0
    %5331 = vmatpush1.bf16.msra.mxu0 0
    %5332 = vmatprep.subr.bf16.mxu0 0
    %5333 = vmatpush1.bf16.msra.mxu0 0
    %5334 = vmatprep.subr.bf16.mxu0 0
    %5335 = vmatpush1.bf16.msra.mxu0 0
    %5336 = vmatprep.subr.bf16.mxu0 0
    %5337 = vmatpush1.bf16.msra.mxu0 0
    %5338 = vmatprep.subr.bf16.mxu0 0
    %5339 = vmatpush1.bf16.msra.mxu0 0
    %5340 = vmatprep.subr.bf16.mxu0 0
    %5341 = vmatpush1.bf16.msra.mxu0 0
    %5342 = vmatprep.subr.bf16.mxu0 0
    %5343 = vmatpush1.bf16.msra.mxu0 0
    %5344 = vmatprep.subr.bf16.mxu0 0
    %5345 = vmatpush1.bf16.msra.mxu0 0
    %5346 = vmatprep.subr.bf16.mxu0 0
    %5347 = vmatpush1.bf16.msra.mxu0 0
    %5348 = vmatprep.subr.bf16.mxu0 0
    %5349 = vmatpush1.bf16.msra.mxu0 0
    %5350 = vmatprep.subr.bf16.mxu0 0
    %5351 = vmatpush1.bf16.msra.mxu0 0
    %5352 = vmatprep.mubr.bf16.mxu0 0
    %5353 = vmatmul.mubr.bf16.gmra.mrb[0].mxu0 %v4288
    %v5354 = vpop.f32.mrb[0].mxu0
    %v5355 = vadd.f32 0.0, %v5354
    %v5356 = vpop.f32.mrb[0].mxu0
    %v5357 = vadd.f32 0.0, %v5356
    %v5358 = vpop.f32.mrb[0].mxu0
    %v5359 = vpop.f32.mrb[0].mxu0
    %5360 = vdwg.mxu0
    %5361 = vmatprep.subr.bf16.mxu0 0
    %5362 = vmatpush1.bf16.msra.mxu0 %v5318
    %5363 = vmatprep.subr.bf16.mxu0 0
    %5364 = vmatpush1.bf16.msra.mxu0 0
    %5365 = vmatprep.subr.bf16.mxu0 0
    %5366 = vmatpush1.bf16.msra.mxu0 0
    %5367 = vmatprep.subr.bf16.mxu0 0
    %5368 = vmatpush1.bf16.msra.mxu0 0
    %5369 = vmatprep.subr.bf16.mxu0 0
    %5370 = vmatpush1.bf16.msra.mxu0 0
    %5371 = vmatprep.subr.bf16.mxu0 0
    %5372 = vmatpush1.bf16.msra.mxu0 0
    %5373 = vmatprep.subr.bf16.mxu0 0
    %5374 = vmatpush1.bf16.msra.mxu0 0
    %5375 = vmatprep.subr.bf16.mxu0 0
    %5376 = vmatpush1.bf16.msra.mxu0 0
    %5377 = vmatprep.subr.bf16.mxu0 0
    %5378 = vmatpush1.bf16.msra.mxu0 0
    %5379 = vmatprep.subr.bf16.mxu0 0
    %5380 = vmatpush1.bf16.msra.mxu0 0
    %5381 = vmatprep.subr.bf16.mxu0 0
    %5382 = vmatpush1.bf16.msra.mxu0 0
    %5383 = vmatprep.subr.bf16.mxu0 0
    %5384 = vmatpush1.bf16.msra.mxu0 0
    %5385 = vmatprep.subr.bf16.mxu0 0
    %5386 = vmatpush1.bf16.msra.mxu0 0
    %5387 = vmatprep.subr.bf16.mxu0 0
    %5388 = vmatpush1.bf16.msra.mxu0 0
    %5389 = vmatprep.subr.bf16.mxu0 0
    %5390 = vmatpush1.bf16.msra.mxu0 0
    %5391 = vmatprep.subr.bf16.mxu0 0
    %5392 = vmatpush1.bf16.msra.mxu0 0
    %5393 = vmatprep.mubr.bf16.mxu0 0
    %5394 = vmatmul.mubr.bf16.gmra.mrb[0].mxu0 %v4288
    %v5395 = vpop.f32.mrb[0].mxu0
    %v5396 = vadd.f32 0.0, %v5395
    %v5397 = vpop.f32.mrb[0].mxu0
    %v5398 = vpop.f32.mrb[0].mxu0
    %v5399 = vpop.f32.mrb[0].mxu0
    %5400 = vdwg.mxu0
    %v5402 = vsel %vm113, %v5297, 0
    %v5405 = vsel %vm113, %v5298, 0
    %v5408 = vsel %vm113, %v5299, 0
    %5410 = vmatprep.subr.bf16.mxu0 %v5405
    %5411 = vmatpush1.bf16.msra.mxu0 %v5402
    %5412 = vmatprep.subr.bf16.mxu0 0
    %5413 = vmatpush1.bf16.msra.mxu0 0
    %5414 = vmatprep.subr.bf16.mxu0 0
    %5415 = vmatpush1.bf16.msra.mxu0 0
    %5416 = vmatprep.subr.bf16.mxu0 0
    %5417 = vmatpush1.bf16.msra.mxu0 0
    %5418 = vmatprep.subr.bf16.mxu0 0
    %5419 = vmatpush1.bf16.msra.mxu0 0
    %5420 = vmatprep.subr.bf16.mxu0 0
    %5421 = vmatpush1.bf16.msra.mxu0 0
    %5422 = vmatprep.subr.bf16.mxu0 0
    %5423 = vmatpush1.bf16.msra.mxu0 0
    %5424 = vmatprep.subr.bf16.mxu0 0
    %5425 = vmatpush1.bf16.msra.mxu0 0
    %5426 = vmatprep.subr.bf16.mxu0 0
    %5427 = vmatpush1.bf16.msra.mxu0 0
    %5428 = vmatprep.subr.bf16.mxu0 0
    %5429 = vmatpush1.bf16.msra.mxu0 0
    %5430 = vmatprep.subr.bf16.mxu0 0
    %5431 = vmatpush1.bf16.msra.mxu0 0
    %5432 = vmatprep.subr.bf16.mxu0 0
    %5433 = vmatpush1.bf16.msra.mxu0 0
    %5434 = vmatprep.subr.bf16.mxu0 0
    %5435 = vmatpush1.bf16.msra.mxu0 0
    %5436 = vmatprep.subr.bf16.mxu0 0
    %5437 = vmatpush1.bf16.msra.mxu0 0
    %5438 = vmatprep.subr.bf16.mxu0 0
    %5439 = vmatpush1.bf16.msra.mxu0 0
    %5440 = vmatprep.subr.bf16.mxu0 0
    %5441 = vmatpush1.bf16.msra.mxu0 0
    %5442 = vmatprep.mubr.bf16.mxu0 0
    %5443 = vmatmul.mubr.bf16.gmra.mrb[0].mxu0 %v4381
    %v5444 = vpop.f32.mrb[0].mxu0
    %v5445 = vadd.f32 %v5355, %v5444
    %v5446 = vpop.f32.mrb[0].mxu0
    %v5447 = vadd.f32 %v5357, %v5446
    %v5448 = vpop.f32.mrb[0].mxu0
    %v5449 = vpop.f32.mrb[0].mxu0
    %5450 = vdwg.mxu0
    %5451 = vmatprep.subr.bf16.mxu0 0
    %5452 = vmatpush1.bf16.msra.mxu0 %v5408
    %5453 = vmatprep.subr.bf16.mxu0 0
    %5454 = vmatpush1.bf16.msra.mxu0 0
    %5455 = vmatprep.subr.bf16.mxu0 0
    %5456 = vmatpush1.bf16.msra.mxu0 0
    %5457 = vmatprep.subr.bf16.mxu0 0
    %5458 = vmatpush1.bf16.msra.mxu0 0
    %5459 = vmatprep.subr.bf16.mxu0 0
    %5460 = vmatpush1.bf16.msra.mxu0 0
    %5461 = vmatprep.subr.bf16.mxu0 0
    %5462 = vmatpush1.bf16.msra.mxu0 0
    %5463 = vmatprep.subr.bf16.mxu0 0
    %5464 = vmatpush1.bf16.msra.mxu0 0
    %5465 = vmatprep.subr.bf16.mxu0 0
    %5466 = vmatpush1.bf16.msra.mxu0 0
    %5467 = vmatprep.subr.bf16.mxu0 0
    %5468 = vmatpush1.bf16.msra.mxu0 0
    %5469 = vmatprep.subr.bf16.mxu0 0
    %5470 = vmatpush1.bf16.msra.mxu0 0
    %5471 = vmatprep.subr.bf16.mxu0 0
    %5472 = vmatpush1.bf16.msra.mxu0 0
    %5473 = vmatprep.subr.bf16.mxu0 0
    %5474 = vmatpush1.bf16.msra.mxu0 0
    %5475 = vmatprep.subr.bf16.mxu0 0
    %5476 = vmatpush1.bf16.msra.mxu0 0
    %5477 = vmatprep.subr.bf16.mxu0 0
    %5478 = vmatpush1.bf16.msra.mxu0 0
    %5479 = vmatprep.subr.bf16.mxu0 0
    %5480 = vmatpush1.bf16.msra.mxu0 0
    %5481 = vmatprep.subr.bf16.mxu0 0
    %5482 = vmatpush1.bf16.msra.mxu0 0
    %5483 = vmatprep.mubr.bf16.mxu0 0
    %5484 = vmatmul.mubr.bf16.gmra.mrb[0].mxu0 %v4381
    %v5485 = vpop.f32.mrb[0].mxu0
    %v5486 = vadd.f32 %v5396, %v5485
    %v5487 = vpop.f32.mrb[0].mxu0
    %v5488 = vpop.f32.mrb[0].mxu0
    %v5489 = vpop.f32.mrb[0].mxu0
    %5490 = vdwg.mxu0
    %v5491 = vld [vmem:[%s1123] sm:$0xff]
    %v5492 = vld [vmem:[%s1123 + $0x8] sm:$0xf]
    %v5494 = vcombine.high %v5491, %v5491
    %v5496 = vpack.c.bf16 %v5491, %v5491
    %v5497 = vpack.c.bf16 %v5494, %v5494
    %v5498 = vpack.c.bf16 %v5492, %v5492
    %5502 = vrot.lane.b32.xlu0 %v5496, 126
    %v5503 = vpop.permute.xlu0 %5502
    %5504 = vrot.lane.b32.xlu0 %v5497, 126
    %v5505 = vpop.permute.xlu0 %5504
    %5506 = vrot.lane.b32.xlu0 %v5498, 126
    %v5507 = vpop.permute.xlu0 %5506
    %v5508 = vsel %vm316, %v5503, %v5505
    %v5509 = vsel %vm316, %v5505, %v5507
    %v5511 = vsel %vm113, %v5508, 0
    %v5514 = vsel %vm113, %v5509, 0
    %v5517 = vsel %vm113, %v5507, 0
    %5519 = vmatprep.subr.bf16.mxu0 %v5514
    %5520 = vmatpush1.bf16.msra.mxu0 %v5511
    %5521 = vmatprep.subr.bf16.mxu0 0
    %5522 = vmatpush1.bf16.msra.mxu0 0
    %5523 = vmatprep.subr.bf16.mxu0 0
    %5524 = vmatpush1.bf16.msra.mxu0 0
    %5525 = vmatprep.subr.bf16.mxu0 0
    %5526 = vmatpush1.bf16.msra.mxu0 0
    %5527 = vmatprep.subr.bf16.mxu0 0
    %5528 = vmatpush1.bf16.msra.mxu0 0
    %5529 = vmatprep.subr.bf16.mxu0 0
    %5530 = vmatpush1.bf16.msra.mxu0 0
    %5531 = vmatprep.subr.bf16.mxu0 0
    %5532 = vmatpush1.bf16.msra.mxu0 0
    %5533 = vmatprep.subr.bf16.mxu0 0
    %5534 = vmatpush1.bf16.msra.mxu0 0
    %5535 = vmatprep.subr.bf16.mxu0 0
    %5536 = vmatpush1.bf16.msra.mxu0 0
    %5537 = vmatprep.subr.bf16.mxu0 0
    %5538 = vmatpush1.bf16.msra.mxu0 0
    %5539 = vmatprep.subr.bf16.mxu0 0
    %5540 = vmatpush1.bf16.msra.mxu0 0
    %5541 = vmatprep.subr.bf16.mxu0 0
    %5542 = vmatpush1.bf16.msra.mxu0 0
    %5543 = vmatprep.subr.bf16.mxu0 0
    %5544 = vmatpush1.bf16.msra.mxu0 0
    %5545 = vmatprep.subr.bf16.mxu0 0
    %5546 = vmatpush1.bf16.msra.mxu0 0
    %5547 = vmatprep.subr.bf16.mxu0 0
    %5548 = vmatpush1.bf16.msra.mxu0 0
    %5549 = vmatprep.subr.bf16.mxu0 0
    %5550 = vmatpush1.bf16.msra.mxu0 0
    %5551 = vmatprep.mubr.bf16.mxu0 0
    %5552 = vmatmul.mubr.bf16.gmra.mrb[0].mxu0 %v4495
    %v5553 = vpop.f32.mrb[0].mxu0
    %v5554 = vadd.f32 0.0, %v5553
    %v5555 = vpop.f32.mrb[0].mxu0
    %v5556 = vadd.f32 0.0, %v5555
    %v5557 = vpop.f32.mrb[0].mxu0
    %v5558 = vpop.f32.mrb[0].mxu0
    %5559 = vdwg.mxu0
    %5560 = vmatprep.subr.bf16.mxu0 0
    %5561 = vmatpush1.bf16.msra.mxu0 %v5517
    %5562 = vmatprep.subr.bf16.mxu0 0
    %5563 = vmatpush1.bf16.msra.mxu0 0
    %5564 = vmatprep.subr.bf16.mxu0 0
    %5565 = vmatpush1.bf16.msra.mxu0 0
    %5566 = vmatprep.subr.bf16.mxu0 0
    %5567 = vmatpush1.bf16.msra.mxu0 0
    %5568 = vmatprep.subr.bf16.mxu0 0
    %5569 = vmatpush1.bf16.msra.mxu0 0
    %5570 = vmatprep.subr.bf16.mxu0 0
    %5571 = vmatpush1.bf16.msra.mxu0 0
    %5572 = vmatprep.subr.bf16.mxu0 0
    %5573 = vmatpush1.bf16.msra.mxu0 0
    %5574 = vmatprep.subr.bf16.mxu0 0
    %5575 = vmatpush1.bf16.msra.mxu0 0
    %5576 = vmatprep.subr.bf16.mxu0 0
    %5577 = vmatpush1.bf16.msra.mxu0 0
    %5578 = vmatprep.subr.bf16.mxu0 0
    %5579 = vmatpush1.bf16.msra.mxu0 0
    %5580 = vmatprep.subr.bf16.mxu0 0
    %5581 = vmatpush1.bf16.msra.mxu0 0
    %5582 = vmatprep.subr.bf16.mxu0 0
    %5583 = vmatpush1.bf16.msra.mxu0 0
    %5584 = vmatprep.subr.bf16.mxu0 0
    %5585 = vmatpush1.bf16.msra.mxu0 0
    %5586 = vmatprep.subr.bf16.mxu0 0
    %5587 = vmatpush1.bf16.msra.mxu0 0
    %5588 = vmatprep.subr.bf16.mxu0 0
    %5589 = vmatpush1.bf16.msra.mxu0 0
    %5590 = vmatprep.subr.bf16.mxu0 0
    %5591 = vmatpush1.bf16.msra.mxu0 0
    %5592 = vmatprep.mubr.bf16.mxu0 0
    %5593 = vmatmul.mubr.bf16.gmra.mrb[0].mxu0 %v4495
    %v5594 = vpop.f32.mrb[0].mxu0
    %v5595 = vadd.f32 0.0, %v5594
    %v5596 = vpop.f32.mrb[0].mxu0
    %v5597 = vpop.f32.mrb[0].mxu0
    %v5598 = vpop.f32.mrb[0].mxu0
    %5599 = vdwg.mxu0
    %v5600 = vadd.f32 %v5445, %v5554
    %v5601 = vadd.f32 %v5447, %v5556
    %v5602 = vadd.f32 %v5486, %v5595
    %v5603 = vld [vmem:[%s1123] sm:$0xff]
    %v5604 = vld [vmem:[%s1123 + $0x8] sm:$0xf]
    %v5606 = vcombine.high %v5603, %v5603
    %v5608 = vpack.c.bf16 %v5603, %v5603
    %v5609 = vpack.c.bf16 %v5606, %v5606
    %v5610 = vpack.c.bf16 %v5604, %v5604
    %5614 = vrot.lane.b32.xlu0 %v5608, 110
    %v5615 = vpop.permute.xlu0 %5614
    %5616 = vrot.lane.b32.xlu0 %v5609, 110
    %v5617 = vpop.permute.xlu0 %5616
    %5618 = vrot.lane.b32.xlu0 %v5610, 110
    %v5619 = vpop.permute.xlu0 %5618
    %v5620 = vsel %vm434, %v5615, %v5617
    %v5621 = vsel %vm434, %v5617, %v5619
    %v5623 = vsel %vm113, %v5620, 0
    %v5626 = vsel %vm113, %v5621, 0
    %v5629 = vsel %vm113, %v5619, 0
    %5631 = vmatprep.subr.bf16.mxu0 %v5626
    %5632 = vmatpush1.bf16.msra.mxu0 %v5623
    %5633 = vmatprep.subr.bf16.mxu0 0
    %5634 = vmatpush1.bf16.msra.mxu0 0
    %5635 = vmatprep.subr.bf16.mxu0 0
    %5636 = vmatpush1.bf16.msra.mxu0 0
    %5637 = vmatprep.subr.bf16.mxu0 0
    %5638 = vmatpush1.bf16.msra.mxu0 0
    %5639 = vmatprep.subr.bf16.mxu0 0
    %5640 = vmatpush1.bf16.msra.mxu0 0
    %5641 = vmatprep.subr.bf16.mxu0 0
    %5642 = vmatpush1.bf16.msra.mxu0 0
    %5643 = vmatprep.subr.bf16.mxu0 0
    %5644 = vmatpush1.bf16.msra.mxu0 0
    %5645 = vmatprep.subr.bf16.mxu0 0
    %5646 = vmatpush1.bf16.msra.mxu0 0
    %5647 = vmatprep.subr.bf16.mxu0 0
    %5648 = vmatpush1.bf16.msra.mxu0 0
    %5649 = vmatprep.subr.bf16.mxu0 0
    %5650 = vmatpush1.bf16.msra.mxu0 0
    %5651 = vmatprep.subr.bf16.mxu0 0
    %5652 = vmatpush1.bf16.msra.mxu0 0
    %5653 = vmatprep.subr.bf16.mxu0 0
    %5654 = vmatpush1.bf16.msra.mxu0 0
    %5655 = vmatprep.subr.bf16.mxu0 0
    %5656 = vmatpush1.bf16.msra.mxu0 0
    %5657 = vmatprep.subr.bf16.mxu0 0
    %5658 = vmatpush1.bf16.msra.mxu0 0
    %5659 = vmatprep.subr.bf16.mxu0 0
    %5660 = vmatpush1.bf16.msra.mxu0 0
    %5661 = vmatprep.subr.bf16.mxu0 0
    %5662 = vmatpush1.bf16.msra.mxu0 0
    %5663 = vmatprep.mubr.bf16.mxu0 0
    %5664 = vmatmul.mubr.bf16.gmra.mrb[0].mxu0 %v4612
    %v5665 = vpop.f32.mrb[0].mxu0
    %v5666 = vadd.f32 0.0, %v5665
    %v5667 = vpop.f32.mrb[0].mxu0
    %v5668 = vadd.f32 0.0, %v5667
    %v5669 = vpop.f32.mrb[0].mxu0
    %v5670 = vpop.f32.mrb[0].mxu0
    %5671 = vdwg.mxu0
    %5672 = vmatprep.subr.bf16.mxu0 0
    %5673 = vmatpush1.bf16.msra.mxu0 %v5629
    %5674 = vmatprep.subr.bf16.mxu0 0
    %5675 = vmatpush1.bf16.msra.mxu0 0
    %5676 = vmatprep.subr.bf16.mxu0 0
    %5677 = vmatpush1.bf16.msra.mxu0 0
    %5678 = vmatprep.subr.bf16.mxu0 0
    %5679 = vmatpush1.bf16.msra.mxu0 0
    %5680 = vmatprep.subr.bf16.mxu0 0
    %5681 = vmatpush1.bf16.msra.mxu0 0
    %5682 = vmatprep.subr.bf16.mxu0 0
    %5683 = vmatpush1.bf16.msra.mxu0 0
    %5684 = vmatprep.subr.bf16.mxu0 0
    %5685 = vmatpush1.bf16.msra.mxu0 0
    %5686 = vmatprep.subr.bf16.mxu0 0
    %5687 = vmatpush1.bf16.msra.mxu0 0
    %5688 = vmatprep.subr.bf16.mxu0 0
    %5689 = vmatpush1.bf16.msra.mxu0 0
    %5690 = vmatprep.subr.bf16.mxu0 0
    %5691 = vmatpush1.bf16.msra.mxu0 0
    %5692 = vmatprep.subr.bf16.mxu0 0
    %5693 = vmatpush1.bf16.msra.mxu0 0
    %5694 = vmatprep.subr.bf16.mxu0 0
    %5695 = vmatpush1.bf16.msra.mxu0 0
    %5696 = vmatprep.subr.bf16.mxu0 0
    %5697 = vmatpush1.bf16.msra.mxu0 0
    %5698 = vmatprep.subr.bf16.mxu0 0
    %5699 = vmatpush1.bf16.msra.mxu0 0
    %5700 = vmatprep.subr.bf16.mxu0 0
    %5701 = vmatpush1.bf16.msra.mxu0 0
    %5702 = vmatprep.subr.bf16.mxu0 0
    %5703 = vmatpush1.bf16.msra.mxu0 0
    %5704 = vmatprep.mubr.bf16.mxu0 0
    %5705 = vmatmul.mubr.bf16.gmra.mrb[0].mxu0 %v4612
    %v5706 = vpop.f32.mrb[0].mxu0
    %v5707 = vadd.f32 0.0, %v5706
    %v5708 = vpop.f32.mrb[0].mxu0
    %v5709 = vpop.f32.mrb[0].mxu0
    %v5710 = vpop.f32.mrb[0].mxu0
    %5711 = vdwg.mxu0
    %v5712 = vadd.f32 %v5600, %v5666
    %v5713 = vadd.f32 %v5601, %v5668
    %v5714 = vadd.f32 %v5602, %v5707
    %v5715 = vld [vmem:[%s1123] sm:$0xff]
    %v5716 = vld [vmem:[%s1123 + $0x8] sm:$0xf]
    %v5718 = vcombine.high %v5715, %v5715
    %v5720 = vpack.c.bf16 %v5715, %v5715
    %v5721 = vpack.c.bf16 %v5718, %v5718
    %v5722 = vpack.c.bf16 %v5716, %v5716
    %5726 = vrot.lane.b32.xlu0 %v5720, 109
    %v5727 = vpop.permute.xlu0 %5726
    %5728 = vrot.lane.b32.xlu0 %v5721, 109
    %v5729 = vpop.permute.xlu0 %5728
    %5730 = vrot.lane.b32.xlu0 %v5722, 109
    %v5731 = vpop.permute.xlu0 %5730
    %v5732 = vsel %vm552, %v5727, %v5729
    %v5733 = vsel %vm552, %v5729, %v5731
    %v5735 = vsel %vm113, %v5732, 0
    %v5738 = vsel %vm113, %v5733, 0
    %v5741 = vsel %vm113, %v5731, 0
    %5743 = vmatprep.subr.bf16.mxu0 %v5738
    %5744 = vmatpush1.bf16.msra.mxu0 %v5735
    %5745 = vmatprep.subr.bf16.mxu0 0
    %5746 = vmatpush1.bf16.msra.mxu0 0
    %5747 = vmatprep.subr.bf16.mxu0 0
    %5748 = vmatpush1.bf16.msra.mxu0 0
    %5749 = vmatprep.subr.bf16.mxu0 0
    %5750 = vmatpush1.bf16.msra.mxu0 0
    %5751 = vmatprep.subr.bf16.mxu0 0
    %5752 = vmatpush1.bf16.msra.mxu0 0
    %5753 = vmatprep.subr.bf16.mxu0 0
    %5754 = vmatpush1.bf16.msra.mxu0 0
    %5755 = vmatprep.subr.bf16.mxu0 0
    %5756 = vmatpush1.bf16.msra.mxu0 0
    %5757 = vmatprep.subr.bf16.mxu0 0
    %5758 = vmatpush1.bf16.msra.mxu0 0
    %5759 = vmatprep.subr.bf16.mxu0 0
    %5760 = vmatpush1.bf16.msra.mxu0 0
    %5761 = vmatprep.subr.bf16.mxu0 0
    %5762 = vmatpush1.bf16.msra.mxu0 0
    %5763 = vmatprep.subr.bf16.mxu0 0
    %5764 = vmatpush1.bf16.msra.mxu0 0
    %5765 = vmatprep.subr.bf16.mxu0 0
    %5766 = vmatpush1.bf16.msra.mxu0 0
    %5767 = vmatprep.subr.bf16.mxu0 0
    %5768 = vmatpush1.bf16.msra.mxu0 0
    %5769 = vmatprep.subr.bf16.mxu0 0
    %5770 = vmatpush1.bf16.msra.mxu0 0
    %5771 = vmatprep.subr.bf16.mxu0 0
    %5772 = vmatpush1.bf16.msra.mxu0 0
    %5773 = vmatprep.subr.bf16.mxu0 0
    %5774 = vmatpush1.bf16.msra.mxu0 0
    %5775 = vmatprep.mubr.bf16.mxu0 0
    %5776 = vmatmul.mubr.bf16.gmra.mrb[0].mxu0 %v4729
    %v5777 = vpop.f32.mrb[0].mxu0
    %v5778 = vadd.f32 0.0, %v5777
    %v5779 = vpop.f32.mrb[0].mxu0
    %v5780 = vadd.f32 0.0, %v5779
    %v5781 = vpop.f32.mrb[0].mxu0
    %v5782 = vpop.f32.mrb[0].mxu0
    %5783 = vdwg.mxu0
    %5784 = vmatprep.subr.bf16.mxu0 0
    %5785 = vmatpush1.bf16.msra.mxu0 %v5741
    %5786 = vmatprep.subr.bf16.mxu0 0
    %5787 = vmatpush1.bf16.msra.mxu0 0
    %5788 = vmatprep.subr.bf16.mxu0 0
    %5789 = vmatpush1.bf16.msra.mxu0 0
    %5790 = vmatprep.subr.bf16.mxu0 0
    %5791 = vmatpush1.bf16.msra.mxu0 0
    %5792 = vmatprep.subr.bf16.mxu0 0
    %5793 = vmatpush1.bf16.msra.mxu0 0
    %5794 = vmatprep.subr.bf16.mxu0 0
    %5795 = vmatpush1.bf16.msra.mxu0 0
    %5796 = vmatprep.subr.bf16.mxu0 0
    %5797 = vmatpush1.bf16.msra.mxu0 0
    %5798 = vmatprep.subr.bf16.mxu0 0
    %5799 = vmatpush1.bf16.msra.mxu0 0
    %5800 = vmatprep.subr.bf16.mxu0 0
    %5801 = vmatpush1.bf16.msra.mxu0 0
    %5802 = vmatprep.subr.bf16.mxu0 0
    %5803 = vmatpush1.bf16.msra.mxu0 0
    %5804 = vmatprep.subr.bf16.mxu0 0
    %5805 = vmatpush1.bf16.msra.mxu0 0
    %5806 = vmatprep.subr.bf16.mxu0 0
    %5807 = vmatpush1.bf16.msra.mxu0 0
    %5808 = vmatprep.subr.bf16.mxu0 0
    %5809 = vmatpush1.bf16.msra.mxu0 0
    %5810 = vmatprep.subr.bf16.mxu0 0
    %5811 = vmatpush1.bf16.msra.mxu0 0
    %5812 = vmatprep.subr.bf16.mxu0 0
    %5813 = vmatpush1.bf16.msra.mxu0 0
    %5814 = vmatprep.subr.bf16.mxu0 0
    %5815 = vmatpush1.bf16.msra.mxu0 0
    %5816 = vmatprep.mubr.bf16.mxu0 0
    %5817 = vmatmul.mubr.bf16.gmra.mrb[0].mxu0 %v4729
    %v5818 = vpop.f32.mrb[0].mxu0
    %v5819 = vadd.f32 0.0, %v5818
    %v5820 = vpop.f32.mrb[0].mxu0
    %v5821 = vpop.f32.mrb[0].mxu0
    %v5822 = vpop.f32.mrb[0].mxu0
    %5823 = vdwg.mxu0
    %v5824 = vadd.f32 %v5712, %v5778
    %v5825 = vadd.f32 %v5713, %v5780
    %v5826 = vadd.f32 %v5714, %v5819
    %v5827 = vld [vmem:[%s1123] sm:$0xff]
    %v5828 = vld [vmem:[%s1123 + $0x8] sm:$0xf]
    %v5830 = vcombine.high %v5827, %v5827
    %v5832 = vpack.c.bf16 %v5827, %v5827
    %v5833 = vpack.c.bf16 %v5830, %v5830
    %v5834 = vpack.c.bf16 %v5828, %v5828
    %5838 = vrot.lane.b32.xlu0 %v5832, 108
    %v5839 = vpop.permute.xlu0 %5838
    %5840 = vrot.lane.b32.xlu0 %v5833, 108
    %v5841 = vpop.permute.xlu0 %5840
    %5842 = vrot.lane.b32.xlu0 %v5834, 108
    %v5843 = vpop.permute.xlu0 %5842
    %v5844 = vsel %vm670, %v5839, %v5841
    %v5845 = vsel %vm670, %v5841, %v5843
    %v5847 = vsel %vm113, %v5844, 0
    %v5850 = vsel %vm113, %v5845, 0
    %v5853 = vsel %vm113, %v5843, 0
    %5855 = vmatprep.subr.bf16.mxu0 %v5850
    %5856 = vmatpush1.bf16.msra.mxu0 %v5847
    %5857 = vmatprep.subr.bf16.mxu0 0
    %5858 = vmatpush1.bf16.msra.mxu0 0
    %5859 = vmatprep.subr.bf16.mxu0 0
    %5860 = vmatpush1.bf16.msra.mxu0 0
    %5861 = vmatprep.subr.bf16.mxu0 0
    %5862 = vmatpush1.bf16.msra.mxu0 0
    %5863 = vmatprep.subr.bf16.mxu0 0
    %5864 = vmatpush1.bf16.msra.mxu0 0
    %5865 = vmatprep.subr.bf16.mxu0 0
    %5866 = vmatpush1.bf16.msra.mxu0 0
    %5867 = vmatprep.subr.bf16.mxu0 0
    %5868 = vmatpush1.bf16.msra.mxu0 0
    %5869 = vmatprep.subr.bf16.mxu0 0
    %5870 = vmatpush1.bf16.msra.mxu0 0
    %5871 = vmatprep.subr.bf16.mxu0 0
    %5872 = vmatpush1.bf16.msra.mxu0 0
    %5873 = vmatprep.subr.bf16.mxu0 0
    %5874 = vmatpush1.bf16.msra.mxu0 0
    %5875 = vmatprep.subr.bf16.mxu0 0
    %5876 = vmatpush1.bf16.msra.mxu0 0
    %5877 = vmatprep.subr.bf16.mxu0 0
    %5878 = vmatpush1.bf16.msra.mxu0 0
    %5879 = vmatprep.subr.bf16.mxu0 0
    %5880 = vmatpush1.bf16.msra.mxu0 0
    %5881 = vmatprep.subr.bf16.mxu0 0
    %5882 = vmatpush1.bf16.msra.mxu0 0
    %5883 = vmatprep.subr.bf16.mxu0 0
    %5884 = vmatpush1.bf16.msra.mxu0 0
    %5885 = vmatprep.subr.bf16.mxu0 0
    %5886 = vmatpush1.bf16.msra.mxu0 0
    %5887 = vmatprep.mubr.bf16.mxu0 0
    %5888 = vmatmul.mubr.bf16.gmra.mrb[0].mxu0 %v4846
    %v5889 = vpop.f32.mrb[0].mxu0
    %v5890 = vadd.f32 0.0, %v5889
    %v5891 = vpop.f32.mrb[0].mxu0
    %v5892 = vadd.f32 0.0, %v5891
    %v5893 = vpop.f32.mrb[0].mxu0
    %v5894 = vpop.f32.mrb[0].mxu0
    %5895 = vdwg.mxu0
    %5896 = vmatprep.subr.bf16.mxu0 0
    %5897 = vmatpush1.bf16.msra.mxu0 %v5853
    %5898 = vmatprep.subr.bf16.mxu0 0
    %5899 = vmatpush1.bf16.msra.mxu0 0
    %5900 = vmatprep.subr.bf16.mxu0 0
    %5901 = vmatpush1.bf16.msra.mxu0 0
    %5902 = vmatprep.subr.bf16.mxu0 0
    %5903 = vmatpush1.bf16.msra.mxu0 0
    %5904 = vmatprep.subr.bf16.mxu0 0
    %5905 = vmatpush1.bf16.msra.mxu0 0
    %5906 = vmatprep.subr.bf16.mxu0 0
    %5907 = vmatpush1.bf16.msra.mxu0 0
    %5908 = vmatprep.subr.bf16.mxu0 0
    %5909 = vmatpush1.bf16.msra.mxu0 0
    %5910 = vmatprep.subr.bf16.mxu0 0
    %5911 = vmatpush1.bf16.msra.mxu0 0
    %5912 = vmatprep.subr.bf16.mxu0 0
    %5913 = vmatpush1.bf16.msra.mxu0 0
    %5914 = vmatprep.subr.bf16.mxu0 0
    %5915 = vmatpush1.bf16.msra.mxu0 0
    %5916 = vmatprep.subr.bf16.mxu0 0
    %5917 = vmatpush1.bf16.msra.mxu0 0
    %5918 = vmatprep.subr.bf16.mxu0 0
    %5919 = vmatpush1.bf16.msra.mxu0 0
    %5920 = vmatprep.subr.bf16.mxu0 0
    %5921 = vmatpush1.bf16.msra.mxu0 0
    %5922 = vmatprep.subr.bf16.mxu0 0
    %5923 = vmatpush1.bf16.msra.mxu0 0
    %5924 = vmatprep.subr.bf16.mxu0 0
    %5925 = vmatpush1.bf16.msra.mxu0 0
    %5926 = vmatprep.subr.bf16.mxu0 0
    %5927 = vmatpush1.bf16.msra.mxu0 0
    %5928 = vmatprep.mubr.bf16.mxu0 0
    %5929 = vmatmul.mubr.bf16.gmra.mrb[0].mxu0 %v4846
    %v5930 = vpop.f32.mrb[0].mxu0
    %v5931 = vadd.f32 0.0, %v5930
    %v5932 = vpop.f32.mrb[0].mxu0
    %v5933 = vpop.f32.mrb[0].mxu0
    %v5934 = vpop.f32.mrb[0].mxu0
    %5935 = vdwg.mxu0
    %v5936 = vadd.f32 %v5824, %v5890
    %v5937 = vadd.f32 %v5825, %v5892
    %v5938 = vadd.f32 %v5826, %v5931
    %v5939 = vld [vmem:[%s1123] sm:$0xff]
    %v5940 = vld [vmem:[%s1123 + $0x8] sm:$0xf]
    %v5942 = vcombine.high %v5939, %v5939
    %v5944 = vpack.c.bf16 %v5939, %v5939
    %v5945 = vpack.c.bf16 %v5942, %v5942
    %v5946 = vpack.c.bf16 %v5940, %v5940
    %5950 = vrot.lane.b32.xlu0 %v5944, 92
    %v5951 = vpop.permute.xlu0 %5950
    %5952 = vrot.lane.b32.xlu0 %v5945, 92
    %v5953 = vpop.permute.xlu0 %5952
    %5954 = vrot.lane.b32.xlu0 %v5946, 92
    %v5955 = vpop.permute.xlu0 %5954
    %v5956 = vsel %vm788, %v5951, %v5953
    %v5957 = vsel %vm788, %v5953, %v5955
    %v5959 = vsel %vm113, %v5956, 0
    %v5962 = vsel %vm113, %v5957, 0
    %v5965 = vsel %vm113, %v5955, 0
    %5967 = vmatprep.subr.bf16.mxu0 %v5962
    %5968 = vmatpush1.bf16.msra.mxu0 %v5959
    %5969 = vmatprep.subr.bf16.mxu0 0
    %5970 = vmatpush1.bf16.msra.mxu0 0
    %5971 = vmatprep.subr.bf16.mxu0 0
    %5972 = vmatpush1.bf16.msra.mxu0 0
    %5973 = vmatprep.subr.bf16.mxu0 0
    %5974 = vmatpush1.bf16.msra.mxu0 0
    %5975 = vmatprep.subr.bf16.mxu0 0
    %5976 = vmatpush1.bf16.msra.mxu0 0
    %5977 = vmatprep.subr.bf16.mxu0 0
    %5978 = vmatpush1.bf16.msra.mxu0 0
    %5979 = vmatprep.subr.bf16.mxu0 0
    %5980 = vmatpush1.bf16.msra.mxu0 0
    %5981 = vmatprep.subr.bf16.mxu0 0
    %5982 = vmatpush1.bf16.msra.mxu0 0
    %5983 = vmatprep.subr.bf16.mxu0 0
    %5984 = vmatpush1.bf16.msra.mxu0 0
    %5985 = vmatprep.subr.bf16.mxu0 0
    %5986 = vmatpush1.bf16.msra.mxu0 0
    %5987 = vmatprep.subr.bf16.mxu0 0
    %5988 = vmatpush1.bf16.msra.mxu0 0
    %5989 = vmatprep.subr.bf16.mxu0 0
    %5990 = vmatpush1.bf16.msra.mxu0 0
    %5991 = vmatprep.subr.bf16.mxu0 0
    %5992 = vmatpush1.bf16.msra.mxu0 0
    %5993 = vmatprep.subr.bf16.mxu0 0
    %5994 = vmatpush1.bf16.msra.mxu0 0
    %5995 = vmatprep.subr.bf16.mxu0 0
    %5996 = vmatpush1.bf16.msra.mxu0 0
    %5997 = vmatprep.subr.bf16.mxu0 0
    %5998 = vmatpush1.bf16.msra.mxu0 0
    %5999 = vmatprep.mubr.bf16.mxu0 0
    %6000 = vmatmul.mubr.bf16.gmra.mrb[0].mxu0 %v4963
    %v6001 = vpop.f32.mrb[0].mxu0
    %v6002 = vadd.f32 0.0, %v6001
    %v6003 = vpop.f32.mrb[0].mxu0
    %v6004 = vadd.f32 0.0, %v6003
    %v6005 = vpop.f32.mrb[0].mxu0
    %v6006 = vpop.f32.mrb[0].mxu0
    %6007 = vdwg.mxu0
    %6008 = vmatprep.subr.bf16.mxu0 0
    %6009 = vmatpush1.bf16.msra.mxu0 %v5965
    %6010 = vmatprep.subr.bf16.mxu0 0
    %6011 = vmatpush1.bf16.msra.mxu0 0
    %6012 = vmatprep.subr.bf16.mxu0 0
    %6013 = vmatpush1.bf16.msra.mxu0 0
    %6014 = vmatprep.subr.bf16.mxu0 0
    %6015 = vmatpush1.bf16.msra.mxu0 0
    %6016 = vmatprep.subr.bf16.mxu0 0
    %6017 = vmatpush1.bf16.msra.mxu0 0
    %6018 = vmatprep.subr.bf16.mxu0 0
    %6019 = vmatpush1.bf16.msra.mxu0 0
    %6020 = vmatprep.subr.bf16.mxu0 0
    %6021 = vmatpush1.bf16.msra.mxu0 0
    %6022 = vmatprep.subr.bf16.mxu0 0
    %6023 = vmatpush1.bf16.msra.mxu0 0
    %6024 = vmatprep.subr.bf16.mxu0 0
    %6025 = vmatpush1.bf16.msra.mxu0 0
    %6026 = vmatprep.subr.bf16.mxu0 0
    %6027 = vmatpush1.bf16.msra.mxu0 0
    %6028 = vmatprep.subr.bf16.mxu0 0
    %6029 = vmatpush1.bf16.msra.mxu0 0
    %6030 = vmatprep.subr.bf16.mxu0 0
    %6031 = vmatpush1.bf16.msra.mxu0 0
    %6032 = vmatprep.subr.bf16.mxu0 0
    %6033 = vmatpush1.bf16.msra.mxu0 0
    %6034 = vmatprep.subr.bf16.mxu0 0
    %6035 = vmatpush1.bf16.msra.mxu0 0
    %6036 = vmatprep.subr.bf16.mxu0 0
    %6037 = vmatpush1.bf16.msra.mxu0 0
    %6038 = vmatprep.subr.bf16.mxu0 0
    %6039 = vmatpush1.bf16.msra.mxu0 0
    %6040 = vmatprep.mubr.bf16.mxu0 0
    %6041 = vmatmul.mubr.bf16.gmra.mrb[0].mxu0 %v4963
    %v6042 = vpop.f32.mrb[0].mxu0
    %v6043 = vadd.f32 0.0, %v6042
    %v6044 = vpop.f32.mrb[0].mxu0
    %v6045 = vpop.f32.mrb[0].mxu0
    %v6046 = vpop.f32.mrb[0].mxu0
    %6047 = vdwg.mxu0
    %v6048 = vadd.f32 %v5936, %v6002
    %v6049 = vadd.f32 %v5937, %v6004
    %v6050 = vadd.f32 %v5938, %v6043
    %v6051 = vld [vmem:[%s1123] sm:$0xff]
    %v6052 = vld [vmem:[%s1123 + $0x8] sm:$0xf]
    %v6054 = vcombine.high %v6051, %v6051
    %v6056 = vpack.c.bf16 %v6051, %v6051
    %v6057 = vpack.c.bf16 %v6054, %v6054
    %v6058 = vpack.c.bf16 %v6052, %v6052
    %6062 = vrot.lane.b32.xlu0 %v6056, 91
    %v6063 = vpop.permute.xlu0 %6062
    %6064 = vrot.lane.b32.xlu0 %v6057, 91
    %v6065 = vpop.permute.xlu0 %6064
    %6066 = vrot.lane.b32.xlu0 %v6058, 91
    %v6067 = vpop.permute.xlu0 %6066
    %v6068 = vsel %vm906, %v6063, %v6065
    %v6069 = vsel %vm906, %v6065, %v6067
    %v6071 = vsel %vm113, %v6068, 0
    %v6074 = vsel %vm113, %v6069, 0
    %v6077 = vsel %vm113, %v6067, 0
    %6079 = vmatprep.subr.bf16.mxu0 %v6074
    %6080 = vmatpush1.bf16.msra.mxu0 %v6071
    %6081 = vmatprep.subr.bf16.mxu0 0
    %6082 = vmatpush1.bf16.msra.mxu0 0
    %6083 = vmatprep.subr.bf16.mxu0 0
    %6084 = vmatpush1.bf16.msra.mxu0 0
    %6085 = vmatprep.subr.bf16.mxu0 0
    %6086 = vmatpush1.bf16.msra.mxu0 0
    %6087 = vmatprep.subr.bf16.mxu0 0
    %6088 = vmatpush1.bf16.msra.mxu0 0
    %6089 = vmatprep.subr.bf16.mxu0 0
    %6090 = vmatpush1.bf16.msra.mxu0 0
    %6091 = vmatprep.subr.bf16.mxu0 0
    %6092 = vmatpush1.bf16.msra.mxu0 0
    %6093 = vmatprep.subr.bf16.mxu0 0
    %6094 = vmatpush1.bf16.msra.mxu0 0
    %6095 = vmatprep.subr.bf16.mxu0 0
    %6096 = vmatpush1.bf16.msra.mxu0 0
    %6097 = vmatprep.subr.bf16.mxu0 0
    %6098 = vmatpush1.bf16.msra.mxu0 0
    %6099 = vmatprep.subr.bf16.mxu0 0
    %6100 = vmatpush1.bf16.msra.mxu0 0
    %6101 = vmatprep.subr.bf16.mxu0 0
    %6102 = vmatpush1.bf16.msra.mxu0 0
    %6103 = vmatprep.subr.bf16.mxu0 0
    %6104 = vmatpush1.bf16.msra.mxu0 0
    %6105 = vmatprep.subr.bf16.mxu0 0
    %6106 = vmatpush1.bf16.msra.mxu0 0
    %6107 = vmatprep.subr.bf16.mxu0 0
    %6108 = vmatpush1.bf16.msra.mxu0 0
    %6109 = vmatprep.subr.bf16.mxu0 0
    %6110 = vmatpush1.bf16.msra.mxu0 0
    %6111 = vmatprep.mubr.bf16.mxu0 0
    %6112 = vmatmul.mubr.bf16.gmra.mrb[0].mxu0 %v5080
    %v6113 = vpop.f32.mrb[0].mxu0
    %v6114 = vadd.f32 0.0, %v6113
    %v6115 = vpop.f32.mrb[0].mxu0
    %v6116 = vadd.f32 0.0, %v6115
    %v6117 = vpop.f32.mrb[0].mxu0
    %v6118 = vpop.f32.mrb[0].mxu0
    %6119 = vdwg.mxu0
    %6120 = vmatprep.subr.bf16.mxu0 0
    %6121 = vmatpush1.bf16.msra.mxu0 %v6077
    %6122 = vmatprep.subr.bf16.mxu0 0
    %6123 = vmatpush1.bf16.msra.mxu0 0
    %6124 = vmatprep.subr.bf16.mxu0 0
    %6125 = vmatpush1.bf16.msra.mxu0 0
    %6126 = vmatprep.subr.bf16.mxu0 0
    %6127 = vmatpush1.bf16.msra.mxu0 0
    %6128 = vmatprep.subr.bf16.mxu0 0
    %6129 = vmatpush1.bf16.msra.mxu0 0
    %6130 = vmatprep.subr.bf16.mxu0 0
    %6131 = vmatpush1.bf16.msra.mxu0 0
    %6132 = vmatprep.subr.bf16.mxu0 0
    %6133 = vmatpush1.bf16.msra.mxu0 0
    %6134 = vmatprep.subr.bf16.mxu0 0
    %6135 = vmatpush1.bf16.msra.mxu0 0
    %6136 = vmatprep.subr.bf16.mxu0 0
    %6137 = vmatpush1.bf16.msra.mxu0 0
    %6138 = vmatprep.subr.bf16.mxu0 0
    %6139 = vmatpush1.bf16.msra.mxu0 0
    %6140 = vmatprep.subr.bf16.mxu0 0
    %6141 = vmatpush1.bf16.msra.mxu0 0
    %6142 = vmatprep.subr.bf16.mxu0 0
    %6143 = vmatpush1.bf16.msra.mxu0 0
    %6144 = vmatprep.subr.bf16.mxu0 0
    %6145 = vmatpush1.bf16.msra.mxu0 0
    %6146 = vmatprep.subr.bf16.mxu0 0
    %6147 = vmatpush1.bf16.msra.mxu0 0
    %6148 = vmatprep.subr.bf16.mxu0 0
    %6149 = vmatpush1.bf16.msra.mxu0 0
    %6150 = vmatprep.subr.bf16.mxu0 0
    %6151 = vmatpush1.bf16.msra.mxu0 0
    %6152 = vmatprep.mubr.bf16.mxu0 0
    %6153 = vmatmul.mubr.bf16.gmra.mrb[0].mxu0 %v5080
    %v6154 = vpop.f32.mrb[0].mxu0
    %v6155 = vadd.f32 0.0, %v6154
    %v6156 = vpop.f32.mrb[0].mxu0
    %v6157 = vpop.f32.mrb[0].mxu0
    %v6158 = vpop.f32.mrb[0].mxu0
    %6159 = vdwg.mxu0
    %v6160 = vadd.f32 %v6048, %v6114
    %v6161 = vadd.f32 %v6049, %v6116
    %v6162 = vadd.f32 %v6050, %v6155
    %v6163 = vld [vmem:[%s1123] sm:$0xff]
    %v6164 = vld [vmem:[%s1123 + $0x8] sm:$0xf]
    %v6166 = vcombine.high %v6163, %v6163
    %v6168 = vpack.c.bf16 %v6163, %v6163
    %v6169 = vpack.c.bf16 %v6166, %v6166
    %v6170 = vpack.c.bf16 %v6164, %v6164
    %6174 = vrot.lane.b32.xlu0 %v6168, 90
    %v6175 = vpop.permute.xlu0 %6174
    %6176 = vrot.lane.b32.xlu0 %v6169, 90
    %v6177 = vpop.permute.xlu0 %6176
    %6178 = vrot.lane.b32.xlu0 %v6170, 90
    %v6179 = vpop.permute.xlu0 %6178
    %v6180 = vsel %vm1024, %v6175, %v6177
    %v6181 = vsel %vm1024, %v6177, %v6179
    %v6183 = vsel %vm113, %v6180, 0
    %v6186 = vsel %vm113, %v6181, 0
    %v6189 = vsel %vm113, %v6179, 0
    %6191 = vmatprep.subr.bf16.mxu0 %v6186
    %6192 = vmatpush1.bf16.msra.mxu0 %v6183
    %6193 = vmatprep.subr.bf16.mxu0 0
    %6194 = vmatpush1.bf16.msra.mxu0 0
    %6195 = vmatprep.subr.bf16.mxu0 0
    %6196 = vmatpush1.bf16.msra.mxu0 0
    %6197 = vmatprep.subr.bf16.mxu0 0
    %6198 = vmatpush1.bf16.msra.mxu0 0
    %6199 = vmatprep.subr.bf16.mxu0 0
    %6200 = vmatpush1.bf16.msra.mxu0 0
    %6201 = vmatprep.subr.bf16.mxu0 0
    %6202 = vmatpush1.bf16.msra.mxu0 0
    %6203 = vmatprep.subr.bf16.mxu0 0
    %6204 = vmatpush1.bf16.msra.mxu0 0
    %6205 = vmatprep.subr.bf16.mxu0 0
    %6206 = vmatpush1.bf16.msra.mxu0 0
    %6207 = vmatprep.subr.bf16.mxu0 0
    %6208 = vmatpush1.bf16.msra.mxu0 0
    %6209 = vmatprep.subr.bf16.mxu0 0
    %6210 = vmatpush1.bf16.msra.mxu0 0
    %6211 = vmatprep.subr.bf16.mxu0 0
    %6212 = vmatpush1.bf16.msra.mxu0 0
    %6213 = vmatprep.subr.bf16.mxu0 0
    %6214 = vmatpush1.bf16.msra.mxu0 0
    %6215 = vmatprep.subr.bf16.mxu0 0
    %6216 = vmatpush1.bf16.msra.mxu0 0
    %6217 = vmatprep.subr.bf16.mxu0 0
    %6218 = vmatpush1.bf16.msra.mxu0 0
    %6219 = vmatprep.subr.bf16.mxu0 0
    %6220 = vmatpush1.bf16.msra.mxu0 0
    %6221 = vmatprep.subr.bf16.mxu0 0
    %6222 = vmatpush1.bf16.msra.mxu0 0
    %6223 = vmatprep.mubr.bf16.mxu0 0
    %6224 = vmatmul.mubr.bf16.gmra.mrb[0].mxu0 %v5197
    %v6225 = vpop.f32.mrb[0].mxu0
    %v6226 = vadd.f32 0.0, %v6225
    %v6227 = vpop.f32.mrb[0].mxu0
    %v6228 = vadd.f32 0.0, %v6227
    %v6229 = vpop.f32.mrb[0].mxu0
    %v6230 = vpop.f32.mrb[0].mxu0
    %6231 = vdwg.mxu0
    %6232 = vmatprep.subr.bf16.mxu0 0
    %6233 = vmatpush1.bf16.msra.mxu0 %v6189
    %6234 = vmatprep.subr.bf16.mxu0 0
    %6235 = vmatpush1.bf16.msra.mxu0 0
    %6236 = vmatprep.subr.bf16.mxu0 0
    %6237 = vmatpush1.bf16.msra.mxu0 0
    %6238 = vmatprep.subr.bf16.mxu0 0
    %6239 = vmatpush1.bf16.msra.mxu0 0
    %6240 = vmatprep.subr.bf16.mxu0 0
    %6241 = vmatpush1.bf16.msra.mxu0 0
    %6242 = vmatprep.subr.bf16.mxu0 0
    %6243 = vmatpush1.bf16.msra.mxu0 0
    %6244 = vmatprep.subr.bf16.mxu0 0
    %6245 = vmatpush1.bf16.msra.mxu0 0
    %6246 = vmatprep.subr.bf16.mxu0 0
    %6247 = vmatpush1.bf16.msra.mxu0 0
    %6248 = vmatprep.subr.bf16.mxu0 0
    %6249 = vmatpush1.bf16.msra.mxu0 0
    %6250 = vmatprep.subr.bf16.mxu0 0
    %6251 = vmatpush1.bf16.msra.mxu0 0
    %6252 = vmatprep.subr.bf16.mxu0 0
    %6253 = vmatpush1.bf16.msra.mxu0 0
    %6254 = vmatprep.subr.bf16.mxu0 0
    %6255 = vmatpush1.bf16.msra.mxu0 0
    %6256 = vmatprep.subr.bf16.mxu0 0
    %6257 = vmatpush1.bf16.msra.mxu0 0
    %6258 = vmatprep.subr.bf16.mxu0 0
    %6259 = vmatpush1.bf16.msra.mxu0 0
    %6260 = vmatprep.subr.bf16.mxu0 0
    %6261 = vmatpush1.bf16.msra.mxu0 0
    %6262 = vmatprep.subr.bf16.mxu0 0
    %6263 = vmatpush1.bf16.msra.mxu0 0
    %6264 = vmatprep.mubr.bf16.mxu0 0
    %6265 = vmatmul.mubr.bf16.gmra.mrb[0].mxu0 %v5197
    %v6266 = vpop.f32.mrb[0].mxu0
    %v6267 = vadd.f32 0.0, %v6266
    %v6268 = vpop.f32.mrb[0].mxu0
    %v6269 = vpop.f32.mrb[0].mxu0
    %v6270 = vpop.f32.mrb[0].mxu0
    %6271 = vdwg.mxu0
    %v6272 = vadd.f32 %v6160, %v6226
    %v6273 = vadd.f32 %v6161, %v6228
    %v6274 = vadd.f32 %v6162, %v6267
    %s6275 = scalar_lea.vmem %s2, 8
    %v6276 = vld [vmem:[%s6275] sm:$0xf]
    %6278 = vset.pattern.permute.xlu0 0
    %6279 = vperm.xlu0 %6278, %v6276
    %v6280 = vpop.permute.xlu0 %6279
    %v6282 = vmul.f32 %v5289, %v6280
    %v6283 = vmul.f32 %v5290, %v6280
    %v6284 = vmul.f32 %v5291, %v6280
    %v6285 = vmul.f32 %v6272, %v6280
    %v6286 = vmul.f32 %v6273, %v6280
    %v6287 = vmul.f32 %v6274, %v6280
    %s6288 = scalar_lea.vmem %s3, 8
    %v6289 = vld [vmem:[%s6288] sm:$0xf]
    %6291 = vset.pattern.permute.xlu0 0
    %6292 = vperm.xlu0 %6291, %v6289
    %v6293 = vpop.permute.xlu0 %6292
    %v6295 = vadd.f32 %v6282, %v6293
    %v6296 = vadd.f32 %v6283, %v6293
    %v6297 = vadd.f32 %v6284, %v6293
    %v6298 = vadd.f32 %v6285, %v6293
    %v6299 = vadd.f32 %v6286, %v6293
    %v6300 = vadd.f32 %v6287, %v6293
    %v6301 = vmax.f32 %v6295, 0.0
    %v6302 = vmax.f32 %v6296, 0.0
    %v6303 = vmax.f32 %v6297, 0.0
    %v6304 = vmax.f32 %v6298, 0.0
    %v6305 = vmax.f32 %v6299, 0.0
    %v6306 = vmax.f32 %v6300, 0.0
    %v6307 = vmul.f32 %v6301, %v37
    %v6308 = vmul.f32 %v6302, %v41
    %v6309 = vmul.f32 %v6303, %v45
    %v6310 = vmul.f32 %v6304, %v37
    %v6311 = vmul.f32 %v6305, %v41
    %v6312 = vmul.f32 %v6306, %v45
    %v6319 = vcombine.low %v6307, %v6308
    %v6320 = vcombine.low %v6310, %v6311
    %6321 = vrot.lane.b32.xlu0 %v6319, 19
    %v6322 = vpop.permute.xlu0 %6321
    %6323 = vrot.lane.b32.xlu0 %v6309, 19
    %v6324 = vpop.permute.xlu0 %6323
    %6325 = vrot.lane.b32.xlu0 %v6320, 19
    %v6326 = vpop.permute.xlu0 %6325
    %6327 = vrot.lane.b32.xlu0 %v6312, 19
    %v6328 = vpop.permute.xlu0 %6327
    %v6329 = vrot.slane %v6322, 4
    %v6330 = vrot.slane %v6326, 4
    %v6331 = vsel %vm69, %v6329, %v6322
    %v6332 = vsel %vm69, %v6329, %v6324
    %v6333 = vsel %vm69, %v6330, %v6326
    %v6334 = vsel %vm69, %v6330, %v6328
    %6339 = vst.msk [vmem:[#allocation2] sm:$0xff] %vm80, %v6331
    %6340 = vst.msk [vmem:[#allocation2 + $0x8] sm:$0xf] %vm82, %v6332
    %6341 = vst.msk [vmem:[#allocation2 + $0xc] sm:$0xff] %vm80, %v6333
    %6342 = vst.msk [vmem:[#allocation2 + $0x14] sm:$0xf] %vm82, %v6334
    %v6343 = vld [vmem:[#allocation2] sm:$0xff]
    %v6344 = vld [vmem:[#allocation2 + $0x8] sm:$0xf]
    %v6346 = vcombine.high %v6343, %v6343
    %v6348 = vpack.c.bf16 %v6343, %v6343
    %v6349 = vpack.c.bf16 %v6346, %v6346
    %v6350 = vpack.c.bf16 %v6344, %v6344
    %s6351 = scalar_lea.vmem %s1, 54
    %v6352 = vld [vmem:[%s6351] sm:$0x3]
    %s6353 = scalar_lea.vmem %s1, 56
    %v6354 = vld [vmem:[%s6353] sm:$0x3]
    %6358 = vrot.lane.b32.xlu0 %v6348, 127
    %v6359 = vpop.permute.xlu0 %6358
    %6360 = vrot.lane.b32.xlu0 %v6349, 127
    %v6361 = vpop.permute.xlu0 %6360
    %6362 = vrot.lane.b32.xlu0 %v6350, 127
    %v6363 = vpop.permute.xlu0 %6362
    %v6364 = vsel %vm106, %v6359, %v6361
    %v6365 = vsel %vm106, %v6361, %v6363
    %v6367 = vsel %vm109, %v6354, 0
    %v6370 = vsel %vm113, %v6364, 0
    %v6373 = vsel %vm113, %v6365, 0
    %v6376 = vsel %vm113, %v6363, 0
    %6378 = vmatprep.subr.bf16.mxu0 %v6373
    %6379 = vmatpush1.bf16.msra.mxu0 %v6370
    %6380 = vmatprep.subr.bf16.mxu0 0
    %6381 = vmatpush1.bf16.msra.mxu0 0
    %6382 = vmatprep.subr.bf16.mxu0 0
    %6383 = vmatpush1.bf16.msra.mxu0 0
    %6384 = vmatprep.subr.bf16.mxu0 0
    %6385 = vmatpush1.bf16.msra.mxu0 0
    %6386 = vmatprep.subr.bf16.mxu0 0
    %6387 = vmatpush1.bf16.msra.mxu0 0
    %6388 = vmatprep.subr.bf16.mxu0 0
    %6389 = vmatpush1.bf16.msra.mxu0 0
    %6390 = vmatprep.subr.bf16.mxu0 0
    %6391 = vmatpush1.bf16.msra.mxu0 0
    %6392 = vmatprep.subr.bf16.mxu0 0
    %6393 = vmatpush1.bf16.msra.mxu0 0
    %6394 = vmatprep.subr.bf16.mxu0 0
    %6395 = vmatpush1.bf16.msra.mxu0 0
    %6396 = vmatprep.subr.bf16.mxu0 0
    %6397 = vmatpush1.bf16.msra.mxu0 0
    %6398 = vmatprep.subr.bf16.mxu0 0
    %6399 = vmatpush1.bf16.msra.mxu0 0
    %6400 = vmatprep.subr.bf16.mxu0 0
    %6401 = vmatpush1.bf16.msra.mxu0 0
    %6402 = vmatprep.subr.bf16.mxu0 0
    %6403 = vmatpush1.bf16.msra.mxu0 0
    %6404 = vmatprep.subr.bf16.mxu0 0
    %6405 = vmatpush1.bf16.msra.mxu0 0
    %6406 = vmatprep.subr.bf16.mxu0 0
    %6407 = vmatpush1.bf16.msra.mxu0 0
    %6408 = vmatprep.subr.bf16.mxu0 0
    %6409 = vmatpush1.bf16.msra.mxu0 0
    %6410 = vmatprep.mubr.bf16.mxu0 0
    %6411 = vmatmul.mubr.bf16.gmra.mrb[0].mxu0 %v6367
    %v6412 = vpop.f32.mrb[0].mxu0
    %v6413 = vadd.f32 0.0, %v6412
    %v6414 = vpop.f32.mrb[0].mxu0
    %v6415 = vadd.f32 0.0, %v6414
    %v6416 = vpop.f32.mrb[0].mxu0
    %v6417 = vpop.f32.mrb[0].mxu0
    %6418 = vdwg.mxu0
    %6419 = vmatprep.subr.bf16.mxu0 0
    %6420 = vmatpush1.bf16.msra.mxu0 %v6376
    %6421 = vmatprep.subr.bf16.mxu0 0
    %6422 = vmatpush1.bf16.msra.mxu0 0
    %6423 = vmatprep.subr.bf16.mxu0 0
    %6424 = vmatpush1.bf16.msra.mxu0 0
    %6425 = vmatprep.subr.bf16.mxu0 0
    %6426 = vmatpush1.bf16.msra.mxu0 0
    %6427 = vmatprep.subr.bf16.mxu0 0
    %6428 = vmatpush1.bf16.msra.mxu0 0
    %6429 = vmatprep.subr.bf16.mxu0 0
    %6430 = vmatpush1.bf16.msra.mxu0 0
    %6431 = vmatprep.subr.bf16.mxu0 0
    %6432 = vmatpush1.bf16.msra.mxu0 0
    %6433 = vmatprep.subr.bf16.mxu0 0
    %6434 = vmatpush1.bf16.msra.mxu0 0
    %6435 = vmatprep.subr.bf16.mxu0 0
    %6436 = vmatpush1.bf16.msra.mxu0 0
    %6437 = vmatprep.subr.bf16.mxu0 0
    %6438 = vmatpush1.bf16.msra.mxu0 0
    %6439 = vmatprep.subr.bf16.mxu0 0
    %6440 = vmatpush1.bf16.msra.mxu0 0
    %6441 = vmatprep.subr.bf16.mxu0 0
    %6442 = vmatpush1.bf16.msra.mxu0 0
    %6443 = vmatprep.subr.bf16.mxu0 0
    %6444 = vmatpush1.bf16.msra.mxu0 0
    %6445 = vmatprep.subr.bf16.mxu0 0
    %6446 = vmatpush1.bf16.msra.mxu0 0
    %6447 = vmatprep.subr.bf16.mxu0 0
    %6448 = vmatpush1.bf16.msra.mxu0 0
    %6449 = vmatprep.subr.bf16.mxu0 0
    %6450 = vmatpush1.bf16.msra.mxu0 0
    %6451 = vmatprep.mubr.bf16.mxu0 0
    %6452 = vmatmul.mubr.bf16.gmra.mrb[0].mxu0 %v6367
    %v6453 = vpop.f32.mrb[0].mxu0
    %v6454 = vadd.f32 0.0, %v6453
    %v6455 = vpop.f32.mrb[0].mxu0
    %v6456 = vpop.f32.mrb[0].mxu0
    %v6457 = vpop.f32.mrb[0].mxu0
    %6458 = vdwg.mxu0
    %v6460 = vsel %vm109, %v6352, 0
    %v6463 = vsel %vm113, %v6348, 0
    %v6466 = vsel %vm113, %v6349, 0
    %v6469 = vsel %vm113, %v6350, 0
    %6471 = vmatprep.subr.bf16.mxu0 %v6466
    %6472 = vmatpush1.bf16.msra.mxu0 %v6463
    %6473 = vmatprep.subr.bf16.mxu0 0
    %6474 = vmatpush1.bf16.msra.mxu0 0
    %6475 = vmatprep.subr.bf16.mxu0 0
    %6476 = vmatpush1.bf16.msra.mxu0 0
    %6477 = vmatprep.subr.bf16.mxu0 0
    %6478 = vmatpush1.bf16.msra.mxu0 0
    %6479 = vmatprep.subr.bf16.mxu0 0
    %6480 = vmatpush1.bf16.msra.mxu0 0
    %6481 = vmatprep.subr.bf16.mxu0 0
    %6482 = vmatpush1.bf16.msra.mxu0 0
    %6483 = vmatprep.subr.bf16.mxu0 0
    %6484 = vmatpush1.bf16.msra.mxu0 0
    %6485 = vmatprep.subr.bf16.mxu0 0
    %6486 = vmatpush1.bf16.msra.mxu0 0
    %6487 = vmatprep.subr.bf16.mxu0 0
    %6488 = vmatpush1.bf16.msra.mxu0 0
    %6489 = vmatprep.subr.bf16.mxu0 0
    %6490 = vmatpush1.bf16.msra.mxu0 0
    %6491 = vmatprep.subr.bf16.mxu0 0
    %6492 = vmatpush1.bf16.msra.mxu0 0
    %6493 = vmatprep.subr.bf16.mxu0 0
    %6494 = vmatpush1.bf16.msra.mxu0 0
    %6495 = vmatprep.subr.bf16.mxu0 0
    %6496 = vmatpush1.bf16.msra.mxu0 0
    %6497 = vmatprep.subr.bf16.mxu0 0
    %6498 = vmatpush1.bf16.msra.mxu0 0
    %6499 = vmatprep.subr.bf16.mxu0 0
    %6500 = vmatpush1.bf16.msra.mxu0 0
    %6501 = vmatprep.subr.bf16.mxu0 0
    %6502 = vmatpush1.bf16.msra.mxu0 0
    %6503 = vmatprep.mubr.bf16.mxu0 0
    %6504 = vmatmul.mubr.bf16.gmra.mrb[0].mxu0 %v6460
    %v6505 = vpop.f32.mrb[0].mxu0
    %v6506 = vadd.f32 %v6413, %v6505
    %v6507 = vpop.f32.mrb[0].mxu0
    %v6508 = vadd.f32 %v6415, %v6507
    %v6509 = vpop.f32.mrb[0].mxu0
    %v6510 = vpop.f32.mrb[0].mxu0
    %6511 = vdwg.mxu0
    %6512 = vmatprep.subr.bf16.mxu0 0
    %6513 = vmatpush1.bf16.msra.mxu0 %v6469
    %6514 = vmatprep.subr.bf16.mxu0 0
    %6515 = vmatpush1.bf16.msra.mxu0 0
    %6516 = vmatprep.subr.bf16.mxu0 0
    %6517 = vmatpush1.bf16.msra.mxu0 0
    %6518 = vmatprep.subr.bf16.mxu0 0
    %6519 = vmatpush1.bf16.msra.mxu0 0
    %6520 = vmatprep.subr.bf16.mxu0 0
    %6521 = vmatpush1.bf16.msra.mxu0 0
    %6522 = vmatprep.subr.bf16.mxu0 0
    %6523 = vmatpush1.bf16.msra.mxu0 0
    %6524 = vmatprep.subr.bf16.mxu0 0
    %6525 = vmatpush1.bf16.msra.mxu0 0
    %6526 = vmatprep.subr.bf16.mxu0 0
    %6527 = vmatpush1.bf16.msra.mxu0 0
    %6528 = vmatprep.subr.bf16.mxu0 0
    %6529 = vmatpush1.bf16.msra.mxu0 0
    %6530 = vmatprep.subr.bf16.mxu0 0
    %6531 = vmatpush1.bf16.msra.mxu0 0
    %6532 = vmatprep.subr.bf16.mxu0 0
    %6533 = vmatpush1.bf16.msra.mxu0 0
    %6534 = vmatprep.subr.bf16.mxu0 0
    %6535 = vmatpush1.bf16.msra.mxu0 0
    %6536 = vmatprep.subr.bf16.mxu0 0
    %6537 = vmatpush1.bf16.msra.mxu0 0
    %6538 = vmatprep.subr.bf16.mxu0 0
    %6539 = vmatpush1.bf16.msra.mxu0 0
    %6540 = vmatprep.subr.bf16.mxu0 0
    %6541 = vmatpush1.bf16.msra.mxu0 0
    %6542 = vmatprep.subr.bf16.mxu0 0
    %6543 = vmatpush1.bf16.msra.mxu0 0
    %6544 = vmatprep.mubr.bf16.mxu0 0
    %6545 = vmatmul.mubr.bf16.gmra.mrb[0].mxu0 %v6460
    %v6546 = vpop.f32.mrb[0].mxu0
    %v6547 = vadd.f32 %v6454, %v6546
    %v6548 = vpop.f32.mrb[0].mxu0
    %v6549 = vpop.f32.mrb[0].mxu0
    %v6550 = vpop.f32.mrb[0].mxu0
    %6551 = vdwg.mxu0
    %v6552 = vld [vmem:[#allocation2] sm:$0xff]
    %v6553 = vld [vmem:[#allocation2 + $0x8] sm:$0xf]
    %v6555 = vcombine.high %v6552, %v6552
    %v6557 = vpack.c.bf16 %v6552, %v6552
    %v6558 = vpack.c.bf16 %v6555, %v6555
    %v6559 = vpack.c.bf16 %v6553, %v6553
    %s6560 = scalar_lea.vmem %s1, 58
    %v6561 = vld [vmem:[%s6560] sm:$0x3]
    %6565 = vrot.lane.b32.xlu0 %v6557, 126
    %v6566 = vpop.permute.xlu0 %6565
    %6567 = vrot.lane.b32.xlu0 %v6558, 126
    %v6568 = vpop.permute.xlu0 %6567
    %6569 = vrot.lane.b32.xlu0 %v6559, 126
    %v6570 = vpop.permute.xlu0 %6569
    %v6571 = vsel %vm316, %v6566, %v6568
    %v6572 = vsel %vm316, %v6568, %v6570
    %v6574 = vsel %vm109, %v6561, 0
    %v6577 = vsel %vm113, %v6571, 0
    %v6580 = vsel %vm113, %v6572, 0
    %v6583 = vsel %vm113, %v6570, 0
    %6585 = vmatprep.subr.bf16.mxu0 %v6580
    %6586 = vmatpush1.bf16.msra.mxu0 %v6577
    %6587 = vmatprep.subr.bf16.mxu0 0
    %6588 = vmatpush1.bf16.msra.mxu0 0
    %6589 = vmatprep.subr.bf16.mxu0 0
    %6590 = vmatpush1.bf16.msra.mxu0 0
    %6591 = vmatprep.subr.bf16.mxu0 0
    %6592 = vmatpush1.bf16.msra.mxu0 0
    %6593 = vmatprep.subr.bf16.mxu0 0
    %6594 = vmatpush1.bf16.msra.mxu0 0
    %6595 = vmatprep.subr.bf16.mxu0 0
    %6596 = vmatpush1.bf16.msra.mxu0 0
    %6597 = vmatprep.subr.bf16.mxu0 0
    %6598 = vmatpush1.bf16.msra.mxu0 0
    %6599 = vmatprep.subr.bf16.mxu0 0
    %6600 = vmatpush1.bf16.msra.mxu0 0
    %6601 = vmatprep.subr.bf16.mxu0 0
    %6602 = vmatpush1.bf16.msra.mxu0 0
    %6603 = vmatprep.subr.bf16.mxu0 0
    %6604 = vmatpush1.bf16.msra.mxu0 0
    %6605 = vmatprep.subr.bf16.mxu0 0
    %6606 = vmatpush1.bf16.msra.mxu0 0
    %6607 = vmatprep.subr.bf16.mxu0 0
    %6608 = vmatpush1.bf16.msra.mxu0 0
    %6609 = vmatprep.subr.bf16.mxu0 0
    %6610 = vmatpush1.bf16.msra.mxu0 0
    %6611 = vmatprep.subr.bf16.mxu0 0
    %6612 = vmatpush1.bf16.msra.mxu0 0
    %6613 = vmatprep.subr.bf16.mxu0 0
    %6614 = vmatpush1.bf16.msra.mxu0 0
    %6615 = vmatprep.subr.bf16.mxu0 0
    %6616 = vmatpush1.bf16.msra.mxu0 0
    %6617 = vmatprep.mubr.bf16.mxu0 0
    %6618 = vmatmul.mubr.bf16.gmra.mrb[0].mxu0 %v6574
    %v6619 = vpop.f32.mrb[0].mxu0
    %v6620 = vadd.f32 0.0, %v6619
    %v6621 = vpop.f32.mrb[0].mxu0
    %v6622 = vadd.f32 0.0, %v6621
    %v6623 = vpop.f32.mrb[0].mxu0
    %v6624 = vpop.f32.mrb[0].mxu0
    %6625 = vdwg.mxu0
    %6626 = vmatprep.subr.bf16.mxu0 0
    %6627 = vmatpush1.bf16.msra.mxu0 %v6583
    %6628 = vmatprep.subr.bf16.mxu0 0
    %6629 = vmatpush1.bf16.msra.mxu0 0
    %6630 = vmatprep.subr.bf16.mxu0 0
    %6631 = vmatpush1.bf16.msra.mxu0 0
    %6632 = vmatprep.subr.bf16.mxu0 0
    %6633 = vmatpush1.bf16.msra.mxu0 0
    %6634 = vmatprep.subr.bf16.mxu0 0
    %6635 = vmatpush1.bf16.msra.mxu0 0
    %6636 = vmatprep.subr.bf16.mxu0 0
    %6637 = vmatpush1.bf16.msra.mxu0 0
    %6638 = vmatprep.subr.bf16.mxu0 0
    %6639 = vmatpush1.bf16.msra.mxu0 0
    %6640 = vmatprep.subr.bf16.mxu0 0
    %6641 = vmatpush1.bf16.msra.mxu0 0
    %6642 = vmatprep.subr.bf16.mxu0 0
    %6643 = vmatpush1.bf16.msra.mxu0 0
    %6644 = vmatprep.subr.bf16.mxu0 0
    %6645 = vmatpush1.bf16.msra.mxu0 0
    %6646 = vmatprep.subr.bf16.mxu0 0
    %6647 = vmatpush1.bf16.msra.mxu0 0
    %6648 = vmatprep.subr.bf16.mxu0 0
    %6649 = vmatpush1.bf16.msra.mxu0 0
    %6650 = vmatprep.subr.bf16.mxu0 0
    %6651 = vmatpush1.bf16.msra.mxu0 0
    %6652 = vmatprep.subr.bf16.mxu0 0
    %6653 = vmatpush1.bf16.msra.mxu0 0
    %6654 = vmatprep.subr.bf16.mxu0 0
    %6655 = vmatpush1.bf16.msra.mxu0 0
    %6656 = vmatprep.subr.bf16.mxu0 0
    %6657 = vmatpush1.bf16.msra.mxu0 0
    %6658 = vmatprep.mubr.bf16.mxu0 0
    %6659 = vmatmul.mubr.bf16.gmra.mrb[0].mxu0 %v6574
    %v6660 = vpop.f32.mrb[0].mxu0
    %v6661 = vadd.f32 0.0, %v6660
    %v6662 = vpop.f32.mrb[0].mxu0
    %v6663 = vpop.f32.mrb[0].mxu0
    %v6664 = vpop.f32.mrb[0].mxu0
    %6665 = vdwg.mxu0
    %v6666 = vadd.f32 %v6506, %v6620
    %v6667 = vadd.f32 %v6508, %v6622
    %v6668 = vadd.f32 %v6547, %v6661
    %v6669 = vld [vmem:[#allocation2] sm:$0xff]
    %v6670 = vld [vmem:[#allocation2 + $0x8] sm:$0xf]
    %v6672 = vcombine.high %v6669, %v6669
    %v6674 = vpack.c.bf16 %v6669, %v6669
    %v6675 = vpack.c.bf16 %v6672, %v6672
    %v6676 = vpack.c.bf16 %v6670, %v6670
    %s6677 = scalar_lea.vmem %s1, 60
    %v6678 = vld [vmem:[%s6677] sm:$0x3]
    %6682 = vrot.lane.b32.xlu0 %v6674, 110
    %v6683 = vpop.permute.xlu0 %6682
    %6684 = vrot.lane.b32.xlu0 %v6675, 110
    %v6685 = vpop.permute.xlu0 %6684
    %6686 = vrot.lane.b32.xlu0 %v6676, 110
    %v6687 = vpop.permute.xlu0 %6686
    %v6688 = vsel %vm434, %v6683, %v6685
    %v6689 = vsel %vm434, %v6685, %v6687
    %v6691 = vsel %vm109, %v6678, 0
    %v6694 = vsel %vm113, %v6688, 0
    %v6697 = vsel %vm113, %v6689, 0
    %v6700 = vsel %vm113, %v6687, 0
    %6702 = vmatprep.subr.bf16.mxu0 %v6697
    %6703 = vmatpush1.bf16.msra.mxu0 %v6694
    %6704 = vmatprep.subr.bf16.mxu0 0
    %6705 = vmatpush1.bf16.msra.mxu0 0
    %6706 = vmatprep.subr.bf16.mxu0 0
    %6707 = vmatpush1.bf16.msra.mxu0 0
    %6708 = vmatprep.subr.bf16.mxu0 0
    %6709 = vmatpush1.bf16.msra.mxu0 0
    %6710 = vmatprep.subr.bf16.mxu0 0
    %6711 = vmatpush1.bf16.msra.mxu0 0
    %6712 = vmatprep.subr.bf16.mxu0 0
    %6713 = vmatpush1.bf16.msra.mxu0 0
    %6714 = vmatprep.subr.bf16.mxu0 0
    %6715 = vmatpush1.bf16.msra.mxu0 0
    %6716 = vmatprep.subr.bf16.mxu0 0
    %6717 = vmatpush1.bf16.msra.mxu0 0
    %6718 = vmatprep.subr.bf16.mxu0 0
    %6719 = vmatpush1.bf16.msra.mxu0 0
    %6720 = vmatprep.subr.bf16.mxu0 0
    %6721 = vmatpush1.bf16.msra.mxu0 0
    %6722 = vmatprep.subr.bf16.mxu0 0
    %6723 = vmatpush1.bf16.msra.mxu0 0
    %6724 = vmatprep.subr.bf16.mxu0 0
    %6725 = vmatpush1.bf16.msra.mxu0 0
    %6726 = vmatprep.subr.bf16.mxu0 0
    %6727 = vmatpush1.bf16.msra.mxu0 0
    %6728 = vmatprep.subr.bf16.mxu0 0
    %6729 = vmatpush1.bf16.msra.mxu0 0
    %6730 = vmatprep.subr.bf16.mxu0 0
    %6731 = vmatpush1.bf16.msra.mxu0 0
    %6732 = vmatprep.subr.bf16.mxu0 0
    %6733 = vmatpush1.bf16.msra.mxu0 0
    %6734 = vmatprep.mubr.bf16.mxu0 0
    %6735 = vmatmul.mubr.bf16.gmra.mrb[0].mxu0 %v6691
    %v6736 = vpop.f32.mrb[0].mxu0
    %v6737 = vadd.f32 0.0, %v6736
    %v6738 = vpop.f32.mrb[0].mxu0
    %v6739 = vadd.f32 0.0, %v6738
    %v6740 = vpop.f32.mrb[0].mxu0
    %v6741 = vpop.f32.mrb[0].mxu0
    %6742 = vdwg.mxu0
    %6743 = vmatprep.subr.bf16.mxu0 0
    %6744 = vmatpush1.bf16.msra.mxu0 %v6700
    %6745 = vmatprep.subr.bf16.mxu0 0
    %6746 = vmatpush1.bf16.msra.mxu0 0
    %6747 = vmatprep.subr.bf16.mxu0 0
    %6748 = vmatpush1.bf16.msra.mxu0 0
    %6749 = vmatprep.subr.bf16.mxu0 0
    %6750 = vmatpush1.bf16.msra.mxu0 0
    %6751 = vmatprep.subr.bf16.mxu0 0
    %6752 = vmatpush1.bf16.msra.mxu0 0
    %6753 = vmatprep.subr.bf16.mxu0 0
    %6754 = vmatpush1.bf16.msra.mxu0 0
    %6755 = vmatprep.subr.bf16.mxu0 0
    %6756 = vmatpush1.bf16.msra.mxu0 0
    %6757 = vmatprep.subr.bf16.mxu0 0
    %6758 = vmatpush1.bf16.msra.mxu0 0
    %6759 = vmatprep.subr.bf16.mxu0 0
    %6760 = vmatpush1.bf16.msra.mxu0 0
    %6761 = vmatprep.subr.bf16.mxu0 0
    %6762 = vmatpush1.bf16.msra.mxu0 0
    %6763 = vmatprep.subr.bf16.mxu0 0
    %6764 = vmatpush1.bf16.msra.mxu0 0
    %6765 = vmatprep.subr.bf16.mxu0 0
    %6766 = vmatpush1.bf16.msra.mxu0 0
    %6767 = vmatprep.subr.bf16.mxu0 0
    %6768 = vmatpush1.bf16.msra.mxu0 0
    %6769 = vmatprep.subr.bf16.mxu0 0
    %6770 = vmatpush1.bf16.msra.mxu0 0
    %6771 = vmatprep.subr.bf16.mxu0 0
    %6772 = vmatpush1.bf16.msra.mxu0 0
    %6773 = vmatprep.subr.bf16.mxu0 0
    %6774 = vmatpush1.bf16.msra.mxu0 0
    %6775 = vmatprep.mubr.bf16.mxu0 0
    %6776 = vmatmul.mubr.bf16.gmra.mrb[0].mxu0 %v6691
    %v6777 = vpop.f32.mrb[0].mxu0
    %v6778 = vadd.f32 0.0, %v6777
    %v6779 = vpop.f32.mrb[0].mxu0
    %v6780 = vpop.f32.mrb[0].mxu0
    %v6781 = vpop.f32.mrb[0].mxu0
    %6782 = vdwg.mxu0
    %v6783 = vadd.f32 %v6666, %v6737
    %v6784 = vadd.f32 %v6667, %v6739
    %v6785 = vadd.f32 %v6668, %v6778
    %v6786 = vld [vmem:[#allocation2] sm:$0xff]
    %v6787 = vld [vmem:[#allocation2 + $0x8] sm:$0xf]
    %v6789 = vcombine.high %v6786, %v6786
    %v6791 = vpack.c.bf16 %v6786, %v6786
    %v6792 = vpack.c.bf16 %v6789, %v6789
    %v6793 = vpack.c.bf16 %v6787, %v6787
    %s6794 = scalar_lea.vmem %s1, 62
    %v6795 = vld [vmem:[%s6794] sm:$0x3]
    %6799 = vrot.lane.b32.xlu0 %v6791, 109
    %v6800 = vpop.permute.xlu0 %6799
    %6801 = vrot.lane.b32.xlu0 %v6792, 109
    %v6802 = vpop.permute.xlu0 %6801
    %6803 = vrot.lane.b32.xlu0 %v6793, 109
    %v6804 = vpop.permute.xlu0 %6803
    %v6805 = vsel %vm552, %v6800, %v6802
    %v6806 = vsel %vm552, %v6802, %v6804
    %v6808 = vsel %vm109, %v6795, 0
    %v6811 = vsel %vm113, %v6805, 0
    %v6814 = vsel %vm113, %v6806, 0
    %v6817 = vsel %vm113, %v6804, 0
    %6819 = vmatprep.subr.bf16.mxu0 %v6814
    %6820 = vmatpush1.bf16.msra.mxu0 %v6811
    %6821 = vmatprep.subr.bf16.mxu0 0
    %6822 = vmatpush1.bf16.msra.mxu0 0
    %6823 = vmatprep.subr.bf16.mxu0 0
    %6824 = vmatpush1.bf16.msra.mxu0 0
    %6825 = vmatprep.subr.bf16.mxu0 0
    %6826 = vmatpush1.bf16.msra.mxu0 0
    %6827 = vmatprep.subr.bf16.mxu0 0
    %6828 = vmatpush1.bf16.msra.mxu0 0
    %6829 = vmatprep.subr.bf16.mxu0 0
    %6830 = vmatpush1.bf16.msra.mxu0 0
    %6831 = vmatprep.subr.bf16.mxu0 0
    %6832 = vmatpush1.bf16.msra.mxu0 0
    %6833 = vmatprep.subr.bf16.mxu0 0
    %6834 = vmatpush1.bf16.msra.mxu0 0
    %6835 = vmatprep.subr.bf16.mxu0 0
    %6836 = vmatpush1.bf16.msra.mxu0 0
    %6837 = vmatprep.subr.bf16.mxu0 0
    %6838 = vmatpush1.bf16.msra.mxu0 0
    %6839 = vmatprep.subr.bf16.mxu0 0
    %6840 = vmatpush1.bf16.msra.mxu0 0
    %6841 = vmatprep.subr.bf16.mxu0 0
    %6842 = vmatpush1.bf16.msra.mxu0 0
    %6843 = vmatprep.subr.bf16.mxu0 0
    %6844 = vmatpush1.bf16.msra.mxu0 0
    %6845 = vmatprep.subr.bf16.mxu0 0
    %6846 = vmatpush1.bf16.msra.mxu0 0
    %6847 = vmatprep.subr.bf16.mxu0 0
    %6848 = vmatpush1.bf16.msra.mxu0 0
    %6849 = vmatprep.subr.bf16.mxu0 0
    %6850 = vmatpush1.bf16.msra.mxu0 0
    %6851 = vmatprep.mubr.bf16.mxu0 0
    %6852 = vmatmul.mubr.bf16.gmra.mrb[0].mxu0 %v6808
    %v6853 = vpop.f32.mrb[0].mxu0
    %v6854 = vadd.f32 0.0, %v6853
    %v6855 = vpop.f32.mrb[0].mxu0
    %v6856 = vadd.f32 0.0, %v6855
    %v6857 = vpop.f32.mrb[0].mxu0
    %v6858 = vpop.f32.mrb[0].mxu0
    %6859 = vdwg.mxu0
    %6860 = vmatprep.subr.bf16.mxu0 0
    %6861 = vmatpush1.bf16.msra.mxu0 %v6817
    %6862 = vmatprep.subr.bf16.mxu0 0
    %6863 = vmatpush1.bf16.msra.mxu0 0
    %6864 = vmatprep.subr.bf16.mxu0 0
    %6865 = vmatpush1.bf16.msra.mxu0 0
    %6866 = vmatprep.subr.bf16.mxu0 0
    %6867 = vmatpush1.bf16.msra.mxu0 0
    %6868 = vmatprep.subr.bf16.mxu0 0
    %6869 = vmatpush1.bf16.msra.mxu0 0
    %6870 = vmatprep.subr.bf16.mxu0 0
    %6871 = vmatpush1.bf16.msra.mxu0 0
    %6872 = vmatprep.subr.bf16.mxu0 0
    %6873 = vmatpush1.bf16.msra.mxu0 0
    %6874 = vmatprep.subr.bf16.mxu0 0
    %6875 = vmatpush1.bf16.msra.mxu0 0
    %6876 = vmatprep.subr.bf16.mxu0 0
    %6877 = vmatpush1.bf16.msra.mxu0 0
    %6878 = vmatprep.subr.bf16.mxu0 0
    %6879 = vmatpush1.bf16.msra.mxu0 0
    %6880 = vmatprep.subr.bf16.mxu0 0
    %6881 = vmatpush1.bf16.msra.mxu0 0
    %6882 = vmatprep.subr.bf16.mxu0 0
    %6883 = vmatpush1.bf16.msra.mxu0 0
    %6884 = vmatprep.subr.bf16.mxu0 0
    %6885 = vmatpush1.bf16.msra.mxu0 0
    %6886 = vmatprep.subr.bf16.mxu0 0
    %6887 = vmatpush1.bf16.msra.mxu0 0
    %6888 = vmatprep.subr.bf16.mxu0 0
    %6889 = vmatpush1.bf16.msra.mxu0 0
    %6890 = vmatprep.subr.bf16.mxu0 0
    %6891 = vmatpush1.bf16.msra.mxu0 0
    %6892 = vmatprep.mubr.bf16.mxu0 0
    %6893 = vmatmul.mubr.bf16.gmra.mrb[0].mxu0 %v6808
    %v6894 = vpop.f32.mrb[0].mxu0
    %v6895 = vadd.f32 0.0, %v6894
    %v6896 = vpop.f32.mrb[0].mxu0
    %v6897 = vpop.f32.mrb[0].mxu0
    %v6898 = vpop.f32.mrb[0].mxu0
    %6899 = vdwg.mxu0
    %v6900 = vadd.f32 %v6783, %v6854
    %v6901 = vadd.f32 %v6784, %v6856
    %v6902 = vadd.f32 %v6785, %v6895
    %v6903 = vld [vmem:[#allocation2] sm:$0xff]
    %v6904 = vld [vmem:[#allocation2 + $0x8] sm:$0xf]
    %v6906 = vcombine.high %v6903, %v6903
    %v6908 = vpack.c.bf16 %v6903, %v6903
    %v6909 = vpack.c.bf16 %v6906, %v6906
    %v6910 = vpack.c.bf16 %v6904, %v6904
    %s6911 = scalar_lea.vmem %s1, 64
    %v6912 = vld [vmem:[%s6911] sm:$0x3]
    %6916 = vrot.lane.b32.xlu0 %v6908, 108
    %v6917 = vpop.permute.xlu0 %6916
    %6918 = vrot.lane.b32.xlu0 %v6909, 108
    %v6919 = vpop.permute.xlu0 %6918
    %6920 = vrot.lane.b32.xlu0 %v6910, 108
    %v6921 = vpop.permute.xlu0 %6920
    %v6922 = vsel %vm670, %v6917, %v6919
    %v6923 = vsel %vm670, %v6919, %v6921
    %v6925 = vsel %vm109, %v6912, 0
    %v6928 = vsel %vm113, %v6922, 0
    %v6931 = vsel %vm113, %v6923, 0
    %v6934 = vsel %vm113, %v6921, 0
    %6936 = vmatprep.subr.bf16.mxu0 %v6931
    %6937 = vmatpush1.bf16.msra.mxu0 %v6928
    %6938 = vmatprep.subr.bf16.mxu0 0
    %6939 = vmatpush1.bf16.msra.mxu0 0
    %6940 = vmatprep.subr.bf16.mxu0 0
    %6941 = vmatpush1.bf16.msra.mxu0 0
    %6942 = vmatprep.subr.bf16.mxu0 0
    %6943 = vmatpush1.bf16.msra.mxu0 0
    %6944 = vmatprep.subr.bf16.mxu0 0
    %6945 = vmatpush1.bf16.msra.mxu0 0
    %6946 = vmatprep.subr.bf16.mxu0 0
    %6947 = vmatpush1.bf16.msra.mxu0 0
    %6948 = vmatprep.subr.bf16.mxu0 0
    %6949 = vmatpush1.bf16.msra.mxu0 0
    %6950 = vmatprep.subr.bf16.mxu0 0
    %6951 = vmatpush1.bf16.msra.mxu0 0
    %6952 = vmatprep.subr.bf16.mxu0 0
    %6953 = vmatpush1.bf16.msra.mxu0 0
    %6954 = vmatprep.subr.bf16.mxu0 0
    %6955 = vmatpush1.bf16.msra.mxu0 0
    %6956 = vmatprep.subr.bf16.mxu0 0
    %6957 = vmatpush1.bf16.msra.mxu0 0
    %6958 = vmatprep.subr.bf16.mxu0 0
    %6959 = vmatpush1.bf16.msra.mxu0 0
    %6960 = vmatprep.subr.bf16.mxu0 0
    %6961 = vmatpush1.bf16.msra.mxu0 0
    %6962 = vmatprep.subr.bf16.mxu0 0
    %6963 = vmatpush1.bf16.msra.mxu0 0
    %6964 = vmatprep.subr.bf16.mxu0 0
    %6965 = vmatpush1.bf16.msra.mxu0 0
    %6966 = vmatprep.subr.bf16.mxu0 0
    %6967 = vmatpush1.bf16.msra.mxu0 0
    %6968 = vmatprep.mubr.bf16.mxu0 0
    %6969 = vmatmul.mubr.bf16.gmra.mrb[0].mxu0 %v6925
    %v6970 = vpop.f32.mrb[0].mxu0
    %v6971 = vadd.f32 0.0, %v6970
    %v6972 = vpop.f32.mrb[0].mxu0
    %v6973 = vadd.f32 0.0, %v6972
    %v6974 = vpop.f32.mrb[0].mxu0
    %v6975 = vpop.f32.mrb[0].mxu0
    %6976 = vdwg.mxu0
    %6977 = vmatprep.subr.bf16.mxu0 0
    %6978 = vmatpush1.bf16.msra.mxu0 %v6934
    %6979 = vmatprep.subr.bf16.mxu0 0
    %6980 = vmatpush1.bf16.msra.mxu0 0
    %6981 = vmatprep.subr.bf16.mxu0 0
    %6982 = vmatpush1.bf16.msra.mxu0 0
    %6983 = vmatprep.subr.bf16.mxu0 0
    %6984 = vmatpush1.bf16.msra.mxu0 0
    %6985 = vmatprep.subr.bf16.mxu0 0
    %6986 = vmatpush1.bf16.msra.mxu0 0
    %6987 = vmatprep.subr.bf16.mxu0 0
    %6988 = vmatpush1.bf16.msra.mxu0 0
    %6989 = vmatprep.subr.bf16.mxu0 0
    %6990 = vmatpush1.bf16.msra.mxu0 0
    %6991 = vmatprep.subr.bf16.mxu0 0
    %6992 = vmatpush1.bf16.msra.mxu0 0
    %6993 = vmatprep.subr.bf16.mxu0 0
    %6994 = vmatpush1.bf16.msra.mxu0 0
    %6995 = vmatprep.subr.bf16.mxu0 0
    %6996 = vmatpush1.bf16.msra.mxu0 0
    %6997 = vmatprep.subr.bf16.mxu0 0
    %6998 = vmatpush1.bf16.msra.mxu0 0
    %6999 = vmatprep.subr.bf16.mxu0 0
    %7000 = vmatpush1.bf16.msra.mxu0 0
    %7001 = vmatprep.subr.bf16.mxu0 0
    %7002 = vmatpush1.bf16.msra.mxu0 0
    %7003 = vmatprep.subr.bf16.mxu0 0
    %7004 = vmatpush1.bf16.msra.mxu0 0
    %7005 = vmatprep.subr.bf16.mxu0 0
    %7006 = vmatpush1.bf16.msra.mxu0 0
    %7007 = vmatprep.subr.bf16.mxu0 0
    %7008 = vmatpush1.bf16.msra.mxu0 0
    %7009 = vmatprep.mubr.bf16.mxu0 0
    %7010 = vmatmul.mubr.bf16.gmra.mrb[0].mxu0 %v6925
    %v7011 = vpop.f32.mrb[0].mxu0
    %v7012 = vadd.f32 0.0, %v7011
    %v7013 = vpop.f32.mrb[0].mxu0
    %v7014 = vpop.f32.mrb[0].mxu0
    %v7015 = vpop.f32.mrb[0].mxu0
    %7016 = vdwg.mxu0
    %v7017 = vadd.f32 %v6900, %v6971
    %v7018 = vadd.f32 %v6901, %v6973
    %v7019 = vadd.f32 %v6902, %v7012
    %v7020 = vld [vmem:[#allocation2] sm:$0xff]
    %v7021 = vld [vmem:[#allocation2 + $0x8] sm:$0xf]
    %v7023 = vcombine.high %v7020, %v7020
    %v7025 = vpack.c.bf16 %v7020, %v7020
    %v7026 = vpack.c.bf16 %v7023, %v7023
    %v7027 = vpack.c.bf16 %v7021, %v7021
    %s7028 = scalar_lea.vmem %s1, 66
    %v7029 = vld [vmem:[%s7028] sm:$0x3]
    %7033 = vrot.lane.b32.xlu0 %v7025, 92
    %v7034 = vpop.permute.xlu0 %7033
    %7035 = vrot.lane.b32.xlu0 %v7026, 92
    %v7036 = vpop.permute.xlu0 %7035
    %7037 = vrot.lane.b32.xlu0 %v7027, 92
    %v7038 = vpop.permute.xlu0 %7037
    %v7039 = vsel %vm788, %v7034, %v7036
    %v7040 = vsel %vm788, %v7036, %v7038
    %v7042 = vsel %vm109, %v7029, 0
    %v7045 = vsel %vm113, %v7039, 0
    %v7048 = vsel %vm113, %v7040, 0
    %v7051 = vsel %vm113, %v7038, 0
    %7053 = vmatprep.subr.bf16.mxu0 %v7048
    %7054 = vmatpush1.bf16.msra.mxu0 %v7045
    %7055 = vmatprep.subr.bf16.mxu0 0
    %7056 = vmatpush1.bf16.msra.mxu0 0
    %7057 = vmatprep.subr.bf16.mxu0 0
    %7058 = vmatpush1.bf16.msra.mxu0 0
    %7059 = vmatprep.subr.bf16.mxu0 0
    %7060 = vmatpush1.bf16.msra.mxu0 0
    %7061 = vmatprep.subr.bf16.mxu0 0
    %7062 = vmatpush1.bf16.msra.mxu0 0
    %7063 = vmatprep.subr.bf16.mxu0 0
    %7064 = vmatpush1.bf16.msra.mxu0 0
    %7065 = vmatprep.subr.bf16.mxu0 0
    %7066 = vmatpush1.bf16.msra.mxu0 0
    %7067 = vmatprep.subr.bf16.mxu0 0
    %7068 = vmatpush1.bf16.msra.mxu0 0
    %7069 = vmatprep.subr.bf16.mxu0 0
    %7070 = vmatpush1.bf16.msra.mxu0 0
    %7071 = vmatprep.subr.bf16.mxu0 0
    %7072 = vmatpush1.bf16.msra.mxu0 0
    %7073 = vmatprep.subr.bf16.mxu0 0
    %7074 = vmatpush1.bf16.msra.mxu0 0
    %7075 = vmatprep.subr.bf16.mxu0 0
    %7076 = vmatpush1.bf16.msra.mxu0 0
    %7077 = vmatprep.subr.bf16.mxu0 0
    %7078 = vmatpush1.bf16.msra.mxu0 0
    %7079 = vmatprep.subr.bf16.mxu0 0
    %7080 = vmatpush1.bf16.msra.mxu0 0
    %7081 = vmatprep.subr.bf16.mxu0 0
    %7082 = vmatpush1.bf16.msra.mxu0 0
    %7083 = vmatprep.subr.bf16.mxu0 0
    %7084 = vmatpush1.bf16.msra.mxu0 0
    %7085 = vmatprep.mubr.bf16.mxu0 0
    %7086 = vmatmul.mubr.bf16.gmra.mrb[0].mxu0 %v7042
    %v7087 = vpop.f32.mrb[0].mxu0
    %v7088 = vadd.f32 0.0, %v7087
    %v7089 = vpop.f32.mrb[0].mxu0
    %v7090 = vadd.f32 0.0, %v7089
    %v7091 = vpop.f32.mrb[0].mxu0
    %v7092 = vpop.f32.mrb[0].mxu0
    %7093 = vdwg.mxu0
    %7094 = vmatprep.subr.bf16.mxu0 0
    %7095 = vmatpush1.bf16.msra.mxu0 %v7051
    %7096 = vmatprep.subr.bf16.mxu0 0
    %7097 = vmatpush1.bf16.msra.mxu0 0
    %7098 = vmatprep.subr.bf16.mxu0 0
    %7099 = vmatpush1.bf16.msra.mxu0 0
    %7100 = vmatprep.subr.bf16.mxu0 0
    %7101 = vmatpush1.bf16.msra.mxu0 0
    %7102 = vmatprep.subr.bf16.mxu0 0
    %7103 = vmatpush1.bf16.msra.mxu0 0
    %7104 = vmatprep.subr.bf16.mxu0 0
    %7105 = vmatpush1.bf16.msra.mxu0 0
    %7106 = vmatprep.subr.bf16.mxu0 0
    %7107 = vmatpush1.bf16.msra.mxu0 0
    %7108 = vmatprep.subr.bf16.mxu0 0
    %7109 = vmatpush1.bf16.msra.mxu0 0
    %7110 = vmatprep.subr.bf16.mxu0 0
    %7111 = vmatpush1.bf16.msra.mxu0 0
    %7112 = vmatprep.subr.bf16.mxu0 0
    %7113 = vmatpush1.bf16.msra.mxu0 0
    %7114 = vmatprep.subr.bf16.mxu0 0
    %7115 = vmatpush1.bf16.msra.mxu0 0
    %7116 = vmatprep.subr.bf16.mxu0 0
    %7117 = vmatpush1.bf16.msra.mxu0 0
    %7118 = vmatprep.subr.bf16.mxu0 0
    %7119 = vmatpush1.bf16.msra.mxu0 0
    %7120 = vmatprep.subr.bf16.mxu0 0
    %7121 = vmatpush1.bf16.msra.mxu0 0
    %7122 = vmatprep.subr.bf16.mxu0 0
    %7123 = vmatpush1.bf16.msra.mxu0 0
    %7124 = vmatprep.subr.bf16.mxu0 0
    %7125 = vmatpush1.bf16.msra.mxu0 0
    %7126 = vmatprep.mubr.bf16.mxu0 0
    %7127 = vmatmul.mubr.bf16.gmra.mrb[0].mxu0 %v7042
    %v7128 = vpop.f32.mrb[0].mxu0
    %v7129 = vadd.f32 0.0, %v7128
    %v7130 = vpop.f32.mrb[0].mxu0
    %v7131 = vpop.f32.mrb[0].mxu0
    %v7132 = vpop.f32.mrb[0].mxu0
    %7133 = vdwg.mxu0
    %v7134 = vadd.f32 %v7017, %v7088
    %v7135 = vadd.f32 %v7018, %v7090
    %v7136 = vadd.f32 %v7019, %v7129
    %v7137 = vld [vmem:[#allocation2] sm:$0xff]
    %v7138 = vld [vmem:[#allocation2 + $0x8] sm:$0xf]
    %v7140 = vcombine.high %v7137, %v7137
    %v7142 = vpack.c.bf16 %v7137, %v7137
    %v7143 = vpack.c.bf16 %v7140, %v7140
    %v7144 = vpack.c.bf16 %v7138, %v7138
    %s7145 = scalar_lea.vmem %s1, 68
    %v7146 = vld [vmem:[%s7145] sm:$0x3]
    %7150 = vrot.lane.b32.xlu0 %v7142, 91
    %v7151 = vpop.permute.xlu0 %7150
    %7152 = vrot.lane.b32.xlu0 %v7143, 91
    %v7153 = vpop.permute.xlu0 %7152
    %7154 = vrot.lane.b32.xlu0 %v7144, 91
    %v7155 = vpop.permute.xlu0 %7154
    %v7156 = vsel %vm906, %v7151, %v7153
    %v7157 = vsel %vm906, %v7153, %v7155
    %v7159 = vsel %vm109, %v7146, 0
    %v7162 = vsel %vm113, %v7156, 0
    %v7165 = vsel %vm113, %v7157, 0
    %v7168 = vsel %vm113, %v7155, 0
    %7170 = vmatprep.subr.bf16.mxu0 %v7165
    %7171 = vmatpush1.bf16.msra.mxu0 %v7162
    %7172 = vmatprep.subr.bf16.mxu0 0
    %7173 = vmatpush1.bf16.msra.mxu0 0
    %7174 = vmatprep.subr.bf16.mxu0 0
    %7175 = vmatpush1.bf16.msra.mxu0 0
    %7176 = vmatprep.subr.bf16.mxu0 0
    %7177 = vmatpush1.bf16.msra.mxu0 0
    %7178 = vmatprep.subr.bf16.mxu0 0
    %7179 = vmatpush1.bf16.msra.mxu0 0
    %7180 = vmatprep.subr.bf16.mxu0 0
    %7181 = vmatpush1.bf16.msra.mxu0 0
    %7182 = vmatprep.subr.bf16.mxu0 0
    %7183 = vmatpush1.bf16.msra.mxu0 0
    %7184 = vmatprep.subr.bf16.mxu0 0
    %7185 = vmatpush1.bf16.msra.mxu0 0
    %7186 = vmatprep.subr.bf16.mxu0 0
    %7187 = vmatpush1.bf16.msra.mxu0 0
    %7188 = vmatprep.subr.bf16.mxu0 0
    %7189 = vmatpush1.bf16.msra.mxu0 0
    %7190 = vmatprep.subr.bf16.mxu0 0
    %7191 = vmatpush1.bf16.msra.mxu0 0
    %7192 = vmatprep.subr.bf16.mxu0 0
    %7193 = vmatpush1.bf16.msra.mxu0 0
    %7194 = vmatprep.subr.bf16.mxu0 0
    %7195 = vmatpush1.bf16.msra.mxu0 0
    %7196 = vmatprep.subr.bf16.mxu0 0
    %7197 = vmatpush1.bf16.msra.mxu0 0
    %7198 = vmatprep.subr.bf16.mxu0 0
    %7199 = vmatpush1.bf16.msra.mxu0 0
    %7200 = vmatprep.subr.bf16.mxu0 0
    %7201 = vmatpush1.bf16.msra.mxu0 0
    %7202 = vmatprep.mubr.bf16.mxu0 0
    %7203 = vmatmul.mubr.bf16.gmra.mrb[0].mxu0 %v7159
    %v7204 = vpop.f32.mrb[0].mxu0
    %v7205 = vadd.f32 0.0, %v7204
    %v7206 = vpop.f32.mrb[0].mxu0
    %v7207 = vadd.f32 0.0, %v7206
    %v7208 = vpop.f32.mrb[0].mxu0
    %v7209 = vpop.f32.mrb[0].mxu0
    %7210 = vdwg.mxu0
    %7211 = vmatprep.subr.bf16.mxu0 0
    %7212 = vmatpush1.bf16.msra.mxu0 %v7168
    %7213 = vmatprep.subr.bf16.mxu0 0
    %7214 = vmatpush1.bf16.msra.mxu0 0
    %7215 = vmatprep.subr.bf16.mxu0 0
    %7216 = vmatpush1.bf16.msra.mxu0 0
    %7217 = vmatprep.subr.bf16.mxu0 0
    %7218 = vmatpush1.bf16.msra.mxu0 0
    %7219 = vmatprep.subr.bf16.mxu0 0
    %7220 = vmatpush1.bf16.msra.mxu0 0
    %7221 = vmatprep.subr.bf16.mxu0 0
    %7222 = vmatpush1.bf16.msra.mxu0 0
    %7223 = vmatprep.subr.bf16.mxu0 0
    %7224 = vmatpush1.bf16.msra.mxu0 0
    %7225 = vmatprep.subr.bf16.mxu0 0
    %7226 = vmatpush1.bf16.msra.mxu0 0
    %7227 = vmatprep.subr.bf16.mxu0 0
    %7228 = vmatpush1.bf16.msra.mxu0 0
    %7229 = vmatprep.subr.bf16.mxu0 0
    %7230 = vmatpush1.bf16.msra.mxu0 0
    %7231 = vmatprep.subr.bf16.mxu0 0
    %7232 = vmatpush1.bf16.msra.mxu0 0
    %7233 = vmatprep.subr.bf16.mxu0 0
    %7234 = vmatpush1.bf16.msra.mxu0 0
    %7235 = vmatprep.subr.bf16.mxu0 0
    %7236 = vmatpush1.bf16.msra.mxu0 0
    %7237 = vmatprep.subr.bf16.mxu0 0
    %7238 = vmatpush1.bf16.msra.mxu0 0
    %7239 = vmatprep.subr.bf16.mxu0 0
    %7240 = vmatpush1.bf16.msra.mxu0 0
    %7241 = vmatprep.subr.bf16.mxu0 0
    %7242 = vmatpush1.bf16.msra.mxu0 0
    %7243 = vmatprep.mubr.bf16.mxu0 0
    %7244 = vmatmul.mubr.bf16.gmra.mrb[0].mxu0 %v7159
    %v7245 = vpop.f32.mrb[0].mxu0
    %v7246 = vadd.f32 0.0, %v7245
    %v7247 = vpop.f32.mrb[0].mxu0
    %v7248 = vpop.f32.mrb[0].mxu0
    %v7249 = vpop.f32.mrb[0].mxu0
    %7250 = vdwg.mxu0
    %v7251 = vadd.f32 %v7134, %v7205
    %v7252 = vadd.f32 %v7135, %v7207
    %v7253 = vadd.f32 %v7136, %v7246
    %v7254 = vld [vmem:[#allocation2] sm:$0xff]
    %v7255 = vld [vmem:[#allocation2 + $0x8] sm:$0xf]
    %v7257 = vcombine.high %v7254, %v7254
    %v7259 = vpack.c.bf16 %v7254, %v7254
    %v7260 = vpack.c.bf16 %v7257, %v7257
    %v7261 = vpack.c.bf16 %v7255, %v7255
    %s7262 = scalar_lea.vmem %s1, 70
    %v7263 = vld [vmem:[%s7262] sm:$0x3]
    %7267 = vrot.lane.b32.xlu0 %v7259, 90
    %v7268 = vpop.permute.xlu0 %7267
    %7269 = vrot.lane.b32.xlu0 %v7260, 90
    %v7270 = vpop.permute.xlu0 %7269
    %7271 = vrot.lane.b32.xlu0 %v7261, 90
    %v7272 = vpop.permute.xlu0 %7271
    %v7273 = vsel %vm1024, %v7268, %v7270
    %v7274 = vsel %vm1024, %v7270, %v7272
    %v7276 = vsel %vm109, %v7263, 0
    %v7279 = vsel %vm113, %v7273, 0
    %v7282 = vsel %vm113, %v7274, 0
    %v7285 = vsel %vm113, %v7272, 0
    %7287 = vmatprep.subr.bf16.mxu0 %v7282
    %7288 = vmatpush1.bf16.msra.mxu0 %v7279
    %7289 = vmatprep.subr.bf16.mxu0 0
    %7290 = vmatpush1.bf16.msra.mxu0 0
    %7291 = vmatprep.subr.bf16.mxu0 0
    %7292 = vmatpush1.bf16.msra.mxu0 0
    %7293 = vmatprep.subr.bf16.mxu0 0
    %7294 = vmatpush1.bf16.msra.mxu0 0
    %7295 = vmatprep.subr.bf16.mxu0 0
    %7296 = vmatpush1.bf16.msra.mxu0 0
    %7297 = vmatprep.subr.bf16.mxu0 0
    %7298 = vmatpush1.bf16.msra.mxu0 0
    %7299 = vmatprep.subr.bf16.mxu0 0
    %7300 = vmatpush1.bf16.msra.mxu0 0
    %7301 = vmatprep.subr.bf16.mxu0 0
    %7302 = vmatpush1.bf16.msra.mxu0 0
    %7303 = vmatprep.subr.bf16.mxu0 0
    %7304 = vmatpush1.bf16.msra.mxu0 0
    %7305 = vmatprep.subr.bf16.mxu0 0
    %7306 = vmatpush1.bf16.msra.mxu0 0
    %7307 = vmatprep.subr.bf16.mxu0 0
    %7308 = vmatpush1.bf16.msra.mxu0 0
    %7309 = vmatprep.subr.bf16.mxu0 0
    %7310 = vmatpush1.bf16.msra.mxu0 0
    %7311 = vmatprep.subr.bf16.mxu0 0
    %7312 = vmatpush1.bf16.msra.mxu0 0
    %7313 = vmatprep.subr.bf16.mxu0 0
    %7314 = vmatpush1.bf16.msra.mxu0 0
    %7315 = vmatprep.subr.bf16.mxu0 0
    %7316 = vmatpush1.bf16.msra.mxu0 0
    %7317 = vmatprep.subr.bf16.mxu0 0
    %7318 = vmatpush1.bf16.msra.mxu0 0
    %7319 = vmatprep.mubr.bf16.mxu0 0
    %7320 = vmatmul.mubr.bf16.gmra.mrb[0].mxu0 %v7276
    %v7321 = vpop.f32.mrb[0].mxu0
    %v7322 = vadd.f32 0.0, %v7321
    %v7323 = vpop.f32.mrb[0].mxu0
    %v7324 = vadd.f32 0.0, %v7323
    %v7325 = vpop.f32.mrb[0].mxu0
    %v7326 = vpop.f32.mrb[0].mxu0
    %7327 = vdwg.mxu0
    %7328 = vmatprep.subr.bf16.mxu0 0
    %7329 = vmatpush1.bf16.msra.mxu0 %v7285
    %7330 = vmatprep.subr.bf16.mxu0 0
    %7331 = vmatpush1.bf16.msra.mxu0 0
    %7332 = vmatprep.subr.bf16.mxu0 0
    %7333 = vmatpush1.bf16.msra.mxu0 0
    %7334 = vmatprep.subr.bf16.mxu0 0
    %7335 = vmatpush1.bf16.msra.mxu0 0
    %7336 = vmatprep.subr.bf16.mxu0 0
    %7337 = vmatpush1.bf16.msra.mxu0 0
    %7338 = vmatprep.subr.bf16.mxu0 0
    %7339 = vmatpush1.bf16.msra.mxu0 0
    %7340 = vmatprep.subr.bf16.mxu0 0
    %7341 = vmatpush1.bf16.msra.mxu0 0
    %7342 = vmatprep.subr.bf16.mxu0 0
    %7343 = vmatpush1.bf16.msra.mxu0 0
    %7344 = vmatprep.subr.bf16.mxu0 0
    %7345 = vmatpush1.bf16.msra.mxu0 0
    %7346 = vmatprep.subr.bf16.mxu0 0
    %7347 = vmatpush1.bf16.msra.mxu0 0
    %7348 = vmatprep.subr.bf16.mxu0 0
    %7349 = vmatpush1.bf16.msra.mxu0 0
    %7350 = vmatprep.subr.bf16.mxu0 0
    %7351 = vmatpush1.bf16.msra.mxu0 0
    %7352 = vmatprep.subr.bf16.mxu0 0
    %7353 = vmatpush1.bf16.msra.mxu0 0
    %7354 = vmatprep.subr.bf16.mxu0 0
    %7355 = vmatpush1.bf16.msra.mxu0 0
    %7356 = vmatprep.subr.bf16.mxu0 0
    %7357 = vmatpush1.bf16.msra.mxu0 0
    %7358 = vmatprep.subr.bf16.mxu0 0
    %7359 = vmatpush1.bf16.msra.mxu0 0
    %7360 = vmatprep.mubr.bf16.mxu0 0
    %7361 = vmatmul.mubr.bf16.gmra.mrb[0].mxu0 %v7276
    %v7362 = vpop.f32.mrb[0].mxu0
    %v7363 = vadd.f32 0.0, %v7362
    %v7364 = vpop.f32.mrb[0].mxu0
    %v7365 = vpop.f32.mrb[0].mxu0
    %v7366 = vpop.f32.mrb[0].mxu0
    %7367 = vdwg.mxu0
    %v7368 = vadd.f32 %v7251, %v7322
    %v7369 = vadd.f32 %v7252, %v7324
    %v7370 = vadd.f32 %v7253, %v7363
    %v7371 = vld [vmem:[%s1123] sm:$0xff]
    %v7372 = vld [vmem:[%s1123 + $0x8] sm:$0xf]
    %v7374 = vcombine.high %v7371, %v7371
    %v7376 = vpack.c.bf16 %v7371, %v7371
    %v7377 = vpack.c.bf16 %v7374, %v7374
    %v7378 = vpack.c.bf16 %v7372, %v7372
    %7382 = vrot.lane.b32.xlu0 %v7376, 127
    %v7383 = vpop.permute.xlu0 %7382
    %7384 = vrot.lane.b32.xlu0 %v7377, 127
    %v7385 = vpop.permute.xlu0 %7384
    %7386 = vrot.lane.b32.xlu0 %v7378, 127
    %v7387 = vpop.permute.xlu0 %7386
    %v7388 = vsel %vm106, %v7383, %v7385
    %v7389 = vsel %vm106, %v7385, %v7387
    %v7391 = vsel %vm113, %v7388, 0
    %v7394 = vsel %vm113, %v7389, 0
    %v7397 = vsel %vm113, %v7387, 0
    %7399 = vmatprep.subr.bf16.mxu0 %v7394
    %7400 = vmatpush1.bf16.msra.mxu0 %v7391
    %7401 = vmatprep.subr.bf16.mxu0 0
    %7402 = vmatpush1.bf16.msra.mxu0 0
    %7403 = vmatprep.subr.bf16.mxu0 0
    %7404 = vmatpush1.bf16.msra.mxu0 0
    %7405 = vmatprep.subr.bf16.mxu0 0
    %7406 = vmatpush1.bf16.msra.mxu0 0
    %7407 = vmatprep.subr.bf16.mxu0 0
    %7408 = vmatpush1.bf16.msra.mxu0 0
    %7409 = vmatprep.subr.bf16.mxu0 0
    %7410 = vmatpush1.bf16.msra.mxu0 0
    %7411 = vmatprep.subr.bf16.mxu0 0
    %7412 = vmatpush1.bf16.msra.mxu0 0
    %7413 = vmatprep.subr.bf16.mxu0 0
    %7414 = vmatpush1.bf16.msra.mxu0 0
    %7415 = vmatprep.subr.bf16.mxu0 0
    %7416 = vmatpush1.bf16.msra.mxu0 0
    %7417 = vmatprep.subr.bf16.mxu0 0
    %7418 = vmatpush1.bf16.msra.mxu0 0
    %7419 = vmatprep.subr.bf16.mxu0 0
    %7420 = vmatpush1.bf16.msra.mxu0 0
    %7421 = vmatprep.subr.bf16.mxu0 0
    %7422 = vmatpush1.bf16.msra.mxu0 0
    %7423 = vmatprep.subr.bf16.mxu0 0
    %7424 = vmatpush1.bf16.msra.mxu0 0
    %7425 = vmatprep.subr.bf16.mxu0 0
    %7426 = vmatpush1.bf16.msra.mxu0 0
    %7427 = vmatprep.subr.bf16.mxu0 0
    %7428 = vmatpush1.bf16.msra.mxu0 0
    %7429 = vmatprep.subr.bf16.mxu0 0
    %7430 = vmatpush1.bf16.msra.mxu0 0
    %7431 = vmatprep.mubr.bf16.mxu0 0
    %7432 = vmatmul.mubr.bf16.gmra.mrb[0].mxu0 %v6367
    %v7433 = vpop.f32.mrb[0].mxu0
    %v7434 = vadd.f32 0.0, %v7433
    %v7435 = vpop.f32.mrb[0].mxu0
    %v7436 = vadd.f32 0.0, %v7435
    %v7437 = vpop.f32.mrb[0].mxu0
    %v7438 = vpop.f32.mrb[0].mxu0
    %7439 = vdwg.mxu0
    %7440 = vmatprep.subr.bf16.mxu0 0
    %7441 = vmatpush1.bf16.msra.mxu0 %v7397
    %7442 = vmatprep.subr.bf16.mxu0 0
    %7443 = vmatpush1.bf16.msra.mxu0 0
    %7444 = vmatprep.subr.bf16.mxu0 0
    %7445 = vmatpush1.bf16.msra.mxu0 0
    %7446 = vmatprep.subr.bf16.mxu0 0
    %7447 = vmatpush1.bf16.msra.mxu0 0
    %7448 = vmatprep.subr.bf16.mxu0 0
    %7449 = vmatpush1.bf16.msra.mxu0 0
    %7450 = vmatprep.subr.bf16.mxu0 0
    %7451 = vmatpush1.bf16.msra.mxu0 0
    %7452 = vmatprep.subr.bf16.mxu0 0
    %7453 = vmatpush1.bf16.msra.mxu0 0
    %7454 = vmatprep.subr.bf16.mxu0 0
    %7455 = vmatpush1.bf16.msra.mxu0 0
    %7456 = vmatprep.subr.bf16.mxu0 0
    %7457 = vmatpush1.bf16.msra.mxu0 0
    %7458 = vmatprep.subr.bf16.mxu0 0
    %7459 = vmatpush1.bf16.msra.mxu0 0
    %7460 = vmatprep.subr.bf16.mxu0 0
    %7461 = vmatpush1.bf16.msra.mxu0 0
    %7462 = vmatprep.subr.bf16.mxu0 0
    %7463 = vmatpush1.bf16.msra.mxu0 0
    %7464 = vmatprep.subr.bf16.mxu0 0
    %7465 = vmatpush1.bf16.msra.mxu0 0
    %7466 = vmatprep.subr.bf16.mxu0 0
    %7467 = vmatpush1.bf16.msra.mxu0 0
    %7468 = vmatprep.subr.bf16.mxu0 0
    %7469 = vmatpush1.bf16.msra.mxu0 0
    %7470 = vmatprep.subr.bf16.mxu0 0
    %7471 = vmatpush1.bf16.msra.mxu0 0
    %7472 = vmatprep.mubr.bf16.mxu0 0
    %7473 = vmatmul.mubr.bf16.gmra.mrb[0].mxu0 %v6367
    %v7474 = vpop.f32.mrb[0].mxu0
    %v7475 = vadd.f32 0.0, %v7474
    %v7476 = vpop.f32.mrb[0].mxu0
    %v7477 = vpop.f32.mrb[0].mxu0
    %v7478 = vpop.f32.mrb[0].mxu0
    %7479 = vdwg.mxu0
    %v7481 = vsel %vm113, %v7376, 0
    %v7484 = vsel %vm113, %v7377, 0
    %v7487 = vsel %vm113, %v7378, 0
    %7489 = vmatprep.subr.bf16.mxu0 %v7484
    %7490 = vmatpush1.bf16.msra.mxu0 %v7481
    %7491 = vmatprep.subr.bf16.mxu0 0
    %7492 = vmatpush1.bf16.msra.mxu0 0
    %7493 = vmatprep.subr.bf16.mxu0 0
    %7494 = vmatpush1.bf16.msra.mxu0 0
    %7495 = vmatprep.subr.bf16.mxu0 0
    %7496 = vmatpush1.bf16.msra.mxu0 0
    %7497 = vmatprep.subr.bf16.mxu0 0
    %7498 = vmatpush1.bf16.msra.mxu0 0
    %7499 = vmatprep.subr.bf16.mxu0 0
    %7500 = vmatpush1.bf16.msra.mxu0 0
    %7501 = vmatprep.subr.bf16.mxu0 0
    %7502 = vmatpush1.bf16.msra.mxu0 0
    %7503 = vmatprep.subr.bf16.mxu0 0
    %7504 = vmatpush1.bf16.msra.mxu0 0
    %7505 = vmatprep.subr.bf16.mxu0 0
    %7506 = vmatpush1.bf16.msra.mxu0 0
    %7507 = vmatprep.subr.bf16.mxu0 0
    %7508 = vmatpush1.bf16.msra.mxu0 0
    %7509 = vmatprep.subr.bf16.mxu0 0
    %7510 = vmatpush1.bf16.msra.mxu0 0
    %7511 = vmatprep.subr.bf16.mxu0 0
    %7512 = vmatpush1.bf16.msra.mxu0 0
    %7513 = vmatprep.subr.bf16.mxu0 0
    %7514 = vmatpush1.bf16.msra.mxu0 0
    %7515 = vmatprep.subr.bf16.mxu0 0
    %7516 = vmatpush1.bf16.msra.mxu0 0
    %7517 = vmatprep.subr.bf16.mxu0 0
    %7518 = vmatpush1.bf16.msra.mxu0 0
    %7519 = vmatprep.subr.bf16.mxu0 0
    %7520 = vmatpush1.bf16.msra.mxu0 0
    %7521 = vmatprep.mubr.bf16.mxu0 0
    %7522 = vmatmul.mubr.bf16.gmra.mrb[0].mxu0 %v6460
    %v7523 = vpop.f32.mrb[0].mxu0
    %v7524 = vadd.f32 %v7434, %v7523
    %v7525 = vpop.f32.mrb[0].mxu0
    %v7526 = vadd.f32 %v7436, %v7525
    %v7527 = vpop.f32.mrb[0].mxu0
    %v7528 = vpop.f32.mrb[0].mxu0
    %7529 = vdwg.mxu0
    %7530 = vmatprep.subr.bf16.mxu0 0
    %7531 = vmatpush1.bf16.msra.mxu0 %v7487
    %7532 = vmatprep.subr.bf16.mxu0 0
    %7533 = vmatpush1.bf16.msra.mxu0 0
    %7534 = vmatprep.subr.bf16.mxu0 0
    %7535 = vmatpush1.bf16.msra.mxu0 0
    %7536 = vmatprep.subr.bf16.mxu0 0
    %7537 = vmatpush1.bf16.msra.mxu0 0
    %7538 = vmatprep.subr.bf16.mxu0 0
    %7539 = vmatpush1.bf16.msra.mxu0 0
    %7540 = vmatprep.subr.bf16.mxu0 0
    %7541 = vmatpush1.bf16.msra.mxu0 0
    %7542 = vmatprep.subr.bf16.mxu0 0
    %7543 = vmatpush1.bf16.msra.mxu0 0
    %7544 = vmatprep.subr.bf16.mxu0 0
    %7545 = vmatpush1.bf16.msra.mxu0 0
    %7546 = vmatprep.subr.bf16.mxu0 0
    %7547 = vmatpush1.bf16.msra.mxu0 0
    %7548 = vmatprep.subr.bf16.mxu0 0
    %7549 = vmatpush1.bf16.msra.mxu0 0
    %7550 = vmatprep.subr.bf16.mxu0 0
    %7551 = vmatpush1.bf16.msra.mxu0 0
    %7552 = vmatprep.subr.bf16.mxu0 0
    %7553 = vmatpush1.bf16.msra.mxu0 0
    %7554 = vmatprep.subr.bf16.mxu0 0
    %7555 = vmatpush1.bf16.msra.mxu0 0
    %7556 = vmatprep.subr.bf16.mxu0 0
    %7557 = vmatpush1.bf16.msra.mxu0 0
    %7558 = vmatprep.subr.bf16.mxu0 0
    %7559 = vmatpush1.bf16.msra.mxu0 0
    %7560 = vmatprep.subr.bf16.mxu0 0
    %7561 = vmatpush1.bf16.msra.mxu0 0
    %7562 = vmatprep.mubr.bf16.mxu0 0
    %7563 = vmatmul.mubr.bf16.gmra.mrb[0].mxu0 %v6460
    %v7564 = vpop.f32.mrb[0].mxu0
    %v7565 = vadd.f32 %v7475, %v7564
    %v7566 = vpop.f32.mrb[0].mxu0
    %v7567 = vpop.f32.mrb[0].mxu0
    %v7568 = vpop.f32.mrb[0].mxu0
    %7569 = vdwg.mxu0
    %v7570 = vld [vmem:[%s1123] sm:$0xff]
    %v7571 = vld [vmem:[%s1123 + $0x8] sm:$0xf]
    %v7573 = vcombine.high %v7570, %v7570
    %v7575 = vpack.c.bf16 %v7570, %v7570
    %v7576 = vpack.c.bf16 %v7573, %v7573
    %v7577 = vpack.c.bf16 %v7571, %v7571
    %7581 = vrot.lane.b32.xlu0 %v7575, 126
    %v7582 = vpop.permute.xlu0 %7581
    %7583 = vrot.lane.b32.xlu0 %v7576, 126
    %v7584 = vpop.permute.xlu0 %7583
    %7585 = vrot.lane.b32.xlu0 %v7577, 126
    %v7586 = vpop.permute.xlu0 %7585
    %v7587 = vsel %vm316, %v7582, %v7584
    %v7588 = vsel %vm316, %v7584, %v7586
    %v7590 = vsel %vm113, %v7587, 0
    %v7593 = vsel %vm113, %v7588, 0
    %v7596 = vsel %vm113, %v7586, 0
    %7598 = vmatprep.subr.bf16.mxu0 %v7593
    %7599 = vmatpush1.bf16.msra.mxu0 %v7590
    %7600 = vmatprep.subr.bf16.mxu0 0
    %7601 = vmatpush1.bf16.msra.mxu0 0
    %7602 = vmatprep.subr.bf16.mxu0 0
    %7603 = vmatpush1.bf16.msra.mxu0 0
    %7604 = vmatprep.subr.bf16.mxu0 0
    %7605 = vmatpush1.bf16.msra.mxu0 0
    %7606 = vmatprep.subr.bf16.mxu0 0
    %7607 = vmatpush1.bf16.msra.mxu0 0
    %7608 = vmatprep.subr.bf16.mxu0 0
    %7609 = vmatpush1.bf16.msra.mxu0 0
    %7610 = vmatprep.subr.bf16.mxu0 0
    %7611 = vmatpush1.bf16.msra.mxu0 0
    %7612 = vmatprep.subr.bf16.mxu0 0
    %7613 = vmatpush1.bf16.msra.mxu0 0
    %7614 = vmatprep.subr.bf16.mxu0 0
    %7615 = vmatpush1.bf16.msra.mxu0 0
    %7616 = vmatprep.subr.bf16.mxu0 0
    %7617 = vmatpush1.bf16.msra.mxu0 0
    %7618 = vmatprep.subr.bf16.mxu0 0
    %7619 = vmatpush1.bf16.msra.mxu0 0
    %7620 = vmatprep.subr.bf16.mxu0 0
    %7621 = vmatpush1.bf16.msra.mxu0 0
    %7622 = vmatprep.subr.bf16.mxu0 0
    %7623 = vmatpush1.bf16.msra.mxu0 0
    %7624 = vmatprep.subr.bf16.mxu0 0
    %7625 = vmatpush1.bf16.msra.mxu0 0
    %7626 = vmatprep.subr.bf16.mxu0 0
    %7627 = vmatpush1.bf16.msra.mxu0 0
    %7628 = vmatprep.subr.bf16.mxu0 0
    %7629 = vmatpush1.bf16.msra.mxu0 0
    %7630 = vmatprep.mubr.bf16.mxu0 0
    %7631 = vmatmul.mubr.bf16.gmra.mrb[0].mxu0 %v6574
    %v7632 = vpop.f32.mrb[0].mxu0
    %v7633 = vadd.f32 0.0, %v7632
    %v7634 = vpop.f32.mrb[0].mxu0
    %v7635 = vadd.f32 0.0, %v7634
    %v7636 = vpop.f32.mrb[0].mxu0
    %v7637 = vpop.f32.mrb[0].mxu0
    %7638 = vdwg.mxu0
    %7639 = vmatprep.subr.bf16.mxu0 0
    %7640 = vmatpush1.bf16.msra.mxu0 %v7596
    %7641 = vmatprep.subr.bf16.mxu0 0
    %7642 = vmatpush1.bf16.msra.mxu0 0
    %7643 = vmatprep.subr.bf16.mxu0 0
    %7644 = vmatpush1.bf16.msra.mxu0 0
    %7645 = vmatprep.subr.bf16.mxu0 0
    %7646 = vmatpush1.bf16.msra.mxu0 0
    %7647 = vmatprep.subr.bf16.mxu0 0
    %7648 = vmatpush1.bf16.msra.mxu0 0
    %7649 = vmatprep.subr.bf16.mxu0 0
    %7650 = vmatpush1.bf16.msra.mxu0 0
    %7651 = vmatprep.subr.bf16.mxu0 0
    %7652 = vmatpush1.bf16.msra.mxu0 0
    %7653 = vmatprep.subr.bf16.mxu0 0
    %7654 = vmatpush1.bf16.msra.mxu0 0
    %7655 = vmatprep.subr.bf16.mxu0 0
    %7656 = vmatpush1.bf16.msra.mxu0 0
    %7657 = vmatprep.subr.bf16.mxu0 0
    %7658 = vmatpush1.bf16.msra.mxu0 0
    %7659 = vmatprep.subr.bf16.mxu0 0
    %7660 = vmatpush1.bf16.msra.mxu0 0
    %7661 = vmatprep.subr.bf16.mxu0 0
    %7662 = vmatpush1.bf16.msra.mxu0 0
    %7663 = vmatprep.subr.bf16.mxu0 0
    %7664 = vmatpush1.bf16.msra.mxu0 0
    %7665 = vmatprep.subr.bf16.mxu0 0
    %7666 = vmatpush1.bf16.msra.mxu0 0
    %7667 = vmatprep.subr.bf16.mxu0 0
    %7668 = vmatpush1.bf16.msra.mxu0 0
    %7669 = vmatprep.subr.bf16.mxu0 0
    %7670 = vmatpush1.bf16.msra.mxu0 0
    %7671 = vmatprep.mubr.bf16.mxu0 0
    %7672 = vmatmul.mubr.bf16.gmra.mrb[0].mxu0 %v6574
    %v7673 = vpop.f32.mrb[0].mxu0
    %v7674 = vadd.f32 0.0, %v7673
    %v7675 = vpop.f32.mrb[0].mxu0
    %v7676 = vpop.f32.mrb[0].mxu0
    %v7677 = vpop.f32.mrb[0].mxu0
    %7678 = vdwg.mxu0
    %v7679 = vadd.f32 %v7524, %v7633
    %v7680 = vadd.f32 %v7526, %v7635
    %v7681 = vadd.f32 %v7565, %v7674
    %v7682 = vld [vmem:[%s1123] sm:$0xff]
    %v7683 = vld [vmem:[%s1123 + $0x8] sm:$0xf]
    %v7685 = vcombine.high %v7682, %v7682
    %v7687 = vpack.c.bf16 %v7682, %v7682
    %v7688 = vpack.c.bf16 %v7685, %v7685
    %v7689 = vpack.c.bf16 %v7683, %v7683
    %7693 = vrot.lane.b32.xlu0 %v7687, 110
    %v7694 = vpop.permute.xlu0 %7693
    %7695 = vrot.lane.b32.xlu0 %v7688, 110
    %v7696 = vpop.permute.xlu0 %7695
    %7697 = vrot.lane.b32.xlu0 %v7689, 110
    %v7698 = vpop.permute.xlu0 %7697
    %v7699 = vsel %vm434, %v7694, %v7696
    %v7700 = vsel %vm434, %v7696, %v7698
    %v7702 = vsel %vm113, %v7699, 0
    %v7705 = vsel %vm113, %v7700, 0
    %v7708 = vsel %vm113, %v7698, 0
    %7710 = vmatprep.subr.bf16.mxu0 %v7705
    %7711 = vmatpush1.bf16.msra.mxu0 %v7702
    %7712 = vmatprep.subr.bf16.mxu0 0
    %7713 = vmatpush1.bf16.msra.mxu0 0
    %7714 = vmatprep.subr.bf16.mxu0 0
    %7715 = vmatpush1.bf16.msra.mxu0 0
    %7716 = vmatprep.subr.bf16.mxu0 0
    %7717 = vmatpush1.bf16.msra.mxu0 0
    %7718 = vmatprep.subr.bf16.mxu0 0
    %7719 = vmatpush1.bf16.msra.mxu0 0
    %7720 = vmatprep.subr.bf16.mxu0 0
    %7721 = vmatpush1.bf16.msra.mxu0 0
    %7722 = vmatprep.subr.bf16.mxu0 0
    %7723 = vmatpush1.bf16.msra.mxu0 0
    %7724 = vmatprep.subr.bf16.mxu0 0
    %7725 = vmatpush1.bf16.msra.mxu0 0
    %7726 = vmatprep.subr.bf16.mxu0 0
    %7727 = vmatpush1.bf16.msra.mxu0 0
    %7728 = vmatprep.subr.bf16.mxu0 0
    %7729 = vmatpush1.bf16.msra.mxu0 0
    %7730 = vmatprep.subr.bf16.mxu0 0
    %7731 = vmatpush1.bf16.msra.mxu0 0
    %7732 = vmatprep.subr.bf16.mxu0 0
    %7733 = vmatpush1.bf16.msra.mxu0 0
    %7734 = vmatprep.subr.bf16.mxu0 0
    %7735 = vmatpush1.bf16.msra.mxu0 0
    %7736 = vmatprep.subr.bf16.mxu0 0
    %7737 = vmatpush1.bf16.msra.mxu0 0
    %7738 = vmatprep.subr.bf16.mxu0 0
    %7739 = vmatpush1.bf16.msra.mxu0 0
    %7740 = vmatprep.subr.bf16.mxu0 0
    %7741 = vmatpush1.bf16.msra.mxu0 0
    %7742 = vmatprep.mubr.bf16.mxu0 0
    %7743 = vmatmul.mubr.bf16.gmra.mrb[0].mxu0 %v6691
    %v7744 = vpop.f32.mrb[0].mxu0
    %v7745 = vadd.f32 0.0, %v7744
    %v7746 = vpop.f32.mrb[0].mxu0
    %v7747 = vadd.f32 0.0, %v7746
    %v7748 = vpop.f32.mrb[0].mxu0
    %v7749 = vpop.f32.mrb[0].mxu0
    %7750 = vdwg.mxu0
    %7751 = vmatprep.subr.bf16.mxu0 0
    %7752 = vmatpush1.bf16.msra.mxu0 %v7708
    %7753 = vmatprep.subr.bf16.mxu0 0
    %7754 = vmatpush1.bf16.msra.mxu0 0
    %7755 = vmatprep.subr.bf16.mxu0 0
    %7756 = vmatpush1.bf16.msra.mxu0 0
    %7757 = vmatprep.subr.bf16.mxu0 0
    %7758 = vmatpush1.bf16.msra.mxu0 0
    %7759 = vmatprep.subr.bf16.mxu0 0
    %7760 = vmatpush1.bf16.msra.mxu0 0
    %7761 = vmatprep.subr.bf16.mxu0 0
    %7762 = vmatpush1.bf16.msra.mxu0 0
    %7763 = vmatprep.subr.bf16.mxu0 0
    %7764 = vmatpush1.bf16.msra.mxu0 0
    %7765 = vmatprep.subr.bf16.mxu0 0
    %7766 = vmatpush1.bf16.msra.mxu0 0
    %7767 = vmatprep.subr.bf16.mxu0 0
    %7768 = vmatpush1.bf16.msra.mxu0 0
    %7769 = vmatprep.subr.bf16.mxu0 0
    %7770 = vmatpush1.bf16.msra.mxu0 0
    %7771 = vmatprep.subr.bf16.mxu0 0
    %7772 = vmatpush1.bf16.msra.mxu0 0
    %7773 = vmatprep.subr.bf16.mxu0 0
    %7774 = vmatpush1.bf16.msra.mxu0 0
    %7775 = vmatprep.subr.bf16.mxu0 0
    %7776 = vmatpush1.bf16.msra.mxu0 0
    %7777 = vmatprep.subr.bf16.mxu0 0
    %7778 = vmatpush1.bf16.msra.mxu0 0
    %7779 = vmatprep.subr.bf16.mxu0 0
    %7780 = vmatpush1.bf16.msra.mxu0 0
    %7781 = vmatprep.subr.bf16.mxu0 0
    %7782 = vmatpush1.bf16.msra.mxu0 0
    %7783 = vmatprep.mubr.bf16.mxu0 0
    %7784 = vmatmul.mubr.bf16.gmra.mrb[0].mxu0 %v6691
    %v7785 = vpop.f32.mrb[0].mxu0
    %v7786 = vadd.f32 0.0, %v7785
    %v7787 = vpop.f32.mrb[0].mxu0
    %v7788 = vpop.f32.mrb[0].mxu0
    %v7789 = vpop.f32.mrb[0].mxu0
    %7790 = vdwg.mxu0
    %v7791 = vadd.f32 %v7679, %v7745
    %v7792 = vadd.f32 %v7680, %v7747
    %v7793 = vadd.f32 %v7681, %v7786
    %v7794 = vld [vmem:[%s1123] sm:$0xff]
    %v7795 = vld [vmem:[%s1123 + $0x8] sm:$0xf]
    %v7797 = vcombine.high %v7794, %v7794
    %v7799 = vpack.c.bf16 %v7794, %v7794
    %v7800 = vpack.c.bf16 %v7797, %v7797
    %v7801 = vpack.c.bf16 %v7795, %v7795
    %7805 = vrot.lane.b32.xlu0 %v7799, 109
    %v7806 = vpop.permute.xlu0 %7805
    %7807 = vrot.lane.b32.xlu0 %v7800, 109
    %v7808 = vpop.permute.xlu0 %7807
    %7809 = vrot.lane.b32.xlu0 %v7801, 109
    %v7810 = vpop.permute.xlu0 %7809
    %v7811 = vsel %vm552, %v7806, %v7808
    %v7812 = vsel %vm552, %v7808, %v7810
    %v7814 = vsel %vm113, %v7811, 0
    %v7817 = vsel %vm113, %v7812, 0
    %v7820 = vsel %vm113, %v7810, 0
    %7822 = vmatprep.subr.bf16.mxu0 %v7817
    %7823 = vmatpush1.bf16.msra.mxu0 %v7814
    %7824 = vmatprep.subr.bf16.mxu0 0
    %7825 = vmatpush1.bf16.msra.mxu0 0
    %7826 = vmatprep.subr.bf16.mxu0 0
    %7827 = vmatpush1.bf16.msra.mxu0 0
    %7828 = vmatprep.subr.bf16.mxu0 0
    %7829 = vmatpush1.bf16.msra.mxu0 0
    %7830 = vmatprep.subr.bf16.mxu0 0
    %7831 = vmatpush1.bf16.msra.mxu0 0
    %7832 = vmatprep.subr.bf16.mxu0 0
    %7833 = vmatpush1.bf16.msra.mxu0 0
    %7834 = vmatprep.subr.bf16.mxu0 0
    %7835 = vmatpush1.bf16.msra.mxu0 0
    %7836 = vmatprep.subr.bf16.mxu0 0
    %7837 = vmatpush1.bf16.msra.mxu0 0
    %7838 = vmatprep.subr.bf16.mxu0 0
    %7839 = vmatpush1.bf16.msra.mxu0 0
    %7840 = vmatprep.subr.bf16.mxu0 0
    %7841 = vmatpush1.bf16.msra.mxu0 0
    %7842 = vmatprep.subr.bf16.mxu0 0
    %7843 = vmatpush1.bf16.msra.mxu0 0
    %7844 = vmatprep.subr.bf16.mxu0 0
    %7845 = vmatpush1.bf16.msra.mxu0 0
    %7846 = vmatprep.subr.bf16.mxu0 0
    %7847 = vmatpush1.bf16.msra.mxu0 0
    %7848 = vmatprep.subr.bf16.mxu0 0
    %7849 = vmatpush1.bf16.msra.mxu0 0
    %7850 = vmatprep.subr.bf16.mxu0 0
    %7851 = vmatpush1.bf16.msra.mxu0 0
    %7852 = vmatprep.subr.bf16.mxu0 0
    %7853 = vmatpush1.bf16.msra.mxu0 0
    %7854 = vmatprep.mubr.bf16.mxu0 0
    %7855 = vmatmul.mubr.bf16.gmra.mrb[0].mxu0 %v6808
    %v7856 = vpop.f32.mrb[0].mxu0
    %v7857 = vadd.f32 0.0, %v7856
    %v7858 = vpop.f32.mrb[0].mxu0
    %v7859 = vadd.f32 0.0, %v7858
    %v7860 = vpop.f32.mrb[0].mxu0
    %v7861 = vpop.f32.mrb[0].mxu0
    %7862 = vdwg.mxu0
    %7863 = vmatprep.subr.bf16.mxu0 0
    %7864 = vmatpush1.bf16.msra.mxu0 %v7820
    %7865 = vmatprep.subr.bf16.mxu0 0
    %7866 = vmatpush1.bf16.msra.mxu0 0
    %7867 = vmatprep.subr.bf16.mxu0 0
    %7868 = vmatpush1.bf16.msra.mxu0 0
    %7869 = vmatprep.subr.bf16.mxu0 0
    %7870 = vmatpush1.bf16.msra.mxu0 0
    %7871 = vmatprep.subr.bf16.mxu0 0
    %7872 = vmatpush1.bf16.msra.mxu0 0
    %7873 = vmatprep.subr.bf16.mxu0 0
    %7874 = vmatpush1.bf16.msra.mxu0 0
    %7875 = vmatprep.subr.bf16.mxu0 0
    %7876 = vmatpush1.bf16.msra.mxu0 0
    %7877 = vmatprep.subr.bf16.mxu0 0
    %7878 = vmatpush1.bf16.msra.mxu0 0
    %7879 = vmatprep.subr.bf16.mxu0 0
    %7880 = vmatpush1.bf16.msra.mxu0 0
    %7881 = vmatprep.subr.bf16.mxu0 0
    %7882 = vmatpush1.bf16.msra.mxu0 0
    %7883 = vmatprep.subr.bf16.mxu0 0
    %7884 = vmatpush1.bf16.msra.mxu0 0
    %7885 = vmatprep.subr.bf16.mxu0 0
    %7886 = vmatpush1.bf16.msra.mxu0 0
    %7887 = vmatprep.subr.bf16.mxu0 0
    %7888 = vmatpush1.bf16.msra.mxu0 0
    %7889 = vmatprep.subr.bf16.mxu0 0
    %7890 = vmatpush1.bf16.msra.mxu0 0
    %7891 = vmatprep.subr.bf16.mxu0 0
    %7892 = vmatpush1.bf16.msra.mxu0 0
    %7893 = vmatprep.subr.bf16.mxu0 0
    %7894 = vmatpush1.bf16.msra.mxu0 0
    %7895 = vmatprep.mubr.bf16.mxu0 0
    %7896 = vmatmul.mubr.bf16.gmra.mrb[0].mxu0 %v6808
    %v7897 = vpop.f32.mrb[0].mxu0
    %v7898 = vadd.f32 0.0, %v7897
    %v7899 = vpop.f32.mrb[0].mxu0
    %v7900 = vpop.f32.mrb[0].mxu0
    %v7901 = vpop.f32.mrb[0].mxu0
    %7902 = vdwg.mxu0
    %v7903 = vadd.f32 %v7791, %v7857
    %v7904 = vadd.f32 %v7792, %v7859
    %v7905 = vadd.f32 %v7793, %v7898
    %v7906 = vld [vmem:[%s1123] sm:$0xff]
    %v7907 = vld [vmem:[%s1123 + $0x8] sm:$0xf]
    %v7909 = vcombine.high %v7906, %v7906
    %v7911 = vpack.c.bf16 %v7906, %v7906
    %v7912 = vpack.c.bf16 %v7909, %v7909
    %v7913 = vpack.c.bf16 %v7907, %v7907
    %7917 = vrot.lane.b32.xlu0 %v7911, 108
    %v7918 = vpop.permute.xlu0 %7917
    %7919 = vrot.lane.b32.xlu0 %v7912, 108
    %v7920 = vpop.permute.xlu0 %7919
    %7921 = vrot.lane.b32.xlu0 %v7913, 108
    %v7922 = vpop.permute.xlu0 %7921
    %v7923 = vsel %vm670, %v7918, %v7920
    %v7924 = vsel %vm670, %v7920, %v7922
    %v7926 = vsel %vm113, %v7923, 0
    %v7929 = vsel %vm113, %v7924, 0
    %v7932 = vsel %vm113, %v7922, 0
    %7934 = vmatprep.subr.bf16.mxu0 %v7929
    %7935 = vmatpush1.bf16.msra.mxu0 %v7926
    %7936 = vmatprep.subr.bf16.mxu0 0
    %7937 = vmatpush1.bf16.msra.mxu0 0
    %7938 = vmatprep.subr.bf16.mxu0 0
    %7939 = vmatpush1.bf16.msra.mxu0 0
    %7940 = vmatprep.subr.bf16.mxu0 0
    %7941 = vmatpush1.bf16.msra.mxu0 0
    %7942 = vmatprep.subr.bf16.mxu0 0
    %7943 = vmatpush1.bf16.msra.mxu0 0
    %7944 = vmatprep.subr.bf16.mxu0 0
    %7945 = vmatpush1.bf16.msra.mxu0 0
    %7946 = vmatprep.subr.bf16.mxu0 0
    %7947 = vmatpush1.bf16.msra.mxu0 0
    %7948 = vmatprep.subr.bf16.mxu0 0
    %7949 = vmatpush1.bf16.msra.mxu0 0
    %7950 = vmatprep.subr.bf16.mxu0 0
    %7951 = vmatpush1.bf16.msra.mxu0 0
    %7952 = vmatprep.subr.bf16.mxu0 0
    %7953 = vmatpush1.bf16.msra.mxu0 0
    %7954 = vmatprep.subr.bf16.mxu0 0
    %7955 = vmatpush1.bf16.msra.mxu0 0
    %7956 = vmatprep.subr.bf16.mxu0 0
    %7957 = vmatpush1.bf16.msra.mxu0 0
    %7958 = vmatprep.subr.bf16.mxu0 0
    %7959 = vmatpush1.bf16.msra.mxu0 0
    %7960 = vmatprep.subr.bf16.mxu0 0
    %7961 = vmatpush1.bf16.msra.mxu0 0
    %7962 = vmatprep.subr.bf16.mxu0 0
    %7963 = vmatpush1.bf16.msra.mxu0 0
    %7964 = vmatprep.subr.bf16.mxu0 0
    %7965 = vmatpush1.bf16.msra.mxu0 0
    %7966 = vmatprep.mubr.bf16.mxu0 0
    %7967 = vmatmul.mubr.bf16.gmra.mrb[0].mxu0 %v6925
    %v7968 = vpop.f32.mrb[0].mxu0
    %v7969 = vadd.f32 0.0, %v7968
    %v7970 = vpop.f32.mrb[0].mxu0
    %v7971 = vadd.f32 0.0, %v7970
    %v7972 = vpop.f32.mrb[0].mxu0
    %v7973 = vpop.f32.mrb[0].mxu0
    %7974 = vdwg.mxu0
    %7975 = vmatprep.subr.bf16.mxu0 0
    %7976 = vmatpush1.bf16.msra.mxu0 %v7932
    %7977 = vmatprep.subr.bf16.mxu0 0
    %7978 = vmatpush1.bf16.msra.mxu0 0
    %7979 = vmatprep.subr.bf16.mxu0 0
    %7980 = vmatpush1.bf16.msra.mxu0 0
    %7981 = vmatprep.subr.bf16.mxu0 0
    %7982 = vmatpush1.bf16.msra.mxu0 0
    %7983 = vmatprep.subr.bf16.mxu0 0
    %7984 = vmatpush1.bf16.msra.mxu0 0
    %7985 = vmatprep.subr.bf16.mxu0 0
    %7986 = vmatpush1.bf16.msra.mxu0 0
    %7987 = vmatprep.subr.bf16.mxu0 0
    %7988 = vmatpush1.bf16.msra.mxu0 0
    %7989 = vmatprep.subr.bf16.mxu0 0
    %7990 = vmatpush1.bf16.msra.mxu0 0
    %7991 = vmatprep.subr.bf16.mxu0 0
    %7992 = vmatpush1.bf16.msra.mxu0 0
    %7993 = vmatprep.subr.bf16.mxu0 0
    %7994 = vmatpush1.bf16.msra.mxu0 0
    %7995 = vmatprep.subr.bf16.mxu0 0
    %7996 = vmatpush1.bf16.msra.mxu0 0
    %7997 = vmatprep.subr.bf16.mxu0 0
    %7998 = vmatpush1.bf16.msra.mxu0 0
    %7999 = vmatprep.subr.bf16.mxu0 0
    %8000 = vmatpush1.bf16.msra.mxu0 0
    %8001 = vmatprep.subr.bf16.mxu0 0
    %8002 = vmatpush1.bf16.msra.mxu0 0
    %8003 = vmatprep.subr.bf16.mxu0 0
    %8004 = vmatpush1.bf16.msra.mxu0 0
    %8005 = vmatprep.subr.bf16.mxu0 0
    %8006 = vmatpush1.bf16.msra.mxu0 0
    %8007 = vmatprep.mubr.bf16.mxu0 0
    %8008 = vmatmul.mubr.bf16.gmra.mrb[0].mxu0 %v6925
    %v8009 = vpop.f32.mrb[0].mxu0
    %v8010 = vadd.f32 0.0, %v8009
    %v8011 = vpop.f32.mrb[0].mxu0
    %v8012 = vpop.f32.mrb[0].mxu0
    %v8013 = vpop.f32.mrb[0].mxu0
    %8014 = vdwg.mxu0
    %v8015 = vadd.f32 %v7903, %v7969
    %v8016 = vadd.f32 %v7904, %v7971
    %v8017 = vadd.f32 %v7905, %v8010
    %v8018 = vld [vmem:[%s1123] sm:$0xff]
    %v8019 = vld [vmem:[%s1123 + $0x8] sm:$0xf]
    %v8021 = vcombine.high %v8018, %v8018
    %v8023 = vpack.c.bf16 %v8018, %v8018
    %v8024 = vpack.c.bf16 %v8021, %v8021
    %v8025 = vpack.c.bf16 %v8019, %v8019
    %8029 = vrot.lane.b32.xlu0 %v8023, 92
    %v8030 = vpop.permute.xlu0 %8029
    %8031 = vrot.lane.b32.xlu0 %v8024, 92
    %v8032 = vpop.permute.xlu0 %8031
    %8033 = vrot.lane.b32.xlu0 %v8025, 92
    %v8034 = vpop.permute.xlu0 %8033
    %v8035 = vsel %vm788, %v8030, %v8032
    %v8036 = vsel %vm788, %v8032, %v8034
    %v8038 = vsel %vm113, %v8035, 0
    %v8041 = vsel %vm113, %v8036, 0
    %v8044 = vsel %vm113, %v8034, 0
    %8046 = vmatprep.subr.bf16.mxu0 %v8041
    %8047 = vmatpush1.bf16.msra.mxu0 %v8038
    %8048 = vmatprep.subr.bf16.mxu0 0
    %8049 = vmatpush1.bf16.msra.mxu0 0
    %8050 = vmatprep.subr.bf16.mxu0 0
    %8051 = vmatpush1.bf16.msra.mxu0 0
    %8052 = vmatprep.subr.bf16.mxu0 0
    %8053 = vmatpush1.bf16.msra.mxu0 0
    %8054 = vmatprep.subr.bf16.mxu0 0
    %8055 = vmatpush1.bf16.msra.mxu0 0
    %8056 = vmatprep.subr.bf16.mxu0 0
    %8057 = vmatpush1.bf16.msra.mxu0 0
    %8058 = vmatprep.subr.bf16.mxu0 0
    %8059 = vmatpush1.bf16.msra.mxu0 0
    %8060 = vmatprep.subr.bf16.mxu0 0
    %8061 = vmatpush1.bf16.msra.mxu0 0
    %8062 = vmatprep.subr.bf16.mxu0 0
    %8063 = vmatpush1.bf16.msra.mxu0 0
    %8064 = vmatprep.subr.bf16.mxu0 0
    %8065 = vmatpush1.bf16.msra.mxu0 0
    %8066 = vmatprep.subr.bf16.mxu0 0
    %8067 = vmatpush1.bf16.msra.mxu0 0
    %8068 = vmatprep.subr.bf16.mxu0 0
    %8069 = vmatpush1.bf16.msra.mxu0 0
    %8070 = vmatprep.subr.bf16.mxu0 0
    %8071 = vmatpush1.bf16.msra.mxu0 0
    %8072 = vmatprep.subr.bf16.mxu0 0
    %8073 = vmatpush1.bf16.msra.mxu0 0
    %8074 = vmatprep.subr.bf16.mxu0 0
    %8075 = vmatpush1.bf16.msra.mxu0 0
    %8076 = vmatprep.subr.bf16.mxu0 0
    %8077 = vmatpush1.bf16.msra.mxu0 0
    %8078 = vmatprep.mubr.bf16.mxu0 0
    %8079 = vmatmul.mubr.bf16.gmra.mrb[0].mxu0 %v7042
    %v8080 = vpop.f32.mrb[0].mxu0
    %v8081 = vadd.f32 0.0, %v8080
    %v8082 = vpop.f32.mrb[0].mxu0
    %v8083 = vadd.f32 0.0, %v8082
    %v8084 = vpop.f32.mrb[0].mxu0
    %v8085 = vpop.f32.mrb[0].mxu0
    %8086 = vdwg.mxu0
    %8087 = vmatprep.subr.bf16.mxu0 0
    %8088 = vmatpush1.bf16.msra.mxu0 %v8044
    %8089 = vmatprep.subr.bf16.mxu0 0
    %8090 = vmatpush1.bf16.msra.mxu0 0
    %8091 = vmatprep.subr.bf16.mxu0 0
    %8092 = vmatpush1.bf16.msra.mxu0 0
    %8093 = vmatprep.subr.bf16.mxu0 0
    %8094 = vmatpush1.bf16.msra.mxu0 0
    %8095 = vmatprep.subr.bf16.mxu0 0
    %8096 = vmatpush1.bf16.msra.mxu0 0
    %8097 = vmatprep.subr.bf16.mxu0 0
    %8098 = vmatpush1.bf16.msra.mxu0 0
    %8099 = vmatprep.subr.bf16.mxu0 0
    %8100 = vmatpush1.bf16.msra.mxu0 0
    %8101 = vmatprep.subr.bf16.mxu0 0
    %8102 = vmatpush1.bf16.msra.mxu0 0
    %8103 = vmatprep.subr.bf16.mxu0 0
    %8104 = vmatpush1.bf16.msra.mxu0 0
    %8105 = vmatprep.subr.bf16.mxu0 0
    %8106 = vmatpush1.bf16.msra.mxu0 0
    %8107 = vmatprep.subr.bf16.mxu0 0
    %8108 = vmatpush1.bf16.msra.mxu0 0
    %8109 = vmatprep.subr.bf16.mxu0 0
    %8110 = vmatpush1.bf16.msra.mxu0 0
    %8111 = vmatprep.subr.bf16.mxu0 0
    %8112 = vmatpush1.bf16.msra.mxu0 0
    %8113 = vmatprep.subr.bf16.mxu0 0
    %8114 = vmatpush1.bf16.msra.mxu0 0
    %8115 = vmatprep.subr.bf16.mxu0 0
    %8116 = vmatpush1.bf16.msra.mxu0 0
    %8117 = vmatprep.subr.bf16.mxu0 0
    %8118 = vmatpush1.bf16.msra.mxu0 0
    %8119 = vmatprep.mubr.bf16.mxu0 0
    %8120 = vmatmul.mubr.bf16.gmra.mrb[0].mxu0 %v7042
    %v8121 = vpop.f32.mrb[0].mxu0
    %v8122 = vadd.f32 0.0, %v8121
    %v8123 = vpop.f32.mrb[0].mxu0
    %v8124 = vpop.f32.mrb[0].mxu0
    %v8125 = vpop.f32.mrb[0].mxu0
    %8126 = vdwg.mxu0
    %v8127 = vadd.f32 %v8015, %v8081
    %v8128 = vadd.f32 %v8016, %v8083
    %v8129 = vadd.f32 %v8017, %v8122
    %v8130 = vld [vmem:[%s1123] sm:$0xff]
    %v8131 = vld [vmem:[%s1123 + $0x8] sm:$0xf]
    %v8133 = vcombine.high %v8130, %v8130
    %v8135 = vpack.c.bf16 %v8130, %v8130
    %v8136 = vpack.c.bf16 %v8133, %v8133
    %v8137 = vpack.c.bf16 %v8131, %v8131
    %8141 = vrot.lane.b32.xlu0 %v8135, 91
    %v8142 = vpop.permute.xlu0 %8141
    %8143 = vrot.lane.b32.xlu0 %v8136, 91
    %v8144 = vpop.permute.xlu0 %8143
    %8145 = vrot.lane.b32.xlu0 %v8137, 91
    %v8146 = vpop.permute.xlu0 %8145
    %v8147 = vsel %vm906, %v8142, %v8144
    %v8148 = vsel %vm906, %v8144, %v8146
    %v8150 = vsel %vm113, %v8147, 0
    %v8153 = vsel %vm113, %v8148, 0
    %v8156 = vsel %vm113, %v8146, 0
    %8158 = vmatprep.subr.bf16.mxu0 %v8153
    %8159 = vmatpush1.bf16.msra.mxu0 %v8150
    %8160 = vmatprep.subr.bf16.mxu0 0
    %8161 = vmatpush1.bf16.msra.mxu0 0
    %8162 = vmatprep.subr.bf16.mxu0 0
    %8163 = vmatpush1.bf16.msra.mxu0 0
    %8164 = vmatprep.subr.bf16.mxu0 0
    %8165 = vmatpush1.bf16.msra.mxu0 0
    %8166 = vmatprep.subr.bf16.mxu0 0
    %8167 = vmatpush1.bf16.msra.mxu0 0
    %8168 = vmatprep.subr.bf16.mxu0 0
    %8169 = vmatpush1.bf16.msra.mxu0 0
    %8170 = vmatprep.subr.bf16.mxu0 0
    %8171 = vmatpush1.bf16.msra.mxu0 0
    %8172 = vmatprep.subr.bf16.mxu0 0
    %8173 = vmatpush1.bf16.msra.mxu0 0
    %8174 = vmatprep.subr.bf16.mxu0 0
    %8175 = vmatpush1.bf16.msra.mxu0 0
    %8176 = vmatprep.subr.bf16.mxu0 0
    %8177 = vmatpush1.bf16.msra.mxu0 0
    %8178 = vmatprep.subr.bf16.mxu0 0
    %8179 = vmatpush1.bf16.msra.mxu0 0
    %8180 = vmatprep.subr.bf16.mxu0 0
    %8181 = vmatpush1.bf16.msra.mxu0 0
    %8182 = vmatprep.subr.bf16.mxu0 0
    %8183 = vmatpush1.bf16.msra.mxu0 0
    %8184 = vmatprep.subr.bf16.mxu0 0
    %8185 = vmatpush1.bf16.msra.mxu0 0
    %8186 = vmatprep.subr.bf16.mxu0 0
    %8187 = vmatpush1.bf16.msra.mxu0 0
    %8188 = vmatprep.subr.bf16.mxu0 0
    %8189 = vmatpush1.bf16.msra.mxu0 0
    %8190 = vmatprep.mubr.bf16.mxu0 0
    %8191 = vmatmul.mubr.bf16.gmra.mrb[0].mxu0 %v7159
    %v8192 = vpop.f32.mrb[0].mxu0
    %v8193 = vadd.f32 0.0, %v8192
    %v8194 = vpop.f32.mrb[0].mxu0
    %v8195 = vadd.f32 0.0, %v8194
    %v8196 = vpop.f32.mrb[0].mxu0
    %v8197 = vpop.f32.mrb[0].mxu0
    %8198 = vdwg.mxu0
    %8199 = vmatprep.subr.bf16.mxu0 0
    %8200 = vmatpush1.bf16.msra.mxu0 %v8156
    %8201 = vmatprep.subr.bf16.mxu0 0
    %8202 = vmatpush1.bf16.msra.mxu0 0
    %8203 = vmatprep.subr.bf16.mxu0 0
    %8204 = vmatpush1.bf16.msra.mxu0 0
    %8205 = vmatprep.subr.bf16.mxu0 0
    %8206 = vmatpush1.bf16.msra.mxu0 0
    %8207 = vmatprep.subr.bf16.mxu0 0
    %8208 = vmatpush1.bf16.msra.mxu0 0
    %8209 = vmatprep.subr.bf16.mxu0 0
    %8210 = vmatpush1.bf16.msra.mxu0 0
    %8211 = vmatprep.subr.bf16.mxu0 0
    %8212 = vmatpush1.bf16.msra.mxu0 0
    %8213 = vmatprep.subr.bf16.mxu0 0
    %8214 = vmatpush1.bf16.msra.mxu0 0
    %8215 = vmatprep.subr.bf16.mxu0 0
    %8216 = vmatpush1.bf16.msra.mxu0 0
    %8217 = vmatprep.subr.bf16.mxu0 0
    %8218 = vmatpush1.bf16.msra.mxu0 0
    %8219 = vmatprep.subr.bf16.mxu0 0
    %8220 = vmatpush1.bf16.msra.mxu0 0
    %8221 = vmatprep.subr.bf16.mxu0 0
    %8222 = vmatpush1.bf16.msra.mxu0 0
    %8223 = vmatprep.subr.bf16.mxu0 0
    %8224 = vmatpush1.bf16.msra.mxu0 0
    %8225 = vmatprep.subr.bf16.mxu0 0
    %8226 = vmatpush1.bf16.msra.mxu0 0
    %8227 = vmatprep.subr.bf16.mxu0 0
    %8228 = vmatpush1.bf16.msra.mxu0 0
    %8229 = vmatprep.subr.bf16.mxu0 0
    %8230 = vmatpush1.bf16.msra.mxu0 0
    %8231 = vmatprep.mubr.bf16.mxu0 0
    %8232 = vmatmul.mubr.bf16.gmra.mrb[0].mxu0 %v7159
    %v8233 = vpop.f32.mrb[0].mxu0
    %v8234 = vadd.f32 0.0, %v8233
    %v8235 = vpop.f32.mrb[0].mxu0
    %v8236 = vpop.f32.mrb[0].mxu0
    %v8237 = vpop.f32.mrb[0].mxu0
    %8238 = vdwg.mxu0
    %v8239 = vadd.f32 %v8127, %v8193
    %v8240 = vadd.f32 %v8128, %v8195
    %v8241 = vadd.f32 %v8129, %v8234
    %v8242 = vld [vmem:[%s1123] sm:$0xff]
    %v8243 = vld [vmem:[%s1123 + $0x8] sm:$0xf]
    %v8245 = vcombine.high %v8242, %v8242
    %v8247 = vpack.c.bf16 %v8242, %v8242
    %v8248 = vpack.c.bf16 %v8245, %v8245
    %v8249 = vpack.c.bf16 %v8243, %v8243
    %8253 = vrot.lane.b32.xlu0 %v8247, 90
    %v8254 = vpop.permute.xlu0 %8253
    %8255 = vrot.lane.b32.xlu0 %v8248, 90
    %v8256 = vpop.permute.xlu0 %8255
    %8257 = vrot.lane.b32.xlu0 %v8249, 90
    %v8258 = vpop.permute.xlu0 %8257
    %v8259 = vsel %vm1024, %v8254, %v8256
    %v8260 = vsel %vm1024, %v8256, %v8258
    %v8262 = vsel %vm113, %v8259, 0
    %v8265 = vsel %vm113, %v8260, 0
    %v8268 = vsel %vm113, %v8258, 0
    %8270 = vmatprep.subr.bf16.mxu0 %v8265
    %8271 = vmatpush1.bf16.msra.mxu0 %v8262
    %8272 = vmatprep.subr.bf16.mxu0 0
    %8273 = vmatpush1.bf16.msra.mxu0 0
    %8274 = vmatprep.subr.bf16.mxu0 0
    %8275 = vmatpush1.bf16.msra.mxu0 0
    %8276 = vmatprep.subr.bf16.mxu0 0
    %8277 = vmatpush1.bf16.msra.mxu0 0
    %8278 = vmatprep.subr.bf16.mxu0 0
    %8279 = vmatpush1.bf16.msra.mxu0 0
    %8280 = vmatprep.subr.bf16.mxu0 0
    %8281 = vmatpush1.bf16.msra.mxu0 0
    %8282 = vmatprep.subr.bf16.mxu0 0
    %8283 = vmatpush1.bf16.msra.mxu0 0
    %8284 = vmatprep.subr.bf16.mxu0 0
    %8285 = vmatpush1.bf16.msra.mxu0 0
    %8286 = vmatprep.subr.bf16.mxu0 0
    %8287 = vmatpush1.bf16.msra.mxu0 0
    %8288 = vmatprep.subr.bf16.mxu0 0
    %8289 = vmatpush1.bf16.msra.mxu0 0
    %8290 = vmatprep.subr.bf16.mxu0 0
    %8291 = vmatpush1.bf16.msra.mxu0 0
    %8292 = vmatprep.subr.bf16.mxu0 0
    %8293 = vmatpush1.bf16.msra.mxu0 0
    %8294 = vmatprep.subr.bf16.mxu0 0
    %8295 = vmatpush1.bf16.msra.mxu0 0
    %8296 = vmatprep.subr.bf16.mxu0 0
    %8297 = vmatpush1.bf16.msra.mxu0 0
    %8298 = vmatprep.subr.bf16.mxu0 0
    %8299 = vmatpush1.bf16.msra.mxu0 0
    %8300 = vmatprep.subr.bf16.mxu0 0
    %8301 = vmatpush1.bf16.msra.mxu0 0
    %8302 = vmatprep.mubr.bf16.mxu0 0
    %8303 = vmatmul.mubr.bf16.gmra.mrb[0].mxu0 %v7276
    %v8304 = vpop.f32.mrb[0].mxu0
    %v8305 = vadd.f32 0.0, %v8304
    %v8306 = vpop.f32.mrb[0].mxu0
    %v8307 = vadd.f32 0.0, %v8306
    %v8308 = vpop.f32.mrb[0].mxu0
    %v8309 = vpop.f32.mrb[0].mxu0
    %8310 = vdwg.mxu0
    %8311 = vmatprep.subr.bf16.mxu0 0
    %8312 = vmatpush1.bf16.msra.mxu0 %v8268
    %8313 = vmatprep.subr.bf16.mxu0 0
    %8314 = vmatpush1.bf16.msra.mxu0 0
    %8315 = vmatprep.subr.bf16.mxu0 0
    %8316 = vmatpush1.bf16.msra.mxu0 0
    %8317 = vmatprep.subr.bf16.mxu0 0
    %8318 = vmatpush1.bf16.msra.mxu0 0
    %8319 = vmatprep.subr.bf16.mxu0 0
    %8320 = vmatpush1.bf16.msra.mxu0 0
    %8321 = vmatprep.subr.bf16.mxu0 0
    %8322 = vmatpush1.bf16.msra.mxu0 0
    %8323 = vmatprep.subr.bf16.mxu0 0
    %8324 = vmatpush1.bf16.msra.mxu0 0
    %8325 = vmatprep.subr.bf16.mxu0 0
    %8326 = vmatpush1.bf16.msra.mxu0 0
    %8327 = vmatprep.subr.bf16.mxu0 0
    %8328 = vmatpush1.bf16.msra.mxu0 0
    %8329 = vmatprep.subr.bf16.mxu0 0
    %8330 = vmatpush1.bf16.msra.mxu0 0
    %8331 = vmatprep.subr.bf16.mxu0 0
    %8332 = vmatpush1.bf16.msra.mxu0 0
    %8333 = vmatprep.subr.bf16.mxu0 0
    %8334 = vmatpush1.bf16.msra.mxu0 0
    %8335 = vmatprep.subr.bf16.mxu0 0
    %8336 = vmatpush1.bf16.msra.mxu0 0
    %8337 = vmatprep.subr.bf16.mxu0 0
    %8338 = vmatpush1.bf16.msra.mxu0 0
    %8339 = vmatprep.subr.bf16.mxu0 0
    %8340 = vmatpush1.bf16.msra.mxu0 0
    %8341 = vmatprep.subr.bf16.mxu0 0
    %8342 = vmatpush1.bf16.msra.mxu0 0
    %8343 = vmatprep.mubr.bf16.mxu0 0
    %8344 = vmatmul.mubr.bf16.gmra.mrb[0].mxu0 %v7276
    %v8345 = vpop.f32.mrb[0].mxu0
    %v8346 = vadd.f32 0.0, %v8345
    %v8347 = vpop.f32.mrb[0].mxu0
    %v8348 = vpop.f32.mrb[0].mxu0
    %v8349 = vpop.f32.mrb[0].mxu0
    %8350 = vdwg.mxu0
    %v8351 = vadd.f32 %v8239, %v8305
    %v8352 = vadd.f32 %v8240, %v8307
    %v8353 = vadd.f32 %v8241, %v8346
    %s8354 = scalar_lea.vmem %s2, 12
    %v8355 = vld [vmem:[%s8354] sm:$0xf]
    %8357 = vset.pattern.permute.xlu0 0
    %8358 = vperm.xlu0 %8357, %v8355
    %v8359 = vpop.permute.xlu0 %8358
    %v8361 = vmul.f32 %v7368, %v8359
    %v8362 = vmul.f32 %v7369, %v8359
    %v8363 = vmul.f32 %v7370, %v8359
    %v8364 = vmul.f32 %v8351, %v8359
    %v8365 = vmul.f32 %v8352, %v8359
    %v8366 = vmul.f32 %v8353, %v8359
    %s8367 = scalar_lea.vmem %s3, 12
    %v8368 = vld [vmem:[%s8367] sm:$0xf]
    %8370 = vset.pattern.permute.xlu0 0
    %8371 = vperm.xlu0 %8370, %v8368
    %v8372 = vpop.permute.xlu0 %8371
    %v8374 = vadd.f32 %v8361, %v8372
    %v8375 = vadd.f32 %v8362, %v8372
    %v8376 = vadd.f32 %v8363, %v8372
    %v8377 = vadd.f32 %v8364, %v8372
    %v8378 = vadd.f32 %v8365, %v8372
    %v8379 = vadd.f32 %v8366, %v8372
    %v8380 = vadd.f32 %v8374, %v4222
    %v8381 = vadd.f32 %v8375, %v4223
    %v8382 = vadd.f32 %v8376, %v4224
    %v8383 = vadd.f32 %v8377, %v4225
    %v8384 = vadd.f32 %v8378, %v4226
    %v8385 = vadd.f32 %v8379, %v4227
    %v8386 = vmax.f32 %v8380, 0.0
    %v8387 = vmax.f32 %v8381, 0.0
    %v8388 = vmax.f32 %v8382, 0.0
    %v8389 = vmax.f32 %v8383, 0.0
    %v8390 = vmax.f32 %v8384, 0.0
    %v8391 = vmax.f32 %v8385, 0.0
    %v8396 = vcombine.low %v8386, %v8387
    %v8397 = vcombine.low %v8389, %v8390
    %8400 = vst [vmem:[#allocation3] sm:$0xff] %v8396
    %vm8401 = vcmask 257024
    %8402 = vst.msk [vmem:[#allocation3 + $0x8] sm:$0xf] %vm8401, %v8388
    %8403 = vst [vmem:[#allocation3 + $0xc] sm:$0xff] %v8397
    %8404 = vst.msk [vmem:[#allocation3 + $0x14] sm:$0xf] %vm8401, %v8391
    // Predicated region
    $region22: #{tpu_custom_call.1} parent=1 // pred_check
      _
    $region23: #{tpu_custom_call.1} parent=1 // pred_check_branch
      %8406 = sbr.rel (0) target = $region25
    $region24: #{tpu_custom_call.1} parent=1 // pred_region
      %s8408 = ssub.s32 384, 384
      %8409 = vsyncadd [#allocation4], %s8408
      %s8410 = sshll.u32 [#allocation3], 4
      %s8411 = int_to_ptr.vmem [resolvable:$true] %s8410
      %8416 = dma.vmem_to_hbm [thread:$0]  %s8411, 384, %s5, [#allocation4], 192, 192, 12
    $region25: #{tpu_custom_call.1} parent=1 // pred_fallthru
      _
    // Predicated region
    $region26: #{tpu_custom_call.1} parent=1 // pred_check
      _
    $region27: #{tpu_custom_call.1} parent=1 // pred_check_branch
      %8418 = sbr.rel (0) target = $region29
    $region28: #{tpu_custom_call.1} parent=1 // pred_region
      %8419 = dma.done [#allocation4], 384
    $region29: #{tpu_custom_call.1} parent=1 // pred_fallthru
      _
    %8420 = vsyncpa [#allocation4], 1

</llo_original>
